<compile_context>
chip_gen: v5e
topology: v5e:2x2
jax: 0.10.0
libtpu: 0.0.40
codegen_flags: <defaults>
</compile_context>

<pallas_src>
import jax
import jax.numpy as jnp
from jax import lax
from jax.experimental import pallas as pl
from jax.experimental.pallas import tpu as pltpu


# ----------------------------- Pallas kernels ------------------------------


def _conv_stage_kernel(p1_ref, w1_ref, b1_ref, w2_ref, b2_ref, o_ref):
    """conv1 + ReLU + conv2 + ReLU + 2x2 max-pool, entirely in VMEM.

    p1_ref : (tn*256, 108) bf16. Conv1 patches on the parity-plane grid of the
             zero-padded 32x32 conv1 output: row = hh*16 + ww, lane =
             plane*27 + (dh*9 + dw*3 + cin), plane = (h%2)*2 + (w%2).
    w1_ref : (108, 128) bf16. Block-diagonal conv1 weight (one 27x32 block per
             parity plane), so one matmul evaluates all four planes.
    w2_ref : (512, 256) bf16. Conv2 weight scattered so that rows index
             (slab, plane, cin) and columns index (pool position, cout);
             entries the 3x3 receptive field cannot reach are zero.
    o_ref  : (tn*232, 64) bf16. Pooled output; row = n*232 + hp*16 + wp
             (valid for hp, wp < 14; the rest is padding that the fc1 weight
             zeroes out), lane = cout.
    """
    tn = o_ref.shape[0] // 232

    # conv1 for all four parity planes at once (block-diagonal weight).
    a1 = jnp.dot(p1_ref[...], w1_ref[...], preferred_element_type=jnp.float32)
    a1 = jnp.maximum(a1 + b1_ref[...], 0.0)                  # (tn*256, 128) f32

    # conv2 "im2col": per image, the four row-shifted slabs {0, 1, 16, 17} of
    # the parity-split activation, concatenated along 128-aligned lanes.
    per_image = []
    for n in range(tn):
        base = n * 256
        slabs = [a1[base + off: base + off + 232, :] for off in (0, 1, 16, 17)]
        per_image.append(jnp.concatenate(slabs, axis=-1))    # (232, 512)
    ss = per_image[0] if tn == 1 else jnp.concatenate(per_image, axis=0)

    # One MXU matmul covers all 4 positions of each 2x2 pool window x 64 couts.
    z = jnp.dot(ss.astype(jnp.bfloat16), w2_ref[...],
                preferred_element_type=jnp.float32)           # (tn*232, 256)

    # maxpool(relu(z + b)) == relu(max_s(z_s) + b): shared bias + monotone ReLU.
    zm = jnp.maximum(jnp.maximum(z[:, 0:64], z[:, 64:128]),
                     jnp.maximum(z[:, 128:192], z[:, 192:256]))
    o_ref[...] = jnp.maximum(zm + b2_ref[...], 0.0).astype(o_ref.dtype)


def _fc_head_kernel(x_ref, w1_ref, b1_ref, w2_ref, b2_ref, o_ref):
    """fc1 + ReLU + fc2 + log_softmax; single K block (no accumulator)."""
    h = jnp.dot(x_ref[...], w1_ref[...], preferred_element_type=jnp.float32)
    h = jnp.maximum(h + b1_ref[...], 0.0)                     # (tm, 128) f32
    z = jnp.dot(h.astype(jnp.bfloat16), w2_ref[...],
                preferred_element_type=jnp.float32) + b2_ref[...]   # (tm, 10)
    m = jnp.max(z, axis=-1, keepdims=True)
    s = z - m
    lse = jnp.log(jnp.sum(jnp.exp(s), axis=-1, keepdims=True))
    o_ref[...] = (s - lse).astype(o_ref.dtype)


# ------------------------------ call wrappers -------------------------------


def _pick_batch_tile(n, cap=8):
    """Largest divisor of n that is <= cap and still leaves >= 2 grid steps
    (so v7x's second TensorCore gets work); every tile keeps block rows a
    multiple of 8 because the per-image row counts (256/232) already are."""
    if n <= 1:
        return max(n, 1)
    limit = max(1, min(cap, n // 2))
    best = 1
    for t in range(1, limit + 1):
        if n % t == 0:
            best = t
    return best


def _pick_fc_tile(n, cap=64):
    """Whole batch for small n; otherwise the largest divisor of n that is a
    multiple of 8 and <= cap (keeps the x block ~2 MiB); fallback: n."""
    if n <= cap:
        return n
    best = None
    for t in range(8, cap + 1, 8):
        if n % t == 0:
            best = t
    return best if best is not None else n


def _conv_stage(p1, w1b, b1t, w2a, b2r, *, n_images, tn):
    rows_in = 256 * tn
    rows_out = 232 * tn
    return pl.pallas_call(
        _conv_stage_kernel,
        out_shape=jax.ShapeDtypeStruct((n_images * 232, 64), jnp.bfloat16),
        grid_spec=pltpu.PrefetchScalarGridSpec(
            num_scalar_prefetch=0,
            grid=(n_images // tn,),
            in_specs=[
                pl.BlockSpec((rows_in, 108), lambda m: (m, 0)),
                pl.BlockSpec((108, 128), lambda m: (0, 0)),
                pl.BlockSpec((1, 128), lambda m: (0, 0)),
                pl.BlockSpec((512, 256), lambda m: (0, 0)),
                pl.BlockSpec((1, 64), lambda m: (0, 0)),
            ],
            out_specs=pl.BlockSpec((rows_out, 64), lambda m: (m, 0)),
        ),
        compiler_params=pltpu.CompilerParams(
            dimension_semantics=("parallel",),
        ),
    )(p1, w1b, b1t, w2a, b2r)


def _fc_head(x, w1, b1, w2, b2, *, tm):
    M, K = x.shape
    _, H = w1.shape
    _, C = w2.shape
    return pl.pallas_call(
        _fc_head_kernel,
        out_shape=jax.ShapeDtypeStruct((M, C), jnp.float32),
        grid_spec=pltpu.PrefetchScalarGridSpec(
            num_scalar_prefetch=0,
            grid=(M // tm,),
            in_specs=[
                pl.BlockSpec((tm, K), lambda m: (m, 0)),
                pl.BlockSpec((K, H), lambda m: (0, 0)),
                pl.BlockSpec((1, H), lambda m: (0, 0)),
                pl.BlockSpec((H, C), lambda m: (0, 0)),
                pl.BlockSpec((1, C), lambda m: (0, 0)),
            ],
            out_specs=pl.BlockSpec((tm, C), lambda m: (m, 0)),
        ),
        compiler_params=pltpu.CompilerParams(
            dimension_semantics=("parallel",),
        ),
    )(x, w1, b1, w2, b2)


# ------------------------ offline weight relayout ---------------------------


def prepare_params(params):
    """One-time weight relayout + bf16 cast (outside the hot path).

    * conv1 -> (108, 128) block-diagonal so one matmul evaluates all four
      (h%2, w%2) parity planes of the conv1 output.
    * conv2 -> (512, 256): rows index (slab qh*2+qw, plane, cin), columns index
      (pool position a*2+b, cout); entries outside the 3x3 window are zero so
      one matmul yields all four positions of every 2x2 pooling window.
    * fc1   -> rows permuted from torch's (c, h, w) flatten order to the
      kernel's (hp*16 + wp)*64 + c layout (padding rows get weight 0), so the
      pooled activation feeds fc1 with no transpose/gather at all.
    """
    (w1, b1, w2, b2, wf1, bf1, wf2, bf2) = params

    # conv1: (32, 3, 3, 3) -> (27, 32), row = dh*9 + dw*3 + cin.
    w1m = jnp.transpose(w1, (2, 3, 1, 0)).reshape(27, 32)
    w1_blk = jnp.zeros((108, 128), jnp.float32)
    for p in range(4):
        w1_blk = w1_blk.at[27 * p: 27 * (p + 1), 32 * p: 32 * (p + 1)].set(w1m)
    b1t = jnp.tile(b1.reshape(1, 32), (1, 4))

    # conv2: (64, 32, 3, 3) -> (3, 3, 32, 64), scattered into (512, 256).
    w2hw = jnp.transpose(w2, (2, 3, 1, 0))
    w2_all = jnp.zeros((512, 256), jnp.float32)
    for a in range(2):
        for b in range(2):
            s = a * 2 + b
            for qh in range(2):
                for qw in range(2):
                    for i in range(2):
                        for j in range(2):
                            dh = 2 * qh + i - a
                            dw = 2 * qw + j - b
                            if 0 <= dh < 3 and 0 <= dw < 3:
                                r0 = (qh * 2 + qw) * 128 + (i * 2 + j) * 32
                                w2_all = w2_all.at[
                                    r0: r0 + 32, s * 64: (s + 1) * 64
                                ].set(w2hw[dh, dw])

    # fc1: rows reordered to (hp*16 + wp)*64 + c; padded rows -> 0.
    m = jnp.arange(232)
    hp, wp = m // 16, m % 16
    valid = (hp < 14) & (wp < 14)                                  # (232,)
    c = jnp.arange(64)
    tcol = jnp.where(valid[:, None],
                     c[None, :] * 196 + (hp * 14 + wp)[:, None], 0)
    wf1_rows = wf1.T[tcol.reshape(-1)]                             # (232*64, 128)
    wf1_rows = wf1_rows * jnp.repeat(valid, 64).astype(wf1.dtype)[:, None]

    return (
        w1_blk.astype(jnp.bfloat16), b1t.astype(jnp.float32),
        w2_all.astype(jnp.bfloat16), b2.reshape(1, 64).astype(jnp.float32),
        wf1_rows.astype(jnp.bfloat16), bf1.reshape(1, 128).astype(jnp.float32),
        wf2.T.astype(jnp.bfloat16), bf2.reshape(1, 10).astype(jnp.float32),
    )


# ------------------------------- glue (JAX) ---------------------------------


def net_forward(x_nchw, prep):
    (w1b, b1t, w2a, b2r, wf1, bf1, wf2, bf2) = prep
    n = x_nchw.shape[0]
    x = jnp.transpose(x_nchw, (0, 2, 3, 1)).astype(jnp.bfloat16)    # NHWC, bf16

    # Conv1 patches on the parity-plane grid of the zero-padded 32x32 conv1
    # output: row = hh*16 + ww; lane = ((h%2)*2 + (w%2))*27 + dh*9 + dw*3 + c.
    # TODO(synk): this (tiny, ~55 KB/image) im2col is still built by XLA; an
    # in-kernel build would force 3-lane-wide layouts for no measurable gain.
    xp = jnp.pad(x, ((0, 0), (0, 2), (0, 2), (0, 0)))               # (n, 34, 34, 3)
    pieces = [
        xp[:, i + dh: i + dh + 31: 2, j + dw: j + dw + 31: 2, :]
        for i in range(2) for j in range(2)
        for dh in range(3) for dw in range(3)
    ]                                                               # 36 x (n,16,16,3)
    p1 = jnp.stack(pieces, axis=3).reshape(n * 256, 108)

    tn = _pick_batch_tile(n)
    conv_out = _conv_stage(p1, w1b, b1t, w2a, b2r, n_images=n, tn=tn)  # (n*232, 64)

    # dropout(0.25): identity in eval mode.
    # TODO(synk): training-mode dropout RNG is not reproduced.

    # flatten: free (contiguous) reshape to a lane-dense (n, 14848) activation;
    # fc1's rows were pre-permuted to this exact layout.
    xf = conv_out.reshape(n, 232 * 64)
    return _fc_head(xf, wf1, bf1, wf2, bf2, tm=_pick_fc_tile(n))


# ---------------------------- f32 reference ---------------------------------


def _reference_forward(x_nchw, params):
    (w1, b1, w2, b2, wf1, bf1, wf2, bf2) = params
    dn = ("NHWC", "HWIO", "NHWC")
    x = jnp.transpose(x_nchw, (0, 2, 3, 1))
    y = lax.conv_general_dilated(x, jnp.transpose(w1, (2, 3, 1, 0)), (1, 1),
                                 "VALID", dimension_numbers=dn) + b1
    y = jnp.maximum(y, 0.0)
    y = lax.conv_general_dilated(y, jnp.transpose(w2, (2, 3, 1, 0)), (1, 1),
                                 "VALID", dimension_numbers=dn) + b2
    y = jnp.maximum(y, 0.0)                                         # (n,28,28,64)
    n = y.shape[0]
    y = y.reshape(n, 14, 2, 14, 2, 64).max(axis=(2, 4))             # 2x2 max pool
    flat = jnp.transpose(y, (0, 3, 1, 2)).reshape(n, 12544)         # torch order
    h = jnp.maximum(flat @ wf1.T + bf1, 0.0)
    z = h @ wf2.T + bf2
    return jax.nn.log_softmax(z, axis=-1)


# ---------------------------------- main ------------------------------------

if __name__ == "__main__":
    key = jax.random.PRNGKey(0)
    (kx, k1, kb1, k2, kb2, k3, kb3, k4, kb4) = jax.random.split(key, 9)

    # Input 32x32 is forced by fc1's in_features = 12544 = 64 * 14 * 14.
    n = 2
    x = jax.random.normal(kx, (n, 3, 32, 32), dtype=jnp.float32)

    # PyTorch-layout parameters: conv (Cout, Cin, kh, kw), linear (out, in).
    params = (
        jax.random.normal(k1, (32, 3, 3, 3), jnp.float32) * 0.10,
        jax.random.normal(kb1, (32,), jnp.float32) * 0.10,
        jax.random.normal(k2, (64, 32, 3, 3), jnp.float32) * 0.05,
        jax.random.normal(kb2, (64,), jnp.float32) * 0.05,
        jax.random.normal(k3, (128, 12544), jnp.float32) * 0.01,
        jax.random.normal(kb3, (128,), jnp.float32) * 0.01,
        jax.random.normal(k4, (10, 128), jnp.float32) * 0.05,
        jax.random.normal(kb4, (10,), jnp.float32) * 0.05,
    )

    prep = prepare_params(params)            # one-time weight relayout / cast
    out = jax.jit(net_forward)(x, prep)
    out = jax.block_until_ready(out)

    assert out.shape == (n, 10) and out.dtype == jnp.float32
    # log_softmax rows must exponentiate-sum to 1.
    row_sums = jnp.sum(jnp.exp(out), axis=1)
    assert bool(jnp.all(jnp.abs(row_sums - 1.0) < 1e-3))
    # f32 reference check (loose tolerance: operands stream through bf16).
    ref = _reference_forward(x, params)
    assert bool(jnp.max(jnp.abs(out - ref)) < 0.1), float(jnp.max(jnp.abs(out - ref)))

    print("KERNEL_OK")
</pallas_src>

<mosaic_0001>
module attributes {stable_mosaic.version = 11 : i64} {
  func.func @_conv_stage_kernel(%arg0: i32, %arg1: memref<256x108xbf16, #tpu.memory_space<vmem>>, %arg2: memref<108x128xbf16, #tpu.memory_space<vmem>>, %arg3: memref<1x128xf32, #tpu.memory_space<vmem>>, %arg4: memref<512x256xbf16, #tpu.memory_space<vmem>>, %arg5: memref<1x64xf32, #tpu.memory_space<vmem>>, %arg6: memref<232x64xbf16, #tpu.memory_space<vmem>>) attributes {dimension_semantics = [#tpu.dimension_semantics<parallel>], iteration_bounds = array<i64: 2>, scalar_prefetch = 0 : i64, scratch_operands = 0 : i64, tpu.core_type = #tpu.core_type<tc>, window_params = [{transform_indices = @transform_0, window_bounds = array<i64: 256, 108>}, {pipeline_mode = #tpu.pipeline_mode<synchronous>, transform_indices = @transform_1, window_bounds = array<i64: 108, 128>}, {pipeline_mode = #tpu.pipeline_mode<synchronous>, transform_indices = @transform_2, window_bounds = array<i64: 1, 128>}, {pipeline_mode = #tpu.pipeline_mode<synchronous>, transform_indices = @transform_3, window_bounds = array<i64: 512, 256>}, {pipeline_mode = #tpu.pipeline_mode<synchronous>, transform_indices = @transform_4, window_bounds = array<i64: 1, 64>}, {transform_indices = @transform_5, window_bounds = array<i64: 232, 64>}]} {
    %c0 = arith.constant 0 : index
    %c0_0 = arith.constant 0 : index
    %0 = vector.load %arg1[%c0, %c0_0] : memref<256x108xbf16, #tpu.memory_space<vmem>>, vector<256x108xbf16>
    %c0_1 = arith.constant 0 : index
    %c0_2 = arith.constant 0 : index
    %1 = vector.load %arg2[%c0_1, %c0_2] : memref<108x128xbf16, #tpu.memory_space<vmem>>, vector<108x128xbf16>
    %cst = arith.constant dense<0.000000e+00> : vector<256x128xf32>
    %2 = tpu.matmul %0, %1, %cst {dimension_numbers = #tpu.dot_dimension_numbers<[1], [0], [0], [1], [0, 0, 1, 1], [], []>} : vector<256x108xbf16>, vector<108x128xbf16>, vector<256x128xf32> -> vector<256x128xf32>
    %c0_3 = arith.constant 0 : index
    %c0_4 = arith.constant 0 : index
    %3 = vector.load %arg3[%c0_3, %c0_4] : memref<1x128xf32, #tpu.memory_space<vmem>>, vector<1x128xf32>
    %4 = vector.broadcast %3 : vector<1x128xf32> to vector<256x128xf32>
    %5 = arith.addf %2, %4 : vector<256x128xf32>
    %cst_5 = arith.constant 0.000000e+00 : f32
    %6 = vector.broadcast %cst_5 : f32 to vector<256x128xf32>
    %7 = arith.maximumf %5, %6 : vector<256x128xf32>
    %8 = vector.extract_strided_slice %7 {offsets = [0, 0], sizes = [232, 128], strides = [1, 1]} : vector<256x128xf32> to vector<232x128xf32>
    %9 = vector.extract_strided_slice %7 {offsets = [1, 0], sizes = [232, 128], strides = [1, 1]} : vector<256x128xf32> to vector<232x128xf32>
    %10 = vector.extract_strided_slice %7 {offsets = [16, 0], sizes = [232, 128], strides = [1, 1]} : vector<256x128xf32> to vector<232x128xf32>
    %11 = vector.extract_strided_slice %7 {offsets = [17, 0], sizes = [232, 128], strides = [1, 1]} : vector<256x128xf32> to vector<232x128xf32>
    %12 = tpu.concatenate %8, %9, %10, %11 in 1 : vector<232x128xf32>, vector<232x128xf32>, vector<232x128xf32>, vector<232x128xf32> -> vector<232x512xf32>
    %13 = arith.truncf %12 : vector<232x512xf32> to vector<232x512xbf16>
    %c0_6 = arith.constant 0 : index
    %c0_7 = arith.constant 0 : index
    %14 = vector.load %arg4[%c0_6, %c0_7] : memref<512x256xbf16, #tpu.memory_space<vmem>>, vector<512x256xbf16>
    %cst_8 = arith.constant dense<0.000000e+00> : vector<232x256xf32>
    %15 = tpu.matmul %13, %14, %cst_8 {dimension_numbers = #tpu.dot_dimension_numbers<[1], [0], [0], [1], [0, 0, 1, 1], [], []>} : vector<232x512xbf16>, vector<512x256xbf16>, vector<232x256xf32> -> vector<232x256xf32>
    %16 = vector.extract_strided_slice %15 {offsets = [0, 0], sizes = [232, 64], strides = [1, 1]} : vector<232x256xf32> to vector<232x64xf32>
    %17 = vector.extract_strided_slice %15 {offsets = [0, 64], sizes = [232, 64], strides = [1, 1]} : vector<232x256xf32> to vector<232x64xf32>
    %18 = arith.maximumf %16, %17 : vector<232x64xf32>
    %19 = vector.extract_strided_slice %15 {offsets = [0, 128], sizes = [232, 64], strides = [1, 1]} : vector<232x256xf32> to vector<232x64xf32>
    %20 = vector.extract_strided_slice %15 {offsets = [0, 192], sizes = [232, 64], strides = [1, 1]} : vector<232x256xf32> to vector<232x64xf32>
    %21 = arith.maximumf %19, %20 : vector<232x64xf32>
    %22 = arith.maximumf %18, %21 : vector<232x64xf32>
    %c0_9 = arith.constant 0 : index
    %c0_10 = arith.constant 0 : index
    %23 = vector.load %arg5[%c0_9, %c0_10] : memref<1x64xf32, #tpu.memory_space<vmem>>, vector<1x64xf32>
    %24 = vector.broadcast %23 : vector<1x64xf32> to vector<232x64xf32>
    %25 = arith.addf %22, %24 : vector<232x64xf32>
    %cst_11 = arith.constant 0.000000e+00 : f32
    %26 = vector.broadcast %cst_11 : f32 to vector<232x64xf32>
    %27 = arith.maximumf %25, %26 : vector<232x64xf32>
    %28 = arith.truncf %27 : vector<232x64xf32> to vector<232x64xbf16>
    %c0_12 = arith.constant 0 : index
    %c0_13 = arith.constant 0 : index
    %29 = vector.load %arg6[%c0_12, %c0_13] : memref<232x64xbf16, #tpu.memory_space<vmem>>, vector<232x64xbf16>
    tpu.vector_store %arg6[%c0_12, %c0_13], %28 {strides = array<i32>} : memref<232x64xbf16, #tpu.memory_space<vmem>>, vector<232x64xbf16>,
    return
  }
  func.func @transform_0(%arg0: i32) -> (i32, i32) {
    %c0_i32 = arith.constant 0 : i32
    %c0_i32_0 = arith.constant 0 : i32
    return %arg0, %c0_i32 : i32, i32
  }
  func.func @transform_1(%arg0: i32) -> (i32, i32) {
    %c0_i32 = arith.constant 0 : i32
    %c0_i32_0 = arith.constant 0 : i32
    %c0_i32_1 = arith.constant 0 : i32
    return %c0_i32, %c0_i32_0 : i32, i32
  }
  func.func @transform_2(%arg0: i32) -> (i32, i32) {
    %c0_i32 = arith.constant 0 : i32
    %c0_i32_0 = arith.constant 0 : i32
    %c0_i32_1 = arith.constant 0 : i32
    return %c0_i32, %c0_i32_0 : i32, i32
  }
  func.func @transform_3(%arg0: i32) -> (i32, i32) {
    %c0_i32 = arith.constant 0 : i32
    %c0_i32_0 = arith.constant 0 : i32
    %c0_i32_1 = arith.constant 0 : i32
    return %c0_i32, %c0_i32_0 : i32, i32
  }
  func.func @transform_4(%arg0: i32) -> (i32, i32) {
    %c0_i32 = arith.constant 0 : i32
    %c0_i32_0 = arith.constant 0 : i32
    %c0_i32_1 = arith.constant 0 : i32
    return %c0_i32, %c0_i32_0 : i32, i32
  }
  func.func @transform_5(%arg0: i32) -> (i32, i32) {
    %c0_i32 = arith.constant 0 : i32
    %c0_i32_0 = arith.constant 0 : i32
    return %arg0, %c0_i32 : i32, i32
  }
}

module attributes {stable_mosaic.version = 11 : i64} {
  func.func @_fc_head_kernel(%arg0: i32, %arg1: memref<2x14848xbf16, #tpu.memory_space<vmem>>, %arg2: memref<14848x128xbf16, #tpu.memory_space<vmem>>, %arg3: memref<1x128xf32, #tpu.memory_space<vmem>>, %arg4: memref<128x10xbf16, #tpu.memory_space<vmem>>, %arg5: memref<1x10xf32, #tpu.memory_space<vmem>>, %arg6: memref<2x10xf32, #tpu.memory_space<vmem>>) attributes {dimension_semantics = [#tpu.dimension_semantics<parallel>], iteration_bounds = array<i64: 1>, scalar_prefetch = 0 : i64, scratch_operands = 0 : i64, tpu.core_type = #tpu.core_type<tc>, window_params = [{transform_indices = @transform_0, window_bounds = array<i64: 2, 14848>}, {pipeline_mode = #tpu.pipeline_mode<synchronous>, transform_indices = @transform_1, window_bounds = array<i64: 14848, 128>}, {pipeline_mode = #tpu.pipeline_mode<synchronous>, transform_indices = @transform_2, window_bounds = array<i64: 1, 128>}, {pipeline_mode = #tpu.pipeline_mode<synchronous>, transform_indices = @transform_3, window_bounds = array<i64: 128, 10>}, {pipeline_mode = #tpu.pipeline_mode<synchronous>, transform_indices = @transform_4, window_bounds = array<i64: 1, 10>}, {transform_indices = @transform_5, window_bounds = array<i64: 2, 10>}]} {
    %c0 = arith.constant 0 : index
    %c0_0 = arith.constant 0 : index
    %0 = vector.load %arg1[%c0, %c0_0] : memref<2x14848xbf16, #tpu.memory_space<vmem>>, vector<2x14848xbf16>
    %c0_1 = arith.constant 0 : index
    %c0_2 = arith.constant 0 : index
    %1 = vector.load %arg2[%c0_1, %c0_2] : memref<14848x128xbf16, #tpu.memory_space<vmem>>, vector<14848x128xbf16>
    %cst = arith.constant dense<0.000000e+00> : vector<2x128xf32>
    %2 = tpu.matmul %0, %1, %cst {dimension_numbers = #tpu.dot_dimension_numbers<[1], [0], [0], [1], [0, 0, 1, 1], [], []>} : vector<2x14848xbf16>, vector<14848x128xbf16>, vector<2x128xf32> -> vector<2x128xf32>
    %c0_3 = arith.constant 0 : index
    %c0_4 = arith.constant 0 : index
    %3 = vector.load %arg3[%c0_3, %c0_4] : memref<1x128xf32, #tpu.memory_space<vmem>>, vector<1x128xf32>
    %4 = vector.broadcast %3 : vector<1x128xf32> to vector<2x128xf32>
    %5 = arith.addf %2, %4 : vector<2x128xf32>
    %cst_5 = arith.constant 0.000000e+00 : f32
    %6 = vector.broadcast %cst_5 : f32 to vector<2x128xf32>
    %7 = arith.maximumf %5, %6 : vector<2x128xf32>
    %8 = arith.truncf %7 : vector<2x128xf32> to vector<2x128xbf16>
    %c0_6 = arith.constant 0 : index
    %c0_7 = arith.constant 0 : index
    %9 = vector.load %arg4[%c0_6, %c0_7] : memref<128x10xbf16, #tpu.memory_space<vmem>>, vector<128x10xbf16>
    %cst_8 = arith.constant dense<0.000000e+00> : vector<2x10xf32>
    %10 = tpu.matmul %8, %9, %cst_8 {dimension_numbers = #tpu.dot_dimension_numbers<[1], [0], [0], [1], [0, 0, 1, 1], [], []>} : vector<2x128xbf16>, vector<128x10xbf16>, vector<2x10xf32> -> vector<2x10xf32>
    %c0_9 = arith.constant 0 : index
    %c0_10 = arith.constant 0 : index
    %11 = vector.load %arg5[%c0_9, %c0_10] : memref<1x10xf32, #tpu.memory_space<vmem>>, vector<1x10xf32>
    %12 = vector.broadcast %11 : vector<1x10xf32> to vector<2x10xf32>
    %13 = arith.addf %10, %12 : vector<2x10xf32>
    %cst_11 = arith.constant dense<0xFF800000> : vector<2xf32>
    %14 = vector.multi_reduction <maximumf>, %13, %cst_11 [1] : vector<2x10xf32> to vector<2xf32>
    %15 = vector.shape_cast %14 : vector<2xf32> to vector<2x1xf32>
    %16 = vector.broadcast %15 : vector<2x1xf32> to vector<2x10xf32>
    %17 = arith.subf %13, %16 : vector<2x10xf32>
    %18 = math.exp %17 : vector<2x10xf32>
    %cst_12 = arith.constant dense<0.000000e+00> : vector<2xf32>
    %19 = vector.multi_reduction <add>, %18, %cst_12 [1] : vector<2x10xf32> to vector<2xf32>
    %20 = vector.shape_cast %19 : vector<2xf32> to vector<2x1xf32>
    %21 = math.log %20 : vector<2x1xf32>
    %22 = vector.broadcast %21 : vector<2x1xf32> to vector<2x10xf32>
    %23 = arith.subf %17, %22 : vector<2x10xf32>
    %c0_13 = arith.constant 0 : index
    %c0_14 = arith.constant 0 : index
    %24 = vector.load %arg6[%c0_13, %c0_14] : memref<2x10xf32, #tpu.memory_space<vmem>>, vector<2x10xf32>
    tpu.vector_store %arg6[%c0_13, %c0_14], %23 {strides = array<i32>} : memref<2x10xf32, #tpu.memory_space<vmem>>, vector<2x10xf32>,
    return
  }
  func.func @transform_0(%arg0: i32) -> (i32, i32) {
    %c0_i32 = arith.constant 0 : i32
    %c0_i32_0 = arith.constant 0 : i32
    return %arg0, %c0_i32 : i32, i32
  }
  func.func @transform_1(%arg0: i32) -> (i32, i32) {
    %c0_i32 = arith.constant 0 : i32
    %c0_i32_0 = arith.constant 0 : i32
    %c0_i32_1 = arith.constant 0 : i32
    return %c0_i32, %c0_i32_0 : i32, i32
  }
  func.func @transform_2(%arg0: i32) -> (i32, i32) {
    %c0_i32 = arith.constant 0 : i32
    %c0_i32_0 = arith.constant 0 : i32
    %c0_i32_1 = arith.constant 0 : i32
    return %c0_i32, %c0_i32_0 : i32, i32
  }
  func.func @transform_3(%arg0: i32) -> (i32, i32) {
    %c0_i32 = arith.constant 0 : i32
    %c0_i32_0 = arith.constant 0 : i32
    %c0_i32_1 = arith.constant 0 : i32
    return %c0_i32, %c0_i32_0 : i32, i32
  }
  func.func @transform_4(%arg0: i32) -> (i32, i32) {
    %c0_i32 = arith.constant 0 : i32
    %c0_i32_0 = arith.constant 0 : i32
    %c0_i32_1 = arith.constant 0 : i32
    return %c0_i32, %c0_i32_0 : i32, i32
  }
  func.func @transform_5(%arg0: i32) -> (i32, i32) {
    %c0_i32 = arith.constant 0 : i32
    %c0_i32_0 = arith.constant 0 : i32
    return %arg0, %c0_i32 : i32, i32
  }
}

</mosaic_0001>

<llo_original>
// kernel: net_forward.2
$region0: #{net_forward.2}
  #allocation0 [shape = 'u32[]', space=smem, size = 0x4, offset = 0x4, fixed_abs, tag = 'smem constant byte address 0x4 - core index']
  #allocation1 [shape = 'u32[72,128]{1,0:T(1,128)}', space=vmem, size = 0x9000, scoped, tag = 'internal scratch']
  %s0 = inlined_call_operand.vmem [shape: bf16[512,108], index: 0, kind: input, shape index: {}]
  %s1 = inlined_call_operand.vmem [shape: bf16[108,128], index: 1, kind: input, shape index: {}]
  %s2 = inlined_call_operand.vmem [shape: f32[1,128], index: 2, kind: input, shape index: {}]
  %s3 = inlined_call_operand.vmem [shape: bf16[512,256], index: 3, kind: input, shape index: {}]
  %s4 = inlined_call_operand.vmem [shape: f32[1,64], index: 4, kind: input, shape index: {}]
  %s5 = inlined_call_operand.vmem [shape: bf16[464,64], index: 5, kind: output, shape index: {}]
  %s6 = sld [smem:[#allocation0]]
  $region53: #{net_forward.2} parent=0
    _
  %s8 = ssub.s32 1, %s6
  %s9 = scalar_select 0, %s8, %s6
  loop: start=0, step=1, limit=4
  $region2: #{net_forward.2} parent=0 // loop_pre_header
    _
  $region3: #{net_forward.2} parent=0 // loop_header
    %s11 = sphi 0, %s15
    %p12 = scmp.ge.s32.totalorder %s11, 4
    %s21 = sphi 0, %s23
    %s24 = sphi 0, %s21
    %s25 = sphi 0, %s24
    %s41 = sphi 0, %s25
    %s45 = sphi 0, %s45
    %s47 = sphi 0, %s45
    %s48 = sphi 0, %s47
    %s62 = sphi 0, %s48
    %s66 = sphi 0, %s66
    %s68 = sphi 0, %s66
    %s69 = sphi 0, %s68
    %s83 = sphi 0, %s69
    %s87 = sphi 0, %s87
    %s89 = sphi 0, %s87
    %s90 = sphi 0, %s89
    %s104 = sphi 0, %s90
    %s108 = sphi 0, %s108
    %s110 = sphi 0, %s108
    %s111 = sphi 0, %s110
    %s125 = sphi 0, %s111
    %s131 = sphi 0, %s133
    %s134 = sphi 0, %s131
    %s135 = sphi 0, %s134
    %s151 = sphi 0, %s135
  $region4: #{net_forward.2} parent=0 // loop_header_branch
    %14 = sbr.rel (%p12) target = $region8
  $region5: #{net_forward.2} parent=0 // loop_body
    %s16 = ssub.s32 %s11, 1
    %s17 = ssub.s32 %s11, 2
    %s18 = sadd.s32 %s11, 1
    %s19 = ssub.s32 %s11, %s18
    %p20 = scmp.eq.s32.totalorder %s19, 0
    %s22 = sadd.s32 %s21, 1
    %s23 = scalar_select %p20, %s21, %s22
    %p26 = pneg %p20
    %p27 = scmp.eq.s32.totalorder %s11, 1
    %p28 = por %p26, %p27
    %p29 = scmp.ne.s32.totalorder %s21, %s24
    %p30 = scmp.eq.s32.totalorder %s11, 0
    %p31 = por %p29, %p30
    %p32 = scmp.ne.s32.totalorder %s21, %s24
    %p33 = scmp.eq.s32.totalorder %s16, 1
    %p34 = por %p32, %p33
    %p35 = scmp.ne.s32.totalorder %s24, %s25
    %p36 = scmp.eq.s32.totalorder %s16, 0
    %p37 = por %p35, %p36
    %p38 = scmp.ne.s32.totalorder %s24, %s25
    %p39 = scmp.eq.s32.totalorder %s17, 1
    %p40 = por %p38, %p39
    %p42 = scmp.ne.s32.totalorder %s25, %s41
    %p43 = scmp.eq.s32.totalorder %s17, 0
    %p44 = por %p42, %p43
    %s46 = sadd.s32 %s45, 1
    %p49 = scmp.eq.s32.totalorder %s11, 1
    %p50 = scmp.ne.s32.totalorder %s45, %s47
    %p51 = scmp.eq.s32.totalorder %s11, 0
    %p52 = por %p50, %p51
    %p53 = scmp.ne.s32.totalorder %s45, %s47
    %p54 = scmp.eq.s32.totalorder %s16, 1
    %p55 = por %p53, %p54
    %p56 = scmp.ne.s32.totalorder %s47, %s48
    %p57 = scmp.eq.s32.totalorder %s16, 0
    %p58 = por %p56, %p57
    %p59 = scmp.ne.s32.totalorder %s47, %s48
    %p60 = scmp.eq.s32.totalorder %s17, 1
    %p61 = por %p59, %p60
    %p63 = scmp.ne.s32.totalorder %s48, %s62
    %p64 = scmp.eq.s32.totalorder %s17, 0
    %p65 = por %p63, %p64
    %s67 = sadd.s32 %s66, 1
    %p70 = scmp.eq.s32.totalorder %s11, 1
    %p71 = scmp.ne.s32.totalorder %s66, %s68
    %p72 = scmp.eq.s32.totalorder %s11, 0
    %p73 = por %p71, %p72
    %p74 = scmp.ne.s32.totalorder %s66, %s68
    %p75 = scmp.eq.s32.totalorder %s16, 1
    %p76 = por %p74, %p75
    %p77 = scmp.ne.s32.totalorder %s68, %s69
    %p78 = scmp.eq.s32.totalorder %s16, 0
    %p79 = por %p77, %p78
    %p80 = scmp.ne.s32.totalorder %s68, %s69
    %p81 = scmp.eq.s32.totalorder %s17, 1
    %p82 = por %p80, %p81
    %p84 = scmp.ne.s32.totalorder %s69, %s83
    %p85 = scmp.eq.s32.totalorder %s17, 0
    %p86 = por %p84, %p85
    %s88 = sadd.s32 %s87, 1
    %p91 = scmp.eq.s32.totalorder %s11, 1
    %p92 = scmp.ne.s32.totalorder %s87, %s89
    %p93 = scmp.eq.s32.totalorder %s11, 0
    %p94 = por %p92, %p93
    %p95 = scmp.ne.s32.totalorder %s87, %s89
    %p96 = scmp.eq.s32.totalorder %s16, 1
    %p97 = por %p95, %p96
    %p98 = scmp.ne.s32.totalorder %s89, %s90
    %p99 = scmp.eq.s32.totalorder %s16, 0
    %p100 = por %p98, %p99
    %p101 = scmp.ne.s32.totalorder %s89, %s90
    %p102 = scmp.eq.s32.totalorder %s17, 1
    %p103 = por %p101, %p102
    %p105 = scmp.ne.s32.totalorder %s90, %s104
    %p106 = scmp.eq.s32.totalorder %s17, 0
    %p107 = por %p105, %p106
    %s109 = sadd.s32 %s108, 1
    %p112 = scmp.eq.s32.totalorder %s11, 1
    %p113 = scmp.ne.s32.totalorder %s108, %s110
    %p114 = scmp.eq.s32.totalorder %s11, 0
    %p115 = por %p113, %p114
    %p116 = scmp.ne.s32.totalorder %s108, %s110
    %p117 = scmp.eq.s32.totalorder %s16, 1
    %p118 = por %p116, %p117
    %p119 = scmp.ne.s32.totalorder %s110, %s111
    %p120 = scmp.eq.s32.totalorder %s16, 0
    %p121 = por %p119, %p120
    %p122 = scmp.ne.s32.totalorder %s110, %s111
    %p123 = scmp.eq.s32.totalorder %s17, 1
    %p124 = por %p122, %p123
    %p126 = scmp.ne.s32.totalorder %s111, %s125
    %p127 = scmp.eq.s32.totalorder %s17, 0
    %p128 = por %p126, %p127
    %s129 = ssub.s32 %s11, %s18
    %p130 = scmp.eq.s32.totalorder %s129, 0
    %s132 = sadd.s32 %s131, 1
    %s133 = scalar_select %p130, %s131, %s132
    %p136 = pneg %p130
    %p137 = scmp.eq.s32.totalorder %s11, 1
    %p138 = por %p136, %p137
    %p139 = scmp.ne.s32.totalorder %s131, %s134
    %p140 = scmp.eq.s32.totalorder %s11, 0
    %p141 = por %p139, %p140
    %p142 = scmp.ne.s32.totalorder %s131, %s134
    %p143 = scmp.eq.s32.totalorder %s16, 1
    %p144 = por %p142, %p143
    %p145 = scmp.ne.s32.totalorder %s134, %s135
    %p146 = scmp.eq.s32.totalorder %s16, 0
    %p147 = por %p145, %p146
    %p148 = scmp.ne.s32.totalorder %s134, %s135
    %p149 = scmp.eq.s32.totalorder %s17, 1
    %p150 = por %p148, %p149
    %p152 = scmp.ne.s32.totalorder %s135, %s151
    %p153 = scmp.eq.s32.totalorder %s17, 0
    %p154 = por %p152, %p153
    %p155 = scmp.le.s32.totalorder 1, %s11
    %p156 = scmp.lt.s32.totalorder %s11, 3
    %p157 = pnand %p155, %p156
    %p158 = pneg %p157
    // Predicated region
    $region9: #{net_forward.2} parent=5 // pred_check
      _
    $region10: #{net_forward.2} parent=5 // pred_check_branch
      %160 = sbr.rel (%p157) target = $region12
    $region11: #{net_forward.2} parent=5 // pred_region
      %s161 = ssub.s32 %s11, 1
      // Predicated region
      $region13: #{net_forward.2} parent=11 // pred_check
        %p162 = pneg %p58
      $region14: #{net_forward.2} parent=11 // pred_check_branch
        %164 = sbr.rel (%p162) target = $region16
      $region15: #{net_forward.2} parent=11 // pred_region
        _
      $region16: #{net_forward.2} parent=11 // pred_fallthru
        _
      // Predicated region
      $region17: #{net_forward.2} parent=11 // pred_check
        %p165 = pneg %p79
      $region18: #{net_forward.2} parent=11 // pred_check_branch
        %167 = sbr.rel (%p165) target = $region20
      $region19: #{net_forward.2} parent=11 // pred_region
        _
      $region20: #{net_forward.2} parent=11 // pred_fallthru
        _
      // Predicated region
      $region21: #{net_forward.2} parent=11 // pred_check
        %p168 = pneg %p100
      $region22: #{net_forward.2} parent=11 // pred_check_branch
        %170 = sbr.rel (%p168) target = $region24
      $region23: #{net_forward.2} parent=11 // pred_region
        _
      $region24: #{net_forward.2} parent=11 // pred_fallthru
        _
      // Predicated region
      $region25: #{net_forward.2} parent=11 // pred_check
        %p171 = pneg %p121
      $region26: #{net_forward.2} parent=11 // pred_check_branch
        %173 = sbr.rel (%p171) target = $region28
      $region27: #{net_forward.2} parent=11 // pred_region
        _
      $region28: #{net_forward.2} parent=11 // pred_fallthru
        _
    $region12: #{net_forward.2} parent=5 // pred_fallthru
      _
    %p174 = scmp.lt.s32.totalorder %s11, 2
    // Predicated region
    $region29: #{net_forward.2} parent=5 // pred_check
      %p175 = pneg %p174
    $region30: #{net_forward.2} parent=5 // pred_check_branch
      %177 = sbr.rel (%p175) target = $region32
    $region31: #{net_forward.2} parent=5 // pred_region
      // Predicated region
      $region33: #{net_forward.2} parent=31 // pred_check
        %p178 = pneg %p31
      $region34: #{net_forward.2} parent=31 // pred_check_branch
        %180 = sbr.rel (%p178) target = $region36
      $region35: #{net_forward.2} parent=31 // pred_region
        %s181 = smul.u32 32, %s11
        %p182 = scmp.lt.s32.totalorder %s181, 63
        %s183 = scalar_select %p182, %s181, 63
        %s184 = smul.addr %s183, 4
        %s185 = scalar_lea.vmem %s0, %s184
        %s186 = smul.u32 32, %s11
      $region36: #{net_forward.2} parent=31 // pred_fallthru
        _
    $region32: #{net_forward.2} parent=5 // pred_fallthru
      _
    %p187 = scmp.le.s32.totalorder 1, %s11
    %p188 = scmp.lt.s32.totalorder %s11, 3
    %p189 = pnand %p187, %p188
    %p190 = pneg %p189
    // Predicated region
    $region37: #{net_forward.2} parent=5 // pred_check
      _
    $region38: #{net_forward.2} parent=5 // pred_check_branch
      %192 = sbr.rel (%p189) target = $region40
    $region39: #{net_forward.2} parent=5 // pred_region
      %s193 = ssub.s32 %s11, 1
      %s194 = smul.u32 32, %s16
      %p195 = scmp.lt.s32.totalorder %s194, 63
      %s196 = scalar_select %p195, %s194, 63
      %s197 = smul.addr %s196, 4
      %s198 = scalar_lea.vmem %s0, %s197
      %p199 = pneg %p37
      %p200 = pneg %p34
      %p201 = pneg %p58
      %p202 = pneg %p55
      %p203 = pneg %p79
      %p204 = pneg %p76
      %p205 = pneg %p100
      %p206 = pneg %p97
      %p207 = pneg %p121
      %p208 = pneg %p118
      %p209 = pneg %p147
      %p210 = pneg %p144
      %s211 = smul.u32 29, %s16
      %p212 = scmp.lt.s32.totalorder %s211, 57
      %s213 = scalar_select %p212, %s211, 57
      %s214 = smul.addr %s213, 4
      %s215 = scalar_lea.vmem %s5, %s214
      %s216 = smul.u32 32, %s16
      %p217 = scmp.lt.s32.totalorder %s216, 63
      %s218 = scalar_select %p217, %s216, 63
      %s219 = smul.addr %s218, 4
      %s220 = scalar_lea.vmem %s0, %s219
      %s221 = smul.u32 32, %s16
      %s222 = smul.u32 29, %s16
      %p223 = scmp.lt.s32.totalorder %s222, 57
      %s224 = scalar_select %p223, %s222, 57
      %s225 = smul.addr %s224, 4
      %s226 = scalar_lea.vmem %s5, %s225
      %s227 = smul.u32 29, %s16
      %v229 = vld [vmem:[%s220] sm:$0xf]
      %v230 = vld [vmem:[%s220 + $0x4] sm:$0xf]
      %v231 = vld [vmem:[%s220 + $0x8] sm:$0xf]
      %v232 = vld [vmem:[%s220 + $0xc] sm:$0xf]
      %v233 = vld [vmem:[%s220 + $0x10] sm:$0xf]
      %v234 = vld [vmem:[%s220 + $0x14] sm:$0xf]
      %v235 = vld [vmem:[%s220 + $0x18] sm:$0xf]
      %v236 = vld [vmem:[%s220 + $0x1c] sm:$0xf]
      %v237 = vld [vmem:[%s220 + $0x20] sm:$0xf]
      %v238 = vld [vmem:[%s220 + $0x24] sm:$0xf]
      %v239 = vld [vmem:[%s220 + $0x28] sm:$0xf]
      %v240 = vld [vmem:[%s220 + $0x2c] sm:$0xf]
      %v241 = vld [vmem:[%s220 + $0x30] sm:$0xf]
      %v242 = vld [vmem:[%s220 + $0x34] sm:$0xf]
      %v243 = vld [vmem:[%s220 + $0x38] sm:$0xf]
      %v244 = vld [vmem:[%s220 + $0x3c] sm:$0xf]
      %v245 = vld [vmem:[%s220 + $0x40] sm:$0xf]
      %v246 = vld [vmem:[%s220 + $0x44] sm:$0xf]
      %v247 = vld [vmem:[%s220 + $0x48] sm:$0xf]
      %v248 = vld [vmem:[%s220 + $0x4c] sm:$0xf]
      %v249 = vld [vmem:[%s220 + $0x50] sm:$0xf]
      %v250 = vld [vmem:[%s220 + $0x54] sm:$0xf]
      %v251 = vld [vmem:[%s220 + $0x58] sm:$0xf]
      %v252 = vld [vmem:[%s220 + $0x5c] sm:$0xf]
      %v253 = vld [vmem:[%s220 + $0x60] sm:$0xf]
      %v254 = vld [vmem:[%s220 + $0x64] sm:$0xf]
      %v255 = vld [vmem:[%s220 + $0x68] sm:$0xf]
      %v256 = vld [vmem:[%s220 + $0x6c] sm:$0xf]
      %v257 = vld [vmem:[%s220 + $0x70] sm:$0xf]
      %v258 = vld [vmem:[%s220 + $0x74] sm:$0xf]
      %v259 = vld [vmem:[%s220 + $0x78] sm:$0xf]
      %v260 = vld [vmem:[%s220 + $0x7c] sm:$0xf]
      %v261 = vld [vmem:[%s1] sm:$0xf]
      %v262 = vld [vmem:[%s1 + $0x4] sm:$0xf]
      %v263 = vld [vmem:[%s1 + $0x8] sm:$0xf]
      %v264 = vld [vmem:[%s1 + $0xc] sm:$0xf]
      %v265 = vld [vmem:[%s1 + $0x10] sm:$0xf]
      %v266 = vld [vmem:[%s1 + $0x14] sm:$0xf]
      %v267 = vld [vmem:[%s1 + $0x18] sm:$0xf]
      %v268 = vld [vmem:[%s1 + $0x1c] sm:$0xf]
      %v269 = vld [vmem:[%s1 + $0x20] sm:$0xf]
      %v270 = vld [vmem:[%s1 + $0x24] sm:$0xf]
      %v271 = vld [vmem:[%s1 + $0x28] sm:$0xf]
      %v272 = vld [vmem:[%s1 + $0x2c] sm:$0xf]
      %v273 = vld [vmem:[%s1 + $0x30] sm:$0xf]
      %v274 = vld [vmem:[%s1 + $0x34] sm:$0x3]
      %v275 = vld [vmem:[%s2] sm:$0x1]
      %v277 = vperm.slane %v275, 0
      %v311 = vunpack.c.l.b16 %v229
      %v312 = vunpack.c.l.b16 %v230
      %v313 = vunpack.c.l.b16 %v231
      %v314 = vunpack.c.l.b16 %v232
      %v315 = vunpack.c.l.b16 %v233
      %v316 = vunpack.c.l.b16 %v234
      %v317 = vunpack.c.l.b16 %v235
      %v318 = vunpack.c.l.b16 %v236
      %v319 = vunpack.c.l.b16 %v237
      %v320 = vunpack.c.l.b16 %v238
      %v321 = vunpack.c.l.b16 %v239
      %v322 = vunpack.c.l.b16 %v240
      %v323 = vunpack.c.l.b16 %v241
      %v324 = vunpack.c.l.b16 %v242
      %v325 = vunpack.c.l.b16 %v243
      %v326 = vunpack.c.l.b16 %v244
      %v327 = vunpack.c.l.b16 %v245
      %v328 = vunpack.c.l.b16 %v246
      %v329 = vunpack.c.l.b16 %v247
      %v330 = vunpack.c.l.b16 %v248
      %v331 = vunpack.c.l.b16 %v249
      %v332 = vunpack.c.l.b16 %v250
      %v333 = vunpack.c.l.b16 %v251
      %v334 = vunpack.c.l.b16 %v252
      %v335 = vunpack.c.l.b16 %v253
      %v336 = vunpack.c.l.b16 %v254
      %v337 = vunpack.c.l.b16 %v255
      %v338 = vunpack.c.l.b16 %v256
      %v339 = vunpack.c.l.b16 %v257
      %v340 = vunpack.c.l.b16 %v258
      %v341 = vunpack.c.l.b16 %v259
      %v342 = vunpack.c.l.b16 %v260
      %v343 = vpack.c.b16 %v312, %v311
      %v344 = vpack.c.b16 %v314, %v313
      %v345 = vpack.c.b16 %v316, %v315
      %v346 = vpack.c.b16 %v318, %v317
      %v347 = vpack.c.b16 %v320, %v319
      %v348 = vpack.c.b16 %v322, %v321
      %v349 = vpack.c.b16 %v324, %v323
      %v350 = vpack.c.b16 %v326, %v325
      %v351 = vpack.c.b16 %v328, %v327
      %v352 = vpack.c.b16 %v330, %v329
      %v353 = vpack.c.b16 %v332, %v331
      %v354 = vpack.c.b16 %v334, %v333
      %v355 = vpack.c.b16 %v336, %v335
      %v356 = vpack.c.b16 %v338, %v337
      %v357 = vpack.c.b16 %v340, %v339
      %v358 = vpack.c.b16 %v342, %v341
      %v373 = vunpack.c.l.b16 %v261
      %v374 = vunpack.c.l.b16 %v262
      %v375 = vunpack.c.l.b16 %v263
      %v376 = vunpack.c.l.b16 %v264
      %v377 = vunpack.c.l.b16 %v265
      %v378 = vunpack.c.l.b16 %v266
      %v379 = vunpack.c.l.b16 %v267
      %v380 = vunpack.c.l.b16 %v268
      %v381 = vunpack.c.l.b16 %v269
      %v382 = vunpack.c.l.b16 %v270
      %v383 = vunpack.c.l.b16 %v271
      %v384 = vunpack.c.l.b16 %v272
      %v385 = vunpack.c.l.b16 %v273
      %v386 = vunpack.c.l.b16 %v274
      %v387 = vpack.c.b16 %v374, %v373
      %v388 = vpack.c.b16 %v376, %v375
      %v389 = vpack.c.b16 %v378, %v377
      %v390 = vpack.c.b16 %v380, %v379
      %v391 = vpack.c.b16 %v382, %v381
      %v392 = vpack.c.b16 %v384, %v383
      %v393 = vpack.c.b16 %v386, %v385
      %vm400 = vcmask 883712
      %v402 = vsel %vm400, %v343, 0
      %v405 = vsel %vm400, %v344, 0
      %v408 = vsel %vm400, %v345, 0
      %v411 = vsel %vm400, %v346, 0
      %v414 = vsel %vm400, %v347, 0
      %v417 = vsel %vm400, %v348, 0
      %v420 = vsel %vm400, %v349, 0
      %v423 = vsel %vm400, %v350, 0
      %v426 = vsel %vm400, %v351, 0
      %v429 = vsel %vm400, %v352, 0
      %v432 = vsel %vm400, %v353, 0
      %v435 = vsel %vm400, %v354, 0
      %v438 = vsel %vm400, %v355, 0
      %v441 = vsel %vm400, %v356, 0
      %v444 = vsel %vm400, %v357, 0
      %v447 = vsel %vm400, %v358, 0
      %vm449 = vcmask 1045504
      %v451 = vsel %vm449, %v393, 0
      %453 = vmatpush.bf16.msra.mxu0 0
      %454 = vmatpush.bf16.msra.mxu0 %v451
      %455 = vmatpush.bf16.msra.mxu0 %v392
      %456 = vmatpush.bf16.msra.mxu0 %v391
      %457 = vmatpush.bf16.msra.mxu0 %v390
      %458 = vmatpush.bf16.msra.mxu0 %v389
      %459 = vmatpush.bf16.msra.mxu0 %v388
      %460 = vmatpush.bf16.msra.mxu0 %v387
      %461 = vmatmul.bf16.gmra.mxu0 %v402
      %v462 = vpop.f32.mrf.mxu0
      %v463 = vadd.f32 %v277, %v462
      %v464 = vpop.f32.mrf.mxu0
      %v465 = vadd.f32 %v277, %v464
      %466 = vmatmul.bf16.gmra.mxu0 %v405
      %v467 = vpop.f32.mrf.mxu0
      %v468 = vadd.f32 %v277, %v467
      %v469 = vpop.f32.mrf.mxu0
      %v470 = vadd.f32 %v277, %v469
      %471 = vmatmul.bf16.gmra.mxu0 %v408
      %v472 = vpop.f32.mrf.mxu0
      %v473 = vadd.f32 %v277, %v472
      %v474 = vpop.f32.mrf.mxu0
      %v475 = vadd.f32 %v277, %v474
      %476 = vmatmul.bf16.gmra.mxu0 %v411
      %v477 = vpop.f32.mrf.mxu0
      %v478 = vadd.f32 %v277, %v477
      %v479 = vpop.f32.mrf.mxu0
      %v480 = vadd.f32 %v277, %v479
      %481 = vmatmul.bf16.gmra.mxu0 %v414
      %v482 = vpop.f32.mrf.mxu0
      %v483 = vadd.f32 %v277, %v482
      %v484 = vpop.f32.mrf.mxu0
      %v485 = vadd.f32 %v277, %v484
      %486 = vmatmul.bf16.gmra.mxu0 %v417
      %v487 = vpop.f32.mrf.mxu0
      %v488 = vadd.f32 %v277, %v487
      %v489 = vpop.f32.mrf.mxu0
      %v490 = vadd.f32 %v277, %v489
      %491 = vmatmul.bf16.gmra.mxu0 %v420
      %v492 = vpop.f32.mrf.mxu0
      %v493 = vadd.f32 %v277, %v492
      %v494 = vpop.f32.mrf.mxu0
      %v495 = vadd.f32 %v277, %v494
      %496 = vmatmul.bf16.gmra.mxu0 %v423
      %v497 = vpop.f32.mrf.mxu0
      %v498 = vadd.f32 %v277, %v497
      %v499 = vpop.f32.mrf.mxu0
      %v500 = vadd.f32 %v277, %v499
      %501 = vmatmul.bf16.gmra.mxu0 %v426
      %v502 = vpop.f32.mrf.mxu0
      %v503 = vadd.f32 %v277, %v502
      %v504 = vpop.f32.mrf.mxu0
      %v505 = vadd.f32 %v277, %v504
      %506 = vmatmul.bf16.gmra.mxu0 %v429
      %v507 = vpop.f32.mrf.mxu0
      %v508 = vadd.f32 %v277, %v507
      %v509 = vpop.f32.mrf.mxu0
      %v510 = vadd.f32 %v277, %v509
      %511 = vmatmul.bf16.gmra.mxu0 %v432
      %v512 = vpop.f32.mrf.mxu0
      %v513 = vadd.f32 %v277, %v512
      %v514 = vpop.f32.mrf.mxu0
      %v515 = vadd.f32 %v277, %v514
      %516 = vmatmul.bf16.gmra.mxu0 %v435
      %v517 = vpop.f32.mrf.mxu0
      %v518 = vadd.f32 %v277, %v517
      %v519 = vpop.f32.mrf.mxu0
      %v520 = vadd.f32 %v277, %v519
      %521 = vmatmul.bf16.gmra.mxu0 %v438
      %v522 = vpop.f32.mrf.mxu0
      %v523 = vadd.f32 %v277, %v522
      %v524 = vpop.f32.mrf.mxu0
      %v525 = vadd.f32 %v277, %v524
      %526 = vmatmul.bf16.gmra.mxu0 %v441
      %v527 = vpop.f32.mrf.mxu0
      %v528 = vadd.f32 %v277, %v527
      %v529 = vpop.f32.mrf.mxu0
      %v530 = vadd.f32 %v277, %v529
      %531 = vmatmul.bf16.gmra.mxu0 %v444
      %v532 = vpop.f32.mrf.mxu0
      %v533 = vadd.f32 %v277, %v532
      %v534 = vpop.f32.mrf.mxu0
      %v535 = vadd.f32 %v277, %v534
      %536 = vmatmul.bf16.gmra.mxu0 %v447
      %v537 = vpop.f32.mrf.mxu0
      %v538 = vadd.f32 %v277, %v537
      %v539 = vpop.f32.mrf.mxu0
      %v540 = vadd.f32 %v277, %v539
      %541 = vdwg.mxu0
      %v542 = vmax.f32 %v463, 0.0
      %v543 = vmax.f32 %v465, 0.0
      %v544 = vmax.f32 %v468, 0.0
      %v545 = vmax.f32 %v470, 0.0
      %v546 = vmax.f32 %v473, 0.0
      %v547 = vmax.f32 %v475, 0.0
      %v548 = vmax.f32 %v478, 0.0
      %v549 = vmax.f32 %v480, 0.0
      %v550 = vmax.f32 %v483, 0.0
      %v551 = vmax.f32 %v485, 0.0
      %v552 = vmax.f32 %v488, 0.0
      %v553 = vmax.f32 %v490, 0.0
      %v554 = vmax.f32 %v493, 0.0
      %v555 = vmax.f32 %v495, 0.0
      %v556 = vmax.f32 %v498, 0.0
      %v557 = vmax.f32 %v500, 0.0
      %v558 = vmax.f32 %v503, 0.0
      %v559 = vmax.f32 %v505, 0.0
      %v560 = vmax.f32 %v508, 0.0
      %v561 = vmax.f32 %v510, 0.0
      %v562 = vmax.f32 %v513, 0.0
      %v563 = vmax.f32 %v515, 0.0
      %v564 = vmax.f32 %v518, 0.0
      %v565 = vmax.f32 %v520, 0.0
      %v566 = vmax.f32 %v523, 0.0
      %v567 = vmax.f32 %v525, 0.0
      %v568 = vmax.f32 %v528, 0.0
      %v569 = vmax.f32 %v530, 0.0
      %v570 = vmax.f32 %v533, 0.0
      %v571 = vmax.f32 %v535, 0.0
      %v572 = vmax.f32 %v538, 0.0
      %v573 = vmax.f32 %v540, 0.0
      %vm604 = vcmask 1046528
      %v605 = vrot.slane %v542, 1
      %v606 = vrot.slane %v543, 1
      %v607 = vsel %vm604, %v605, %v606
      %v608 = vrot.slane %v544, 1
      %v609 = vsel %vm604, %v606, %v608
      %v610 = vrot.slane %v545, 1
      %v611 = vsel %vm604, %v608, %v610
      %v612 = vrot.slane %v546, 1
      %v613 = vsel %vm604, %v610, %v612
      %v614 = vrot.slane %v547, 1
      %v615 = vsel %vm604, %v612, %v614
      %v616 = vrot.slane %v548, 1
      %v617 = vsel %vm604, %v614, %v616
      %v618 = vrot.slane %v549, 1
      %v619 = vsel %vm604, %v616, %v618
      %v620 = vrot.slane %v550, 1
      %v621 = vsel %vm604, %v618, %v620
      %v622 = vrot.slane %v551, 1
      %v623 = vsel %vm604, %v620, %v622
      %v624 = vrot.slane %v552, 1
      %v625 = vsel %vm604, %v622, %v624
      %v626 = vrot.slane %v553, 1
      %v627 = vsel %vm604, %v624, %v626
      %v628 = vrot.slane %v554, 1
      %v629 = vsel %vm604, %v626, %v628
      %v630 = vrot.slane %v555, 1
      %v631 = vsel %vm604, %v628, %v630
      %v632 = vrot.slane %v556, 1
      %v633 = vsel %vm604, %v630, %v632
      %v634 = vrot.slane %v557, 1
      %v635 = vsel %vm604, %v632, %v634
      %v636 = vrot.slane %v558, 1
      %v637 = vsel %vm604, %v634, %v636
      %v638 = vrot.slane %v559, 1
      %v639 = vsel %vm604, %v636, %v638
      %v640 = vrot.slane %v560, 1
      %v641 = vsel %vm604, %v638, %v640
      %v642 = vrot.slane %v561, 1
      %v643 = vsel %vm604, %v640, %v642
      %v644 = vrot.slane %v562, 1
      %v645 = vsel %vm604, %v642, %v644
      %v646 = vrot.slane %v563, 1
      %v647 = vsel %vm604, %v644, %v646
      %v648 = vrot.slane %v564, 1
      %v649 = vsel %vm604, %v646, %v648
      %v650 = vrot.slane %v565, 1
      %v651 = vsel %vm604, %v648, %v650
      %v652 = vrot.slane %v566, 1
      %v653 = vsel %vm604, %v650, %v652
      %v654 = vrot.slane %v567, 1
      %v655 = vsel %vm604, %v652, %v654
      %v656 = vrot.slane %v568, 1
      %v657 = vsel %vm604, %v654, %v656
      %v658 = vrot.slane %v569, 1
      %v659 = vsel %vm604, %v656, %v658
      %v660 = vrot.slane %v570, 1
      %v661 = vsel %vm604, %v658, %v660
      %v662 = vrot.slane %v571, 1
      %v663 = vsel %vm604, %v660, %v662
      %v695 = vrot.slane %v572, 1
      %v696 = vsel %vm604, %v662, %v695
      %v697 = vrot.slane %v573, 1
      %v698 = vsel %vm604, %v695, %v697
      %v701 = vpack.c.bf16 %v543, %v542
      %v702 = vpack.c.bf16 %v609, %v607
      %v703 = vpack.c.bf16 %v545, %v544
      %v704 = vpack.c.bf16 %v613, %v611
      %v705 = vpack.c.bf16 %v547, %v546
      %v706 = vpack.c.bf16 %v617, %v615
      %v707 = vpack.c.bf16 %v549, %v548
      %v708 = vpack.c.bf16 %v621, %v619
      %v709 = vpack.c.bf16 %v551, %v550
      %v710 = vpack.c.bf16 %v625, %v623
      %v711 = vpack.c.bf16 %v553, %v552
      %v712 = vpack.c.bf16 %v629, %v627
      %v713 = vpack.c.bf16 %v555, %v554
      %v714 = vpack.c.bf16 %v633, %v631
      %v715 = vpack.c.bf16 %v557, %v556
      %v716 = vpack.c.bf16 %v637, %v635
      %v717 = vpack.c.bf16 %v559, %v558
      %v718 = vpack.c.bf16 %v641, %v639
      %v719 = vpack.c.bf16 %v561, %v560
      %v720 = vpack.c.bf16 %v645, %v643
      %v721 = vpack.c.bf16 %v563, %v562
      %v722 = vpack.c.bf16 %v649, %v647
      %v723 = vpack.c.bf16 %v565, %v564
      %v724 = vpack.c.bf16 %v653, %v651
      %v725 = vpack.c.bf16 %v567, %v566
      %v726 = vpack.c.bf16 %v657, %v655
      %v727 = vpack.c.bf16 %v569, %v568
      %v728 = vpack.c.bf16 %v661, %v659
      %v729 = vpack.c.bf16 %v571, %v570
      %v730 = vpack.c.bf16 %v696, %v663
      %v731 = vpack.c.bf16 %v570, %v570
      %v732 = vpack.c.bf16 %v663, %v663
      %v733 = vpack.c.bf16 %v572, %v572
      %v734 = vpack.c.bf16 %v698, %v698
      %v735 = vld [vmem:[%s3] sm:$0xff]
      %v736 = vld [vmem:[%s3 + $0x8] sm:$0xff]
      %v737 = vld [vmem:[%s3 + $0x10] sm:$0xff]
      %v738 = vld [vmem:[%s3 + $0x18] sm:$0xff]
      %v739 = vld [vmem:[%s3 + $0x20] sm:$0xff]
      %v740 = vld [vmem:[%s3 + $0x28] sm:$0xff]
      %v741 = vld [vmem:[%s3 + $0x30] sm:$0xff]
      %v742 = vld [vmem:[%s3 + $0x38] sm:$0xff]
      %v743 = vld [vmem:[%s3 + $0x40] sm:$0xff]
      %v744 = vld [vmem:[%s3 + $0x48] sm:$0xff]
      %v745 = vld [vmem:[%s3 + $0x50] sm:$0xff]
      %v746 = vld [vmem:[%s3 + $0x58] sm:$0xff]
      %v747 = vld [vmem:[%s3 + $0x60] sm:$0xff]
      %v748 = vld [vmem:[%s3 + $0x68] sm:$0xff]
      %v749 = vld [vmem:[%s3 + $0x70] sm:$0xff]
      %v750 = vld [vmem:[%s3 + $0x78] sm:$0xff]
      %v751 = vld [vmem:[%s3 + $0x80] sm:$0xff]
      %v752 = vld [vmem:[%s3 + $0x88] sm:$0xff]
      %v753 = vld [vmem:[%s3 + $0x90] sm:$0xff]
      %v754 = vld [vmem:[%s3 + $0x98] sm:$0xff]
      %v755 = vld [vmem:[%s3 + $0xa0] sm:$0xff]
      %v756 = vld [vmem:[%s3 + $0xa8] sm:$0xff]
      %v757 = vld [vmem:[%s3 + $0xb0] sm:$0xff]
      %v758 = vld [vmem:[%s3 + $0xb8] sm:$0xff]
      %v759 = vld [vmem:[%s3 + $0xc0] sm:$0xff]
      %v760 = vld [vmem:[%s3 + $0xc8] sm:$0xff]
      %v761 = vld [vmem:[%s3 + $0xd0] sm:$0xff]
      %v762 = vld [vmem:[%s3 + $0xd8] sm:$0xff]
      %v763 = vld [vmem:[%s3 + $0xe0] sm:$0xff]
      %v764 = vld [vmem:[%s3 + $0xe8] sm:$0xff]
      %v765 = vld [vmem:[%s3 + $0xf0] sm:$0xff]
      %v766 = vld [vmem:[%s3 + $0xf8] sm:$0xff]
      %v767 = vld [vmem:[%s3 + $0x100] sm:$0xff]
      %v768 = vld [vmem:[%s3 + $0x108] sm:$0xff]
      %v769 = vld [vmem:[%s3 + $0x110] sm:$0xff]
      %v770 = vld [vmem:[%s3 + $0x118] sm:$0xff]
      %v771 = vld [vmem:[%s3 + $0x120] sm:$0xff]
      %v772 = vld [vmem:[%s3 + $0x128] sm:$0xff]
      %v773 = vld [vmem:[%s3 + $0x130] sm:$0xff]
      %v774 = vld [vmem:[%s3 + $0x138] sm:$0xff]
      %v775 = vld [vmem:[%s3 + $0x140] sm:$0xff]
      %v776 = vld [vmem:[%s3 + $0x148] sm:$0xff]
      %v777 = vld [vmem:[%s3 + $0x150] sm:$0xff]
      %v778 = vld [vmem:[%s3 + $0x158] sm:$0xff]
      %v779 = vld [vmem:[%s3 + $0x160] sm:$0xff]
      %v780 = vld [vmem:[%s3 + $0x168] sm:$0xff]
      %v781 = vld [vmem:[%s3 + $0x170] sm:$0xff]
      %v782 = vld [vmem:[%s3 + $0x178] sm:$0xff]
      %v783 = vld [vmem:[%s3 + $0x180] sm:$0xff]
      %v784 = vld [vmem:[%s3 + $0x188] sm:$0xff]
      %v785 = vld [vmem:[%s3 + $0x190] sm:$0xff]
      %v786 = vld [vmem:[%s3 + $0x198] sm:$0xff]
      %v787 = vld [vmem:[%s3 + $0x1a0] sm:$0xff]
      %v788 = vld [vmem:[%s3 + $0x1a8] sm:$0xff]
      %v789 = vld [vmem:[%s3 + $0x1b0] sm:$0xff]
      %v790 = vld [vmem:[%s3 + $0x1b8] sm:$0xff]
      %v791 = vld [vmem:[%s3 + $0x1c0] sm:$0xff]
      %v792 = vld [vmem:[%s3 + $0x1c8] sm:$0xff]
      %v793 = vld [vmem:[%s3 + $0x1d0] sm:$0xff]
      %v794 = vld [vmem:[%s3 + $0x1d8] sm:$0xff]
      %v795 = vld [vmem:[%s3 + $0x1e0] sm:$0xff]
      %v796 = vld [vmem:[%s3 + $0x1e8] sm:$0xff]
      %v797 = vld [vmem:[%s3 + $0x1f0] sm:$0xff]
      %v798 = vld [vmem:[%s3 + $0x1f8] sm:$0xff]
      %v863 = vunpack.c.l.b16 %v735
      %v864 = vunpack.c.h.b16 %v735
      %v865 = vunpack.c.l.b16 %v736
      %v866 = vunpack.c.h.b16 %v736
      %v867 = vunpack.c.l.b16 %v737
      %v868 = vunpack.c.h.b16 %v737
      %v869 = vunpack.c.l.b16 %v738
      %v870 = vunpack.c.h.b16 %v738
      %v871 = vunpack.c.l.b16 %v739
      %v872 = vunpack.c.h.b16 %v739
      %v873 = vunpack.c.l.b16 %v740
      %v874 = vunpack.c.h.b16 %v740
      %v875 = vunpack.c.l.b16 %v741
      %v876 = vunpack.c.h.b16 %v741
      %v877 = vunpack.c.l.b16 %v742
      %v878 = vunpack.c.h.b16 %v742
      %v879 = vunpack.c.l.b16 %v743
      %v880 = vunpack.c.h.b16 %v743
      %v881 = vunpack.c.l.b16 %v744
      %v882 = vunpack.c.h.b16 %v744
      %v883 = vunpack.c.l.b16 %v745
      %v884 = vunpack.c.h.b16 %v745
      %v885 = vunpack.c.l.b16 %v746
      %v886 = vunpack.c.h.b16 %v746
      %v887 = vunpack.c.l.b16 %v747
      %v888 = vunpack.c.h.b16 %v747
      %v889 = vunpack.c.l.b16 %v748
      %v890 = vunpack.c.h.b16 %v748
      %v891 = vunpack.c.l.b16 %v749
      %v892 = vunpack.c.h.b16 %v749
      %v893 = vunpack.c.l.b16 %v750
      %v894 = vunpack.c.h.b16 %v750
      %v895 = vunpack.c.l.b16 %v751
      %v896 = vunpack.c.h.b16 %v751
      %v897 = vunpack.c.l.b16 %v752
      %v898 = vunpack.c.h.b16 %v752
      %v899 = vunpack.c.l.b16 %v753
      %v900 = vunpack.c.h.b16 %v753
      %v901 = vunpack.c.l.b16 %v754
      %v902 = vunpack.c.h.b16 %v754
      %v903 = vunpack.c.l.b16 %v755
      %v904 = vunpack.c.h.b16 %v755
      %v905 = vunpack.c.l.b16 %v756
      %v906 = vunpack.c.h.b16 %v756
      %v907 = vunpack.c.l.b16 %v757
      %v908 = vunpack.c.h.b16 %v757
      %v909 = vunpack.c.l.b16 %v758
      %v910 = vunpack.c.h.b16 %v758
      %v911 = vunpack.c.l.b16 %v759
      %v912 = vunpack.c.h.b16 %v759
      %v913 = vunpack.c.l.b16 %v760
      %v914 = vunpack.c.h.b16 %v760
      %v915 = vunpack.c.l.b16 %v761
      %v916 = vunpack.c.h.b16 %v761
      %v917 = vunpack.c.l.b16 %v762
      %v918 = vunpack.c.h.b16 %v762
      %v919 = vunpack.c.l.b16 %v763
      %v920 = vunpack.c.h.b16 %v763
      %v921 = vunpack.c.l.b16 %v764
      %v922 = vunpack.c.h.b16 %v764
      %v923 = vunpack.c.l.b16 %v765
      %v924 = vunpack.c.h.b16 %v765
      %v925 = vunpack.c.l.b16 %v766
      %v926 = vunpack.c.h.b16 %v766
      %v927 = vunpack.c.l.b16 %v767
      %v928 = vunpack.c.h.b16 %v767
      %v929 = vunpack.c.l.b16 %v768
      %v930 = vunpack.c.h.b16 %v768
      %v931 = vunpack.c.l.b16 %v769
      %v932 = vunpack.c.h.b16 %v769
      %v933 = vunpack.c.l.b16 %v770
      %v934 = vunpack.c.h.b16 %v770
      %v935 = vunpack.c.l.b16 %v771
      %v936 = vunpack.c.h.b16 %v771
      %v937 = vunpack.c.l.b16 %v772
      %v938 = vunpack.c.h.b16 %v772
      %v939 = vunpack.c.l.b16 %v773
      %v940 = vunpack.c.h.b16 %v773
      %v941 = vunpack.c.l.b16 %v774
      %v942 = vunpack.c.h.b16 %v774
      %v943 = vunpack.c.l.b16 %v775
      %v944 = vunpack.c.h.b16 %v775
      %v945 = vunpack.c.l.b16 %v776
      %v946 = vunpack.c.h.b16 %v776
      %v947 = vunpack.c.l.b16 %v777
      %v948 = vunpack.c.h.b16 %v777
      %v949 = vunpack.c.l.b16 %v778
      %v950 = vunpack.c.h.b16 %v778
      %v951 = vunpack.c.l.b16 %v779
      %v952 = vunpack.c.h.b16 %v779
      %v953 = vunpack.c.l.b16 %v780
      %v954 = vunpack.c.h.b16 %v780
      %v955 = vunpack.c.l.b16 %v781
      %v956 = vunpack.c.h.b16 %v781
      %v957 = vunpack.c.l.b16 %v782
      %v958 = vunpack.c.h.b16 %v782
      %v959 = vunpack.c.l.b16 %v783
      %v960 = vunpack.c.h.b16 %v783
      %v961 = vunpack.c.l.b16 %v784
      %v962 = vunpack.c.h.b16 %v784
      %v963 = vunpack.c.l.b16 %v785
      %v964 = vunpack.c.h.b16 %v785
      %v965 = vunpack.c.l.b16 %v786
      %v966 = vunpack.c.h.b16 %v786
      %v967 = vunpack.c.l.b16 %v787
      %v968 = vunpack.c.h.b16 %v787
      %v969 = vunpack.c.l.b16 %v788
      %v970 = vunpack.c.h.b16 %v788
      %v971 = vunpack.c.l.b16 %v789
      %v972 = vunpack.c.h.b16 %v789
      %v973 = vunpack.c.l.b16 %v790
      %v974 = vunpack.c.h.b16 %v790
      %v975 = vunpack.c.l.b16 %v791
      %v976 = vunpack.c.h.b16 %v791
      %v977 = vunpack.c.l.b16 %v792
      %v978 = vunpack.c.h.b16 %v792
      %v979 = vunpack.c.l.b16 %v793
      %v980 = vunpack.c.h.b16 %v793
      %v981 = vunpack.c.l.b16 %v794
      %v982 = vunpack.c.h.b16 %v794
      %v983 = vunpack.c.l.b16 %v795
      %v984 = vunpack.c.h.b16 %v795
      %v985 = vunpack.c.l.b16 %v796
      %v986 = vunpack.c.h.b16 %v796
      %v987 = vunpack.c.l.b16 %v797
      %v988 = vunpack.c.h.b16 %v797
      %v989 = vunpack.c.l.b16 %v798
      %v990 = vunpack.c.h.b16 %v798
      %v991 = vpack.c.b16 %v865, %v863
      %v992 = vpack.c.b16 %v866, %v864
      %v993 = vpack.c.b16 %v869, %v867
      %v994 = vpack.c.b16 %v870, %v868
      %v995 = vpack.c.b16 %v873, %v871
      %v996 = vpack.c.b16 %v874, %v872
      %v997 = vpack.c.b16 %v877, %v875
      %v998 = vpack.c.b16 %v878, %v876
      %v999 = vpack.c.b16 %v881, %v879
      %v1000 = vpack.c.b16 %v882, %v880
      %v1001 = vpack.c.b16 %v885, %v883
      %v1002 = vpack.c.b16 %v886, %v884
      %v1003 = vpack.c.b16 %v889, %v887
      %v1004 = vpack.c.b16 %v890, %v888
      %v1005 = vpack.c.b16 %v893, %v891
      %v1006 = vpack.c.b16 %v894, %v892
      %v1007 = vpack.c.b16 %v897, %v895
      %v1008 = vpack.c.b16 %v898, %v896
      %v1009 = vpack.c.b16 %v901, %v899
      %v1010 = vpack.c.b16 %v902, %v900
      %v1011 = vpack.c.b16 %v905, %v903
      %v1012 = vpack.c.b16 %v906, %v904
      %v1013 = vpack.c.b16 %v909, %v907
      %v1014 = vpack.c.b16 %v910, %v908
      %v1015 = vpack.c.b16 %v913, %v911
      %v1016 = vpack.c.b16 %v914, %v912
      %v1017 = vpack.c.b16 %v917, %v915
      %v1018 = vpack.c.b16 %v918, %v916
      %v1019 = vpack.c.b16 %v921, %v919
      %v1020 = vpack.c.b16 %v922, %v920
      %v1021 = vpack.c.b16 %v925, %v923
      %v1022 = vpack.c.b16 %v926, %v924
      %v1023 = vpack.c.b16 %v929, %v927
      %v1024 = vpack.c.b16 %v930, %v928
      %v1025 = vpack.c.b16 %v933, %v931
      %v1026 = vpack.c.b16 %v934, %v932
      %v1027 = vpack.c.b16 %v937, %v935
      %v1028 = vpack.c.b16 %v938, %v936
      %v1029 = vpack.c.b16 %v941, %v939
      %v1030 = vpack.c.b16 %v942, %v940
      %v1031 = vpack.c.b16 %v945, %v943
      %v1032 = vpack.c.b16 %v946, %v944
      %v1033 = vpack.c.b16 %v949, %v947
      %v1034 = vpack.c.b16 %v950, %v948
      %v1035 = vpack.c.b16 %v953, %v951
      %v1036 = vpack.c.b16 %v954, %v952
      %v1037 = vpack.c.b16 %v957, %v955
      %v1038 = vpack.c.b16 %v958, %v956
      %v1039 = vpack.c.b16 %v961, %v959
      %v1040 = vpack.c.b16 %v962, %v960
      %v1041 = vpack.c.b16 %v965, %v963
      %v1042 = vpack.c.b16 %v966, %v964
      %v1043 = vpack.c.b16 %v969, %v967
      %v1044 = vpack.c.b16 %v970, %v968
      %v1045 = vpack.c.b16 %v973, %v971
      %v1046 = vpack.c.b16 %v974, %v972
      %v1047 = vpack.c.b16 %v977, %v975
      %v1048 = vpack.c.b16 %v978, %v976
      %v1049 = vpack.c.b16 %v981, %v979
      %v1050 = vpack.c.b16 %v982, %v980
      %v1051 = vpack.c.b16 %v985, %v983
      %v1052 = vpack.c.b16 %v986, %v984
      %v1053 = vpack.c.b16 %v989, %v987
      %v1054 = vpack.c.b16 %v990, %v988
      %1119 = vmatpush.bf16.msra.mxu0 %v1005
      %1120 = vmatpush.bf16.msra.mxu0 %v1003
      %1121 = vmatpush.bf16.msra.mxu0 %v1001
      %1122 = vmatpush.bf16.msra.mxu0 %v999
      %1123 = vmatpush.bf16.msra.mxu0 %v997
      %1124 = vmatpush.bf16.msra.mxu0 %v995
      %1125 = vmatpush.bf16.msra.mxu0 %v993
      %1126 = vmatpush.bf16.msra.mxu0 %v991
      %1127 = vmatmul.bf16.gmra.mxu0 %v701
      %v1128 = vpop.f32.mrf.mxu0
      %v1129 = vadd.f32 0.0, %v1128
      %v1130 = vpop.f32.mrf.mxu0
      %v1131 = vadd.f32 0.0, %v1130
      %1132 = vmatmul.bf16.gmra.mxu0 %v703
      %v1133 = vpop.f32.mrf.mxu0
      %v1134 = vadd.f32 0.0, %v1133
      %v1135 = vpop.f32.mrf.mxu0
      %v1136 = vadd.f32 0.0, %v1135
      %1137 = vmatmul.bf16.gmra.mxu0 %v705
      %v1138 = vpop.f32.mrf.mxu0
      %v1139 = vadd.f32 0.0, %v1138
      %v1140 = vpop.f32.mrf.mxu0
      %v1141 = vadd.f32 0.0, %v1140
      %1142 = vmatmul.bf16.gmra.mxu0 %v707
      %v1143 = vpop.f32.mrf.mxu0
      %v1144 = vadd.f32 0.0, %v1143
      %v1145 = vpop.f32.mrf.mxu0
      %v1146 = vadd.f32 0.0, %v1145
      %1147 = vmatmul.bf16.gmra.mxu0 %v709
      %v1148 = vpop.f32.mrf.mxu0
      %v1149 = vadd.f32 0.0, %v1148
      %v1150 = vpop.f32.mrf.mxu0
      %v1151 = vadd.f32 0.0, %v1150
      %1152 = vmatmul.bf16.gmra.mxu0 %v711
      %v1153 = vpop.f32.mrf.mxu0
      %v1154 = vadd.f32 0.0, %v1153
      %v1155 = vpop.f32.mrf.mxu0
      %v1156 = vadd.f32 0.0, %v1155
      %1157 = vmatmul.bf16.gmra.mxu0 %v713
      %v1158 = vpop.f32.mrf.mxu0
      %v1159 = vadd.f32 0.0, %v1158
      %v1160 = vpop.f32.mrf.mxu0
      %v1161 = vadd.f32 0.0, %v1160
      %1162 = vmatmul.bf16.gmra.mxu0 %v715
      %v1163 = vpop.f32.mrf.mxu0
      %v1164 = vadd.f32 0.0, %v1163
      %v1165 = vpop.f32.mrf.mxu0
      %v1166 = vadd.f32 0.0, %v1165
      %1167 = vmatmul.bf16.gmra.mxu0 %v717
      %v1168 = vpop.f32.mrf.mxu0
      %v1169 = vadd.f32 0.0, %v1168
      %v1170 = vpop.f32.mrf.mxu0
      %v1171 = vadd.f32 0.0, %v1170
      %1172 = vmatmul.bf16.gmra.mxu0 %v719
      %v1173 = vpop.f32.mrf.mxu0
      %v1174 = vadd.f32 0.0, %v1173
      %v1175 = vpop.f32.mrf.mxu0
      %v1176 = vadd.f32 0.0, %v1175
      %1177 = vmatmul.bf16.gmra.mxu0 %v721
      %v1178 = vpop.f32.mrf.mxu0
      %v1179 = vadd.f32 0.0, %v1178
      %v1180 = vpop.f32.mrf.mxu0
      %v1181 = vadd.f32 0.0, %v1180
      %1182 = vmatmul.bf16.gmra.mxu0 %v723
      %v1183 = vpop.f32.mrf.mxu0
      %v1184 = vadd.f32 0.0, %v1183
      %v1185 = vpop.f32.mrf.mxu0
      %v1186 = vadd.f32 0.0, %v1185
      %1187 = vmatmul.bf16.gmra.mxu0 %v725
      %v1188 = vpop.f32.mrf.mxu0
      %v1189 = vadd.f32 0.0, %v1188
      %v1190 = vpop.f32.mrf.mxu0
      %v1191 = vadd.f32 0.0, %v1190
      %1192 = vmatmul.bf16.gmra.mxu0 %v727
      %v1193 = vpop.f32.mrf.mxu0
      %v1194 = vadd.f32 0.0, %v1193
      %v1195 = vpop.f32.mrf.mxu0
      %v1196 = vadd.f32 0.0, %v1195
      %1197 = vmatmul.bf16.gmra.mxu0 %v731
      %v1198 = vpop.f32.mrf.mxu0
      %v1199 = vadd.f32 0.0, %v1198
      %v1200 = vpop.f32.mrf.mxu0
      %1201 = vdwg.mxu0
      %1202 = vmatpush.bf16.msra.mxu0 %v1021
      %1203 = vmatpush.bf16.msra.mxu0 %v1019
      %1204 = vmatpush.bf16.msra.mxu0 %v1017
      %1205 = vmatpush.bf16.msra.mxu0 %v1015
      %1206 = vmatpush.bf16.msra.mxu0 %v1013
      %1207 = vmatpush.bf16.msra.mxu0 %v1011
      %1208 = vmatpush.bf16.msra.mxu0 %v1009
      %1209 = vmatpush.bf16.msra.mxu0 %v1007
      %1210 = vmatmul.bf16.gmra.mxu0 %v702
      %v1211 = vpop.f32.mrf.mxu0
      %v1212 = vadd.f32 %v1129, %v1211
      %v1213 = vpop.f32.mrf.mxu0
      %v1214 = vadd.f32 %v1131, %v1213
      %1215 = vmatmul.bf16.gmra.mxu0 %v704
      %v1216 = vpop.f32.mrf.mxu0
      %v1217 = vadd.f32 %v1134, %v1216
      %v1218 = vpop.f32.mrf.mxu0
      %v1219 = vadd.f32 %v1136, %v1218
      %1220 = vmatmul.bf16.gmra.mxu0 %v706
      %v1221 = vpop.f32.mrf.mxu0
      %v1222 = vadd.f32 %v1139, %v1221
      %v1223 = vpop.f32.mrf.mxu0
      %v1224 = vadd.f32 %v1141, %v1223
      %1225 = vmatmul.bf16.gmra.mxu0 %v708
      %v1226 = vpop.f32.mrf.mxu0
      %v1227 = vadd.f32 %v1144, %v1226
      %v1228 = vpop.f32.mrf.mxu0
      %v1229 = vadd.f32 %v1146, %v1228
      %1230 = vmatmul.bf16.gmra.mxu0 %v710
      %v1231 = vpop.f32.mrf.mxu0
      %v1232 = vadd.f32 %v1149, %v1231
      %v1233 = vpop.f32.mrf.mxu0
      %v1234 = vadd.f32 %v1151, %v1233
      %1235 = vmatmul.bf16.gmra.mxu0 %v712
      %v1236 = vpop.f32.mrf.mxu0
      %v1237 = vadd.f32 %v1154, %v1236
      %v1238 = vpop.f32.mrf.mxu0
      %v1239 = vadd.f32 %v1156, %v1238
      %1240 = vmatmul.bf16.gmra.mxu0 %v714
      %v1241 = vpop.f32.mrf.mxu0
      %v1242 = vadd.f32 %v1159, %v1241
      %v1243 = vpop.f32.mrf.mxu0
      %v1244 = vadd.f32 %v1161, %v1243
      %1245 = vmatmul.bf16.gmra.mxu0 %v716
      %v1246 = vpop.f32.mrf.mxu0
      %v1247 = vadd.f32 %v1164, %v1246
      %v1248 = vpop.f32.mrf.mxu0
      %v1249 = vadd.f32 %v1166, %v1248
      %1250 = vmatmul.bf16.gmra.mxu0 %v718
      %v1251 = vpop.f32.mrf.mxu0
      %v1252 = vadd.f32 %v1169, %v1251
      %v1253 = vpop.f32.mrf.mxu0
      %v1254 = vadd.f32 %v1171, %v1253
      %1255 = vmatmul.bf16.gmra.mxu0 %v720
      %v1256 = vpop.f32.mrf.mxu0
      %v1257 = vadd.f32 %v1174, %v1256
      %v1258 = vpop.f32.mrf.mxu0
      %v1259 = vadd.f32 %v1176, %v1258
      %1260 = vmatmul.bf16.gmra.mxu0 %v722
      %v1261 = vpop.f32.mrf.mxu0
      %v1262 = vadd.f32 %v1179, %v1261
      %v1263 = vpop.f32.mrf.mxu0
      %v1264 = vadd.f32 %v1181, %v1263
      %1265 = vmatmul.bf16.gmra.mxu0 %v724
      %v1266 = vpop.f32.mrf.mxu0
      %v1267 = vadd.f32 %v1184, %v1266
      %v1268 = vpop.f32.mrf.mxu0
      %v1269 = vadd.f32 %v1186, %v1268
      %1270 = vmatmul.bf16.gmra.mxu0 %v726
      %v1271 = vpop.f32.mrf.mxu0
      %v1272 = vadd.f32 %v1189, %v1271
      %v1273 = vpop.f32.mrf.mxu0
      %v1274 = vadd.f32 %v1191, %v1273
      %1275 = vmatmul.bf16.gmra.mxu0 %v728
      %v1276 = vpop.f32.mrf.mxu0
      %v1277 = vadd.f32 %v1194, %v1276
      %v1278 = vpop.f32.mrf.mxu0
      %v1279 = vadd.f32 %v1196, %v1278
      %1280 = vmatmul.bf16.gmra.mxu0 %v732
      %v1281 = vpop.f32.mrf.mxu0
      %v1282 = vadd.f32 %v1199, %v1281
      %v1283 = vpop.f32.mrf.mxu0
      %1284 = vdwg.mxu0
      %1285 = vmatpush.bf16.msra.mxu0 %v1037
      %1286 = vmatpush.bf16.msra.mxu0 %v1035
      %1287 = vmatpush.bf16.msra.mxu0 %v1033
      %1288 = vmatpush.bf16.msra.mxu0 %v1031
      %1289 = vmatpush.bf16.msra.mxu0 %v1029
      %1290 = vmatpush.bf16.msra.mxu0 %v1027
      %1291 = vmatpush.bf16.msra.mxu0 %v1025
      %1292 = vmatpush.bf16.msra.mxu0 %v1023
      %1293 = vmatmul.bf16.gmra.mxu0 %v703
      %v1294 = vpop.f32.mrf.mxu0
      %v1295 = vadd.f32 %v1212, %v1294
      %v1296 = vpop.f32.mrf.mxu0
      %v1297 = vadd.f32 %v1214, %v1296
      %1298 = vmatmul.bf16.gmra.mxu0 %v705
      %v1299 = vpop.f32.mrf.mxu0
      %v1300 = vadd.f32 %v1217, %v1299
      %v1301 = vpop.f32.mrf.mxu0
      %v1302 = vadd.f32 %v1219, %v1301
      %1303 = vmatmul.bf16.gmra.mxu0 %v707
      %v1304 = vpop.f32.mrf.mxu0
      %v1305 = vadd.f32 %v1222, %v1304
      %v1306 = vpop.f32.mrf.mxu0
      %v1307 = vadd.f32 %v1224, %v1306
      %1308 = vmatmul.bf16.gmra.mxu0 %v709
      %v1309 = vpop.f32.mrf.mxu0
      %v1310 = vadd.f32 %v1227, %v1309
      %v1311 = vpop.f32.mrf.mxu0
      %v1312 = vadd.f32 %v1229, %v1311
      %1313 = vmatmul.bf16.gmra.mxu0 %v711
      %v1314 = vpop.f32.mrf.mxu0
      %v1315 = vadd.f32 %v1232, %v1314
      %v1316 = vpop.f32.mrf.mxu0
      %v1317 = vadd.f32 %v1234, %v1316
      %1318 = vmatmul.bf16.gmra.mxu0 %v713
      %v1319 = vpop.f32.mrf.mxu0
      %v1320 = vadd.f32 %v1237, %v1319
      %v1321 = vpop.f32.mrf.mxu0
      %v1322 = vadd.f32 %v1239, %v1321
      %1323 = vmatmul.bf16.gmra.mxu0 %v715
      %v1324 = vpop.f32.mrf.mxu0
      %v1325 = vadd.f32 %v1242, %v1324
      %v1326 = vpop.f32.mrf.mxu0
      %v1327 = vadd.f32 %v1244, %v1326
      %1328 = vmatmul.bf16.gmra.mxu0 %v717
      %v1329 = vpop.f32.mrf.mxu0
      %v1330 = vadd.f32 %v1247, %v1329
      %v1331 = vpop.f32.mrf.mxu0
      %v1332 = vadd.f32 %v1249, %v1331
      %1333 = vmatmul.bf16.gmra.mxu0 %v719
      %v1334 = vpop.f32.mrf.mxu0
      %v1335 = vadd.f32 %v1252, %v1334
      %v1336 = vpop.f32.mrf.mxu0
      %v1337 = vadd.f32 %v1254, %v1336
      %1338 = vmatmul.bf16.gmra.mxu0 %v721
      %v1339 = vpop.f32.mrf.mxu0
      %v1340 = vadd.f32 %v1257, %v1339
      %v1341 = vpop.f32.mrf.mxu0
      %v1342 = vadd.f32 %v1259, %v1341
      %1343 = vmatmul.bf16.gmra.mxu0 %v723
      %v1344 = vpop.f32.mrf.mxu0
      %v1345 = vadd.f32 %v1262, %v1344
      %v1346 = vpop.f32.mrf.mxu0
      %v1347 = vadd.f32 %v1264, %v1346
      %1348 = vmatmul.bf16.gmra.mxu0 %v725
      %v1349 = vpop.f32.mrf.mxu0
      %v1350 = vadd.f32 %v1267, %v1349
      %v1351 = vpop.f32.mrf.mxu0
      %v1352 = vadd.f32 %v1269, %v1351
      %1353 = vmatmul.bf16.gmra.mxu0 %v727
      %v1354 = vpop.f32.mrf.mxu0
      %v1355 = vadd.f32 %v1272, %v1354
      %v1356 = vpop.f32.mrf.mxu0
      %v1357 = vadd.f32 %v1274, %v1356
      %1358 = vmatmul.bf16.gmra.mxu0 %v729
      %v1359 = vpop.f32.mrf.mxu0
      %v1360 = vadd.f32 %v1277, %v1359
      %v1361 = vpop.f32.mrf.mxu0
      %v1362 = vadd.f32 %v1279, %v1361
      %1363 = vmatmul.bf16.gmra.mxu0 %v733
      %v1364 = vpop.f32.mrf.mxu0
      %v1365 = vadd.f32 %v1282, %v1364
      %v1366 = vpop.f32.mrf.mxu0
      %1367 = vdwg.mxu0
      %1368 = vmatpush.bf16.msra.mxu0 %v1053
      %1369 = vmatpush.bf16.msra.mxu0 %v1051
      %1370 = vmatpush.bf16.msra.mxu0 %v1049
      %1371 = vmatpush.bf16.msra.mxu0 %v1047
      %1372 = vmatpush.bf16.msra.mxu0 %v1045
      %1373 = vmatpush.bf16.msra.mxu0 %v1043
      %1374 = vmatpush.bf16.msra.mxu0 %v1041
      %1375 = vmatpush.bf16.msra.mxu0 %v1039
      %1376 = vmatmul.bf16.gmra.mxu0 %v704
      %v1377 = vpop.f32.mrf.mxu0
      %v1378 = vadd.f32 %v1295, %v1377
      %v1379 = vpop.f32.mrf.mxu0
      %v1380 = vadd.f32 %v1297, %v1379
      %1381 = vmatmul.bf16.gmra.mxu0 %v706
      %v1382 = vpop.f32.mrf.mxu0
      %v1383 = vadd.f32 %v1300, %v1382
      %v1384 = vpop.f32.mrf.mxu0
      %v1385 = vadd.f32 %v1302, %v1384
      %1386 = vmatmul.bf16.gmra.mxu0 %v708
      %v1387 = vpop.f32.mrf.mxu0
      %v1388 = vadd.f32 %v1305, %v1387
      %v1389 = vpop.f32.mrf.mxu0
      %v1390 = vadd.f32 %v1307, %v1389
      %1391 = vmatmul.bf16.gmra.mxu0 %v710
      %v1392 = vpop.f32.mrf.mxu0
      %v1393 = vadd.f32 %v1310, %v1392
      %v1394 = vpop.f32.mrf.mxu0
      %v1395 = vadd.f32 %v1312, %v1394
      %1396 = vmatmul.bf16.gmra.mxu0 %v712
      %v1397 = vpop.f32.mrf.mxu0
      %v1398 = vadd.f32 %v1315, %v1397
      %v1399 = vpop.f32.mrf.mxu0
      %v1400 = vadd.f32 %v1317, %v1399
      %1401 = vmatmul.bf16.gmra.mxu0 %v714
      %v1402 = vpop.f32.mrf.mxu0
      %v1403 = vadd.f32 %v1320, %v1402
      %v1404 = vpop.f32.mrf.mxu0
      %v1405 = vadd.f32 %v1322, %v1404
      %1406 = vmatmul.bf16.gmra.mxu0 %v716
      %v1407 = vpop.f32.mrf.mxu0
      %v1408 = vadd.f32 %v1325, %v1407
      %v1409 = vpop.f32.mrf.mxu0
      %v1410 = vadd.f32 %v1327, %v1409
      %1411 = vmatmul.bf16.gmra.mxu0 %v718
      %v1412 = vpop.f32.mrf.mxu0
      %v1413 = vadd.f32 %v1330, %v1412
      %v1414 = vpop.f32.mrf.mxu0
      %v1415 = vadd.f32 %v1332, %v1414
      %1416 = vmatmul.bf16.gmra.mxu0 %v720
      %v1417 = vpop.f32.mrf.mxu0
      %v1418 = vadd.f32 %v1335, %v1417
      %v1419 = vpop.f32.mrf.mxu0
      %v1420 = vadd.f32 %v1337, %v1419
      %1421 = vmatmul.bf16.gmra.mxu0 %v722
      %v1422 = vpop.f32.mrf.mxu0
      %v1423 = vadd.f32 %v1340, %v1422
      %v1424 = vpop.f32.mrf.mxu0
      %v1425 = vadd.f32 %v1342, %v1424
      %1426 = vmatmul.bf16.gmra.mxu0 %v724
      %v1427 = vpop.f32.mrf.mxu0
      %v1428 = vadd.f32 %v1345, %v1427
      %v1429 = vpop.f32.mrf.mxu0
      %v1430 = vadd.f32 %v1347, %v1429
      %1431 = vmatmul.bf16.gmra.mxu0 %v726
      %v1432 = vpop.f32.mrf.mxu0
      %v1433 = vadd.f32 %v1350, %v1432
      %v1434 = vpop.f32.mrf.mxu0
      %v1435 = vadd.f32 %v1352, %v1434
      %1436 = vmatmul.bf16.gmra.mxu0 %v728
      %v1437 = vpop.f32.mrf.mxu0
      %v1438 = vadd.f32 %v1355, %v1437
      %v1439 = vpop.f32.mrf.mxu0
      %v1440 = vadd.f32 %v1357, %v1439
      %1441 = vmatmul.bf16.gmra.mxu0 %v730
      %v1442 = vpop.f32.mrf.mxu0
      %v1443 = vadd.f32 %v1360, %v1442
      %v1444 = vpop.f32.mrf.mxu0
      %v1445 = vadd.f32 %v1362, %v1444
      %1446 = vmatmul.bf16.gmra.mxu0 %v734
      %v1447 = vpop.f32.mrf.mxu0
      %v1448 = vadd.f32 %v1365, %v1447
      %v1449 = vpop.f32.mrf.mxu0
      %1450 = vdwg.mxu0
      %1451 = vmatpush.bf16.msra.mxu0 %v1006
      %1452 = vmatpush.bf16.msra.mxu0 %v1004
      %1453 = vmatpush.bf16.msra.mxu0 %v1002
      %1454 = vmatpush.bf16.msra.mxu0 %v1000
      %1455 = vmatpush.bf16.msra.mxu0 %v998
      %1456 = vmatpush.bf16.msra.mxu0 %v996
      %1457 = vmatpush.bf16.msra.mxu0 %v994
      %1458 = vmatpush.bf16.msra.mxu0 %v992
      %1459 = vmatmul.bf16.gmra.mxu0 %v701
      %v1460 = vpop.f32.mrf.mxu0
      %v1461 = vadd.f32 0.0, %v1460
      %v1462 = vpop.f32.mrf.mxu0
      %v1463 = vadd.f32 0.0, %v1462
      %1464 = vmatmul.bf16.gmra.mxu0 %v703
      %v1465 = vpop.f32.mrf.mxu0
      %v1466 = vadd.f32 0.0, %v1465
      %v1467 = vpop.f32.mrf.mxu0
      %v1468 = vadd.f32 0.0, %v1467
      %1469 = vmatmul.bf16.gmra.mxu0 %v705
      %v1470 = vpop.f32.mrf.mxu0
      %v1471 = vadd.f32 0.0, %v1470
      %v1472 = vpop.f32.mrf.mxu0
      %v1473 = vadd.f32 0.0, %v1472
      %1474 = vmatmul.bf16.gmra.mxu0 %v707
      %v1475 = vpop.f32.mrf.mxu0
      %v1476 = vadd.f32 0.0, %v1475
      %v1477 = vpop.f32.mrf.mxu0
      %v1478 = vadd.f32 0.0, %v1477
      %1479 = vmatmul.bf16.gmra.mxu0 %v709
      %v1480 = vpop.f32.mrf.mxu0
      %v1481 = vadd.f32 0.0, %v1480
      %v1482 = vpop.f32.mrf.mxu0
      %v1483 = vadd.f32 0.0, %v1482
      %1484 = vmatmul.bf16.gmra.mxu0 %v711
      %v1485 = vpop.f32.mrf.mxu0
      %v1486 = vadd.f32 0.0, %v1485
      %v1487 = vpop.f32.mrf.mxu0
      %v1488 = vadd.f32 0.0, %v1487
      %1489 = vmatmul.bf16.gmra.mxu0 %v713
      %v1490 = vpop.f32.mrf.mxu0
      %v1491 = vadd.f32 0.0, %v1490
      %v1492 = vpop.f32.mrf.mxu0
      %v1493 = vadd.f32 0.0, %v1492
      %1494 = vmatmul.bf16.gmra.mxu0 %v715
      %v1495 = vpop.f32.mrf.mxu0
      %v1496 = vadd.f32 0.0, %v1495
      %v1497 = vpop.f32.mrf.mxu0
      %v1498 = vadd.f32 0.0, %v1497
      %1499 = vmatmul.bf16.gmra.mxu0 %v717
      %v1500 = vpop.f32.mrf.mxu0
      %v1501 = vadd.f32 0.0, %v1500
      %v1502 = vpop.f32.mrf.mxu0
      %v1503 = vadd.f32 0.0, %v1502
      %1504 = vmatmul.bf16.gmra.mxu0 %v719
      %v1505 = vpop.f32.mrf.mxu0
      %v1506 = vadd.f32 0.0, %v1505
      %v1507 = vpop.f32.mrf.mxu0
      %v1508 = vadd.f32 0.0, %v1507
      %1509 = vmatmul.bf16.gmra.mxu0 %v721
      %v1510 = vpop.f32.mrf.mxu0
      %v1511 = vadd.f32 0.0, %v1510
      %v1512 = vpop.f32.mrf.mxu0
      %v1513 = vadd.f32 0.0, %v1512
      %1514 = vmatmul.bf16.gmra.mxu0 %v723
      %v1515 = vpop.f32.mrf.mxu0
      %v1516 = vadd.f32 0.0, %v1515
      %v1517 = vpop.f32.mrf.mxu0
      %v1518 = vadd.f32 0.0, %v1517
      %1519 = vmatmul.bf16.gmra.mxu0 %v725
      %v1520 = vpop.f32.mrf.mxu0
      %v1521 = vadd.f32 0.0, %v1520
      %v1522 = vpop.f32.mrf.mxu0
      %v1523 = vadd.f32 0.0, %v1522
      %1524 = vmatmul.bf16.gmra.mxu0 %v727
      %v1525 = vpop.f32.mrf.mxu0
      %v1526 = vadd.f32 0.0, %v1525
      %v1527 = vpop.f32.mrf.mxu0
      %v1528 = vadd.f32 0.0, %v1527
      %1529 = vmatmul.bf16.gmra.mxu0 %v731
      %v1530 = vpop.f32.mrf.mxu0
      %v1531 = vadd.f32 0.0, %v1530
      %v1532 = vpop.f32.mrf.mxu0
      %1533 = vdwg.mxu0
      %1534 = vmatpush.bf16.msra.mxu0 %v1022
      %1535 = vmatpush.bf16.msra.mxu0 %v1020
      %1536 = vmatpush.bf16.msra.mxu0 %v1018
      %1537 = vmatpush.bf16.msra.mxu0 %v1016
      %1538 = vmatpush.bf16.msra.mxu0 %v1014
      %1539 = vmatpush.bf16.msra.mxu0 %v1012
      %1540 = vmatpush.bf16.msra.mxu0 %v1010
      %1541 = vmatpush.bf16.msra.mxu0 %v1008
      %1542 = vmatmul.bf16.gmra.mxu0 %v702
      %v1543 = vpop.f32.mrf.mxu0
      %v1544 = vadd.f32 %v1461, %v1543
      %v1545 = vpop.f32.mrf.mxu0
      %v1546 = vadd.f32 %v1463, %v1545
      %1547 = vmatmul.bf16.gmra.mxu0 %v704
      %v1548 = vpop.f32.mrf.mxu0
      %v1549 = vadd.f32 %v1466, %v1548
      %v1550 = vpop.f32.mrf.mxu0
      %v1551 = vadd.f32 %v1468, %v1550
      %1552 = vmatmul.bf16.gmra.mxu0 %v706
      %v1553 = vpop.f32.mrf.mxu0
      %v1554 = vadd.f32 %v1471, %v1553
      %v1555 = vpop.f32.mrf.mxu0
      %v1556 = vadd.f32 %v1473, %v1555
      %1557 = vmatmul.bf16.gmra.mxu0 %v708
      %v1558 = vpop.f32.mrf.mxu0
      %v1559 = vadd.f32 %v1476, %v1558
      %v1560 = vpop.f32.mrf.mxu0
      %v1561 = vadd.f32 %v1478, %v1560
      %1562 = vmatmul.bf16.gmra.mxu0 %v710
      %v1563 = vpop.f32.mrf.mxu0
      %v1564 = vadd.f32 %v1481, %v1563
      %v1565 = vpop.f32.mrf.mxu0
      %v1566 = vadd.f32 %v1483, %v1565
      %1567 = vmatmul.bf16.gmra.mxu0 %v712
      %v1568 = vpop.f32.mrf.mxu0
      %v1569 = vadd.f32 %v1486, %v1568
      %v1570 = vpop.f32.mrf.mxu0
      %v1571 = vadd.f32 %v1488, %v1570
      %1572 = vmatmul.bf16.gmra.mxu0 %v714
      %v1573 = vpop.f32.mrf.mxu0
      %v1574 = vadd.f32 %v1491, %v1573
      %v1575 = vpop.f32.mrf.mxu0
      %v1576 = vadd.f32 %v1493, %v1575
      %1577 = vmatmul.bf16.gmra.mxu0 %v716
      %v1578 = vpop.f32.mrf.mxu0
      %v1579 = vadd.f32 %v1496, %v1578
      %v1580 = vpop.f32.mrf.mxu0
      %v1581 = vadd.f32 %v1498, %v1580
      %1582 = vmatmul.bf16.gmra.mxu0 %v718
      %v1583 = vpop.f32.mrf.mxu0
      %v1584 = vadd.f32 %v1501, %v1583
      %v1585 = vpop.f32.mrf.mxu0
      %v1586 = vadd.f32 %v1503, %v1585
      %1587 = vmatmul.bf16.gmra.mxu0 %v720
      %v1588 = vpop.f32.mrf.mxu0
      %v1589 = vadd.f32 %v1506, %v1588
      %v1590 = vpop.f32.mrf.mxu0
      %v1591 = vadd.f32 %v1508, %v1590
      %1592 = vmatmul.bf16.gmra.mxu0 %v722
      %v1593 = vpop.f32.mrf.mxu0
      %v1594 = vadd.f32 %v1511, %v1593
      %v1595 = vpop.f32.mrf.mxu0
      %v1596 = vadd.f32 %v1513, %v1595
      %1597 = vmatmul.bf16.gmra.mxu0 %v724
      %v1598 = vpop.f32.mrf.mxu0
      %v1599 = vadd.f32 %v1516, %v1598
      %v1600 = vpop.f32.mrf.mxu0
      %v1601 = vadd.f32 %v1518, %v1600
      %1602 = vmatmul.bf16.gmra.mxu0 %v726
      %v1603 = vpop.f32.mrf.mxu0
      %v1604 = vadd.f32 %v1521, %v1603
      %v1605 = vpop.f32.mrf.mxu0
      %v1606 = vadd.f32 %v1523, %v1605
      %1607 = vmatmul.bf16.gmra.mxu0 %v728
      %v1608 = vpop.f32.mrf.mxu0
      %v1609 = vadd.f32 %v1526, %v1608
      %v1610 = vpop.f32.mrf.mxu0
      %v1611 = vadd.f32 %v1528, %v1610
      %1612 = vmatmul.bf16.gmra.mxu0 %v732
      %v1613 = vpop.f32.mrf.mxu0
      %v1614 = vadd.f32 %v1531, %v1613
      %v1615 = vpop.f32.mrf.mxu0
      %1616 = vdwg.mxu0
      %1617 = vmatpush.bf16.msra.mxu0 %v1038
      %1618 = vmatpush.bf16.msra.mxu0 %v1036
      %1619 = vmatpush.bf16.msra.mxu0 %v1034
      %1620 = vmatpush.bf16.msra.mxu0 %v1032
      %1621 = vmatpush.bf16.msra.mxu0 %v1030
      %1622 = vmatpush.bf16.msra.mxu0 %v1028
      %1623 = vmatpush.bf16.msra.mxu0 %v1026
      %1624 = vmatpush.bf16.msra.mxu0 %v1024
      %1625 = vmatmul.bf16.gmra.mxu0 %v703
      %v1626 = vpop.f32.mrf.mxu0
      %v1627 = vadd.f32 %v1544, %v1626
      %v1628 = vpop.f32.mrf.mxu0
      %v1629 = vadd.f32 %v1546, %v1628
      %1630 = vmatmul.bf16.gmra.mxu0 %v705
      %v1631 = vpop.f32.mrf.mxu0
      %v1632 = vadd.f32 %v1549, %v1631
      %v1633 = vpop.f32.mrf.mxu0
      %v1634 = vadd.f32 %v1551, %v1633
      %1635 = vmatmul.bf16.gmra.mxu0 %v707
      %v1636 = vpop.f32.mrf.mxu0
      %v1637 = vadd.f32 %v1554, %v1636
      %v1638 = vpop.f32.mrf.mxu0
      %v1639 = vadd.f32 %v1556, %v1638
      %1640 = vmatmul.bf16.gmra.mxu0 %v709
      %v1641 = vpop.f32.mrf.mxu0
      %v1642 = vadd.f32 %v1559, %v1641
      %v1643 = vpop.f32.mrf.mxu0
      %v1644 = vadd.f32 %v1561, %v1643
      %1645 = vmatmul.bf16.gmra.mxu0 %v711
      %v1646 = vpop.f32.mrf.mxu0
      %v1647 = vadd.f32 %v1564, %v1646
      %v1648 = vpop.f32.mrf.mxu0
      %v1649 = vadd.f32 %v1566, %v1648
      %1650 = vmatmul.bf16.gmra.mxu0 %v713
      %v1651 = vpop.f32.mrf.mxu0
      %v1652 = vadd.f32 %v1569, %v1651
      %v1653 = vpop.f32.mrf.mxu0
      %v1654 = vadd.f32 %v1571, %v1653
      %1655 = vmatmul.bf16.gmra.mxu0 %v715
      %v1656 = vpop.f32.mrf.mxu0
      %v1657 = vadd.f32 %v1574, %v1656
      %v1658 = vpop.f32.mrf.mxu0
      %v1659 = vadd.f32 %v1576, %v1658
      %1660 = vmatmul.bf16.gmra.mxu0 %v717
      %v1661 = vpop.f32.mrf.mxu0
      %v1662 = vadd.f32 %v1579, %v1661
      %v1663 = vpop.f32.mrf.mxu0
      %v1664 = vadd.f32 %v1581, %v1663
      %1665 = vmatmul.bf16.gmra.mxu0 %v719
      %v1666 = vpop.f32.mrf.mxu0
      %v1667 = vadd.f32 %v1584, %v1666
      %v1668 = vpop.f32.mrf.mxu0
      %v1669 = vadd.f32 %v1586, %v1668
      %1670 = vmatmul.bf16.gmra.mxu0 %v721
      %v1671 = vpop.f32.mrf.mxu0
      %v1672 = vadd.f32 %v1589, %v1671
      %v1673 = vpop.f32.mrf.mxu0
      %v1674 = vadd.f32 %v1591, %v1673
      %1675 = vmatmul.bf16.gmra.mxu0 %v723
      %v1676 = vpop.f32.mrf.mxu0
      %v1677 = vadd.f32 %v1594, %v1676
      %v1678 = vpop.f32.mrf.mxu0
      %v1679 = vadd.f32 %v1596, %v1678
      %1680 = vmatmul.bf16.gmra.mxu0 %v725
      %v1681 = vpop.f32.mrf.mxu0
      %v1682 = vadd.f32 %v1599, %v1681
      %v1683 = vpop.f32.mrf.mxu0
      %v1684 = vadd.f32 %v1601, %v1683
      %1685 = vmatmul.bf16.gmra.mxu0 %v727
      %v1686 = vpop.f32.mrf.mxu0
      %v1687 = vadd.f32 %v1604, %v1686
      %v1688 = vpop.f32.mrf.mxu0
      %v1689 = vadd.f32 %v1606, %v1688
      %1690 = vmatmul.bf16.gmra.mxu0 %v729
      %v1691 = vpop.f32.mrf.mxu0
      %v1692 = vadd.f32 %v1609, %v1691
      %v1693 = vpop.f32.mrf.mxu0
      %v1694 = vadd.f32 %v1611, %v1693
      %1695 = vmatmul.bf16.gmra.mxu0 %v733
      %v1696 = vpop.f32.mrf.mxu0
      %v1697 = vadd.f32 %v1614, %v1696
      %v1698 = vpop.f32.mrf.mxu0
      %1699 = vdwg.mxu0
      %1700 = vmatpush.bf16.msra.mxu0 %v1054
      %1701 = vmatpush.bf16.msra.mxu0 %v1052
      %1702 = vmatpush.bf16.msra.mxu0 %v1050
      %1703 = vmatpush.bf16.msra.mxu0 %v1048
      %1704 = vmatpush.bf16.msra.mxu0 %v1046
      %1705 = vmatpush.bf16.msra.mxu0 %v1044
      %1706 = vmatpush.bf16.msra.mxu0 %v1042
      %1707 = vmatpush.bf16.msra.mxu0 %v1040
      %1708 = vmatmul.bf16.gmra.mxu0 %v704
      %v1709 = vpop.f32.mrf.mxu0
      %v1710 = vadd.f32 %v1627, %v1709
      %v1711 = vpop.f32.mrf.mxu0
      %v1712 = vadd.f32 %v1629, %v1711
      %1713 = vmatmul.bf16.gmra.mxu0 %v706
      %v1714 = vpop.f32.mrf.mxu0
      %v1715 = vadd.f32 %v1632, %v1714
      %v1716 = vpop.f32.mrf.mxu0
      %v1717 = vadd.f32 %v1634, %v1716
      %1718 = vmatmul.bf16.gmra.mxu0 %v708
      %v1719 = vpop.f32.mrf.mxu0
      %v1720 = vadd.f32 %v1637, %v1719
      %v1721 = vpop.f32.mrf.mxu0
      %v1722 = vadd.f32 %v1639, %v1721
      %1723 = vmatmul.bf16.gmra.mxu0 %v710
      %v1724 = vpop.f32.mrf.mxu0
      %v1725 = vadd.f32 %v1642, %v1724
      %v1726 = vpop.f32.mrf.mxu0
      %v1727 = vadd.f32 %v1644, %v1726
      %1728 = vmatmul.bf16.gmra.mxu0 %v712
      %v1729 = vpop.f32.mrf.mxu0
      %v1730 = vadd.f32 %v1647, %v1729
      %v1731 = vpop.f32.mrf.mxu0
      %v1732 = vadd.f32 %v1649, %v1731
      %1733 = vmatmul.bf16.gmra.mxu0 %v714
      %v1734 = vpop.f32.mrf.mxu0
      %v1735 = vadd.f32 %v1652, %v1734
      %v1736 = vpop.f32.mrf.mxu0
      %v1737 = vadd.f32 %v1654, %v1736
      %1738 = vmatmul.bf16.gmra.mxu0 %v716
      %v1739 = vpop.f32.mrf.mxu0
      %v1740 = vadd.f32 %v1657, %v1739
      %v1741 = vpop.f32.mrf.mxu0
      %v1742 = vadd.f32 %v1659, %v1741
      %1743 = vmatmul.bf16.gmra.mxu0 %v718
      %v1744 = vpop.f32.mrf.mxu0
      %v1745 = vadd.f32 %v1662, %v1744
      %v1746 = vpop.f32.mrf.mxu0
      %v1747 = vadd.f32 %v1664, %v1746
      %1748 = vmatmul.bf16.gmra.mxu0 %v720
      %v1749 = vpop.f32.mrf.mxu0
      %v1750 = vadd.f32 %v1667, %v1749
      %v1751 = vpop.f32.mrf.mxu0
      %v1752 = vadd.f32 %v1669, %v1751
      %1753 = vmatmul.bf16.gmra.mxu0 %v722
      %v1754 = vpop.f32.mrf.mxu0
      %v1755 = vadd.f32 %v1672, %v1754
      %v1756 = vpop.f32.mrf.mxu0
      %v1757 = vadd.f32 %v1674, %v1756
      %1758 = vmatmul.bf16.gmra.mxu0 %v724
      %v1759 = vpop.f32.mrf.mxu0
      %v1760 = vadd.f32 %v1677, %v1759
      %v1761 = vpop.f32.mrf.mxu0
      %v1762 = vadd.f32 %v1679, %v1761
      %1763 = vmatmul.bf16.gmra.mxu0 %v726
      %v1764 = vpop.f32.mrf.mxu0
      %v1765 = vadd.f32 %v1682, %v1764
      %v1766 = vpop.f32.mrf.mxu0
      %v1767 = vadd.f32 %v1684, %v1766
      %1768 = vmatmul.bf16.gmra.mxu0 %v728
      %v1769 = vpop.f32.mrf.mxu0
      %v1770 = vadd.f32 %v1687, %v1769
      %v1771 = vpop.f32.mrf.mxu0
      %v1772 = vadd.f32 %v1689, %v1771
      %1773 = vmatmul.bf16.gmra.mxu0 %v730
      %v1774 = vpop.f32.mrf.mxu0
      %v1775 = vadd.f32 %v1692, %v1774
      %v1776 = vpop.f32.mrf.mxu0
      %v1777 = vadd.f32 %v1694, %v1776
      %1778 = vmatmul.bf16.gmra.mxu0 %v734
      %v1779 = vpop.f32.mrf.mxu0
      %v1780 = vadd.f32 %v1697, %v1779
      %v1781 = vpop.f32.mrf.mxu0
      %1782 = vdwg.mxu0
      %1812 = vrot.lane.b32.xlu0 %v1378, 64
      %v1813 = vpop.permute.xlu0 %1812
      %1814 = vrot.lane.b32.xlu0 %v1380, 64
      %v1815 = vpop.permute.xlu0 %1814
      %1816 = vrot.lane.b32.xlu0 %v1383, 64
      %v1817 = vpop.permute.xlu0 %1816
      %1818 = vrot.lane.b32.xlu0 %v1385, 64
      %v1819 = vpop.permute.xlu0 %1818
      %1820 = vrot.lane.b32.xlu0 %v1388, 64
      %v1821 = vpop.permute.xlu0 %1820
      %1822 = vrot.lane.b32.xlu0 %v1390, 64
      %v1823 = vpop.permute.xlu0 %1822
      %1824 = vrot.lane.b32.xlu0 %v1393, 64
      %v1825 = vpop.permute.xlu0 %1824
      %1826 = vrot.lane.b32.xlu0 %v1395, 64
      %v1827 = vpop.permute.xlu0 %1826
      %1828 = vrot.lane.b32.xlu0 %v1398, 64
      %v1829 = vpop.permute.xlu0 %1828
      %1830 = vrot.lane.b32.xlu0 %v1400, 64
      %v1831 = vpop.permute.xlu0 %1830
      %1832 = vrot.lane.b32.xlu0 %v1403, 64
      %v1833 = vpop.permute.xlu0 %1832
      %1834 = vrot.lane.b32.xlu0 %v1405, 64
      %v1835 = vpop.permute.xlu0 %1834
      %1836 = vrot.lane.b32.xlu0 %v1408, 64
      %v1837 = vpop.permute.xlu0 %1836
      %1838 = vrot.lane.b32.xlu0 %v1410, 64
      %v1839 = vpop.permute.xlu0 %1838
      %1840 = vrot.lane.b32.xlu0 %v1413, 64
      %v1841 = vpop.permute.xlu0 %1840
      %1842 = vrot.lane.b32.xlu0 %v1415, 64
      %v1843 = vpop.permute.xlu0 %1842
      %1844 = vrot.lane.b32.xlu0 %v1418, 64
      %v1845 = vpop.permute.xlu0 %1844
      %1846 = vrot.lane.b32.xlu0 %v1420, 64
      %v1847 = vpop.permute.xlu0 %1846
      %1848 = vrot.lane.b32.xlu0 %v1423, 64
      %v1849 = vpop.permute.xlu0 %1848
      %1850 = vrot.lane.b32.xlu0 %v1425, 64
      %v1851 = vpop.permute.xlu0 %1850
      %1852 = vrot.lane.b32.xlu0 %v1428, 64
      %v1853 = vpop.permute.xlu0 %1852
      %1854 = vrot.lane.b32.xlu0 %v1430, 64
      %v1855 = vpop.permute.xlu0 %1854
      %1856 = vrot.lane.b32.xlu0 %v1433, 64
      %v1857 = vpop.permute.xlu0 %1856
      %1858 = vrot.lane.b32.xlu0 %v1435, 64
      %v1859 = vpop.permute.xlu0 %1858
      %1860 = vrot.lane.b32.xlu0 %v1438, 64
      %v1861 = vpop.permute.xlu0 %1860
      %1862 = vrot.lane.b32.xlu0 %v1440, 64
      %v1863 = vpop.permute.xlu0 %1862
      %1864 = vrot.lane.b32.xlu0 %v1443, 64
      %v1865 = vpop.permute.xlu0 %1864
      %1866 = vrot.lane.b32.xlu0 %v1445, 64
      %v1867 = vpop.permute.xlu0 %1866
      %1868 = vrot.lane.b32.xlu0 %v1448, 64
      %v1869 = vpop.permute.xlu0 %1868
      %v1899 = vmax.f32 %v1378, %v1813
      %v1900 = vmax.f32 %v1380, %v1815
      %v1901 = vmax.f32 %v1383, %v1817
      %v1902 = vmax.f32 %v1385, %v1819
      %v1903 = vmax.f32 %v1388, %v1821
      %v1904 = vmax.f32 %v1390, %v1823
      %v1905 = vmax.f32 %v1393, %v1825
      %v1906 = vmax.f32 %v1395, %v1827
      %v1907 = vmax.f32 %v1398, %v1829
      %v1908 = vmax.f32 %v1400, %v1831
      %v1909 = vmax.f32 %v1403, %v1833
      %v1910 = vmax.f32 %v1405, %v1835
      %v1911 = vmax.f32 %v1408, %v1837
      %v1912 = vmax.f32 %v1410, %v1839
      %v1913 = vmax.f32 %v1413, %v1841
      %v1914 = vmax.f32 %v1415, %v1843
      %v1915 = vmax.f32 %v1418, %v1845
      %v1916 = vmax.f32 %v1420, %v1847
      %v1917 = vmax.f32 %v1423, %v1849
      %v1918 = vmax.f32 %v1425, %v1851
      %v1919 = vmax.f32 %v1428, %v1853
      %v1920 = vmax.f32 %v1430, %v1855
      %v1921 = vmax.f32 %v1433, %v1857
      %v1922 = vmax.f32 %v1435, %v1859
      %v1923 = vmax.f32 %v1438, %v1861
      %v1924 = vmax.f32 %v1440, %v1863
      %v1925 = vmax.f32 %v1443, %v1865
      %v1926 = vmax.f32 %v1445, %v1867
      %v1927 = vmax.f32 %v1448, %v1869
      %1957 = vrot.lane.b32.xlu0 %v1710, 64
      %v1958 = vpop.permute.xlu0 %1957
      %1959 = vrot.lane.b32.xlu0 %v1712, 64
      %v1960 = vpop.permute.xlu0 %1959
      %1961 = vrot.lane.b32.xlu0 %v1715, 64
      %v1962 = vpop.permute.xlu0 %1961
      %1963 = vrot.lane.b32.xlu0 %v1717, 64
      %v1964 = vpop.permute.xlu0 %1963
      %1965 = vrot.lane.b32.xlu0 %v1720, 64
      %v1966 = vpop.permute.xlu0 %1965
      %1967 = vrot.lane.b32.xlu0 %v1722, 64
      %v1968 = vpop.permute.xlu0 %1967
      %1969 = vrot.lane.b32.xlu0 %v1725, 64
      %v1970 = vpop.permute.xlu0 %1969
      %1971 = vrot.lane.b32.xlu0 %v1727, 64
      %v1972 = vpop.permute.xlu0 %1971
      %1973 = vrot.lane.b32.xlu0 %v1730, 64
      %v1974 = vpop.permute.xlu0 %1973
      %1975 = vrot.lane.b32.xlu0 %v1732, 64
      %v1976 = vpop.permute.xlu0 %1975
      %1977 = vrot.lane.b32.xlu0 %v1735, 64
      %v1978 = vpop.permute.xlu0 %1977
      %1979 = vrot.lane.b32.xlu0 %v1737, 64
      %v1980 = vpop.permute.xlu0 %1979
      %1981 = vrot.lane.b32.xlu0 %v1740, 64
      %v1982 = vpop.permute.xlu0 %1981
      %1983 = vrot.lane.b32.xlu0 %v1742, 64
      %v1984 = vpop.permute.xlu0 %1983
      %1985 = vrot.lane.b32.xlu0 %v1745, 64
      %v1986 = vpop.permute.xlu0 %1985
      %1987 = vrot.lane.b32.xlu0 %v1747, 64
      %v1988 = vpop.permute.xlu0 %1987
      %1989 = vrot.lane.b32.xlu0 %v1750, 64
      %v1990 = vpop.permute.xlu0 %1989
      %1991 = vrot.lane.b32.xlu0 %v1752, 64
      %v1992 = vpop.permute.xlu0 %1991
      %1993 = vrot.lane.b32.xlu0 %v1755, 64
      %v1994 = vpop.permute.xlu0 %1993
      %1995 = vrot.lane.b32.xlu0 %v1757, 64
      %v1996 = vpop.permute.xlu0 %1995
      %1997 = vrot.lane.b32.xlu0 %v1760, 64
      %v1998 = vpop.permute.xlu0 %1997
      %1999 = vrot.lane.b32.xlu0 %v1762, 64
      %v2000 = vpop.permute.xlu0 %1999
      %2001 = vrot.lane.b32.xlu0 %v1765, 64
      %v2002 = vpop.permute.xlu0 %2001
      %2003 = vrot.lane.b32.xlu0 %v1767, 64
      %v2004 = vpop.permute.xlu0 %2003
      %2005 = vrot.lane.b32.xlu0 %v1770, 64
      %v2006 = vpop.permute.xlu0 %2005
      %2007 = vrot.lane.b32.xlu0 %v1772, 64
      %v2008 = vpop.permute.xlu0 %2007
      %2009 = vrot.lane.b32.xlu0 %v1775, 64
      %v2010 = vpop.permute.xlu0 %2009
      %2011 = vrot.lane.b32.xlu0 %v1777, 64
      %v2012 = vpop.permute.xlu0 %2011
      %2013 = vrot.lane.b32.xlu0 %v1780, 64
      %v2014 = vpop.permute.xlu0 %2013
      %v2044 = vmax.f32 %v1710, %v1958
      %v2045 = vmax.f32 %v1712, %v1960
      %v2046 = vmax.f32 %v1715, %v1962
      %v2047 = vmax.f32 %v1717, %v1964
      %v2048 = vmax.f32 %v1720, %v1966
      %v2049 = vmax.f32 %v1722, %v1968
      %v2050 = vmax.f32 %v1725, %v1970
      %v2051 = vmax.f32 %v1727, %v1972
      %v2052 = vmax.f32 %v1730, %v1974
      %v2053 = vmax.f32 %v1732, %v1976
      %v2054 = vmax.f32 %v1735, %v1978
      %v2055 = vmax.f32 %v1737, %v1980
      %v2056 = vmax.f32 %v1740, %v1982
      %v2057 = vmax.f32 %v1742, %v1984
      %v2058 = vmax.f32 %v1745, %v1986
      %v2059 = vmax.f32 %v1747, %v1988
      %v2060 = vmax.f32 %v1750, %v1990
      %v2061 = vmax.f32 %v1752, %v1992
      %v2062 = vmax.f32 %v1755, %v1994
      %v2063 = vmax.f32 %v1757, %v1996
      %v2064 = vmax.f32 %v1760, %v1998
      %v2065 = vmax.f32 %v1762, %v2000
      %v2066 = vmax.f32 %v1765, %v2002
      %v2067 = vmax.f32 %v1767, %v2004
      %v2068 = vmax.f32 %v1770, %v2006
      %v2069 = vmax.f32 %v1772, %v2008
      %v2070 = vmax.f32 %v1775, %v2010
      %v2071 = vmax.f32 %v1777, %v2012
      %v2072 = vmax.f32 %v1780, %v2014
      %v2073 = vmax.f32 %v1899, %v2044
      %v2074 = vmax.f32 %v1900, %v2045
      %v2075 = vmax.f32 %v1901, %v2046
      %v2076 = vmax.f32 %v1902, %v2047
      %v2077 = vmax.f32 %v1903, %v2048
      %v2078 = vmax.f32 %v1904, %v2049
      %v2079 = vmax.f32 %v1905, %v2050
      %v2080 = vmax.f32 %v1906, %v2051
      %v2081 = vmax.f32 %v1907, %v2052
      %v2082 = vmax.f32 %v1908, %v2053
      %v2083 = vmax.f32 %v1909, %v2054
      %v2084 = vmax.f32 %v1910, %v2055
      %v2085 = vmax.f32 %v1911, %v2056
      %v2086 = vmax.f32 %v1912, %v2057
      %v2087 = vmax.f32 %v1913, %v2058
      %v2088 = vmax.f32 %v1914, %v2059
      %v2089 = vmax.f32 %v1915, %v2060
      %v2090 = vmax.f32 %v1916, %v2061
      %v2091 = vmax.f32 %v1917, %v2062
      %v2092 = vmax.f32 %v1918, %v2063
      %v2093 = vmax.f32 %v1919, %v2064
      %v2094 = vmax.f32 %v1920, %v2065
      %v2095 = vmax.f32 %v1921, %v2066
      %v2096 = vmax.f32 %v1922, %v2067
      %v2097 = vmax.f32 %v1923, %v2068
      %v2098 = vmax.f32 %v1924, %v2069
      %v2099 = vmax.f32 %v1925, %v2070
      %v2100 = vmax.f32 %v1926, %v2071
      %v2101 = vmax.f32 %v1927, %v2072
      %v2102 = vld [vmem:[%s4] sm:$0x1]
      %v2104 = vperm.slane %v2102, 0
      %v2106 = vadd.f32 %v2073, %v2104
      %v2107 = vadd.f32 %v2074, %v2104
      %v2108 = vadd.f32 %v2075, %v2104
      %v2109 = vadd.f32 %v2076, %v2104
      %v2110 = vadd.f32 %v2077, %v2104
      %v2111 = vadd.f32 %v2078, %v2104
      %v2112 = vadd.f32 %v2079, %v2104
      %v2113 = vadd.f32 %v2080, %v2104
      %v2114 = vadd.f32 %v2081, %v2104
      %v2115 = vadd.f32 %v2082, %v2104
      %v2116 = vadd.f32 %v2083, %v2104
      %v2117 = vadd.f32 %v2084, %v2104
      %v2118 = vadd.f32 %v2085, %v2104
      %v2119 = vadd.f32 %v2086, %v2104
      %v2120 = vadd.f32 %v2087, %v2104
      %v2121 = vadd.f32 %v2088, %v2104
      %v2122 = vadd.f32 %v2089, %v2104
      %v2123 = vadd.f32 %v2090, %v2104
      %v2124 = vadd.f32 %v2091, %v2104
      %v2125 = vadd.f32 %v2092, %v2104
      %v2126 = vadd.f32 %v2093, %v2104
      %v2127 = vadd.f32 %v2094, %v2104
      %v2128 = vadd.f32 %v2095, %v2104
      %v2129 = vadd.f32 %v2096, %v2104
      %v2130 = vadd.f32 %v2097, %v2104
      %v2131 = vadd.f32 %v2098, %v2104
      %v2132 = vadd.f32 %v2099, %v2104
      %v2133 = vadd.f32 %v2100, %v2104
      %v2134 = vadd.f32 %v2101, %v2104
      %v2135 = vmax.f32 %v2106, 0.0
      %v2136 = vmax.f32 %v2107, 0.0
      %v2137 = vmax.f32 %v2108, 0.0
      %v2138 = vmax.f32 %v2109, 0.0
      %v2139 = vmax.f32 %v2110, 0.0
      %v2140 = vmax.f32 %v2111, 0.0
      %v2141 = vmax.f32 %v2112, 0.0
      %v2142 = vmax.f32 %v2113, 0.0
      %v2143 = vmax.f32 %v2114, 0.0
      %v2144 = vmax.f32 %v2115, 0.0
      %v2145 = vmax.f32 %v2116, 0.0
      %v2146 = vmax.f32 %v2117, 0.0
      %v2147 = vmax.f32 %v2118, 0.0
      %v2148 = vmax.f32 %v2119, 0.0
      %v2149 = vmax.f32 %v2120, 0.0
      %v2150 = vmax.f32 %v2121, 0.0
      %v2151 = vmax.f32 %v2122, 0.0
      %v2152 = vmax.f32 %v2123, 0.0
      %v2153 = vmax.f32 %v2124, 0.0
      %v2154 = vmax.f32 %v2125, 0.0
      %v2155 = vmax.f32 %v2126, 0.0
      %v2156 = vmax.f32 %v2127, 0.0
      %v2157 = vmax.f32 %v2128, 0.0
      %v2158 = vmax.f32 %v2129, 0.0
      %v2159 = vmax.f32 %v2130, 0.0
      %v2160 = vmax.f32 %v2131, 0.0
      %v2161 = vmax.f32 %v2132, 0.0
      %v2162 = vmax.f32 %v2133, 0.0
      %v2163 = vmax.f32 %v2134, 0.0
      %v2164 = vpack.c.bf16 %v2135, %v2135
      %v2165 = vpack.c.bf16 %v2136, %v2136
      %v2166 = vpack.c.bf16 %v2137, %v2137
      %v2167 = vpack.c.bf16 %v2138, %v2138
      %v2168 = vpack.c.bf16 %v2139, %v2139
      %v2169 = vpack.c.bf16 %v2140, %v2140
      %v2170 = vpack.c.bf16 %v2141, %v2141
      %v2171 = vpack.c.bf16 %v2142, %v2142
      %v2172 = vpack.c.bf16 %v2143, %v2143
      %v2173 = vpack.c.bf16 %v2144, %v2144
      %v2174 = vpack.c.bf16 %v2145, %v2145
      %v2175 = vpack.c.bf16 %v2146, %v2146
      %v2176 = vpack.c.bf16 %v2147, %v2147
      %v2177 = vpack.c.bf16 %v2148, %v2148
      %v2178 = vpack.c.bf16 %v2149, %v2149
      %v2179 = vpack.c.bf16 %v2150, %v2150
      %v2180 = vpack.c.bf16 %v2151, %v2151
      %v2181 = vpack.c.bf16 %v2152, %v2152
      %v2182 = vpack.c.bf16 %v2153, %v2153
      %v2183 = vpack.c.bf16 %v2154, %v2154
      %v2184 = vpack.c.bf16 %v2155, %v2155
      %v2185 = vpack.c.bf16 %v2156, %v2156
      %v2186 = vpack.c.bf16 %v2157, %v2157
      %v2187 = vpack.c.bf16 %v2158, %v2158
      %v2188 = vpack.c.bf16 %v2159, %v2159
      %v2189 = vpack.c.bf16 %v2160, %v2160
      %v2190 = vpack.c.bf16 %v2161, %v2161
      %v2191 = vpack.c.bf16 %v2162, %v2162
      %v2192 = vpack.c.bf16 %v2163, %v2163
      %vm2193 = vcmask 519168
      %2194 = vst.msk [vmem:[%s226] sm:$0xf] %vm2193, %v2164
      %2195 = vst.msk [vmem:[%s226 + $0x4] sm:$0xf] %vm2193, %v2165
      %2196 = vst.msk [vmem:[%s226 + $0x8] sm:$0xf] %vm2193, %v2166
      %2197 = vst.msk [vmem:[%s226 + $0xc] sm:$0xf] %vm2193, %v2167
      %2198 = vst.msk [vmem:[%s226 + $0x10] sm:$0xf] %vm2193, %v2168
      %2199 = vst.msk [vmem:[%s226 + $0x14] sm:$0xf] %vm2193, %v2169
      %2200 = vst.msk [vmem:[%s226 + $0x18] sm:$0xf] %vm2193, %v2170
      %2201 = vst.msk [vmem:[%s226 + $0x1c] sm:$0xf] %vm2193, %v2171
      %2202 = vst.msk [vmem:[%s226 + $0x20] sm:$0xf] %vm2193, %v2172
      %2203 = vst.msk [vmem:[%s226 + $0x24] sm:$0xf] %vm2193, %v2173
      %2204 = vst.msk [vmem:[%s226 + $0x28] sm:$0xf] %vm2193, %v2174
      %2205 = vst.msk [vmem:[%s226 + $0x2c] sm:$0xf] %vm2193, %v2175
      %2206 = vst.msk [vmem:[%s226 + $0x30] sm:$0xf] %vm2193, %v2176
      %2207 = vst.msk [vmem:[%s226 + $0x34] sm:$0xf] %vm2193, %v2177
      %2208 = vst.msk [vmem:[%s226 + $0x38] sm:$0xf] %vm2193, %v2178
      %2209 = vst.msk [vmem:[%s226 + $0x3c] sm:$0xf] %vm2193, %v2179
      %2210 = vst.msk [vmem:[%s226 + $0x40] sm:$0xf] %vm2193, %v2180
      %2211 = vst.msk [vmem:[%s226 + $0x44] sm:$0xf] %vm2193, %v2181
      %2212 = vst.msk [vmem:[%s226 + $0x48] sm:$0xf] %vm2193, %v2182
      %2213 = vst.msk [vmem:[%s226 + $0x4c] sm:$0xf] %vm2193, %v2183
      %2214 = vst.msk [vmem:[%s226 + $0x50] sm:$0xf] %vm2193, %v2184
      %2215 = vst.msk [vmem:[%s226 + $0x54] sm:$0xf] %vm2193, %v2185
      %2216 = vst.msk [vmem:[%s226 + $0x58] sm:$0xf] %vm2193, %v2186
      %2217 = vst.msk [vmem:[%s226 + $0x5c] sm:$0xf] %vm2193, %v2187
      %2218 = vst.msk [vmem:[%s226 + $0x60] sm:$0xf] %vm2193, %v2188
      %2219 = vst.msk [vmem:[%s226 + $0x64] sm:$0xf] %vm2193, %v2189
      %2220 = vst.msk [vmem:[%s226 + $0x68] sm:$0xf] %vm2193, %v2190
      %2221 = vst.msk [vmem:[%s226 + $0x6c] sm:$0xf] %vm2193, %v2191
      %2222 = vst.msk [vmem:[%s226 + $0x70] sm:$0xf] %vm2193, %v2192
      %s2223 = smul.u32 29, %s16
      %p2224 = scmp.lt.s32.totalorder %s2223, 57
      %s2225 = scalar_select %p2224, %s2223, 57
      %s2226 = smul.addr %s2225, 4
      %s2227 = scalar_lea.vmem %s5, %s2226
      // Predicated region
      $region41: #{net_forward.2} parent=39 // pred_check
        %p2228 = pneg %p144
      $region42: #{net_forward.2} parent=39 // pred_check_branch
        %2230 = sbr.rel (%p2228) target = $region44
      $region43: #{net_forward.2} parent=39 // pred_region
        %s2231 = smul.u32 29, %s16
      $region44: #{net_forward.2} parent=39 // pred_fallthru
        _
    $region40: #{net_forward.2} parent=5 // pred_fallthru
      _
    %p2232 = scmp.le.s32.totalorder 2, %s11
    // Predicated region
    $region45: #{net_forward.2} parent=5 // pred_check
      %p2233 = pneg %p2232
    $region46: #{net_forward.2} parent=5 // pred_check_branch
      %2235 = sbr.rel (%p2233) target = $region48
    $region47: #{net_forward.2} parent=5 // pred_region
      %s2236 = ssub.s32 %s11, 2
      // Predicated region
      $region49: #{net_forward.2} parent=47 // pred_check
        %p2237 = pneg %p150
      $region50: #{net_forward.2} parent=47 // pred_check_branch
        %2239 = sbr.rel (%p2237) target = $region52
      $region51: #{net_forward.2} parent=47 // pred_region
        %s2240 = smul.u32 29, %s17
        %p2241 = scmp.lt.s32.totalorder %s2240, 57
        %s2242 = scalar_select %p2241, %s2240, 57
        %s2243 = smul.addr %s2242, 4
        %s2244 = scalar_lea.vmem %s5, %s2243
      $region52: #{net_forward.2} parent=47 // pred_fallthru
        _
    $region48: #{net_forward.2} parent=5 // pred_fallthru
      _
  $region6: #{net_forward.2} parent=0 // loop_footer
    %s15 = sadd.s32 1, %s11
  $region7: #{net_forward.2} parent=0 // loop_footer_branch
    %10 = sbr.rel target = $region3
  $region8: #{net_forward.2} parent=0 // loop_exit
    _

// kernel: net_forward.3
$region0: #{net_forward.3}
  #allocation0 [shape = 'u32[]', space=smem, size = 0x4, offset = 0x4, fixed_abs, tag = 'smem constant byte address 0x4 - core index']
  #allocation1 [shape = 'u32[72,128]{1,0:T(1,128)}', space=vmem, size = 0x9000, scoped, tag = 'internal scratch']
  %s0 = inlined_call_operand.vmem [shape: bf16[2,14848], index: 0, kind: input, shape index: {}]
  %s1 = inlined_call_operand.vmem [shape: bf16[14848,128], index: 1, kind: input, shape index: {}]
  %s2 = inlined_call_operand.vmem [shape: f32[1,128], index: 2, kind: input, shape index: {}]
  %s3 = inlined_call_operand.vmem [shape: bf16[128,10], index: 3, kind: input, shape index: {}]
  %s4 = inlined_call_operand.vmem [shape: f32[1,10], index: 4, kind: input, shape index: {}]
  %s5 = inlined_call_operand.hbm [shape: f32[2,10], index: 5, kind: output, shape index: {}]
  %s6 = sld [smem:[#allocation0]]
  $region30: #{net_forward.3} parent=0
    _
  %s8 = ssub.s32 1, %s6
  %s9 = scalar_select 0, %s8, %s6
  $region1: #{net_forward.3} parent=0
    #allocation2 [shape = 'u8[1024]{0}', space=vmem, size = 0x400, scoped, tag = 'output window, operand 0, single buffered']
    #allocation3 [shape = 's32[1]{0}', space=sflag, size = 0x4, scoped, tag = 'scoped memory for net_forward.3']
    %10 = vsyncpa [#allocation3], 0
    // Predicated region
    $region2: #{net_forward.3} parent=1 // pred_check
      _
    $region3: #{net_forward.3} parent=1 // pred_check_branch
      %12 = sbr.rel (0) target = $region5
    $region4: #{net_forward.3} parent=1 // pred_region
      _
    $region5: #{net_forward.3} parent=1 // pred_fallthru
      _
    // Predicated region
    $region6: #{net_forward.3} parent=1 // pred_check
      _
    $region7: #{net_forward.3} parent=1 // pred_check_branch
      %14 = sbr.rel (0) target = $region9
    $region8: #{net_forward.3} parent=1 // pred_region
      _
    $region9: #{net_forward.3} parent=1 // pred_fallthru
      _
    // Predicated region
    $region10: #{net_forward.3} parent=1 // pred_check
      _
    $region11: #{net_forward.3} parent=1 // pred_check_branch
      %16 = sbr.rel (0) target = $region13
    $region12: #{net_forward.3} parent=1 // pred_region
      _
    $region13: #{net_forward.3} parent=1 // pred_fallthru
      _
    // Predicated region
    $region14: #{net_forward.3} parent=1 // pred_check
      _
    $region15: #{net_forward.3} parent=1 // pred_check_branch
      %18 = sbr.rel (0) target = $region17
    $region16: #{net_forward.3} parent=1 // pred_region
      _
    $region17: #{net_forward.3} parent=1 // pred_fallthru
      _
    // Predicated region
    $region18: #{net_forward.3} parent=1 // pred_check
      _
    $region19: #{net_forward.3} parent=1 // pred_check_branch
      %20 = sbr.rel (0) target = $region21
    $region20: #{net_forward.3} parent=1 // pred_region
      _
    $region21: #{net_forward.3} parent=1 // pred_fallthru
      _
    %v21 = vld [vmem:[%s0] sm:$0xff]
    %v22 = vld [vmem:[%s0 + $0x8] sm:$0xff]
    %v23 = vld [vmem:[%s0 + $0x10] sm:$0xff]
    %v24 = vld [vmem:[%s0 + $0x18] sm:$0xff]
    %v25 = vld [vmem:[%s0 + $0x20] sm:$0xff]
    %v26 = vld [vmem:[%s0 + $0x28] sm:$0xff]
    %v27 = vld [vmem:[%s0 + $0x30] sm:$0xff]
    %v28 = vld [vmem:[%s0 + $0x38] sm:$0xff]
    %v29 = vld [vmem:[%s0 + $0x40] sm:$0xff]
    %v30 = vld [vmem:[%s0 + $0x48] sm:$0xff]
    %v31 = vld [vmem:[%s0 + $0x50] sm:$0xff]
    %v32 = vld [vmem:[%s0 + $0x58] sm:$0xff]
    %v33 = vld [vmem:[%s0 + $0x60] sm:$0xff]
    %v34 = vld [vmem:[%s0 + $0x68] sm:$0xff]
    %v35 = vld [vmem:[%s0 + $0x70] sm:$0xf]
    %v36 = vld [vmem:[%s1] sm:$0xf]
    %v37 = vld [vmem:[%s1 + $0x4] sm:$0xf]
    %v38 = vld [vmem:[%s1 + $0x8] sm:$0xf]
    %v39 = vld [vmem:[%s1 + $0xc] sm:$0xf]
    %v40 = vld [vmem:[%s1 + $0x10] sm:$0xf]
    %v41 = vld [vmem:[%s1 + $0x14] sm:$0xf]
    %v42 = vld [vmem:[%s1 + $0x18] sm:$0xf]
    %v43 = vld [vmem:[%s1 + $0x1c] sm:$0xf]
    %v44 = vld [vmem:[%s1 + $0x20] sm:$0xf]
    %v45 = vld [vmem:[%s1 + $0x24] sm:$0xf]
    %v46 = vld [vmem:[%s1 + $0x28] sm:$0xf]
    %v47 = vld [vmem:[%s1 + $0x2c] sm:$0xf]
    %v48 = vld [vmem:[%s1 + $0x30] sm:$0xf]
    %v49 = vld [vmem:[%s1 + $0x34] sm:$0xf]
    %v50 = vld [vmem:[%s1 + $0x38] sm:$0xf]
    %v51 = vld [vmem:[%s1 + $0x3c] sm:$0xf]
    %v52 = vld [vmem:[%s1 + $0x40] sm:$0xf]
    %v53 = vld [vmem:[%s1 + $0x44] sm:$0xf]
    %v54 = vld [vmem:[%s1 + $0x48] sm:$0xf]
    %v55 = vld [vmem:[%s1 + $0x4c] sm:$0xf]
    %v56 = vld [vmem:[%s1 + $0x50] sm:$0xf]
    %v57 = vld [vmem:[%s1 + $0x54] sm:$0xf]
    %v58 = vld [vmem:[%s1 + $0x58] sm:$0xf]
    %v59 = vld [vmem:[%s1 + $0x5c] sm:$0xf]
    %v60 = vld [vmem:[%s1 + $0x60] sm:$0xf]
    %v61 = vld [vmem:[%s1 + $0x64] sm:$0xf]
    %v62 = vld [vmem:[%s1 + $0x68] sm:$0xf]
    %v63 = vld [vmem:[%s1 + $0x6c] sm:$0xf]
    %v64 = vld [vmem:[%s1 + $0x70] sm:$0xf]
    %v65 = vld [vmem:[%s1 + $0x74] sm:$0xf]
    %v66 = vld [vmem:[%s1 + $0x78] sm:$0xf]
    %v67 = vld [vmem:[%s1 + $0x7c] sm:$0xf]
    %v68 = vld [vmem:[%s1 + $0x80] sm:$0xf]
    %v69 = vld [vmem:[%s1 + $0x84] sm:$0xf]
    %v70 = vld [vmem:[%s1 + $0x88] sm:$0xf]
    %v71 = vld [vmem:[%s1 + $0x8c] sm:$0xf]
    %v72 = vld [vmem:[%s1 + $0x90] sm:$0xf]
    %v73 = vld [vmem:[%s1 + $0x94] sm:$0xf]
    %v74 = vld [vmem:[%s1 + $0x98] sm:$0xf]
    %v75 = vld [vmem:[%s1 + $0x9c] sm:$0xf]
    %v76 = vld [vmem:[%s1 + $0xa0] sm:$0xf]
    %v77 = vld [vmem:[%s1 + $0xa4] sm:$0xf]
    %v78 = vld [vmem:[%s1 + $0xa8] sm:$0xf]
    %v79 = vld [vmem:[%s1 + $0xac] sm:$0xf]
    %v80 = vld [vmem:[%s1 + $0xb0] sm:$0xf]
    %v81 = vld [vmem:[%s1 + $0xb4] sm:$0xf]
    %v82 = vld [vmem:[%s1 + $0xb8] sm:$0xf]
    %v83 = vld [vmem:[%s1 + $0xbc] sm:$0xf]
    %v84 = vld [vmem:[%s1 + $0xc0] sm:$0xf]
    %v85 = vld [vmem:[%s1 + $0xc4] sm:$0xf]
    %v86 = vld [vmem:[%s1 + $0xc8] sm:$0xf]
    %v87 = vld [vmem:[%s1 + $0xcc] sm:$0xf]
    %v88 = vld [vmem:[%s1 + $0xd0] sm:$0xf]
    %v89 = vld [vmem:[%s1 + $0xd4] sm:$0xf]
    %v90 = vld [vmem:[%s1 + $0xd8] sm:$0xf]
    %v91 = vld [vmem:[%s1 + $0xdc] sm:$0xf]
    %v92 = vld [vmem:[%s1 + $0xe0] sm:$0xf]
    %v93 = vld [vmem:[%s1 + $0xe4] sm:$0xf]
    %v94 = vld [vmem:[%s1 + $0xe8] sm:$0xf]
    %v95 = vld [vmem:[%s1 + $0xec] sm:$0xf]
    %v96 = vld [vmem:[%s1 + $0xf0] sm:$0xf]
    %v97 = vld [vmem:[%s1 + $0xf4] sm:$0xf]
    %v98 = vld [vmem:[%s1 + $0xf8] sm:$0xf]
    %v99 = vld [vmem:[%s1 + $0xfc] sm:$0xf]
    %v100 = vld [vmem:[%s1 + $0x100] sm:$0xf]
    %v101 = vld [vmem:[%s1 + $0x104] sm:$0xf]
    %v102 = vld [vmem:[%s1 + $0x108] sm:$0xf]
    %v103 = vld [vmem:[%s1 + $0x10c] sm:$0xf]
    %v104 = vld [vmem:[%s1 + $0x110] sm:$0xf]
    %v105 = vld [vmem:[%s1 + $0x114] sm:$0xf]
    %v106 = vld [vmem:[%s1 + $0x118] sm:$0xf]
    %v107 = vld [vmem:[%s1 + $0x11c] sm:$0xf]
    %v108 = vld [vmem:[%s1 + $0x120] sm:$0xf]
    %v109 = vld [vmem:[%s1 + $0x124] sm:$0xf]
    %v110 = vld [vmem:[%s1 + $0x128] sm:$0xf]
    %v111 = vld [vmem:[%s1 + $0x12c] sm:$0xf]
    %v112 = vld [vmem:[%s1 + $0x130] sm:$0xf]
    %v113 = vld [vmem:[%s1 + $0x134] sm:$0xf]
    %v114 = vld [vmem:[%s1 + $0x138] sm:$0xf]
    %v115 = vld [vmem:[%s1 + $0x13c] sm:$0xf]
    %v116 = vld [vmem:[%s1 + $0x140] sm:$0xf]
    %v117 = vld [vmem:[%s1 + $0x144] sm:$0xf]
    %v118 = vld [vmem:[%s1 + $0x148] sm:$0xf]
    %v119 = vld [vmem:[%s1 + $0x14c] sm:$0xf]
    %v120 = vld [vmem:[%s1 + $0x150] sm:$0xf]
    %v121 = vld [vmem:[%s1 + $0x154] sm:$0xf]
    %v122 = vld [vmem:[%s1 + $0x158] sm:$0xf]
    %v123 = vld [vmem:[%s1 + $0x15c] sm:$0xf]
    %v124 = vld [vmem:[%s1 + $0x160] sm:$0xf]
    %v125 = vld [vmem:[%s1 + $0x164] sm:$0xf]
    %v126 = vld [vmem:[%s1 + $0x168] sm:$0xf]
    %v127 = vld [vmem:[%s1 + $0x16c] sm:$0xf]
    %v128 = vld [vmem:[%s1 + $0x170] sm:$0xf]
    %v129 = vld [vmem:[%s1 + $0x174] sm:$0xf]
    %v130 = vld [vmem:[%s1 + $0x178] sm:$0xf]
    %v131 = vld [vmem:[%s1 + $0x17c] sm:$0xf]
    %v132 = vld [vmem:[%s1 + $0x180] sm:$0xf]
    %v133 = vld [vmem:[%s1 + $0x184] sm:$0xf]
    %v134 = vld [vmem:[%s1 + $0x188] sm:$0xf]
    %v135 = vld [vmem:[%s1 + $0x18c] sm:$0xf]
    %v136 = vld [vmem:[%s1 + $0x190] sm:$0xf]
    %v137 = vld [vmem:[%s1 + $0x194] sm:$0xf]
    %v138 = vld [vmem:[%s1 + $0x198] sm:$0xf]
    %v139 = vld [vmem:[%s1 + $0x19c] sm:$0xf]
    %v140 = vld [vmem:[%s1 + $0x1a0] sm:$0xf]
    %v141 = vld [vmem:[%s1 + $0x1a4] sm:$0xf]
    %v142 = vld [vmem:[%s1 + $0x1a8] sm:$0xf]
    %v143 = vld [vmem:[%s1 + $0x1ac] sm:$0xf]
    %v144 = vld [vmem:[%s1 + $0x1b0] sm:$0xf]
    %v145 = vld [vmem:[%s1 + $0x1b4] sm:$0xf]
    %v146 = vld [vmem:[%s1 + $0x1b8] sm:$0xf]
    %v147 = vld [vmem:[%s1 + $0x1bc] sm:$0xf]
    %v148 = vld [vmem:[%s1 + $0x1c0] sm:$0xf]
    %v149 = vld [vmem:[%s1 + $0x1c4] sm:$0xf]
    %v150 = vld [vmem:[%s1 + $0x1c8] sm:$0xf]
    %v151 = vld [vmem:[%s1 + $0x1cc] sm:$0xf]
    %v152 = vld [vmem:[%s1 + $0x1d0] sm:$0xf]
    %v153 = vld [vmem:[%s1 + $0x1d4] sm:$0xf]
    %v154 = vld [vmem:[%s1 + $0x1d8] sm:$0xf]
    %v155 = vld [vmem:[%s1 + $0x1dc] sm:$0xf]
    %v156 = vld [vmem:[%s1 + $0x1e0] sm:$0xf]
    %v157 = vld [vmem:[%s1 + $0x1e4] sm:$0xf]
    %v158 = vld [vmem:[%s1 + $0x1e8] sm:$0xf]
    %v159 = vld [vmem:[%s1 + $0x1ec] sm:$0xf]
    %v160 = vld [vmem:[%s1 + $0x1f0] sm:$0xf]
    %v161 = vld [vmem:[%s1 + $0x1f4] sm:$0xf]
    %v162 = vld [vmem:[%s1 + $0x1f8] sm:$0xf]
    %v163 = vld [vmem:[%s1 + $0x1fc] sm:$0xf]
    %v164 = vld [vmem:[%s1 + $0x200] sm:$0xf]
    %v165 = vld [vmem:[%s1 + $0x204] sm:$0xf]
    %v166 = vld [vmem:[%s1 + $0x208] sm:$0xf]
    %v167 = vld [vmem:[%s1 + $0x20c] sm:$0xf]
    %v168 = vld [vmem:[%s1 + $0x210] sm:$0xf]
    %v169 = vld [vmem:[%s1 + $0x214] sm:$0xf]
    %v170 = vld [vmem:[%s1 + $0x218] sm:$0xf]
    %v171 = vld [vmem:[%s1 + $0x21c] sm:$0xf]
    %v172 = vld [vmem:[%s1 + $0x220] sm:$0xf]
    %v173 = vld [vmem:[%s1 + $0x224] sm:$0xf]
    %v174 = vld [vmem:[%s1 + $0x228] sm:$0xf]
    %v175 = vld [vmem:[%s1 + $0x22c] sm:$0xf]
    %v176 = vld [vmem:[%s1 + $0x230] sm:$0xf]
    %v177 = vld [vmem:[%s1 + $0x234] sm:$0xf]
    %v178 = vld [vmem:[%s1 + $0x238] sm:$0xf]
    %v179 = vld [vmem:[%s1 + $0x23c] sm:$0xf]
    %v180 = vld [vmem:[%s1 + $0x240] sm:$0xf]
    %v181 = vld [vmem:[%s1 + $0x244] sm:$0xf]
    %v182 = vld [vmem:[%s1 + $0x248] sm:$0xf]
    %v183 = vld [vmem:[%s1 + $0x24c] sm:$0xf]
    %v184 = vld [vmem:[%s1 + $0x250] sm:$0xf]
    %v185 = vld [vmem:[%s1 + $0x254] sm:$0xf]
    %v186 = vld [vmem:[%s1 + $0x258] sm:$0xf]
    %v187 = vld [vmem:[%s1 + $0x25c] sm:$0xf]
    %v188 = vld [vmem:[%s1 + $0x260] sm:$0xf]
    %v189 = vld [vmem:[%s1 + $0x264] sm:$0xf]
    %v190 = vld [vmem:[%s1 + $0x268] sm:$0xf]
    %v191 = vld [vmem:[%s1 + $0x26c] sm:$0xf]
    %v192 = vld [vmem:[%s1 + $0x270] sm:$0xf]
    %v193 = vld [vmem:[%s1 + $0x274] sm:$0xf]
    %v194 = vld [vmem:[%s1 + $0x278] sm:$0xf]
    %v195 = vld [vmem:[%s1 + $0x27c] sm:$0xf]
    %v196 = vld [vmem:[%s1 + $0x280] sm:$0xf]
    %v197 = vld [vmem:[%s1 + $0x284] sm:$0xf]
    %v198 = vld [vmem:[%s1 + $0x288] sm:$0xf]
    %v199 = vld [vmem:[%s1 + $0x28c] sm:$0xf]
    %v200 = vld [vmem:[%s1 + $0x290] sm:$0xf]
    %v201 = vld [vmem:[%s1 + $0x294] sm:$0xf]
    %v202 = vld [vmem:[%s1 + $0x298] sm:$0xf]
    %v203 = vld [vmem:[%s1 + $0x29c] sm:$0xf]
    %v204 = vld [vmem:[%s1 + $0x2a0] sm:$0xf]
    %v205 = vld [vmem:[%s1 + $0x2a4] sm:$0xf]
    %v206 = vld [vmem:[%s1 + $0x2a8] sm:$0xf]
    %v207 = vld [vmem:[%s1 + $0x2ac] sm:$0xf]
    %v208 = vld [vmem:[%s1 + $0x2b0] sm:$0xf]
    %v209 = vld [vmem:[%s1 + $0x2b4] sm:$0xf]
    %v210 = vld [vmem:[%s1 + $0x2b8] sm:$0xf]
    %v211 = vld [vmem:[%s1 + $0x2bc] sm:$0xf]
    %v212 = vld [vmem:[%s1 + $0x2c0] sm:$0xf]
    %v213 = vld [vmem:[%s1 + $0x2c4] sm:$0xf]
    %v214 = vld [vmem:[%s1 + $0x2c8] sm:$0xf]
    %v215 = vld [vmem:[%s1 + $0x2cc] sm:$0xf]
    %v216 = vld [vmem:[%s1 + $0x2d0] sm:$0xf]
    %v217 = vld [vmem:[%s1 + $0x2d4] sm:$0xf]
    %v218 = vld [vmem:[%s1 + $0x2d8] sm:$0xf]
    %v219 = vld [vmem:[%s1 + $0x2dc] sm:$0xf]
    %v220 = vld [vmem:[%s1 + $0x2e0] sm:$0xf]
    %v221 = vld [vmem:[%s1 + $0x2e4] sm:$0xf]
    %v222 = vld [vmem:[%s1 + $0x2e8] sm:$0xf]
    %v223 = vld [vmem:[%s1 + $0x2ec] sm:$0xf]
    %v224 = vld [vmem:[%s1 + $0x2f0] sm:$0xf]
    %v225 = vld [vmem:[%s1 + $0x2f4] sm:$0xf]
    %v226 = vld [vmem:[%s1 + $0x2f8] sm:$0xf]
    %v227 = vld [vmem:[%s1 + $0x2fc] sm:$0xf]
    %v228 = vld [vmem:[%s1 + $0x300] sm:$0xf]
    %v229 = vld [vmem:[%s1 + $0x304] sm:$0xf]
    %v230 = vld [vmem:[%s1 + $0x308] sm:$0xf]
    %v231 = vld [vmem:[%s1 + $0x30c] sm:$0xf]
    %v232 = vld [vmem:[%s1 + $0x310] sm:$0xf]
    %v233 = vld [vmem:[%s1 + $0x314] sm:$0xf]
    %v234 = vld [vmem:[%s1 + $0x318] sm:$0xf]
    %v235 = vld [vmem:[%s1 + $0x31c] sm:$0xf]
    %v236 = vld [vmem:[%s1 + $0x320] sm:$0xf]
    %v237 = vld [vmem:[%s1 + $0x324] sm:$0xf]
    %v238 = vld [vmem:[%s1 + $0x328] sm:$0xf]
    %v239 = vld [vmem:[%s1 + $0x32c] sm:$0xf]
    %v240 = vld [vmem:[%s1 + $0x330] sm:$0xf]
    %v241 = vld [vmem:[%s1 + $0x334] sm:$0xf]
    %v242 = vld [vmem:[%s1 + $0x338] sm:$0xf]
    %v243 = vld [vmem:[%s1 + $0x33c] sm:$0xf]
    %v244 = vld [vmem:[%s1 + $0x340] sm:$0xf]
    %v245 = vld [vmem:[%s1 + $0x344] sm:$0xf]
    %v246 = vld [vmem:[%s1 + $0x348] sm:$0xf]
    %v247 = vld [vmem:[%s1 + $0x34c] sm:$0xf]
    %v248 = vld [vmem:[%s1 + $0x350] sm:$0xf]
    %v249 = vld [vmem:[%s1 + $0x354] sm:$0xf]
    %v250 = vld [vmem:[%s1 + $0x358] sm:$0xf]
    %v251 = vld [vmem:[%s1 + $0x35c] sm:$0xf]
    %v252 = vld [vmem:[%s1 + $0x360] sm:$0xf]
    %v253 = vld [vmem:[%s1 + $0x364] sm:$0xf]
    %v254 = vld [vmem:[%s1 + $0x368] sm:$0xf]
    %v255 = vld [vmem:[%s1 + $0x36c] sm:$0xf]
    %v256 = vld [vmem:[%s1 + $0x370] sm:$0xf]
    %v257 = vld [vmem:[%s1 + $0x374] sm:$0xf]
    %v258 = vld [vmem:[%s1 + $0x378] sm:$0xf]
    %v259 = vld [vmem:[%s1 + $0x37c] sm:$0xf]
    %v260 = vld [vmem:[%s1 + $0x380] sm:$0xf]
    %v261 = vld [vmem:[%s1 + $0x384] sm:$0xf]
    %v262 = vld [vmem:[%s1 + $0x388] sm:$0xf]
    %v263 = vld [vmem:[%s1 + $0x38c] sm:$0xf]
    %v264 = vld [vmem:[%s1 + $0x390] sm:$0xf]
    %v265 = vld [vmem:[%s1 + $0x394] sm:$0xf]
    %v266 = vld [vmem:[%s1 + $0x398] sm:$0xf]
    %v267 = vld [vmem:[%s1 + $0x39c] sm:$0xf]
    %v268 = vld [vmem:[%s1 + $0x3a0] sm:$0xf]
    %v269 = vld [vmem:[%s1 + $0x3a4] sm:$0xf]
    %v270 = vld [vmem:[%s1 + $0x3a8] sm:$0xf]
    %v271 = vld [vmem:[%s1 + $0x3ac] sm:$0xf]
    %v272 = vld [vmem:[%s1 + $0x3b0] sm:$0xf]
    %v273 = vld [vmem:[%s1 + $0x3b4] sm:$0xf]
    %v274 = vld [vmem:[%s1 + $0x3b8] sm:$0xf]
    %v275 = vld [vmem:[%s1 + $0x3bc] sm:$0xf]
    %v276 = vld [vmem:[%s1 + $0x3c0] sm:$0xf]
    %v277 = vld [vmem:[%s1 + $0x3c4] sm:$0xf]
    %v278 = vld [vmem:[%s1 + $0x3c8] sm:$0xf]
    %v279 = vld [vmem:[%s1 + $0x3cc] sm:$0xf]
    %v280 = vld [vmem:[%s1 + $0x3d0] sm:$0xf]
    %v281 = vld [vmem:[%s1 + $0x3d4] sm:$0xf]
    %v282 = vld [vmem:[%s1 + $0x3d8] sm:$0xf]
    %v283 = vld [vmem:[%s1 + $0x3dc] sm:$0xf]
    %v284 = vld [vmem:[%s1 + $0x3e0] sm:$0xf]
    %v285 = vld [vmem:[%s1 + $0x3e4] sm:$0xf]
    %v286 = vld [vmem:[%s1 + $0x3e8] sm:$0xf]
    %v287 = vld [vmem:[%s1 + $0x3ec] sm:$0xf]
    %v288 = vld [vmem:[%s1 + $0x3f0] sm:$0xf]
    %v289 = vld [vmem:[%s1 + $0x3f4] sm:$0xf]
    %v290 = vld [vmem:[%s1 + $0x3f8] sm:$0xf]
    %v291 = vld [vmem:[%s1 + $0x3fc] sm:$0xf]
    %v292 = vld [vmem:[%s1 + $0x400] sm:$0xf]
    %v293 = vld [vmem:[%s1 + $0x404] sm:$0xf]
    %v294 = vld [vmem:[%s1 + $0x408] sm:$0xf]
    %v295 = vld [vmem:[%s1 + $0x40c] sm:$0xf]
    %v296 = vld [vmem:[%s1 + $0x410] sm:$0xf]
    %v297 = vld [vmem:[%s1 + $0x414] sm:$0xf]
    %v298 = vld [vmem:[%s1 + $0x418] sm:$0xf]
    %v299 = vld [vmem:[%s1 + $0x41c] sm:$0xf]
    %v300 = vld [vmem:[%s1 + $0x420] sm:$0xf]
    %v301 = vld [vmem:[%s1 + $0x424] sm:$0xf]
    %v302 = vld [vmem:[%s1 + $0x428] sm:$0xf]
    %v303 = vld [vmem:[%s1 + $0x42c] sm:$0xf]
    %v304 = vld [vmem:[%s1 + $0x430] sm:$0xf]
    %v305 = vld [vmem:[%s1 + $0x434] sm:$0xf]
    %v306 = vld [vmem:[%s1 + $0x438] sm:$0xf]
    %v307 = vld [vmem:[%s1 + $0x43c] sm:$0xf]
    %v308 = vld [vmem:[%s1 + $0x440] sm:$0xf]
    %v309 = vld [vmem:[%s1 + $0x444] sm:$0xf]
    %v310 = vld [vmem:[%s1 + $0x448] sm:$0xf]
    %v311 = vld [vmem:[%s1 + $0x44c] sm:$0xf]
    %v312 = vld [vmem:[%s1 + $0x450] sm:$0xf]
    %v313 = vld [vmem:[%s1 + $0x454] sm:$0xf]
    %v314 = vld [vmem:[%s1 + $0x458] sm:$0xf]
    %v315 = vld [vmem:[%s1 + $0x45c] sm:$0xf]
    %v316 = vld [vmem:[%s1 + $0x460] sm:$0xf]
    %v317 = vld [vmem:[%s1 + $0x464] sm:$0xf]
    %v318 = vld [vmem:[%s1 + $0x468] sm:$0xf]
    %v319 = vld [vmem:[%s1 + $0x46c] sm:$0xf]
    %v320 = vld [vmem:[%s1 + $0x470] sm:$0xf]
    %v321 = vld [vmem:[%s1 + $0x474] sm:$0xf]
    %v322 = vld [vmem:[%s1 + $0x478] sm:$0xf]
    %v323 = vld [vmem:[%s1 + $0x47c] sm:$0xf]
    %v324 = vld [vmem:[%s1 + $0x480] sm:$0xf]
    %v325 = vld [vmem:[%s1 + $0x484] sm:$0xf]
    %v326 = vld [vmem:[%s1 + $0x488] sm:$0xf]
    %v327 = vld [vmem:[%s1 + $0x48c] sm:$0xf]
    %v328 = vld [vmem:[%s1 + $0x490] sm:$0xf]
    %v329 = vld [vmem:[%s1 + $0x494] sm:$0xf]
    %v330 = vld [vmem:[%s1 + $0x498] sm:$0xf]
    %v331 = vld [vmem:[%s1 + $0x49c] sm:$0xf]
    %v332 = vld [vmem:[%s1 + $0x4a0] sm:$0xf]
    %v333 = vld [vmem:[%s1 + $0x4a4] sm:$0xf]
    %v334 = vld [vmem:[%s1 + $0x4a8] sm:$0xf]
    %v335 = vld [vmem:[%s1 + $0x4ac] sm:$0xf]
    %v336 = vld [vmem:[%s1 + $0x4b0] sm:$0xf]
    %v337 = vld [vmem:[%s1 + $0x4b4] sm:$0xf]
    %v338 = vld [vmem:[%s1 + $0x4b8] sm:$0xf]
    %v339 = vld [vmem:[%s1 + $0x4bc] sm:$0xf]
    %v340 = vld [vmem:[%s1 + $0x4c0] sm:$0xf]
    %v341 = vld [vmem:[%s1 + $0x4c4] sm:$0xf]
    %v342 = vld [vmem:[%s1 + $0x4c8] sm:$0xf]
    %v343 = vld [vmem:[%s1 + $0x4cc] sm:$0xf]
    %v344 = vld [vmem:[%s1 + $0x4d0] sm:$0xf]
    %v345 = vld [vmem:[%s1 + $0x4d4] sm:$0xf]
    %v346 = vld [vmem:[%s1 + $0x4d8] sm:$0xf]
    %v347 = vld [vmem:[%s1 + $0x4dc] sm:$0xf]
    %v348 = vld [vmem:[%s1 + $0x4e0] sm:$0xf]
    %v349 = vld [vmem:[%s1 + $0x4e4] sm:$0xf]
    %v350 = vld [vmem:[%s1 + $0x4e8] sm:$0xf]
    %v351 = vld [vmem:[%s1 + $0x4ec] sm:$0xf]
    %v352 = vld [vmem:[%s1 + $0x4f0] sm:$0xf]
    %v353 = vld [vmem:[%s1 + $0x4f4] sm:$0xf]
    %v354 = vld [vmem:[%s1 + $0x4f8] sm:$0xf]
    %v355 = vld [vmem:[%s1 + $0x4fc] sm:$0xf]
    %v356 = vld [vmem:[%s1 + $0x500] sm:$0xf]
    %v357 = vld [vmem:[%s1 + $0x504] sm:$0xf]
    %v358 = vld [vmem:[%s1 + $0x508] sm:$0xf]
    %v359 = vld [vmem:[%s1 + $0x50c] sm:$0xf]
    %v360 = vld [vmem:[%s1 + $0x510] sm:$0xf]
    %v361 = vld [vmem:[%s1 + $0x514] sm:$0xf]
    %v362 = vld [vmem:[%s1 + $0x518] sm:$0xf]
    %v363 = vld [vmem:[%s1 + $0x51c] sm:$0xf]
    %v364 = vld [vmem:[%s1 + $0x520] sm:$0xf]
    %v365 = vld [vmem:[%s1 + $0x524] sm:$0xf]
    %v366 = vld [vmem:[%s1 + $0x528] sm:$0xf]
    %v367 = vld [vmem:[%s1 + $0x52c] sm:$0xf]
    %v368 = vld [vmem:[%s1 + $0x530] sm:$0xf]
    %v369 = vld [vmem:[%s1 + $0x534] sm:$0xf]
    %v370 = vld [vmem:[%s1 + $0x538] sm:$0xf]
    %v371 = vld [vmem:[%s1 + $0x53c] sm:$0xf]
    %v372 = vld [vmem:[%s1 + $0x540] sm:$0xf]
    %v373 = vld [vmem:[%s1 + $0x544] sm:$0xf]
    %v374 = vld [vmem:[%s1 + $0x548] sm:$0xf]
    %v375 = vld [vmem:[%s1 + $0x54c] sm:$0xf]
    %v376 = vld [vmem:[%s1 + $0x550] sm:$0xf]
    %v377 = vld [vmem:[%s1 + $0x554] sm:$0xf]
    %v378 = vld [vmem:[%s1 + $0x558] sm:$0xf]
    %v379 = vld [vmem:[%s1 + $0x55c] sm:$0xf]
    %v380 = vld [vmem:[%s1 + $0x560] sm:$0xf]
    %v381 = vld [vmem:[%s1 + $0x564] sm:$0xf]
    %v382 = vld [vmem:[%s1 + $0x568] sm:$0xf]
    %v383 = vld [vmem:[%s1 + $0x56c] sm:$0xf]
    %v384 = vld [vmem:[%s1 + $0x570] sm:$0xf]
    %v385 = vld [vmem:[%s1 + $0x574] sm:$0xf]
    %v386 = vld [vmem:[%s1 + $0x578] sm:$0xf]
    %v387 = vld [vmem:[%s1 + $0x57c] sm:$0xf]
    %v388 = vld [vmem:[%s1 + $0x580] sm:$0xf]
    %v389 = vld [vmem:[%s1 + $0x584] sm:$0xf]
    %v390 = vld [vmem:[%s1 + $0x588] sm:$0xf]
    %v391 = vld [vmem:[%s1 + $0x58c] sm:$0xf]
    %v392 = vld [vmem:[%s1 + $0x590] sm:$0xf]
    %v393 = vld [vmem:[%s1 + $0x594] sm:$0xf]
    %v394 = vld [vmem:[%s1 + $0x598] sm:$0xf]
    %v395 = vld [vmem:[%s1 + $0x59c] sm:$0xf]
    %v396 = vld [vmem:[%s1 + $0x5a0] sm:$0xf]
    %v397 = vld [vmem:[%s1 + $0x5a4] sm:$0xf]
    %v398 = vld [vmem:[%s1 + $0x5a8] sm:$0xf]
    %v399 = vld [vmem:[%s1 + $0x5ac] sm:$0xf]
    %v400 = vld [vmem:[%s1 + $0x5b0] sm:$0xf]
    %v401 = vld [vmem:[%s1 + $0x5b4] sm:$0xf]
    %v402 = vld [vmem:[%s1 + $0x5b8] sm:$0xf]
    %v403 = vld [vmem:[%s1 + $0x5bc] sm:$0xf]
    %v404 = vld [vmem:[%s1 + $0x5c0] sm:$0xf]
    %v405 = vld [vmem:[%s1 + $0x5c4] sm:$0xf]
    %v406 = vld [vmem:[%s1 + $0x5c8] sm:$0xf]
    %v407 = vld [vmem:[%s1 + $0x5cc] sm:$0xf]
    %v408 = vld [vmem:[%s1 + $0x5d0] sm:$0xf]
    %v409 = vld [vmem:[%s1 + $0x5d4] sm:$0xf]
    %v410 = vld [vmem:[%s1 + $0x5d8] sm:$0xf]
    %v411 = vld [vmem:[%s1 + $0x5dc] sm:$0xf]
    %v412 = vld [vmem:[%s1 + $0x5e0] sm:$0xf]
    %v413 = vld [vmem:[%s1 + $0x5e4] sm:$0xf]
    %v414 = vld [vmem:[%s1 + $0x5e8] sm:$0xf]
    %v415 = vld [vmem:[%s1 + $0x5ec] sm:$0xf]
    %v416 = vld [vmem:[%s1 + $0x5f0] sm:$0xf]
    %v417 = vld [vmem:[%s1 + $0x5f4] sm:$0xf]
    %v418 = vld [vmem:[%s1 + $0x5f8] sm:$0xf]
    %v419 = vld [vmem:[%s1 + $0x5fc] sm:$0xf]
    %v420 = vld [vmem:[%s1 + $0x600] sm:$0xf]
    %v421 = vld [vmem:[%s1 + $0x604] sm:$0xf]
    %v422 = vld [vmem:[%s1 + $0x608] sm:$0xf]
    %v423 = vld [vmem:[%s1 + $0x60c] sm:$0xf]
    %v424 = vld [vmem:[%s1 + $0x610] sm:$0xf]
    %v425 = vld [vmem:[%s1 + $0x614] sm:$0xf]
    %v426 = vld [vmem:[%s1 + $0x618] sm:$0xf]
    %v427 = vld [vmem:[%s1 + $0x61c] sm:$0xf]
    %v428 = vld [vmem:[%s1 + $0x620] sm:$0xf]
    %v429 = vld [vmem:[%s1 + $0x624] sm:$0xf]
    %v430 = vld [vmem:[%s1 + $0x628] sm:$0xf]
    %v431 = vld [vmem:[%s1 + $0x62c] sm:$0xf]
    %v432 = vld [vmem:[%s1 + $0x630] sm:$0xf]
    %v433 = vld [vmem:[%s1 + $0x634] sm:$0xf]
    %v434 = vld [vmem:[%s1 + $0x638] sm:$0xf]
    %v435 = vld [vmem:[%s1 + $0x63c] sm:$0xf]
    %v436 = vld [vmem:[%s1 + $0x640] sm:$0xf]
    %v437 = vld [vmem:[%s1 + $0x644] sm:$0xf]
    %v438 = vld [vmem:[%s1 + $0x648] sm:$0xf]
    %v439 = vld [vmem:[%s1 + $0x64c] sm:$0xf]
    %v440 = vld [vmem:[%s1 + $0x650] sm:$0xf]
    %v441 = vld [vmem:[%s1 + $0x654] sm:$0xf]
    %v442 = vld [vmem:[%s1 + $0x658] sm:$0xf]
    %v443 = vld [vmem:[%s1 + $0x65c] sm:$0xf]
    %v444 = vld [vmem:[%s1 + $0x660] sm:$0xf]
    %v445 = vld [vmem:[%s1 + $0x664] sm:$0xf]
    %v446 = vld [vmem:[%s1 + $0x668] sm:$0xf]
    %v447 = vld [vmem:[%s1 + $0x66c] sm:$0xf]
    %v448 = vld [vmem:[%s1 + $0x670] sm:$0xf]
    %v449 = vld [vmem:[%s1 + $0x674] sm:$0xf]
    %v450 = vld [vmem:[%s1 + $0x678] sm:$0xf]
    %v451 = vld [vmem:[%s1 + $0x67c] sm:$0xf]
    %v452 = vld [vmem:[%s1 + $0x680] sm:$0xf]
    %v453 = vld [vmem:[%s1 + $0x684] sm:$0xf]
    %v454 = vld [vmem:[%s1 + $0x688] sm:$0xf]
    %v455 = vld [vmem:[%s1 + $0x68c] sm:$0xf]
    %v456 = vld [vmem:[%s1 + $0x690] sm:$0xf]
    %v457 = vld [vmem:[%s1 + $0x694] sm:$0xf]
    %v458 = vld [vmem:[%s1 + $0x698] sm:$0xf]
    %v459 = vld [vmem:[%s1 + $0x69c] sm:$0xf]
    %v460 = vld [vmem:[%s1 + $0x6a0] sm:$0xf]
    %v461 = vld [vmem:[%s1 + $0x6a4] sm:$0xf]
    %v462 = vld [vmem:[%s1 + $0x6a8] sm:$0xf]
    %v463 = vld [vmem:[%s1 + $0x6ac] sm:$0xf]
    %v464 = vld [vmem:[%s1 + $0x6b0] sm:$0xf]
    %v465 = vld [vmem:[%s1 + $0x6b4] sm:$0xf]
    %v466 = vld [vmem:[%s1 + $0x6b8] sm:$0xf]
    %v467 = vld [vmem:[%s1 + $0x6bc] sm:$0xf]
    %v468 = vld [vmem:[%s1 + $0x6c0] sm:$0xf]
    %v469 = vld [vmem:[%s1 + $0x6c4] sm:$0xf]
    %v470 = vld [vmem:[%s1 + $0x6c8] sm:$0xf]
    %v471 = vld [vmem:[%s1 + $0x6cc] sm:$0xf]
    %v472 = vld [vmem:[%s1 + $0x6d0] sm:$0xf]
    %v473 = vld [vmem:[%s1 + $0x6d4] sm:$0xf]
    %v474 = vld [vmem:[%s1 + $0x6d8] sm:$0xf]
    %v475 = vld [vmem:[%s1 + $0x6dc] sm:$0xf]
    %v476 = vld [vmem:[%s1 + $0x6e0] sm:$0xf]
    %v477 = vld [vmem:[%s1 + $0x6e4] sm:$0xf]
    %v478 = vld [vmem:[%s1 + $0x6e8] sm:$0xf]
    %v479 = vld [vmem:[%s1 + $0x6ec] sm:$0xf]
    %v480 = vld [vmem:[%s1 + $0x6f0] sm:$0xf]
    %v481 = vld [vmem:[%s1 + $0x6f4] sm:$0xf]
    %v482 = vld [vmem:[%s1 + $0x6f8] sm:$0xf]
    %v483 = vld [vmem:[%s1 + $0x6fc] sm:$0xf]
    %v484 = vld [vmem:[%s1 + $0x700] sm:$0xf]
    %v485 = vld [vmem:[%s1 + $0x704] sm:$0xf]
    %v486 = vld [vmem:[%s1 + $0x708] sm:$0xf]
    %v487 = vld [vmem:[%s1 + $0x70c] sm:$0xf]
    %v488 = vld [vmem:[%s1 + $0x710] sm:$0xf]
    %v489 = vld [vmem:[%s1 + $0x714] sm:$0xf]
    %v490 = vld [vmem:[%s1 + $0x718] sm:$0xf]
    %v491 = vld [vmem:[%s1 + $0x71c] sm:$0xf]
    %v492 = vld [vmem:[%s1 + $0x720] sm:$0xf]
    %v493 = vld [vmem:[%s1 + $0x724] sm:$0xf]
    %v494 = vld [vmem:[%s1 + $0x728] sm:$0xf]
    %v495 = vld [vmem:[%s1 + $0x72c] sm:$0xf]
    %v496 = vld [vmem:[%s1 + $0x730] sm:$0xf]
    %v497 = vld [vmem:[%s1 + $0x734] sm:$0xf]
    %v498 = vld [vmem:[%s1 + $0x738] sm:$0xf]
    %v499 = vld [vmem:[%s1 + $0x73c] sm:$0xf]
    %v500 = vld [vmem:[%s1 + $0x740] sm:$0xf]
    %v501 = vld [vmem:[%s1 + $0x744] sm:$0xf]
    %v502 = vld [vmem:[%s1 + $0x748] sm:$0xf]
    %v503 = vld [vmem:[%s1 + $0x74c] sm:$0xf]
    %v504 = vld [vmem:[%s1 + $0x750] sm:$0xf]
    %v505 = vld [vmem:[%s1 + $0x754] sm:$0xf]
    %v506 = vld [vmem:[%s1 + $0x758] sm:$0xf]
    %v507 = vld [vmem:[%s1 + $0x75c] sm:$0xf]
    %v508 = vld [vmem:[%s1 + $0x760] sm:$0xf]
    %v509 = vld [vmem:[%s1 + $0x764] sm:$0xf]
    %v510 = vld [vmem:[%s1 + $0x768] sm:$0xf]
    %v511 = vld [vmem:[%s1 + $0x76c] sm:$0xf]
    %v512 = vld [vmem:[%s1 + $0x770] sm:$0xf]
    %v513 = vld [vmem:[%s1 + $0x774] sm:$0xf]
    %v514 = vld [vmem:[%s1 + $0x778] sm:$0xf]
    %v515 = vld [vmem:[%s1 + $0x77c] sm:$0xf]
    %v516 = vld [vmem:[%s1 + $0x780] sm:$0xf]
    %v517 = vld [vmem:[%s1 + $0x784] sm:$0xf]
    %v518 = vld [vmem:[%s1 + $0x788] sm:$0xf]
    %v519 = vld [vmem:[%s1 + $0x78c] sm:$0xf]
    %v520 = vld [vmem:[%s1 + $0x790] sm:$0xf]
    %v521 = vld [vmem:[%s1 + $0x794] sm:$0xf]
    %v522 = vld [vmem:[%s1 + $0x798] sm:$0xf]
    %v523 = vld [vmem:[%s1 + $0x79c] sm:$0xf]
    %v524 = vld [vmem:[%s1 + $0x7a0] sm:$0xf]
    %v525 = vld [vmem:[%s1 + $0x7a4] sm:$0xf]
    %v526 = vld [vmem:[%s1 + $0x7a8] sm:$0xf]
    %v527 = vld [vmem:[%s1 + $0x7ac] sm:$0xf]
    %v528 = vld [vmem:[%s1 + $0x7b0] sm:$0xf]
    %v529 = vld [vmem:[%s1 + $0x7b4] sm:$0xf]
    %v530 = vld [vmem:[%s1 + $0x7b8] sm:$0xf]
    %v531 = vld [vmem:[%s1 + $0x7bc] sm:$0xf]
    %v532 = vld [vmem:[%s1 + $0x7c0] sm:$0xf]
    %v533 = vld [vmem:[%s1 + $0x7c4] sm:$0xf]
    %v534 = vld [vmem:[%s1 + $0x7c8] sm:$0xf]
    %v535 = vld [vmem:[%s1 + $0x7cc] sm:$0xf]
    %v536 = vld [vmem:[%s1 + $0x7d0] sm:$0xf]
    %v537 = vld [vmem:[%s1 + $0x7d4] sm:$0xf]
    %v538 = vld [vmem:[%s1 + $0x7d8] sm:$0xf]
    %v539 = vld [vmem:[%s1 + $0x7dc] sm:$0xf]
    %v540 = vld [vmem:[%s1 + $0x7e0] sm:$0xf]
    %v541 = vld [vmem:[%s1 + $0x7e4] sm:$0xf]
    %v542 = vld [vmem:[%s1 + $0x7e8] sm:$0xf]
    %v543 = vld [vmem:[%s1 + $0x7ec] sm:$0xf]
    %v544 = vld [vmem:[%s1 + $0x7f0] sm:$0xf]
    %v545 = vld [vmem:[%s1 + $0x7f4] sm:$0xf]
    %v546 = vld [vmem:[%s1 + $0x7f8] sm:$0xf]
    %v547 = vld [vmem:[%s1 + $0x7fc] sm:$0xf]
    %v548 = vld [vmem:[%s1 + $0x800] sm:$0xf]
    %v549 = vld [vmem:[%s1 + $0x804] sm:$0xf]
    %v550 = vld [vmem:[%s1 + $0x808] sm:$0xf]
    %v551 = vld [vmem:[%s1 + $0x80c] sm:$0xf]
    %v552 = vld [vmem:[%s1 + $0x810] sm:$0xf]
    %v553 = vld [vmem:[%s1 + $0x814] sm:$0xf]
    %v554 = vld [vmem:[%s1 + $0x818] sm:$0xf]
    %v555 = vld [vmem:[%s1 + $0x81c] sm:$0xf]
    %v556 = vld [vmem:[%s1 + $0x820] sm:$0xf]
    %v557 = vld [vmem:[%s1 + $0x824] sm:$0xf]
    %v558 = vld [vmem:[%s1 + $0x828] sm:$0xf]
    %v559 = vld [vmem:[%s1 + $0x82c] sm:$0xf]
    %v560 = vld [vmem:[%s1 + $0x830] sm:$0xf]
    %v561 = vld [vmem:[%s1 + $0x834] sm:$0xf]
    %v562 = vld [vmem:[%s1 + $0x838] sm:$0xf]
    %v563 = vld [vmem:[%s1 + $0x83c] sm:$0xf]
    %v564 = vld [vmem:[%s1 + $0x840] sm:$0xf]
    %v565 = vld [vmem:[%s1 + $0x844] sm:$0xf]
    %v566 = vld [vmem:[%s1 + $0x848] sm:$0xf]
    %v567 = vld [vmem:[%s1 + $0x84c] sm:$0xf]
    %v568 = vld [vmem:[%s1 + $0x850] sm:$0xf]
    %v569 = vld [vmem:[%s1 + $0x854] sm:$0xf]
    %v570 = vld [vmem:[%s1 + $0x858] sm:$0xf]
    %v571 = vld [vmem:[%s1 + $0x85c] sm:$0xf]
    %v572 = vld [vmem:[%s1 + $0x860] sm:$0xf]
    %v573 = vld [vmem:[%s1 + $0x864] sm:$0xf]
    %v574 = vld [vmem:[%s1 + $0x868] sm:$0xf]
    %v575 = vld [vmem:[%s1 + $0x86c] sm:$0xf]
    %v576 = vld [vmem:[%s1 + $0x870] sm:$0xf]
    %v577 = vld [vmem:[%s1 + $0x874] sm:$0xf]
    %v578 = vld [vmem:[%s1 + $0x878] sm:$0xf]
    %v579 = vld [vmem:[%s1 + $0x87c] sm:$0xf]
    %v580 = vld [vmem:[%s1 + $0x880] sm:$0xf]
    %v581 = vld [vmem:[%s1 + $0x884] sm:$0xf]
    %v582 = vld [vmem:[%s1 + $0x888] sm:$0xf]
    %v583 = vld [vmem:[%s1 + $0x88c] sm:$0xf]
    %v584 = vld [vmem:[%s1 + $0x890] sm:$0xf]
    %v585 = vld [vmem:[%s1 + $0x894] sm:$0xf]
    %v586 = vld [vmem:[%s1 + $0x898] sm:$0xf]
    %v587 = vld [vmem:[%s1 + $0x89c] sm:$0xf]
    %v588 = vld [vmem:[%s1 + $0x8a0] sm:$0xf]
    %v589 = vld [vmem:[%s1 + $0x8a4] sm:$0xf]
    %v590 = vld [vmem:[%s1 + $0x8a8] sm:$0xf]
    %v591 = vld [vmem:[%s1 + $0x8ac] sm:$0xf]
    %v592 = vld [vmem:[%s1 + $0x8b0] sm:$0xf]
    %v593 = vld [vmem:[%s1 + $0x8b4] sm:$0xf]
    %v594 = vld [vmem:[%s1 + $0x8b8] sm:$0xf]
    %v595 = vld [vmem:[%s1 + $0x8bc] sm:$0xf]
    %v596 = vld [vmem:[%s1 + $0x8c0] sm:$0xf]
    %v597 = vld [vmem:[%s1 + $0x8c4] sm:$0xf]
    %v598 = vld [vmem:[%s1 + $0x8c8] sm:$0xf]
    %v599 = vld [vmem:[%s1 + $0x8cc] sm:$0xf]
    %v600 = vld [vmem:[%s1 + $0x8d0] sm:$0xf]
    %v601 = vld [vmem:[%s1 + $0x8d4] sm:$0xf]
    %v602 = vld [vmem:[%s1 + $0x8d8] sm:$0xf]
    %v603 = vld [vmem:[%s1 + $0x8dc] sm:$0xf]
    %v604 = vld [vmem:[%s1 + $0x8e0] sm:$0xf]
    %v605 = vld [vmem:[%s1 + $0x8e4] sm:$0xf]
    %v606 = vld [vmem:[%s1 + $0x8e8] sm:$0xf]
    %v607 = vld [vmem:[%s1 + $0x8ec] sm:$0xf]
    %v608 = vld [vmem:[%s1 + $0x8f0] sm:$0xf]
    %v609 = vld [vmem:[%s1 + $0x8f4] sm:$0xf]
    %v610 = vld [vmem:[%s1 + $0x8f8] sm:$0xf]
    %v611 = vld [vmem:[%s1 + $0x8fc] sm:$0xf]
    %v612 = vld [vmem:[%s1 + $0x900] sm:$0xf]
    %v613 = vld [vmem:[%s1 + $0x904] sm:$0xf]
    %v614 = vld [vmem:[%s1 + $0x908] sm:$0xf]
    %v615 = vld [vmem:[%s1 + $0x90c] sm:$0xf]
    %v616 = vld [vmem:[%s1 + $0x910] sm:$0xf]
    %v617 = vld [vmem:[%s1 + $0x914] sm:$0xf]
    %v618 = vld [vmem:[%s1 + $0x918] sm:$0xf]
    %v619 = vld [vmem:[%s1 + $0x91c] sm:$0xf]
    %v620 = vld [vmem:[%s1 + $0x920] sm:$0xf]
    %v621 = vld [vmem:[%s1 + $0x924] sm:$0xf]
    %v622 = vld [vmem:[%s1 + $0x928] sm:$0xf]
    %v623 = vld [vmem:[%s1 + $0x92c] sm:$0xf]
    %v624 = vld [vmem:[%s1 + $0x930] sm:$0xf]
    %v625 = vld [vmem:[%s1 + $0x934] sm:$0xf]
    %v626 = vld [vmem:[%s1 + $0x938] sm:$0xf]
    %v627 = vld [vmem:[%s1 + $0x93c] sm:$0xf]
    %v628 = vld [vmem:[%s1 + $0x940] sm:$0xf]
    %v629 = vld [vmem:[%s1 + $0x944] sm:$0xf]
    %v630 = vld [vmem:[%s1 + $0x948] sm:$0xf]
    %v631 = vld [vmem:[%s1 + $0x94c] sm:$0xf]
    %v632 = vld [vmem:[%s1 + $0x950] sm:$0xf]
    %v633 = vld [vmem:[%s1 + $0x954] sm:$0xf]
    %v634 = vld [vmem:[%s1 + $0x958] sm:$0xf]
    %v635 = vld [vmem:[%s1 + $0x95c] sm:$0xf]
    %v636 = vld [vmem:[%s1 + $0x960] sm:$0xf]
    %v637 = vld [vmem:[%s1 + $0x964] sm:$0xf]
    %v638 = vld [vmem:[%s1 + $0x968] sm:$0xf]
    %v639 = vld [vmem:[%s1 + $0x96c] sm:$0xf]
    %v640 = vld [vmem:[%s1 + $0x970] sm:$0xf]
    %v641 = vld [vmem:[%s1 + $0x974] sm:$0xf]
    %v642 = vld [vmem:[%s1 + $0x978] sm:$0xf]
    %v643 = vld [vmem:[%s1 + $0x97c] sm:$0xf]
    %v644 = vld [vmem:[%s1 + $0x980] sm:$0xf]
    %v645 = vld [vmem:[%s1 + $0x984] sm:$0xf]
    %v646 = vld [vmem:[%s1 + $0x988] sm:$0xf]
    %v647 = vld [vmem:[%s1 + $0x98c] sm:$0xf]
    %v648 = vld [vmem:[%s1 + $0x990] sm:$0xf]
    %v649 = vld [vmem:[%s1 + $0x994] sm:$0xf]
    %v650 = vld [vmem:[%s1 + $0x998] sm:$0xf]
    %v651 = vld [vmem:[%s1 + $0x99c] sm:$0xf]
    %v652 = vld [vmem:[%s1 + $0x9a0] sm:$0xf]
    %v653 = vld [vmem:[%s1 + $0x9a4] sm:$0xf]
    %v654 = vld [vmem:[%s1 + $0x9a8] sm:$0xf]
    %v655 = vld [vmem:[%s1 + $0x9ac] sm:$0xf]
    %v656 = vld [vmem:[%s1 + $0x9b0] sm:$0xf]
    %v657 = vld [vmem:[%s1 + $0x9b4] sm:$0xf]
    %v658 = vld [vmem:[%s1 + $0x9b8] sm:$0xf]
    %v659 = vld [vmem:[%s1 + $0x9bc] sm:$0xf]
    %v660 = vld [vmem:[%s1 + $0x9c0] sm:$0xf]
    %v661 = vld [vmem:[%s1 + $0x9c4] sm:$0xf]
    %v662 = vld [vmem:[%s1 + $0x9c8] sm:$0xf]
    %v663 = vld [vmem:[%s1 + $0x9cc] sm:$0xf]
    %v664 = vld [vmem:[%s1 + $0x9d0] sm:$0xf]
    %v665 = vld [vmem:[%s1 + $0x9d4] sm:$0xf]
    %v666 = vld [vmem:[%s1 + $0x9d8] sm:$0xf]
    %v667 = vld [vmem:[%s1 + $0x9dc] sm:$0xf]
    %v668 = vld [vmem:[%s1 + $0x9e0] sm:$0xf]
    %v669 = vld [vmem:[%s1 + $0x9e4] sm:$0xf]
    %v670 = vld [vmem:[%s1 + $0x9e8] sm:$0xf]
    %v671 = vld [vmem:[%s1 + $0x9ec] sm:$0xf]
    %v672 = vld [vmem:[%s1 + $0x9f0] sm:$0xf]
    %v673 = vld [vmem:[%s1 + $0x9f4] sm:$0xf]
    %v674 = vld [vmem:[%s1 + $0x9f8] sm:$0xf]
    %v675 = vld [vmem:[%s1 + $0x9fc] sm:$0xf]
    %v676 = vld [vmem:[%s1 + $0xa00] sm:$0xf]
    %v677 = vld [vmem:[%s1 + $0xa04] sm:$0xf]
    %v678 = vld [vmem:[%s1 + $0xa08] sm:$0xf]
    %v679 = vld [vmem:[%s1 + $0xa0c] sm:$0xf]
    %v680 = vld [vmem:[%s1 + $0xa10] sm:$0xf]
    %v681 = vld [vmem:[%s1 + $0xa14] sm:$0xf]
    %v682 = vld [vmem:[%s1 + $0xa18] sm:$0xf]
    %v683 = vld [vmem:[%s1 + $0xa1c] sm:$0xf]
    %v684 = vld [vmem:[%s1 + $0xa20] sm:$0xf]
    %v685 = vld [vmem:[%s1 + $0xa24] sm:$0xf]
    %v686 = vld [vmem:[%s1 + $0xa28] sm:$0xf]
    %v687 = vld [vmem:[%s1 + $0xa2c] sm:$0xf]
    %v688 = vld [vmem:[%s1 + $0xa30] sm:$0xf]
    %v689 = vld [vmem:[%s1 + $0xa34] sm:$0xf]
    %v690 = vld [vmem:[%s1 + $0xa38] sm:$0xf]
    %v691 = vld [vmem:[%s1 + $0xa3c] sm:$0xf]
    %v692 = vld [vmem:[%s1 + $0xa40] sm:$0xf]
    %v693 = vld [vmem:[%s1 + $0xa44] sm:$0xf]
    %v694 = vld [vmem:[%s1 + $0xa48] sm:$0xf]
    %v695 = vld [vmem:[%s1 + $0xa4c] sm:$0xf]
    %v696 = vld [vmem:[%s1 + $0xa50] sm:$0xf]
    %v697 = vld [vmem:[%s1 + $0xa54] sm:$0xf]
    %v698 = vld [vmem:[%s1 + $0xa58] sm:$0xf]
    %v699 = vld [vmem:[%s1 + $0xa5c] sm:$0xf]
    %v700 = vld [vmem:[%s1 + $0xa60] sm:$0xf]
    %v701 = vld [vmem:[%s1 + $0xa64] sm:$0xf]
    %v702 = vld [vmem:[%s1 + $0xa68] sm:$0xf]
    %v703 = vld [vmem:[%s1 + $0xa6c] sm:$0xf]
    %v704 = vld [vmem:[%s1 + $0xa70] sm:$0xf]
    %v705 = vld [vmem:[%s1 + $0xa74] sm:$0xf]
    %v706 = vld [vmem:[%s1 + $0xa78] sm:$0xf]
    %v707 = vld [vmem:[%s1 + $0xa7c] sm:$0xf]
    %v708 = vld [vmem:[%s1 + $0xa80] sm:$0xf]
    %v709 = vld [vmem:[%s1 + $0xa84] sm:$0xf]
    %v710 = vld [vmem:[%s1 + $0xa88] sm:$0xf]
    %v711 = vld [vmem:[%s1 + $0xa8c] sm:$0xf]
    %v712 = vld [vmem:[%s1 + $0xa90] sm:$0xf]
    %v713 = vld [vmem:[%s1 + $0xa94] sm:$0xf]
    %v714 = vld [vmem:[%s1 + $0xa98] sm:$0xf]
    %v715 = vld [vmem:[%s1 + $0xa9c] sm:$0xf]
    %v716 = vld [vmem:[%s1 + $0xaa0] sm:$0xf]
    %v717 = vld [vmem:[%s1 + $0xaa4] sm:$0xf]
    %v718 = vld [vmem:[%s1 + $0xaa8] sm:$0xf]
    %v719 = vld [vmem:[%s1 + $0xaac] sm:$0xf]
    %v720 = vld [vmem:[%s1 + $0xab0] sm:$0xf]
    %v721 = vld [vmem:[%s1 + $0xab4] sm:$0xf]
    %v722 = vld [vmem:[%s1 + $0xab8] sm:$0xf]
    %v723 = vld [vmem:[%s1 + $0xabc] sm:$0xf]
    %v724 = vld [vmem:[%s1 + $0xac0] sm:$0xf]
    %v725 = vld [vmem:[%s1 + $0xac4] sm:$0xf]
    %v726 = vld [vmem:[%s1 + $0xac8] sm:$0xf]
    %v727 = vld [vmem:[%s1 + $0xacc] sm:$0xf]
    %v728 = vld [vmem:[%s1 + $0xad0] sm:$0xf]
    %v729 = vld [vmem:[%s1 + $0xad4] sm:$0xf]
    %v730 = vld [vmem:[%s1 + $0xad8] sm:$0xf]
    %v731 = vld [vmem:[%s1 + $0xadc] sm:$0xf]
    %v732 = vld [vmem:[%s1 + $0xae0] sm:$0xf]
    %v733 = vld [vmem:[%s1 + $0xae4] sm:$0xf]
    %v734 = vld [vmem:[%s1 + $0xae8] sm:$0xf]
    %v735 = vld [vmem:[%s1 + $0xaec] sm:$0xf]
    %v736 = vld [vmem:[%s1 + $0xaf0] sm:$0xf]
    %v737 = vld [vmem:[%s1 + $0xaf4] sm:$0xf]
    %v738 = vld [vmem:[%s1 + $0xaf8] sm:$0xf]
    %v739 = vld [vmem:[%s1 + $0xafc] sm:$0xf]
    %v740 = vld [vmem:[%s1 + $0xb00] sm:$0xf]
    %v741 = vld [vmem:[%s1 + $0xb04] sm:$0xf]
    %v742 = vld [vmem:[%s1 + $0xb08] sm:$0xf]
    %v743 = vld [vmem:[%s1 + $0xb0c] sm:$0xf]
    %v744 = vld [vmem:[%s1 + $0xb10] sm:$0xf]
    %v745 = vld [vmem:[%s1 + $0xb14] sm:$0xf]
    %v746 = vld [vmem:[%s1 + $0xb18] sm:$0xf]
    %v747 = vld [vmem:[%s1 + $0xb1c] sm:$0xf]
    %v748 = vld [vmem:[%s1 + $0xb20] sm:$0xf]
    %v749 = vld [vmem:[%s1 + $0xb24] sm:$0xf]
    %v750 = vld [vmem:[%s1 + $0xb28] sm:$0xf]
    %v751 = vld [vmem:[%s1 + $0xb2c] sm:$0xf]
    %v752 = vld [vmem:[%s1 + $0xb30] sm:$0xf]
    %v753 = vld [vmem:[%s1 + $0xb34] sm:$0xf]
    %v754 = vld [vmem:[%s1 + $0xb38] sm:$0xf]
    %v755 = vld [vmem:[%s1 + $0xb3c] sm:$0xf]
    %v756 = vld [vmem:[%s1 + $0xb40] sm:$0xf]
    %v757 = vld [vmem:[%s1 + $0xb44] sm:$0xf]
    %v758 = vld [vmem:[%s1 + $0xb48] sm:$0xf]
    %v759 = vld [vmem:[%s1 + $0xb4c] sm:$0xf]
    %v760 = vld [vmem:[%s1 + $0xb50] sm:$0xf]
    %v761 = vld [vmem:[%s1 + $0xb54] sm:$0xf]
    %v762 = vld [vmem:[%s1 + $0xb58] sm:$0xf]
    %v763 = vld [vmem:[%s1 + $0xb5c] sm:$0xf]
    %v764 = vld [vmem:[%s1 + $0xb60] sm:$0xf]
    %v765 = vld [vmem:[%s1 + $0xb64] sm:$0xf]
    %v766 = vld [vmem:[%s1 + $0xb68] sm:$0xf]
    %v767 = vld [vmem:[%s1 + $0xb6c] sm:$0xf]
    %v768 = vld [vmem:[%s1 + $0xb70] sm:$0xf]
    %v769 = vld [vmem:[%s1 + $0xb74] sm:$0xf]
    %v770 = vld [vmem:[%s1 + $0xb78] sm:$0xf]
    %v771 = vld [vmem:[%s1 + $0xb7c] sm:$0xf]
    %v772 = vld [vmem:[%s1 + $0xb80] sm:$0xf]
    %v773 = vld [vmem:[%s1 + $0xb84] sm:$0xf]
    %v774 = vld [vmem:[%s1 + $0xb88] sm:$0xf]
    %v775 = vld [vmem:[%s1 + $0xb8c] sm:$0xf]
    %v776 = vld [vmem:[%s1 + $0xb90] sm:$0xf]
    %v777 = vld [vmem:[%s1 + $0xb94] sm:$0xf]
    %v778 = vld [vmem:[%s1 + $0xb98] sm:$0xf]
    %v779 = vld [vmem:[%s1 + $0xb9c] sm:$0xf]
    %v780 = vld [vmem:[%s1 + $0xba0] sm:$0xf]
    %v781 = vld [vmem:[%s1 + $0xba4] sm:$0xf]
    %v782 = vld [vmem:[%s1 + $0xba8] sm:$0xf]
    %v783 = vld [vmem:[%s1 + $0xbac] sm:$0xf]
    %v784 = vld [vmem:[%s1 + $0xbb0] sm:$0xf]
    %v785 = vld [vmem:[%s1 + $0xbb4] sm:$0xf]
    %v786 = vld [vmem:[%s1 + $0xbb8] sm:$0xf]
    %v787 = vld [vmem:[%s1 + $0xbbc] sm:$0xf]
    %v788 = vld [vmem:[%s1 + $0xbc0] sm:$0xf]
    %v789 = vld [vmem:[%s1 + $0xbc4] sm:$0xf]
    %v790 = vld [vmem:[%s1 + $0xbc8] sm:$0xf]
    %v791 = vld [vmem:[%s1 + $0xbcc] sm:$0xf]
    %v792 = vld [vmem:[%s1 + $0xbd0] sm:$0xf]
    %v793 = vld [vmem:[%s1 + $0xbd4] sm:$0xf]
    %v794 = vld [vmem:[%s1 + $0xbd8] sm:$0xf]
    %v795 = vld [vmem:[%s1 + $0xbdc] sm:$0xf]
    %v796 = vld [vmem:[%s1 + $0xbe0] sm:$0xf]
    %v797 = vld [vmem:[%s1 + $0xbe4] sm:$0xf]
    %v798 = vld [vmem:[%s1 + $0xbe8] sm:$0xf]
    %v799 = vld [vmem:[%s1 + $0xbec] sm:$0xf]
    %v800 = vld [vmem:[%s1 + $0xbf0] sm:$0xf]
    %v801 = vld [vmem:[%s1 + $0xbf4] sm:$0xf]
    %v802 = vld [vmem:[%s1 + $0xbf8] sm:$0xf]
    %v803 = vld [vmem:[%s1 + $0xbfc] sm:$0xf]
    %v804 = vld [vmem:[%s1 + $0xc00] sm:$0xf]
    %v805 = vld [vmem:[%s1 + $0xc04] sm:$0xf]
    %v806 = vld [vmem:[%s1 + $0xc08] sm:$0xf]
    %v807 = vld [vmem:[%s1 + $0xc0c] sm:$0xf]
    %v808 = vld [vmem:[%s1 + $0xc10] sm:$0xf]
    %v809 = vld [vmem:[%s1 + $0xc14] sm:$0xf]
    %v810 = vld [vmem:[%s1 + $0xc18] sm:$0xf]
    %v811 = vld [vmem:[%s1 + $0xc1c] sm:$0xf]
    %v812 = vld [vmem:[%s1 + $0xc20] sm:$0xf]
    %v813 = vld [vmem:[%s1 + $0xc24] sm:$0xf]
    %v814 = vld [vmem:[%s1 + $0xc28] sm:$0xf]
    %v815 = vld [vmem:[%s1 + $0xc2c] sm:$0xf]
    %v816 = vld [vmem:[%s1 + $0xc30] sm:$0xf]
    %v817 = vld [vmem:[%s1 + $0xc34] sm:$0xf]
    %v818 = vld [vmem:[%s1 + $0xc38] sm:$0xf]
    %v819 = vld [vmem:[%s1 + $0xc3c] sm:$0xf]
    %v820 = vld [vmem:[%s1 + $0xc40] sm:$0xf]
    %v821 = vld [vmem:[%s1 + $0xc44] sm:$0xf]
    %v822 = vld [vmem:[%s1 + $0xc48] sm:$0xf]
    %v823 = vld [vmem:[%s1 + $0xc4c] sm:$0xf]
    %v824 = vld [vmem:[%s1 + $0xc50] sm:$0xf]
    %v825 = vld [vmem:[%s1 + $0xc54] sm:$0xf]
    %v826 = vld [vmem:[%s1 + $0xc58] sm:$0xf]
    %v827 = vld [vmem:[%s1 + $0xc5c] sm:$0xf]
    %v828 = vld [vmem:[%s1 + $0xc60] sm:$0xf]
    %v829 = vld [vmem:[%s1 + $0xc64] sm:$0xf]
    %v830 = vld [vmem:[%s1 + $0xc68] sm:$0xf]
    %v831 = vld [vmem:[%s1 + $0xc6c] sm:$0xf]
    %v832 = vld [vmem:[%s1 + $0xc70] sm:$0xf]
    %v833 = vld [vmem:[%s1 + $0xc74] sm:$0xf]
    %v834 = vld [vmem:[%s1 + $0xc78] sm:$0xf]
    %v835 = vld [vmem:[%s1 + $0xc7c] sm:$0xf]
    %v836 = vld [vmem:[%s1 + $0xc80] sm:$0xf]
    %v837 = vld [vmem:[%s1 + $0xc84] sm:$0xf]
    %v838 = vld [vmem:[%s1 + $0xc88] sm:$0xf]
    %v839 = vld [vmem:[%s1 + $0xc8c] sm:$0xf]
    %v840 = vld [vmem:[%s1 + $0xc90] sm:$0xf]
    %v841 = vld [vmem:[%s1 + $0xc94] sm:$0xf]
    %v842 = vld [vmem:[%s1 + $0xc98] sm:$0xf]
    %v843 = vld [vmem:[%s1 + $0xc9c] sm:$0xf]
    %v844 = vld [vmem:[%s1 + $0xca0] sm:$0xf]
    %v845 = vld [vmem:[%s1 + $0xca4] sm:$0xf]
    %v846 = vld [vmem:[%s1 + $0xca8] sm:$0xf]
    %v847 = vld [vmem:[%s1 + $0xcac] sm:$0xf]
    %v848 = vld [vmem:[%s1 + $0xcb0] sm:$0xf]
    %v849 = vld [vmem:[%s1 + $0xcb4] sm:$0xf]
    %v850 = vld [vmem:[%s1 + $0xcb8] sm:$0xf]
    %v851 = vld [vmem:[%s1 + $0xcbc] sm:$0xf]
    %v852 = vld [vmem:[%s1 + $0xcc0] sm:$0xf]
    %v853 = vld [vmem:[%s1 + $0xcc4] sm:$0xf]
    %v854 = vld [vmem:[%s1 + $0xcc8] sm:$0xf]
    %v855 = vld [vmem:[%s1 + $0xccc] sm:$0xf]
    %v856 = vld [vmem:[%s1 + $0xcd0] sm:$0xf]
    %v857 = vld [vmem:[%s1 + $0xcd4] sm:$0xf]
    %v858 = vld [vmem:[%s1 + $0xcd8] sm:$0xf]
    %v859 = vld [vmem:[%s1 + $0xcdc] sm:$0xf]
    %v860 = vld [vmem:[%s1 + $0xce0] sm:$0xf]
    %v861 = vld [vmem:[%s1 + $0xce4] sm:$0xf]
    %v862 = vld [vmem:[%s1 + $0xce8] sm:$0xf]
    %v863 = vld [vmem:[%s1 + $0xcec] sm:$0xf]
    %v864 = vld [vmem:[%s1 + $0xcf0] sm:$0xf]
    %v865 = vld [vmem:[%s1 + $0xcf4] sm:$0xf]
    %v866 = vld [vmem:[%s1 + $0xcf8] sm:$0xf]
    %v867 = vld [vmem:[%s1 + $0xcfc] sm:$0xf]
    %v868 = vld [vmem:[%s1 + $0xd00] sm:$0xf]
    %v869 = vld [vmem:[%s1 + $0xd04] sm:$0xf]
    %v870 = vld [vmem:[%s1 + $0xd08] sm:$0xf]
    %v871 = vld [vmem:[%s1 + $0xd0c] sm:$0xf]
    %v872 = vld [vmem:[%s1 + $0xd10] sm:$0xf]
    %v873 = vld [vmem:[%s1 + $0xd14] sm:$0xf]
    %v874 = vld [vmem:[%s1 + $0xd18] sm:$0xf]
    %v875 = vld [vmem:[%s1 + $0xd1c] sm:$0xf]
    %v876 = vld [vmem:[%s1 + $0xd20] sm:$0xf]
    %v877 = vld [vmem:[%s1 + $0xd24] sm:$0xf]
    %v878 = vld [vmem:[%s1 + $0xd28] sm:$0xf]
    %v879 = vld [vmem:[%s1 + $0xd2c] sm:$0xf]
    %v880 = vld [vmem:[%s1 + $0xd30] sm:$0xf]
    %v881 = vld [vmem:[%s1 + $0xd34] sm:$0xf]
    %v882 = vld [vmem:[%s1 + $0xd38] sm:$0xf]
    %v883 = vld [vmem:[%s1 + $0xd3c] sm:$0xf]
    %v884 = vld [vmem:[%s1 + $0xd40] sm:$0xf]
    %v885 = vld [vmem:[%s1 + $0xd44] sm:$0xf]
    %v886 = vld [vmem:[%s1 + $0xd48] sm:$0xf]
    %v887 = vld [vmem:[%s1 + $0xd4c] sm:$0xf]
    %v888 = vld [vmem:[%s1 + $0xd50] sm:$0xf]
    %v889 = vld [vmem:[%s1 + $0xd54] sm:$0xf]
    %v890 = vld [vmem:[%s1 + $0xd58] sm:$0xf]
    %v891 = vld [vmem:[%s1 + $0xd5c] sm:$0xf]
    %v892 = vld [vmem:[%s1 + $0xd60] sm:$0xf]
    %v893 = vld [vmem:[%s1 + $0xd64] sm:$0xf]
    %v894 = vld [vmem:[%s1 + $0xd68] sm:$0xf]
    %v895 = vld [vmem:[%s1 + $0xd6c] sm:$0xf]
    %v896 = vld [vmem:[%s1 + $0xd70] sm:$0xf]
    %v897 = vld [vmem:[%s1 + $0xd74] sm:$0xf]
    %v898 = vld [vmem:[%s1 + $0xd78] sm:$0xf]
    %v899 = vld [vmem:[%s1 + $0xd7c] sm:$0xf]
    %v900 = vld [vmem:[%s1 + $0xd80] sm:$0xf]
    %v901 = vld [vmem:[%s1 + $0xd84] sm:$0xf]
    %v902 = vld [vmem:[%s1 + $0xd88] sm:$0xf]
    %v903 = vld [vmem:[%s1 + $0xd8c] sm:$0xf]
    %v904 = vld [vmem:[%s1 + $0xd90] sm:$0xf]
    %v905 = vld [vmem:[%s1 + $0xd94] sm:$0xf]
    %v906 = vld [vmem:[%s1 + $0xd98] sm:$0xf]
    %v907 = vld [vmem:[%s1 + $0xd9c] sm:$0xf]
    %v908 = vld [vmem:[%s1 + $0xda0] sm:$0xf]
    %v909 = vld [vmem:[%s1 + $0xda4] sm:$0xf]
    %v910 = vld [vmem:[%s1 + $0xda8] sm:$0xf]
    %v911 = vld [vmem:[%s1 + $0xdac] sm:$0xf]
    %v912 = vld [vmem:[%s1 + $0xdb0] sm:$0xf]
    %v913 = vld [vmem:[%s1 + $0xdb4] sm:$0xf]
    %v914 = vld [vmem:[%s1 + $0xdb8] sm:$0xf]
    %v915 = vld [vmem:[%s1 + $0xdbc] sm:$0xf]
    %v916 = vld [vmem:[%s1 + $0xdc0] sm:$0xf]
    %v917 = vld [vmem:[%s1 + $0xdc4] sm:$0xf]
    %v918 = vld [vmem:[%s1 + $0xdc8] sm:$0xf]
    %v919 = vld [vmem:[%s1 + $0xdcc] sm:$0xf]
    %v920 = vld [vmem:[%s1 + $0xdd0] sm:$0xf]
    %v921 = vld [vmem:[%s1 + $0xdd4] sm:$0xf]
    %v922 = vld [vmem:[%s1 + $0xdd8] sm:$0xf]
    %v923 = vld [vmem:[%s1 + $0xddc] sm:$0xf]
    %v924 = vld [vmem:[%s1 + $0xde0] sm:$0xf]
    %v925 = vld [vmem:[%s1 + $0xde4] sm:$0xf]
    %v926 = vld [vmem:[%s1 + $0xde8] sm:$0xf]
    %v927 = vld [vmem:[%s1 + $0xdec] sm:$0xf]
    %v928 = vld [vmem:[%s1 + $0xdf0] sm:$0xf]
    %v929 = vld [vmem:[%s1 + $0xdf4] sm:$0xf]
    %v930 = vld [vmem:[%s1 + $0xdf8] sm:$0xf]
    %v931 = vld [vmem:[%s1 + $0xdfc] sm:$0xf]
    %v932 = vld [vmem:[%s1 + $0xe00] sm:$0xf]
    %v933 = vld [vmem:[%s1 + $0xe04] sm:$0xf]
    %v934 = vld [vmem:[%s1 + $0xe08] sm:$0xf]
    %v935 = vld [vmem:[%s1 + $0xe0c] sm:$0xf]
    %v936 = vld [vmem:[%s1 + $0xe10] sm:$0xf]
    %v937 = vld [vmem:[%s1 + $0xe14] sm:$0xf]
    %v938 = vld [vmem:[%s1 + $0xe18] sm:$0xf]
    %v939 = vld [vmem:[%s1 + $0xe1c] sm:$0xf]
    %v940 = vld [vmem:[%s1 + $0xe20] sm:$0xf]
    %v941 = vld [vmem:[%s1 + $0xe24] sm:$0xf]
    %v942 = vld [vmem:[%s1 + $0xe28] sm:$0xf]
    %v943 = vld [vmem:[%s1 + $0xe2c] sm:$0xf]
    %v944 = vld [vmem:[%s1 + $0xe30] sm:$0xf]
    %v945 = vld [vmem:[%s1 + $0xe34] sm:$0xf]
    %v946 = vld [vmem:[%s1 + $0xe38] sm:$0xf]
    %v947 = vld [vmem:[%s1 + $0xe3c] sm:$0xf]
    %v948 = vld [vmem:[%s1 + $0xe40] sm:$0xf]
    %v949 = vld [vmem:[%s1 + $0xe44] sm:$0xf]
    %v950 = vld [vmem:[%s1 + $0xe48] sm:$0xf]
    %v951 = vld [vmem:[%s1 + $0xe4c] sm:$0xf]
    %v952 = vld [vmem:[%s1 + $0xe50] sm:$0xf]
    %v953 = vld [vmem:[%s1 + $0xe54] sm:$0xf]
    %v954 = vld [vmem:[%s1 + $0xe58] sm:$0xf]
    %v955 = vld [vmem:[%s1 + $0xe5c] sm:$0xf]
    %v956 = vld [vmem:[%s1 + $0xe60] sm:$0xf]
    %v957 = vld [vmem:[%s1 + $0xe64] sm:$0xf]
    %v958 = vld [vmem:[%s1 + $0xe68] sm:$0xf]
    %v959 = vld [vmem:[%s1 + $0xe6c] sm:$0xf]
    %v960 = vld [vmem:[%s1 + $0xe70] sm:$0xf]
    %v961 = vld [vmem:[%s1 + $0xe74] sm:$0xf]
    %v962 = vld [vmem:[%s1 + $0xe78] sm:$0xf]
    %v963 = vld [vmem:[%s1 + $0xe7c] sm:$0xf]
    %v964 = vld [vmem:[%s1 + $0xe80] sm:$0xf]
    %v965 = vld [vmem:[%s1 + $0xe84] sm:$0xf]
    %v966 = vld [vmem:[%s1 + $0xe88] sm:$0xf]
    %v967 = vld [vmem:[%s1 + $0xe8c] sm:$0xf]
    %v968 = vld [vmem:[%s1 + $0xe90] sm:$0xf]
    %v969 = vld [vmem:[%s1 + $0xe94] sm:$0xf]
    %v970 = vld [vmem:[%s1 + $0xe98] sm:$0xf]
    %v971 = vld [vmem:[%s1 + $0xe9c] sm:$0xf]
    %v972 = vld [vmem:[%s1 + $0xea0] sm:$0xf]
    %v973 = vld [vmem:[%s1 + $0xea4] sm:$0xf]
    %v974 = vld [vmem:[%s1 + $0xea8] sm:$0xf]
    %v975 = vld [vmem:[%s1 + $0xeac] sm:$0xf]
    %v976 = vld [vmem:[%s1 + $0xeb0] sm:$0xf]
    %v977 = vld [vmem:[%s1 + $0xeb4] sm:$0xf]
    %v978 = vld [vmem:[%s1 + $0xeb8] sm:$0xf]
    %v979 = vld [vmem:[%s1 + $0xebc] sm:$0xf]
    %v980 = vld [vmem:[%s1 + $0xec0] sm:$0xf]
    %v981 = vld [vmem:[%s1 + $0xec4] sm:$0xf]
    %v982 = vld [vmem:[%s1 + $0xec8] sm:$0xf]
    %v983 = vld [vmem:[%s1 + $0xecc] sm:$0xf]
    %v984 = vld [vmem:[%s1 + $0xed0] sm:$0xf]
    %v985 = vld [vmem:[%s1 + $0xed4] sm:$0xf]
    %v986 = vld [vmem:[%s1 + $0xed8] sm:$0xf]
    %v987 = vld [vmem:[%s1 + $0xedc] sm:$0xf]
    %v988 = vld [vmem:[%s1 + $0xee0] sm:$0xf]
    %v989 = vld [vmem:[%s1 + $0xee4] sm:$0xf]
    %v990 = vld [vmem:[%s1 + $0xee8] sm:$0xf]
    %v991 = vld [vmem:[%s1 + $0xeec] sm:$0xf]
    %v992 = vld [vmem:[%s1 + $0xef0] sm:$0xf]
    %v993 = vld [vmem:[%s1 + $0xef4] sm:$0xf]
    %v994 = vld [vmem:[%s1 + $0xef8] sm:$0xf]
    %v995 = vld [vmem:[%s1 + $0xefc] sm:$0xf]
    %v996 = vld [vmem:[%s1 + $0xf00] sm:$0xf]
    %v997 = vld [vmem:[%s1 + $0xf04] sm:$0xf]
    %v998 = vld [vmem:[%s1 + $0xf08] sm:$0xf]
    %v999 = vld [vmem:[%s1 + $0xf0c] sm:$0xf]
    %v1000 = vld [vmem:[%s1 + $0xf10] sm:$0xf]
    %v1001 = vld [vmem:[%s1 + $0xf14] sm:$0xf]
    %v1002 = vld [vmem:[%s1 + $0xf18] sm:$0xf]
    %v1003 = vld [vmem:[%s1 + $0xf1c] sm:$0xf]
    %v1004 = vld [vmem:[%s1 + $0xf20] sm:$0xf]
    %v1005 = vld [vmem:[%s1 + $0xf24] sm:$0xf]
    %v1006 = vld [vmem:[%s1 + $0xf28] sm:$0xf]
    %v1007 = vld [vmem:[%s1 + $0xf2c] sm:$0xf]
    %v1008 = vld [vmem:[%s1 + $0xf30] sm:$0xf]
    %v1009 = vld [vmem:[%s1 + $0xf34] sm:$0xf]
    %v1010 = vld [vmem:[%s1 + $0xf38] sm:$0xf]
    %v1011 = vld [vmem:[%s1 + $0xf3c] sm:$0xf]
    %v1012 = vld [vmem:[%s1 + $0xf40] sm:$0xf]
    %v1013 = vld [vmem:[%s1 + $0xf44] sm:$0xf]
    %v1014 = vld [vmem:[%s1 + $0xf48] sm:$0xf]
    %v1015 = vld [vmem:[%s1 + $0xf4c] sm:$0xf]
    %v1016 = vld [vmem:[%s1 + $0xf50] sm:$0xf]
    %v1017 = vld [vmem:[%s1 + $0xf54] sm:$0xf]
    %v1018 = vld [vmem:[%s1 + $0xf58] sm:$0xf]
    %v1019 = vld [vmem:[%s1 + $0xf5c] sm:$0xf]
    %v1020 = vld [vmem:[%s1 + $0xf60] sm:$0xf]
    %v1021 = vld [vmem:[%s1 + $0xf64] sm:$0xf]
    %v1022 = vld [vmem:[%s1 + $0xf68] sm:$0xf]
    %v1023 = vld [vmem:[%s1 + $0xf6c] sm:$0xf]
    %v1024 = vld [vmem:[%s1 + $0xf70] sm:$0xf]
    %v1025 = vld [vmem:[%s1 + $0xf74] sm:$0xf]
    %v1026 = vld [vmem:[%s1 + $0xf78] sm:$0xf]
    %v1027 = vld [vmem:[%s1 + $0xf7c] sm:$0xf]
    %v1028 = vld [vmem:[%s1 + $0xf80] sm:$0xf]
    %v1029 = vld [vmem:[%s1 + $0xf84] sm:$0xf]
    %v1030 = vld [vmem:[%s1 + $0xf88] sm:$0xf]
    %v1031 = vld [vmem:[%s1 + $0xf8c] sm:$0xf]
    %v1032 = vld [vmem:[%s1 + $0xf90] sm:$0xf]
    %v1033 = vld [vmem:[%s1 + $0xf94] sm:$0xf]
    %v1034 = vld [vmem:[%s1 + $0xf98] sm:$0xf]
    %v1035 = vld [vmem:[%s1 + $0xf9c] sm:$0xf]
    %v1036 = vld [vmem:[%s1 + $0xfa0] sm:$0xf]
    %v1037 = vld [vmem:[%s1 + $0xfa4] sm:$0xf]
    %v1038 = vld [vmem:[%s1 + $0xfa8] sm:$0xf]
    %v1039 = vld [vmem:[%s1 + $0xfac] sm:$0xf]
    %v1040 = vld [vmem:[%s1 + $0xfb0] sm:$0xf]
    %v1041 = vld [vmem:[%s1 + $0xfb4] sm:$0xf]
    %v1042 = vld [vmem:[%s1 + $0xfb8] sm:$0xf]
    %v1043 = vld [vmem:[%s1 + $0xfbc] sm:$0xf]
    %v1044 = vld [vmem:[%s1 + $0xfc0] sm:$0xf]
    %v1045 = vld [vmem:[%s1 + $0xfc4] sm:$0xf]
    %v1046 = vld [vmem:[%s1 + $0xfc8] sm:$0xf]
    %v1047 = vld [vmem:[%s1 + $0xfcc] sm:$0xf]
    %v1048 = vld [vmem:[%s1 + $0xfd0] sm:$0xf]
    %v1049 = vld [vmem:[%s1 + $0xfd4] sm:$0xf]
    %v1050 = vld [vmem:[%s1 + $0xfd8] sm:$0xf]
    %v1051 = vld [vmem:[%s1 + $0xfdc] sm:$0xf]
    %v1052 = vld [vmem:[%s1 + $0xfe0] sm:$0xf]
    %v1053 = vld [vmem:[%s1 + $0xfe4] sm:$0xf]
    %v1054 = vld [vmem:[%s1 + $0xfe8] sm:$0xf]
    %v1055 = vld [vmem:[%s1 + $0xfec] sm:$0xf]
    %v1056 = vld [vmem:[%s1 + $0xff0] sm:$0xf]
    %v1057 = vld [vmem:[%s1 + $0xff4] sm:$0xf]
    %v1058 = vld [vmem:[%s1 + $0xff8] sm:$0xf]
    %v1059 = vld [vmem:[%s1 + $0xffc] sm:$0xf]
    %v1060 = vld [vmem:[%s1 + $0x1000] sm:$0xf]
    %v1061 = vld [vmem:[%s1 + $0x1004] sm:$0xf]
    %v1062 = vld [vmem:[%s1 + $0x1008] sm:$0xf]
    %v1063 = vld [vmem:[%s1 + $0x100c] sm:$0xf]
    %v1064 = vld [vmem:[%s1 + $0x1010] sm:$0xf]
    %v1065 = vld [vmem:[%s1 + $0x1014] sm:$0xf]
    %v1066 = vld [vmem:[%s1 + $0x1018] sm:$0xf]
    %v1067 = vld [vmem:[%s1 + $0x101c] sm:$0xf]
    %v1068 = vld [vmem:[%s1 + $0x1020] sm:$0xf]
    %v1069 = vld [vmem:[%s1 + $0x1024] sm:$0xf]
    %v1070 = vld [vmem:[%s1 + $0x1028] sm:$0xf]
    %v1071 = vld [vmem:[%s1 + $0x102c] sm:$0xf]
    %v1072 = vld [vmem:[%s1 + $0x1030] sm:$0xf]
    %v1073 = vld [vmem:[%s1 + $0x1034] sm:$0xf]
    %v1074 = vld [vmem:[%s1 + $0x1038] sm:$0xf]
    %v1075 = vld [vmem:[%s1 + $0x103c] sm:$0xf]
    %v1076 = vld [vmem:[%s1 + $0x1040] sm:$0xf]
    %v1077 = vld [vmem:[%s1 + $0x1044] sm:$0xf]
    %v1078 = vld [vmem:[%s1 + $0x1048] sm:$0xf]
    %v1079 = vld [vmem:[%s1 + $0x104c] sm:$0xf]
    %v1080 = vld [vmem:[%s1 + $0x1050] sm:$0xf]
    %v1081 = vld [vmem:[%s1 + $0x1054] sm:$0xf]
    %v1082 = vld [vmem:[%s1 + $0x1058] sm:$0xf]
    %v1083 = vld [vmem:[%s1 + $0x105c] sm:$0xf]
    %v1084 = vld [vmem:[%s1 + $0x1060] sm:$0xf]
    %v1085 = vld [vmem:[%s1 + $0x1064] sm:$0xf]
    %v1086 = vld [vmem:[%s1 + $0x1068] sm:$0xf]
    %v1087 = vld [vmem:[%s1 + $0x106c] sm:$0xf]
    %v1088 = vld [vmem:[%s1 + $0x1070] sm:$0xf]
    %v1089 = vld [vmem:[%s1 + $0x1074] sm:$0xf]
    %v1090 = vld [vmem:[%s1 + $0x1078] sm:$0xf]
    %v1091 = vld [vmem:[%s1 + $0x107c] sm:$0xf]
    %v1092 = vld [vmem:[%s1 + $0x1080] sm:$0xf]
    %v1093 = vld [vmem:[%s1 + $0x1084] sm:$0xf]
    %v1094 = vld [vmem:[%s1 + $0x1088] sm:$0xf]
    %v1095 = vld [vmem:[%s1 + $0x108c] sm:$0xf]
    %v1096 = vld [vmem:[%s1 + $0x1090] sm:$0xf]
    %v1097 = vld [vmem:[%s1 + $0x1094] sm:$0xf]
    %v1098 = vld [vmem:[%s1 + $0x1098] sm:$0xf]
    %v1099 = vld [vmem:[%s1 + $0x109c] sm:$0xf]
    %v1100 = vld [vmem:[%s1 + $0x10a0] sm:$0xf]
    %v1101 = vld [vmem:[%s1 + $0x10a4] sm:$0xf]
    %v1102 = vld [vmem:[%s1 + $0x10a8] sm:$0xf]
    %v1103 = vld [vmem:[%s1 + $0x10ac] sm:$0xf]
    %v1104 = vld [vmem:[%s1 + $0x10b0] sm:$0xf]
    %v1105 = vld [vmem:[%s1 + $0x10b4] sm:$0xf]
    %v1106 = vld [vmem:[%s1 + $0x10b8] sm:$0xf]
    %v1107 = vld [vmem:[%s1 + $0x10bc] sm:$0xf]
    %v1108 = vld [vmem:[%s1 + $0x10c0] sm:$0xf]
    %v1109 = vld [vmem:[%s1 + $0x10c4] sm:$0xf]
    %v1110 = vld [vmem:[%s1 + $0x10c8] sm:$0xf]
    %v1111 = vld [vmem:[%s1 + $0x10cc] sm:$0xf]
    %v1112 = vld [vmem:[%s1 + $0x10d0] sm:$0xf]
    %v1113 = vld [vmem:[%s1 + $0x10d4] sm:$0xf]
    %v1114 = vld [vmem:[%s1 + $0x10d8] sm:$0xf]
    %v1115 = vld [vmem:[%s1 + $0x10dc] sm:$0xf]
    %v1116 = vld [vmem:[%s1 + $0x10e0] sm:$0xf]
    %v1117 = vld [vmem:[%s1 + $0x10e4] sm:$0xf]
    %v1118 = vld [vmem:[%s1 + $0x10e8] sm:$0xf]
    %v1119 = vld [vmem:[%s1 + $0x10ec] sm:$0xf]
    %v1120 = vld [vmem:[%s1 + $0x10f0] sm:$0xf]
    %v1121 = vld [vmem:[%s1 + $0x10f4] sm:$0xf]
    %v1122 = vld [vmem:[%s1 + $0x10f8] sm:$0xf]
    %v1123 = vld [vmem:[%s1 + $0x10fc] sm:$0xf]
    %v1124 = vld [vmem:[%s1 + $0x1100] sm:$0xf]
    %v1125 = vld [vmem:[%s1 + $0x1104] sm:$0xf]
    %v1126 = vld [vmem:[%s1 + $0x1108] sm:$0xf]
    %v1127 = vld [vmem:[%s1 + $0x110c] sm:$0xf]
    %v1128 = vld [vmem:[%s1 + $0x1110] sm:$0xf]
    %v1129 = vld [vmem:[%s1 + $0x1114] sm:$0xf]
    %v1130 = vld [vmem:[%s1 + $0x1118] sm:$0xf]
    %v1131 = vld [vmem:[%s1 + $0x111c] sm:$0xf]
    %v1132 = vld [vmem:[%s1 + $0x1120] sm:$0xf]
    %v1133 = vld [vmem:[%s1 + $0x1124] sm:$0xf]
    %v1134 = vld [vmem:[%s1 + $0x1128] sm:$0xf]
    %v1135 = vld [vmem:[%s1 + $0x112c] sm:$0xf]
    %v1136 = vld [vmem:[%s1 + $0x1130] sm:$0xf]
    %v1137 = vld [vmem:[%s1 + $0x1134] sm:$0xf]
    %v1138 = vld [vmem:[%s1 + $0x1138] sm:$0xf]
    %v1139 = vld [vmem:[%s1 + $0x113c] sm:$0xf]
    %v1140 = vld [vmem:[%s1 + $0x1140] sm:$0xf]
    %v1141 = vld [vmem:[%s1 + $0x1144] sm:$0xf]
    %v1142 = vld [vmem:[%s1 + $0x1148] sm:$0xf]
    %v1143 = vld [vmem:[%s1 + $0x114c] sm:$0xf]
    %v1144 = vld [vmem:[%s1 + $0x1150] sm:$0xf]
    %v1145 = vld [vmem:[%s1 + $0x1154] sm:$0xf]
    %v1146 = vld [vmem:[%s1 + $0x1158] sm:$0xf]
    %v1147 = vld [vmem:[%s1 + $0x115c] sm:$0xf]
    %v1148 = vld [vmem:[%s1 + $0x1160] sm:$0xf]
    %v1149 = vld [vmem:[%s1 + $0x1164] sm:$0xf]
    %v1150 = vld [vmem:[%s1 + $0x1168] sm:$0xf]
    %v1151 = vld [vmem:[%s1 + $0x116c] sm:$0xf]
    %v1152 = vld [vmem:[%s1 + $0x1170] sm:$0xf]
    %v1153 = vld [vmem:[%s1 + $0x1174] sm:$0xf]
    %v1154 = vld [vmem:[%s1 + $0x1178] sm:$0xf]
    %v1155 = vld [vmem:[%s1 + $0x117c] sm:$0xf]
    %v1156 = vld [vmem:[%s1 + $0x1180] sm:$0xf]
    %v1157 = vld [vmem:[%s1 + $0x1184] sm:$0xf]
    %v1158 = vld [vmem:[%s1 + $0x1188] sm:$0xf]
    %v1159 = vld [vmem:[%s1 + $0x118c] sm:$0xf]
    %v1160 = vld [vmem:[%s1 + $0x1190] sm:$0xf]
    %v1161 = vld [vmem:[%s1 + $0x1194] sm:$0xf]
    %v1162 = vld [vmem:[%s1 + $0x1198] sm:$0xf]
    %v1163 = vld [vmem:[%s1 + $0x119c] sm:$0xf]
    %v1164 = vld [vmem:[%s1 + $0x11a0] sm:$0xf]
    %v1165 = vld [vmem:[%s1 + $0x11a4] sm:$0xf]
    %v1166 = vld [vmem:[%s1 + $0x11a8] sm:$0xf]
    %v1167 = vld [vmem:[%s1 + $0x11ac] sm:$0xf]
    %v1168 = vld [vmem:[%s1 + $0x11b0] sm:$0xf]
    %v1169 = vld [vmem:[%s1 + $0x11b4] sm:$0xf]
    %v1170 = vld [vmem:[%s1 + $0x11b8] sm:$0xf]
    %v1171 = vld [vmem:[%s1 + $0x11bc] sm:$0xf]
    %v1172 = vld [vmem:[%s1 + $0x11c0] sm:$0xf]
    %v1173 = vld [vmem:[%s1 + $0x11c4] sm:$0xf]
    %v1174 = vld [vmem:[%s1 + $0x11c8] sm:$0xf]
    %v1175 = vld [vmem:[%s1 + $0x11cc] sm:$0xf]
    %v1176 = vld [vmem:[%s1 + $0x11d0] sm:$0xf]
    %v1177 = vld [vmem:[%s1 + $0x11d4] sm:$0xf]
    %v1178 = vld [vmem:[%s1 + $0x11d8] sm:$0xf]
    %v1179 = vld [vmem:[%s1 + $0x11dc] sm:$0xf]
    %v1180 = vld [vmem:[%s1 + $0x11e0] sm:$0xf]
    %v1181 = vld [vmem:[%s1 + $0x11e4] sm:$0xf]
    %v1182 = vld [vmem:[%s1 + $0x11e8] sm:$0xf]
    %v1183 = vld [vmem:[%s1 + $0x11ec] sm:$0xf]
    %v1184 = vld [vmem:[%s1 + $0x11f0] sm:$0xf]
    %v1185 = vld [vmem:[%s1 + $0x11f4] sm:$0xf]
    %v1186 = vld [vmem:[%s1 + $0x11f8] sm:$0xf]
    %v1187 = vld [vmem:[%s1 + $0x11fc] sm:$0xf]
    %v1188 = vld [vmem:[%s1 + $0x1200] sm:$0xf]
    %v1189 = vld [vmem:[%s1 + $0x1204] sm:$0xf]
    %v1190 = vld [vmem:[%s1 + $0x1208] sm:$0xf]
    %v1191 = vld [vmem:[%s1 + $0x120c] sm:$0xf]
    %v1192 = vld [vmem:[%s1 + $0x1210] sm:$0xf]
    %v1193 = vld [vmem:[%s1 + $0x1214] sm:$0xf]
    %v1194 = vld [vmem:[%s1 + $0x1218] sm:$0xf]
    %v1195 = vld [vmem:[%s1 + $0x121c] sm:$0xf]
    %v1196 = vld [vmem:[%s1 + $0x1220] sm:$0xf]
    %v1197 = vld [vmem:[%s1 + $0x1224] sm:$0xf]
    %v1198 = vld [vmem:[%s1 + $0x1228] sm:$0xf]
    %v1199 = vld [vmem:[%s1 + $0x122c] sm:$0xf]
    %v1200 = vld [vmem:[%s1 + $0x1230] sm:$0xf]
    %v1201 = vld [vmem:[%s1 + $0x1234] sm:$0xf]
    %v1202 = vld [vmem:[%s1 + $0x1238] sm:$0xf]
    %v1203 = vld [vmem:[%s1 + $0x123c] sm:$0xf]
    %v1204 = vld [vmem:[%s1 + $0x1240] sm:$0xf]
    %v1205 = vld [vmem:[%s1 + $0x1244] sm:$0xf]
    %v1206 = vld [vmem:[%s1 + $0x1248] sm:$0xf]
    %v1207 = vld [vmem:[%s1 + $0x124c] sm:$0xf]
    %v1208 = vld [vmem:[%s1 + $0x1250] sm:$0xf]
    %v1209 = vld [vmem:[%s1 + $0x1254] sm:$0xf]
    %v1210 = vld [vmem:[%s1 + $0x1258] sm:$0xf]
    %v1211 = vld [vmem:[%s1 + $0x125c] sm:$0xf]
    %v1212 = vld [vmem:[%s1 + $0x1260] sm:$0xf]
    %v1213 = vld [vmem:[%s1 + $0x1264] sm:$0xf]
    %v1214 = vld [vmem:[%s1 + $0x1268] sm:$0xf]
    %v1215 = vld [vmem:[%s1 + $0x126c] sm:$0xf]
    %v1216 = vld [vmem:[%s1 + $0x1270] sm:$0xf]
    %v1217 = vld [vmem:[%s1 + $0x1274] sm:$0xf]
    %v1218 = vld [vmem:[%s1 + $0x1278] sm:$0xf]
    %v1219 = vld [vmem:[%s1 + $0x127c] sm:$0xf]
    %v1220 = vld [vmem:[%s1 + $0x1280] sm:$0xf]
    %v1221 = vld [vmem:[%s1 + $0x1284] sm:$0xf]
    %v1222 = vld [vmem:[%s1 + $0x1288] sm:$0xf]
    %v1223 = vld [vmem:[%s1 + $0x128c] sm:$0xf]
    %v1224 = vld [vmem:[%s1 + $0x1290] sm:$0xf]
    %v1225 = vld [vmem:[%s1 + $0x1294] sm:$0xf]
    %v1226 = vld [vmem:[%s1 + $0x1298] sm:$0xf]
    %v1227 = vld [vmem:[%s1 + $0x129c] sm:$0xf]
    %v1228 = vld [vmem:[%s1 + $0x12a0] sm:$0xf]
    %v1229 = vld [vmem:[%s1 + $0x12a4] sm:$0xf]
    %v1230 = vld [vmem:[%s1 + $0x12a8] sm:$0xf]
    %v1231 = vld [vmem:[%s1 + $0x12ac] sm:$0xf]
    %v1232 = vld [vmem:[%s1 + $0x12b0] sm:$0xf]
    %v1233 = vld [vmem:[%s1 + $0x12b4] sm:$0xf]
    %v1234 = vld [vmem:[%s1 + $0x12b8] sm:$0xf]
    %v1235 = vld [vmem:[%s1 + $0x12bc] sm:$0xf]
    %v1236 = vld [vmem:[%s1 + $0x12c0] sm:$0xf]
    %v1237 = vld [vmem:[%s1 + $0x12c4] sm:$0xf]
    %v1238 = vld [vmem:[%s1 + $0x12c8] sm:$0xf]
    %v1239 = vld [vmem:[%s1 + $0x12cc] sm:$0xf]
    %v1240 = vld [vmem:[%s1 + $0x12d0] sm:$0xf]
    %v1241 = vld [vmem:[%s1 + $0x12d4] sm:$0xf]
    %v1242 = vld [vmem:[%s1 + $0x12d8] sm:$0xf]
    %v1243 = vld [vmem:[%s1 + $0x12dc] sm:$0xf]
    %v1244 = vld [vmem:[%s1 + $0x12e0] sm:$0xf]
    %v1245 = vld [vmem:[%s1 + $0x12e4] sm:$0xf]
    %v1246 = vld [vmem:[%s1 + $0x12e8] sm:$0xf]
    %v1247 = vld [vmem:[%s1 + $0x12ec] sm:$0xf]
    %v1248 = vld [vmem:[%s1 + $0x12f0] sm:$0xf]
    %v1249 = vld [vmem:[%s1 + $0x12f4] sm:$0xf]
    %v1250 = vld [vmem:[%s1 + $0x12f8] sm:$0xf]
    %v1251 = vld [vmem:[%s1 + $0x12fc] sm:$0xf]
    %v1252 = vld [vmem:[%s1 + $0x1300] sm:$0xf]
    %v1253 = vld [vmem:[%s1 + $0x1304] sm:$0xf]
    %v1254 = vld [vmem:[%s1 + $0x1308] sm:$0xf]
    %v1255 = vld [vmem:[%s1 + $0x130c] sm:$0xf]
    %v1256 = vld [vmem:[%s1 + $0x1310] sm:$0xf]
    %v1257 = vld [vmem:[%s1 + $0x1314] sm:$0xf]
    %v1258 = vld [vmem:[%s1 + $0x1318] sm:$0xf]
    %v1259 = vld [vmem:[%s1 + $0x131c] sm:$0xf]
    %v1260 = vld [vmem:[%s1 + $0x1320] sm:$0xf]
    %v1261 = vld [vmem:[%s1 + $0x1324] sm:$0xf]
    %v1262 = vld [vmem:[%s1 + $0x1328] sm:$0xf]
    %v1263 = vld [vmem:[%s1 + $0x132c] sm:$0xf]
    %v1264 = vld [vmem:[%s1 + $0x1330] sm:$0xf]
    %v1265 = vld [vmem:[%s1 + $0x1334] sm:$0xf]
    %v1266 = vld [vmem:[%s1 + $0x1338] sm:$0xf]
    %v1267 = vld [vmem:[%s1 + $0x133c] sm:$0xf]
    %v1268 = vld [vmem:[%s1 + $0x1340] sm:$0xf]
    %v1269 = vld [vmem:[%s1 + $0x1344] sm:$0xf]
    %v1270 = vld [vmem:[%s1 + $0x1348] sm:$0xf]
    %v1271 = vld [vmem:[%s1 + $0x134c] sm:$0xf]
    %v1272 = vld [vmem:[%s1 + $0x1350] sm:$0xf]
    %v1273 = vld [vmem:[%s1 + $0x1354] sm:$0xf]
    %v1274 = vld [vmem:[%s1 + $0x1358] sm:$0xf]
    %v1275 = vld [vmem:[%s1 + $0x135c] sm:$0xf]
    %v1276 = vld [vmem:[%s1 + $0x1360] sm:$0xf]
    %v1277 = vld [vmem:[%s1 + $0x1364] sm:$0xf]
    %v1278 = vld [vmem:[%s1 + $0x1368] sm:$0xf]
    %v1279 = vld [vmem:[%s1 + $0x136c] sm:$0xf]
    %v1280 = vld [vmem:[%s1 + $0x1370] sm:$0xf]
    %v1281 = vld [vmem:[%s1 + $0x1374] sm:$0xf]
    %v1282 = vld [vmem:[%s1 + $0x1378] sm:$0xf]
    %v1283 = vld [vmem:[%s1 + $0x137c] sm:$0xf]
    %v1284 = vld [vmem:[%s1 + $0x1380] sm:$0xf]
    %v1285 = vld [vmem:[%s1 + $0x1384] sm:$0xf]
    %v1286 = vld [vmem:[%s1 + $0x1388] sm:$0xf]
    %v1287 = vld [vmem:[%s1 + $0x138c] sm:$0xf]
    %v1288 = vld [vmem:[%s1 + $0x1390] sm:$0xf]
    %v1289 = vld [vmem:[%s1 + $0x1394] sm:$0xf]
    %v1290 = vld [vmem:[%s1 + $0x1398] sm:$0xf]
    %v1291 = vld [vmem:[%s1 + $0x139c] sm:$0xf]
    %v1292 = vld [vmem:[%s1 + $0x13a0] sm:$0xf]
    %v1293 = vld [vmem:[%s1 + $0x13a4] sm:$0xf]
    %v1294 = vld [vmem:[%s1 + $0x13a8] sm:$0xf]
    %v1295 = vld [vmem:[%s1 + $0x13ac] sm:$0xf]
    %v1296 = vld [vmem:[%s1 + $0x13b0] sm:$0xf]
    %v1297 = vld [vmem:[%s1 + $0x13b4] sm:$0xf]
    %v1298 = vld [vmem:[%s1 + $0x13b8] sm:$0xf]
    %v1299 = vld [vmem:[%s1 + $0x13bc] sm:$0xf]
    %v1300 = vld [vmem:[%s1 + $0x13c0] sm:$0xf]
    %v1301 = vld [vmem:[%s1 + $0x13c4] sm:$0xf]
    %v1302 = vld [vmem:[%s1 + $0x13c8] sm:$0xf]
    %v1303 = vld [vmem:[%s1 + $0x13cc] sm:$0xf]
    %v1304 = vld [vmem:[%s1 + $0x13d0] sm:$0xf]
    %v1305 = vld [vmem:[%s1 + $0x13d4] sm:$0xf]
    %v1306 = vld [vmem:[%s1 + $0x13d8] sm:$0xf]
    %v1307 = vld [vmem:[%s1 + $0x13dc] sm:$0xf]
    %v1308 = vld [vmem:[%s1 + $0x13e0] sm:$0xf]
    %v1309 = vld [vmem:[%s1 + $0x13e4] sm:$0xf]
    %v1310 = vld [vmem:[%s1 + $0x13e8] sm:$0xf]
    %v1311 = vld [vmem:[%s1 + $0x13ec] sm:$0xf]
    %v1312 = vld [vmem:[%s1 + $0x13f0] sm:$0xf]
    %v1313 = vld [vmem:[%s1 + $0x13f4] sm:$0xf]
    %v1314 = vld [vmem:[%s1 + $0x13f8] sm:$0xf]
    %v1315 = vld [vmem:[%s1 + $0x13fc] sm:$0xf]
    %v1316 = vld [vmem:[%s1 + $0x1400] sm:$0xf]
    %v1317 = vld [vmem:[%s1 + $0x1404] sm:$0xf]
    %v1318 = vld [vmem:[%s1 + $0x1408] sm:$0xf]
    %v1319 = vld [vmem:[%s1 + $0x140c] sm:$0xf]
    %v1320 = vld [vmem:[%s1 + $0x1410] sm:$0xf]
    %v1321 = vld [vmem:[%s1 + $0x1414] sm:$0xf]
    %v1322 = vld [vmem:[%s1 + $0x1418] sm:$0xf]
    %v1323 = vld [vmem:[%s1 + $0x141c] sm:$0xf]
    %v1324 = vld [vmem:[%s1 + $0x1420] sm:$0xf]
    %v1325 = vld [vmem:[%s1 + $0x1424] sm:$0xf]
    %v1326 = vld [vmem:[%s1 + $0x1428] sm:$0xf]
    %v1327 = vld [vmem:[%s1 + $0x142c] sm:$0xf]
    %v1328 = vld [vmem:[%s1 + $0x1430] sm:$0xf]
    %v1329 = vld [vmem:[%s1 + $0x1434] sm:$0xf]
    %v1330 = vld [vmem:[%s1 + $0x1438] sm:$0xf]
    %v1331 = vld [vmem:[%s1 + $0x143c] sm:$0xf]
    %v1332 = vld [vmem:[%s1 + $0x1440] sm:$0xf]
    %v1333 = vld [vmem:[%s1 + $0x1444] sm:$0xf]
    %v1334 = vld [vmem:[%s1 + $0x1448] sm:$0xf]
    %v1335 = vld [vmem:[%s1 + $0x144c] sm:$0xf]
    %v1336 = vld [vmem:[%s1 + $0x1450] sm:$0xf]
    %v1337 = vld [vmem:[%s1 + $0x1454] sm:$0xf]
    %v1338 = vld [vmem:[%s1 + $0x1458] sm:$0xf]
    %v1339 = vld [vmem:[%s1 + $0x145c] sm:$0xf]
    %v1340 = vld [vmem:[%s1 + $0x1460] sm:$0xf]
    %v1341 = vld [vmem:[%s1 + $0x1464] sm:$0xf]
    %v1342 = vld [vmem:[%s1 + $0x1468] sm:$0xf]
    %v1343 = vld [vmem:[%s1 + $0x146c] sm:$0xf]
    %v1344 = vld [vmem:[%s1 + $0x1470] sm:$0xf]
    %v1345 = vld [vmem:[%s1 + $0x1474] sm:$0xf]
    %v1346 = vld [vmem:[%s1 + $0x1478] sm:$0xf]
    %v1347 = vld [vmem:[%s1 + $0x147c] sm:$0xf]
    %v1348 = vld [vmem:[%s1 + $0x1480] sm:$0xf]
    %v1349 = vld [vmem:[%s1 + $0x1484] sm:$0xf]
    %v1350 = vld [vmem:[%s1 + $0x1488] sm:$0xf]
    %v1351 = vld [vmem:[%s1 + $0x148c] sm:$0xf]
    %v1352 = vld [vmem:[%s1 + $0x1490] sm:$0xf]
    %v1353 = vld [vmem:[%s1 + $0x1494] sm:$0xf]
    %v1354 = vld [vmem:[%s1 + $0x1498] sm:$0xf]
    %v1355 = vld [vmem:[%s1 + $0x149c] sm:$0xf]
    %v1356 = vld [vmem:[%s1 + $0x14a0] sm:$0xf]
    %v1357 = vld [vmem:[%s1 + $0x14a4] sm:$0xf]
    %v1358 = vld [vmem:[%s1 + $0x14a8] sm:$0xf]
    %v1359 = vld [vmem:[%s1 + $0x14ac] sm:$0xf]
    %v1360 = vld [vmem:[%s1 + $0x14b0] sm:$0xf]
    %v1361 = vld [vmem:[%s1 + $0x14b4] sm:$0xf]
    %v1362 = vld [vmem:[%s1 + $0x14b8] sm:$0xf]
    %v1363 = vld [vmem:[%s1 + $0x14bc] sm:$0xf]
    %v1364 = vld [vmem:[%s1 + $0x14c0] sm:$0xf]
    %v1365 = vld [vmem:[%s1 + $0x14c4] sm:$0xf]
    %v1366 = vld [vmem:[%s1 + $0x14c8] sm:$0xf]
    %v1367 = vld [vmem:[%s1 + $0x14cc] sm:$0xf]
    %v1368 = vld [vmem:[%s1 + $0x14d0] sm:$0xf]
    %v1369 = vld [vmem:[%s1 + $0x14d4] sm:$0xf]
    %v1370 = vld [vmem:[%s1 + $0x14d8] sm:$0xf]
    %v1371 = vld [vmem:[%s1 + $0x14dc] sm:$0xf]
    %v1372 = vld [vmem:[%s1 + $0x14e0] sm:$0xf]
    %v1373 = vld [vmem:[%s1 + $0x14e4] sm:$0xf]
    %v1374 = vld [vmem:[%s1 + $0x14e8] sm:$0xf]
    %v1375 = vld [vmem:[%s1 + $0x14ec] sm:$0xf]
    %v1376 = vld [vmem:[%s1 + $0x14f0] sm:$0xf]
    %v1377 = vld [vmem:[%s1 + $0x14f4] sm:$0xf]
    %v1378 = vld [vmem:[%s1 + $0x14f8] sm:$0xf]
    %v1379 = vld [vmem:[%s1 + $0x14fc] sm:$0xf]
    %v1380 = vld [vmem:[%s1 + $0x1500] sm:$0xf]
    %v1381 = vld [vmem:[%s1 + $0x1504] sm:$0xf]
    %v1382 = vld [vmem:[%s1 + $0x1508] sm:$0xf]
    %v1383 = vld [vmem:[%s1 + $0x150c] sm:$0xf]
    %v1384 = vld [vmem:[%s1 + $0x1510] sm:$0xf]
    %v1385 = vld [vmem:[%s1 + $0x1514] sm:$0xf]
    %v1386 = vld [vmem:[%s1 + $0x1518] sm:$0xf]
    %v1387 = vld [vmem:[%s1 + $0x151c] sm:$0xf]
    %v1388 = vld [vmem:[%s1 + $0x1520] sm:$0xf]
    %v1389 = vld [vmem:[%s1 + $0x1524] sm:$0xf]
    %v1390 = vld [vmem:[%s1 + $0x1528] sm:$0xf]
    %v1391 = vld [vmem:[%s1 + $0x152c] sm:$0xf]
    %v1392 = vld [vmem:[%s1 + $0x1530] sm:$0xf]
    %v1393 = vld [vmem:[%s1 + $0x1534] sm:$0xf]
    %v1394 = vld [vmem:[%s1 + $0x1538] sm:$0xf]
    %v1395 = vld [vmem:[%s1 + $0x153c] sm:$0xf]
    %v1396 = vld [vmem:[%s1 + $0x1540] sm:$0xf]
    %v1397 = vld [vmem:[%s1 + $0x1544] sm:$0xf]
    %v1398 = vld [vmem:[%s1 + $0x1548] sm:$0xf]
    %v1399 = vld [vmem:[%s1 + $0x154c] sm:$0xf]
    %v1400 = vld [vmem:[%s1 + $0x1550] sm:$0xf]
    %v1401 = vld [vmem:[%s1 + $0x1554] sm:$0xf]
    %v1402 = vld [vmem:[%s1 + $0x1558] sm:$0xf]
    %v1403 = vld [vmem:[%s1 + $0x155c] sm:$0xf]
    %v1404 = vld [vmem:[%s1 + $0x1560] sm:$0xf]
    %v1405 = vld [vmem:[%s1 + $0x1564] sm:$0xf]
    %v1406 = vld [vmem:[%s1 + $0x1568] sm:$0xf]
    %v1407 = vld [vmem:[%s1 + $0x156c] sm:$0xf]
    %v1408 = vld [vmem:[%s1 + $0x1570] sm:$0xf]
    %v1409 = vld [vmem:[%s1 + $0x1574] sm:$0xf]
    %v1410 = vld [vmem:[%s1 + $0x1578] sm:$0xf]
    %v1411 = vld [vmem:[%s1 + $0x157c] sm:$0xf]
    %v1412 = vld [vmem:[%s1 + $0x1580] sm:$0xf]
    %v1413 = vld [vmem:[%s1 + $0x1584] sm:$0xf]
    %v1414 = vld [vmem:[%s1 + $0x1588] sm:$0xf]
    %v1415 = vld [vmem:[%s1 + $0x158c] sm:$0xf]
    %v1416 = vld [vmem:[%s1 + $0x1590] sm:$0xf]
    %v1417 = vld [vmem:[%s1 + $0x1594] sm:$0xf]
    %v1418 = vld [vmem:[%s1 + $0x1598] sm:$0xf]
    %v1419 = vld [vmem:[%s1 + $0x159c] sm:$0xf]
    %v1420 = vld [vmem:[%s1 + $0x15a0] sm:$0xf]
    %v1421 = vld [vmem:[%s1 + $0x15a4] sm:$0xf]
    %v1422 = vld [vmem:[%s1 + $0x15a8] sm:$0xf]
    %v1423 = vld [vmem:[%s1 + $0x15ac] sm:$0xf]
    %v1424 = vld [vmem:[%s1 + $0x15b0] sm:$0xf]
    %v1425 = vld [vmem:[%s1 + $0x15b4] sm:$0xf]
    %v1426 = vld [vmem:[%s1 + $0x15b8] sm:$0xf]
    %v1427 = vld [vmem:[%s1 + $0x15bc] sm:$0xf]
    %v1428 = vld [vmem:[%s1 + $0x15c0] sm:$0xf]
    %v1429 = vld [vmem:[%s1 + $0x15c4] sm:$0xf]
    %v1430 = vld [vmem:[%s1 + $0x15c8] sm:$0xf]
    %v1431 = vld [vmem:[%s1 + $0x15cc] sm:$0xf]
    %v1432 = vld [vmem:[%s1 + $0x15d0] sm:$0xf]
    %v1433 = vld [vmem:[%s1 + $0x15d4] sm:$0xf]
    %v1434 = vld [vmem:[%s1 + $0x15d8] sm:$0xf]
    %v1435 = vld [vmem:[%s1 + $0x15dc] sm:$0xf]
    %v1436 = vld [vmem:[%s1 + $0x15e0] sm:$0xf]
    %v1437 = vld [vmem:[%s1 + $0x15e4] sm:$0xf]
    %v1438 = vld [vmem:[%s1 + $0x15e8] sm:$0xf]
    %v1439 = vld [vmem:[%s1 + $0x15ec] sm:$0xf]
    %v1440 = vld [vmem:[%s1 + $0x15f0] sm:$0xf]
    %v1441 = vld [vmem:[%s1 + $0x15f4] sm:$0xf]
    %v1442 = vld [vmem:[%s1 + $0x15f8] sm:$0xf]
    %v1443 = vld [vmem:[%s1 + $0x15fc] sm:$0xf]
    %v1444 = vld [vmem:[%s1 + $0x1600] sm:$0xf]
    %v1445 = vld [vmem:[%s1 + $0x1604] sm:$0xf]
    %v1446 = vld [vmem:[%s1 + $0x1608] sm:$0xf]
    %v1447 = vld [vmem:[%s1 + $0x160c] sm:$0xf]
    %v1448 = vld [vmem:[%s1 + $0x1610] sm:$0xf]
    %v1449 = vld [vmem:[%s1 + $0x1614] sm:$0xf]
    %v1450 = vld [vmem:[%s1 + $0x1618] sm:$0xf]
    %v1451 = vld [vmem:[%s1 + $0x161c] sm:$0xf]
    %v1452 = vld [vmem:[%s1 + $0x1620] sm:$0xf]
    %v1453 = vld [vmem:[%s1 + $0x1624] sm:$0xf]
    %v1454 = vld [vmem:[%s1 + $0x1628] sm:$0xf]
    %v1455 = vld [vmem:[%s1 + $0x162c] sm:$0xf]
    %v1456 = vld [vmem:[%s1 + $0x1630] sm:$0xf]
    %v1457 = vld [vmem:[%s1 + $0x1634] sm:$0xf]
    %v1458 = vld [vmem:[%s1 + $0x1638] sm:$0xf]
    %v1459 = vld [vmem:[%s1 + $0x163c] sm:$0xf]
    %v1460 = vld [vmem:[%s1 + $0x1640] sm:$0xf]
    %v1461 = vld [vmem:[%s1 + $0x1644] sm:$0xf]
    %v1462 = vld [vmem:[%s1 + $0x1648] sm:$0xf]
    %v1463 = vld [vmem:[%s1 + $0x164c] sm:$0xf]
    %v1464 = vld [vmem:[%s1 + $0x1650] sm:$0xf]
    %v1465 = vld [vmem:[%s1 + $0x1654] sm:$0xf]
    %v1466 = vld [vmem:[%s1 + $0x1658] sm:$0xf]
    %v1467 = vld [vmem:[%s1 + $0x165c] sm:$0xf]
    %v1468 = vld [vmem:[%s1 + $0x1660] sm:$0xf]
    %v1469 = vld [vmem:[%s1 + $0x1664] sm:$0xf]
    %v1470 = vld [vmem:[%s1 + $0x1668] sm:$0xf]
    %v1471 = vld [vmem:[%s1 + $0x166c] sm:$0xf]
    %v1472 = vld [vmem:[%s1 + $0x1670] sm:$0xf]
    %v1473 = vld [vmem:[%s1 + $0x1674] sm:$0xf]
    %v1474 = vld [vmem:[%s1 + $0x1678] sm:$0xf]
    %v1475 = vld [vmem:[%s1 + $0x167c] sm:$0xf]
    %v1476 = vld [vmem:[%s1 + $0x1680] sm:$0xf]
    %v1477 = vld [vmem:[%s1 + $0x1684] sm:$0xf]
    %v1478 = vld [vmem:[%s1 + $0x1688] sm:$0xf]
    %v1479 = vld [vmem:[%s1 + $0x168c] sm:$0xf]
    %v1480 = vld [vmem:[%s1 + $0x1690] sm:$0xf]
    %v1481 = vld [vmem:[%s1 + $0x1694] sm:$0xf]
    %v1482 = vld [vmem:[%s1 + $0x1698] sm:$0xf]
    %v1483 = vld [vmem:[%s1 + $0x169c] sm:$0xf]
    %v1484 = vld [vmem:[%s1 + $0x16a0] sm:$0xf]
    %v1485 = vld [vmem:[%s1 + $0x16a4] sm:$0xf]
    %v1486 = vld [vmem:[%s1 + $0x16a8] sm:$0xf]
    %v1487 = vld [vmem:[%s1 + $0x16ac] sm:$0xf]
    %v1488 = vld [vmem:[%s1 + $0x16b0] sm:$0xf]
    %v1489 = vld [vmem:[%s1 + $0x16b4] sm:$0xf]
    %v1490 = vld [vmem:[%s1 + $0x16b8] sm:$0xf]
    %v1491 = vld [vmem:[%s1 + $0x16bc] sm:$0xf]
    %v1492 = vld [vmem:[%s1 + $0x16c0] sm:$0xf]
    %v1493 = vld [vmem:[%s1 + $0x16c4] sm:$0xf]
    %v1494 = vld [vmem:[%s1 + $0x16c8] sm:$0xf]
    %v1495 = vld [vmem:[%s1 + $0x16cc] sm:$0xf]
    %v1496 = vld [vmem:[%s1 + $0x16d0] sm:$0xf]
    %v1497 = vld [vmem:[%s1 + $0x16d4] sm:$0xf]
    %v1498 = vld [vmem:[%s1 + $0x16d8] sm:$0xf]
    %v1499 = vld [vmem:[%s1 + $0x16dc] sm:$0xf]
    %v1500 = vld [vmem:[%s1 + $0x16e0] sm:$0xf]
    %v1501 = vld [vmem:[%s1 + $0x16e4] sm:$0xf]
    %v1502 = vld [vmem:[%s1 + $0x16e8] sm:$0xf]
    %v1503 = vld [vmem:[%s1 + $0x16ec] sm:$0xf]
    %v1504 = vld [vmem:[%s1 + $0x16f0] sm:$0xf]
    %v1505 = vld [vmem:[%s1 + $0x16f4] sm:$0xf]
    %v1506 = vld [vmem:[%s1 + $0x16f8] sm:$0xf]
    %v1507 = vld [vmem:[%s1 + $0x16fc] sm:$0xf]
    %v1508 = vld [vmem:[%s1 + $0x1700] sm:$0xf]
    %v1509 = vld [vmem:[%s1 + $0x1704] sm:$0xf]
    %v1510 = vld [vmem:[%s1 + $0x1708] sm:$0xf]
    %v1511 = vld [vmem:[%s1 + $0x170c] sm:$0xf]
    %v1512 = vld [vmem:[%s1 + $0x1710] sm:$0xf]
    %v1513 = vld [vmem:[%s1 + $0x1714] sm:$0xf]
    %v1514 = vld [vmem:[%s1 + $0x1718] sm:$0xf]
    %v1515 = vld [vmem:[%s1 + $0x171c] sm:$0xf]
    %v1516 = vld [vmem:[%s1 + $0x1720] sm:$0xf]
    %v1517 = vld [vmem:[%s1 + $0x1724] sm:$0xf]
    %v1518 = vld [vmem:[%s1 + $0x1728] sm:$0xf]
    %v1519 = vld [vmem:[%s1 + $0x172c] sm:$0xf]
    %v1520 = vld [vmem:[%s1 + $0x1730] sm:$0xf]
    %v1521 = vld [vmem:[%s1 + $0x1734] sm:$0xf]
    %v1522 = vld [vmem:[%s1 + $0x1738] sm:$0xf]
    %v1523 = vld [vmem:[%s1 + $0x173c] sm:$0xf]
    %v1524 = vld [vmem:[%s1 + $0x1740] sm:$0xf]
    %v1525 = vld [vmem:[%s1 + $0x1744] sm:$0xf]
    %v1526 = vld [vmem:[%s1 + $0x1748] sm:$0xf]
    %v1527 = vld [vmem:[%s1 + $0x174c] sm:$0xf]
    %v1528 = vld [vmem:[%s1 + $0x1750] sm:$0xf]
    %v1529 = vld [vmem:[%s1 + $0x1754] sm:$0xf]
    %v1530 = vld [vmem:[%s1 + $0x1758] sm:$0xf]
    %v1531 = vld [vmem:[%s1 + $0x175c] sm:$0xf]
    %v1532 = vld [vmem:[%s1 + $0x1760] sm:$0xf]
    %v1533 = vld [vmem:[%s1 + $0x1764] sm:$0xf]
    %v1534 = vld [vmem:[%s1 + $0x1768] sm:$0xf]
    %v1535 = vld [vmem:[%s1 + $0x176c] sm:$0xf]
    %v1536 = vld [vmem:[%s1 + $0x1770] sm:$0xf]
    %v1537 = vld [vmem:[%s1 + $0x1774] sm:$0xf]
    %v1538 = vld [vmem:[%s1 + $0x1778] sm:$0xf]
    %v1539 = vld [vmem:[%s1 + $0x177c] sm:$0xf]
    %v1540 = vld [vmem:[%s1 + $0x1780] sm:$0xf]
    %v1541 = vld [vmem:[%s1 + $0x1784] sm:$0xf]
    %v1542 = vld [vmem:[%s1 + $0x1788] sm:$0xf]
    %v1543 = vld [vmem:[%s1 + $0x178c] sm:$0xf]
    %v1544 = vld [vmem:[%s1 + $0x1790] sm:$0xf]
    %v1545 = vld [vmem:[%s1 + $0x1794] sm:$0xf]
    %v1546 = vld [vmem:[%s1 + $0x1798] sm:$0xf]
    %v1547 = vld [vmem:[%s1 + $0x179c] sm:$0xf]
    %v1548 = vld [vmem:[%s1 + $0x17a0] sm:$0xf]
    %v1549 = vld [vmem:[%s1 + $0x17a4] sm:$0xf]
    %v1550 = vld [vmem:[%s1 + $0x17a8] sm:$0xf]
    %v1551 = vld [vmem:[%s1 + $0x17ac] sm:$0xf]
    %v1552 = vld [vmem:[%s1 + $0x17b0] sm:$0xf]
    %v1553 = vld [vmem:[%s1 + $0x17b4] sm:$0xf]
    %v1554 = vld [vmem:[%s1 + $0x17b8] sm:$0xf]
    %v1555 = vld [vmem:[%s1 + $0x17bc] sm:$0xf]
    %v1556 = vld [vmem:[%s1 + $0x17c0] sm:$0xf]
    %v1557 = vld [vmem:[%s1 + $0x17c4] sm:$0xf]
    %v1558 = vld [vmem:[%s1 + $0x17c8] sm:$0xf]
    %v1559 = vld [vmem:[%s1 + $0x17cc] sm:$0xf]
    %v1560 = vld [vmem:[%s1 + $0x17d0] sm:$0xf]
    %v1561 = vld [vmem:[%s1 + $0x17d4] sm:$0xf]
    %v1562 = vld [vmem:[%s1 + $0x17d8] sm:$0xf]
    %v1563 = vld [vmem:[%s1 + $0x17dc] sm:$0xf]
    %v1564 = vld [vmem:[%s1 + $0x17e0] sm:$0xf]
    %v1565 = vld [vmem:[%s1 + $0x17e4] sm:$0xf]
    %v1566 = vld [vmem:[%s1 + $0x17e8] sm:$0xf]
    %v1567 = vld [vmem:[%s1 + $0x17ec] sm:$0xf]
    %v1568 = vld [vmem:[%s1 + $0x17f0] sm:$0xf]
    %v1569 = vld [vmem:[%s1 + $0x17f4] sm:$0xf]
    %v1570 = vld [vmem:[%s1 + $0x17f8] sm:$0xf]
    %v1571 = vld [vmem:[%s1 + $0x17fc] sm:$0xf]
    %v1572 = vld [vmem:[%s1 + $0x1800] sm:$0xf]
    %v1573 = vld [vmem:[%s1 + $0x1804] sm:$0xf]
    %v1574 = vld [vmem:[%s1 + $0x1808] sm:$0xf]
    %v1575 = vld [vmem:[%s1 + $0x180c] sm:$0xf]
    %v1576 = vld [vmem:[%s1 + $0x1810] sm:$0xf]
    %v1577 = vld [vmem:[%s1 + $0x1814] sm:$0xf]
    %v1578 = vld [vmem:[%s1 + $0x1818] sm:$0xf]
    %v1579 = vld [vmem:[%s1 + $0x181c] sm:$0xf]
    %v1580 = vld [vmem:[%s1 + $0x1820] sm:$0xf]
    %v1581 = vld [vmem:[%s1 + $0x1824] sm:$0xf]
    %v1582 = vld [vmem:[%s1 + $0x1828] sm:$0xf]
    %v1583 = vld [vmem:[%s1 + $0x182c] sm:$0xf]
    %v1584 = vld [vmem:[%s1 + $0x1830] sm:$0xf]
    %v1585 = vld [vmem:[%s1 + $0x1834] sm:$0xf]
    %v1586 = vld [vmem:[%s1 + $0x1838] sm:$0xf]
    %v1587 = vld [vmem:[%s1 + $0x183c] sm:$0xf]
    %v1588 = vld [vmem:[%s1 + $0x1840] sm:$0xf]
    %v1589 = vld [vmem:[%s1 + $0x1844] sm:$0xf]
    %v1590 = vld [vmem:[%s1 + $0x1848] sm:$0xf]
    %v1591 = vld [vmem:[%s1 + $0x184c] sm:$0xf]
    %v1592 = vld [vmem:[%s1 + $0x1850] sm:$0xf]
    %v1593 = vld [vmem:[%s1 + $0x1854] sm:$0xf]
    %v1594 = vld [vmem:[%s1 + $0x1858] sm:$0xf]
    %v1595 = vld [vmem:[%s1 + $0x185c] sm:$0xf]
    %v1596 = vld [vmem:[%s1 + $0x1860] sm:$0xf]
    %v1597 = vld [vmem:[%s1 + $0x1864] sm:$0xf]
    %v1598 = vld [vmem:[%s1 + $0x1868] sm:$0xf]
    %v1599 = vld [vmem:[%s1 + $0x186c] sm:$0xf]
    %v1600 = vld [vmem:[%s1 + $0x1870] sm:$0xf]
    %v1601 = vld [vmem:[%s1 + $0x1874] sm:$0xf]
    %v1602 = vld [vmem:[%s1 + $0x1878] sm:$0xf]
    %v1603 = vld [vmem:[%s1 + $0x187c] sm:$0xf]
    %v1604 = vld [vmem:[%s1 + $0x1880] sm:$0xf]
    %v1605 = vld [vmem:[%s1 + $0x1884] sm:$0xf]
    %v1606 = vld [vmem:[%s1 + $0x1888] sm:$0xf]
    %v1607 = vld [vmem:[%s1 + $0x188c] sm:$0xf]
    %v1608 = vld [vmem:[%s1 + $0x1890] sm:$0xf]
    %v1609 = vld [vmem:[%s1 + $0x1894] sm:$0xf]
    %v1610 = vld [vmem:[%s1 + $0x1898] sm:$0xf]
    %v1611 = vld [vmem:[%s1 + $0x189c] sm:$0xf]
    %v1612 = vld [vmem:[%s1 + $0x18a0] sm:$0xf]
    %v1613 = vld [vmem:[%s1 + $0x18a4] sm:$0xf]
    %v1614 = vld [vmem:[%s1 + $0x18a8] sm:$0xf]
    %v1615 = vld [vmem:[%s1 + $0x18ac] sm:$0xf]
    %v1616 = vld [vmem:[%s1 + $0x18b0] sm:$0xf]
    %v1617 = vld [vmem:[%s1 + $0x18b4] sm:$0xf]
    %v1618 = vld [vmem:[%s1 + $0x18b8] sm:$0xf]
    %v1619 = vld [vmem:[%s1 + $0x18bc] sm:$0xf]
    %v1620 = vld [vmem:[%s1 + $0x18c0] sm:$0xf]
    %v1621 = vld [vmem:[%s1 + $0x18c4] sm:$0xf]
    %v1622 = vld [vmem:[%s1 + $0x18c8] sm:$0xf]
    %v1623 = vld [vmem:[%s1 + $0x18cc] sm:$0xf]
    %v1624 = vld [vmem:[%s1 + $0x18d0] sm:$0xf]
    %v1625 = vld [vmem:[%s1 + $0x18d4] sm:$0xf]
    %v1626 = vld [vmem:[%s1 + $0x18d8] sm:$0xf]
    %v1627 = vld [vmem:[%s1 + $0x18dc] sm:$0xf]
    %v1628 = vld [vmem:[%s1 + $0x18e0] sm:$0xf]
    %v1629 = vld [vmem:[%s1 + $0x18e4] sm:$0xf]
    %v1630 = vld [vmem:[%s1 + $0x18e8] sm:$0xf]
    %v1631 = vld [vmem:[%s1 + $0x18ec] sm:$0xf]
    %v1632 = vld [vmem:[%s1 + $0x18f0] sm:$0xf]
    %v1633 = vld [vmem:[%s1 + $0x18f4] sm:$0xf]
    %v1634 = vld [vmem:[%s1 + $0x18f8] sm:$0xf]
    %v1635 = vld [vmem:[%s1 + $0x18fc] sm:$0xf]
    %v1636 = vld [vmem:[%s1 + $0x1900] sm:$0xf]
    %v1637 = vld [vmem:[%s1 + $0x1904] sm:$0xf]
    %v1638 = vld [vmem:[%s1 + $0x1908] sm:$0xf]
    %v1639 = vld [vmem:[%s1 + $0x190c] sm:$0xf]
    %v1640 = vld [vmem:[%s1 + $0x1910] sm:$0xf]
    %v1641 = vld [vmem:[%s1 + $0x1914] sm:$0xf]
    %v1642 = vld [vmem:[%s1 + $0x1918] sm:$0xf]
    %v1643 = vld [vmem:[%s1 + $0x191c] sm:$0xf]
    %v1644 = vld [vmem:[%s1 + $0x1920] sm:$0xf]
    %v1645 = vld [vmem:[%s1 + $0x1924] sm:$0xf]
    %v1646 = vld [vmem:[%s1 + $0x1928] sm:$0xf]
    %v1647 = vld [vmem:[%s1 + $0x192c] sm:$0xf]
    %v1648 = vld [vmem:[%s1 + $0x1930] sm:$0xf]
    %v1649 = vld [vmem:[%s1 + $0x1934] sm:$0xf]
    %v1650 = vld [vmem:[%s1 + $0x1938] sm:$0xf]
    %v1651 = vld [vmem:[%s1 + $0x193c] sm:$0xf]
    %v1652 = vld [vmem:[%s1 + $0x1940] sm:$0xf]
    %v1653 = vld [vmem:[%s1 + $0x1944] sm:$0xf]
    %v1654 = vld [vmem:[%s1 + $0x1948] sm:$0xf]
    %v1655 = vld [vmem:[%s1 + $0x194c] sm:$0xf]
    %v1656 = vld [vmem:[%s1 + $0x1950] sm:$0xf]
    %v1657 = vld [vmem:[%s1 + $0x1954] sm:$0xf]
    %v1658 = vld [vmem:[%s1 + $0x1958] sm:$0xf]
    %v1659 = vld [vmem:[%s1 + $0x195c] sm:$0xf]
    %v1660 = vld [vmem:[%s1 + $0x1960] sm:$0xf]
    %v1661 = vld [vmem:[%s1 + $0x1964] sm:$0xf]
    %v1662 = vld [vmem:[%s1 + $0x1968] sm:$0xf]
    %v1663 = vld [vmem:[%s1 + $0x196c] sm:$0xf]
    %v1664 = vld [vmem:[%s1 + $0x1970] sm:$0xf]
    %v1665 = vld [vmem:[%s1 + $0x1974] sm:$0xf]
    %v1666 = vld [vmem:[%s1 + $0x1978] sm:$0xf]
    %v1667 = vld [vmem:[%s1 + $0x197c] sm:$0xf]
    %v1668 = vld [vmem:[%s1 + $0x1980] sm:$0xf]
    %v1669 = vld [vmem:[%s1 + $0x1984] sm:$0xf]
    %v1670 = vld [vmem:[%s1 + $0x1988] sm:$0xf]
    %v1671 = vld [vmem:[%s1 + $0x198c] sm:$0xf]
    %v1672 = vld [vmem:[%s1 + $0x1990] sm:$0xf]
    %v1673 = vld [vmem:[%s1 + $0x1994] sm:$0xf]
    %v1674 = vld [vmem:[%s1 + $0x1998] sm:$0xf]
    %v1675 = vld [vmem:[%s1 + $0x199c] sm:$0xf]
    %v1676 = vld [vmem:[%s1 + $0x19a0] sm:$0xf]
    %v1677 = vld [vmem:[%s1 + $0x19a4] sm:$0xf]
    %v1678 = vld [vmem:[%s1 + $0x19a8] sm:$0xf]
    %v1679 = vld [vmem:[%s1 + $0x19ac] sm:$0xf]
    %v1680 = vld [vmem:[%s1 + $0x19b0] sm:$0xf]
    %v1681 = vld [vmem:[%s1 + $0x19b4] sm:$0xf]
    %v1682 = vld [vmem:[%s1 + $0x19b8] sm:$0xf]
    %v1683 = vld [vmem:[%s1 + $0x19bc] sm:$0xf]
    %v1684 = vld [vmem:[%s1 + $0x19c0] sm:$0xf]
    %v1685 = vld [vmem:[%s1 + $0x19c4] sm:$0xf]
    %v1686 = vld [vmem:[%s1 + $0x19c8] sm:$0xf]
    %v1687 = vld [vmem:[%s1 + $0x19cc] sm:$0xf]
    %v1688 = vld [vmem:[%s1 + $0x19d0] sm:$0xf]
    %v1689 = vld [vmem:[%s1 + $0x19d4] sm:$0xf]
    %v1690 = vld [vmem:[%s1 + $0x19d8] sm:$0xf]
    %v1691 = vld [vmem:[%s1 + $0x19dc] sm:$0xf]
    %v1692 = vld [vmem:[%s1 + $0x19e0] sm:$0xf]
    %v1693 = vld [vmem:[%s1 + $0x19e4] sm:$0xf]
    %v1694 = vld [vmem:[%s1 + $0x19e8] sm:$0xf]
    %v1695 = vld [vmem:[%s1 + $0x19ec] sm:$0xf]
    %v1696 = vld [vmem:[%s1 + $0x19f0] sm:$0xf]
    %v1697 = vld [vmem:[%s1 + $0x19f4] sm:$0xf]
    %v1698 = vld [vmem:[%s1 + $0x19f8] sm:$0xf]
    %v1699 = vld [vmem:[%s1 + $0x19fc] sm:$0xf]
    %v1700 = vld [vmem:[%s1 + $0x1a00] sm:$0xf]
    %v1701 = vld [vmem:[%s1 + $0x1a04] sm:$0xf]
    %v1702 = vld [vmem:[%s1 + $0x1a08] sm:$0xf]
    %v1703 = vld [vmem:[%s1 + $0x1a0c] sm:$0xf]
    %v1704 = vld [vmem:[%s1 + $0x1a10] sm:$0xf]
    %v1705 = vld [vmem:[%s1 + $0x1a14] sm:$0xf]
    %v1706 = vld [vmem:[%s1 + $0x1a18] sm:$0xf]
    %v1707 = vld [vmem:[%s1 + $0x1a1c] sm:$0xf]
    %v1708 = vld [vmem:[%s1 + $0x1a20] sm:$0xf]
    %v1709 = vld [vmem:[%s1 + $0x1a24] sm:$0xf]
    %v1710 = vld [vmem:[%s1 + $0x1a28] sm:$0xf]
    %v1711 = vld [vmem:[%s1 + $0x1a2c] sm:$0xf]
    %v1712 = vld [vmem:[%s1 + $0x1a30] sm:$0xf]
    %v1713 = vld [vmem:[%s1 + $0x1a34] sm:$0xf]
    %v1714 = vld [vmem:[%s1 + $0x1a38] sm:$0xf]
    %v1715 = vld [vmem:[%s1 + $0x1a3c] sm:$0xf]
    %v1716 = vld [vmem:[%s1 + $0x1a40] sm:$0xf]
    %v1717 = vld [vmem:[%s1 + $0x1a44] sm:$0xf]
    %v1718 = vld [vmem:[%s1 + $0x1a48] sm:$0xf]
    %v1719 = vld [vmem:[%s1 + $0x1a4c] sm:$0xf]
    %v1720 = vld [vmem:[%s1 + $0x1a50] sm:$0xf]
    %v1721 = vld [vmem:[%s1 + $0x1a54] sm:$0xf]
    %v1722 = vld [vmem:[%s1 + $0x1a58] sm:$0xf]
    %v1723 = vld [vmem:[%s1 + $0x1a5c] sm:$0xf]
    %v1724 = vld [vmem:[%s1 + $0x1a60] sm:$0xf]
    %v1725 = vld [vmem:[%s1 + $0x1a64] sm:$0xf]
    %v1726 = vld [vmem:[%s1 + $0x1a68] sm:$0xf]
    %v1727 = vld [vmem:[%s1 + $0x1a6c] sm:$0xf]
    %v1728 = vld [vmem:[%s1 + $0x1a70] sm:$0xf]
    %v1729 = vld [vmem:[%s1 + $0x1a74] sm:$0xf]
    %v1730 = vld [vmem:[%s1 + $0x1a78] sm:$0xf]
    %v1731 = vld [vmem:[%s1 + $0x1a7c] sm:$0xf]
    %v1732 = vld [vmem:[%s1 + $0x1a80] sm:$0xf]
    %v1733 = vld [vmem:[%s1 + $0x1a84] sm:$0xf]
    %v1734 = vld [vmem:[%s1 + $0x1a88] sm:$0xf]
    %v1735 = vld [vmem:[%s1 + $0x1a8c] sm:$0xf]
    %v1736 = vld [vmem:[%s1 + $0x1a90] sm:$0xf]
    %v1737 = vld [vmem:[%s1 + $0x1a94] sm:$0xf]
    %v1738 = vld [vmem:[%s1 + $0x1a98] sm:$0xf]
    %v1739 = vld [vmem:[%s1 + $0x1a9c] sm:$0xf]
    %v1740 = vld [vmem:[%s1 + $0x1aa0] sm:$0xf]
    %v1741 = vld [vmem:[%s1 + $0x1aa4] sm:$0xf]
    %v1742 = vld [vmem:[%s1 + $0x1aa8] sm:$0xf]
    %v1743 = vld [vmem:[%s1 + $0x1aac] sm:$0xf]
    %v1744 = vld [vmem:[%s1 + $0x1ab0] sm:$0xf]
    %v1745 = vld [vmem:[%s1 + $0x1ab4] sm:$0xf]
    %v1746 = vld [vmem:[%s1 + $0x1ab8] sm:$0xf]
    %v1747 = vld [vmem:[%s1 + $0x1abc] sm:$0xf]
    %v1748 = vld [vmem:[%s1 + $0x1ac0] sm:$0xf]
    %v1749 = vld [vmem:[%s1 + $0x1ac4] sm:$0xf]
    %v1750 = vld [vmem:[%s1 + $0x1ac8] sm:$0xf]
    %v1751 = vld [vmem:[%s1 + $0x1acc] sm:$0xf]
    %v1752 = vld [vmem:[%s1 + $0x1ad0] sm:$0xf]
    %v1753 = vld [vmem:[%s1 + $0x1ad4] sm:$0xf]
    %v1754 = vld [vmem:[%s1 + $0x1ad8] sm:$0xf]
    %v1755 = vld [vmem:[%s1 + $0x1adc] sm:$0xf]
    %v1756 = vld [vmem:[%s1 + $0x1ae0] sm:$0xf]
    %v1757 = vld [vmem:[%s1 + $0x1ae4] sm:$0xf]
    %v1758 = vld [vmem:[%s1 + $0x1ae8] sm:$0xf]
    %v1759 = vld [vmem:[%s1 + $0x1aec] sm:$0xf]
    %v1760 = vld [vmem:[%s1 + $0x1af0] sm:$0xf]
    %v1761 = vld [vmem:[%s1 + $0x1af4] sm:$0xf]
    %v1762 = vld [vmem:[%s1 + $0x1af8] sm:$0xf]
    %v1763 = vld [vmem:[%s1 + $0x1afc] sm:$0xf]
    %v1764 = vld [vmem:[%s1 + $0x1b00] sm:$0xf]
    %v1765 = vld [vmem:[%s1 + $0x1b04] sm:$0xf]
    %v1766 = vld [vmem:[%s1 + $0x1b08] sm:$0xf]
    %v1767 = vld [vmem:[%s1 + $0x1b0c] sm:$0xf]
    %v1768 = vld [vmem:[%s1 + $0x1b10] sm:$0xf]
    %v1769 = vld [vmem:[%s1 + $0x1b14] sm:$0xf]
    %v1770 = vld [vmem:[%s1 + $0x1b18] sm:$0xf]
    %v1771 = vld [vmem:[%s1 + $0x1b1c] sm:$0xf]
    %v1772 = vld [vmem:[%s1 + $0x1b20] sm:$0xf]
    %v1773 = vld [vmem:[%s1 + $0x1b24] sm:$0xf]
    %v1774 = vld [vmem:[%s1 + $0x1b28] sm:$0xf]
    %v1775 = vld [vmem:[%s1 + $0x1b2c] sm:$0xf]
    %v1776 = vld [vmem:[%s1 + $0x1b30] sm:$0xf]
    %v1777 = vld [vmem:[%s1 + $0x1b34] sm:$0xf]
    %v1778 = vld [vmem:[%s1 + $0x1b38] sm:$0xf]
    %v1779 = vld [vmem:[%s1 + $0x1b3c] sm:$0xf]
    %v1780 = vld [vmem:[%s1 + $0x1b40] sm:$0xf]
    %v1781 = vld [vmem:[%s1 + $0x1b44] sm:$0xf]
    %v1782 = vld [vmem:[%s1 + $0x1b48] sm:$0xf]
    %v1783 = vld [vmem:[%s1 + $0x1b4c] sm:$0xf]
    %v1784 = vld [vmem:[%s1 + $0x1b50] sm:$0xf]
    %v1785 = vld [vmem:[%s1 + $0x1b54] sm:$0xf]
    %v1786 = vld [vmem:[%s1 + $0x1b58] sm:$0xf]
    %v1787 = vld [vmem:[%s1 + $0x1b5c] sm:$0xf]
    %v1788 = vld [vmem:[%s1 + $0x1b60] sm:$0xf]
    %v1789 = vld [vmem:[%s1 + $0x1b64] sm:$0xf]
    %v1790 = vld [vmem:[%s1 + $0x1b68] sm:$0xf]
    %v1791 = vld [vmem:[%s1 + $0x1b6c] sm:$0xf]
    %v1792 = vld [vmem:[%s1 + $0x1b70] sm:$0xf]
    %v1793 = vld [vmem:[%s1 + $0x1b74] sm:$0xf]
    %v1794 = vld [vmem:[%s1 + $0x1b78] sm:$0xf]
    %v1795 = vld [vmem:[%s1 + $0x1b7c] sm:$0xf]
    %v1796 = vld [vmem:[%s1 + $0x1b80] sm:$0xf]
    %v1797 = vld [vmem:[%s1 + $0x1b84] sm:$0xf]
    %v1798 = vld [vmem:[%s1 + $0x1b88] sm:$0xf]
    %v1799 = vld [vmem:[%s1 + $0x1b8c] sm:$0xf]
    %v1800 = vld [vmem:[%s1 + $0x1b90] sm:$0xf]
    %v1801 = vld [vmem:[%s1 + $0x1b94] sm:$0xf]
    %v1802 = vld [vmem:[%s1 + $0x1b98] sm:$0xf]
    %v1803 = vld [vmem:[%s1 + $0x1b9c] sm:$0xf]
    %v1804 = vld [vmem:[%s1 + $0x1ba0] sm:$0xf]
    %v1805 = vld [vmem:[%s1 + $0x1ba4] sm:$0xf]
    %v1806 = vld [vmem:[%s1 + $0x1ba8] sm:$0xf]
    %v1807 = vld [vmem:[%s1 + $0x1bac] sm:$0xf]
    %v1808 = vld [vmem:[%s1 + $0x1bb0] sm:$0xf]
    %v1809 = vld [vmem:[%s1 + $0x1bb4] sm:$0xf]
    %v1810 = vld [vmem:[%s1 + $0x1bb8] sm:$0xf]
    %v1811 = vld [vmem:[%s1 + $0x1bbc] sm:$0xf]
    %v1812 = vld [vmem:[%s1 + $0x1bc0] sm:$0xf]
    %v1813 = vld [vmem:[%s1 + $0x1bc4] sm:$0xf]
    %v1814 = vld [vmem:[%s1 + $0x1bc8] sm:$0xf]
    %v1815 = vld [vmem:[%s1 + $0x1bcc] sm:$0xf]
    %v1816 = vld [vmem:[%s1 + $0x1bd0] sm:$0xf]
    %v1817 = vld [vmem:[%s1 + $0x1bd4] sm:$0xf]
    %v1818 = vld [vmem:[%s1 + $0x1bd8] sm:$0xf]
    %v1819 = vld [vmem:[%s1 + $0x1bdc] sm:$0xf]
    %v1820 = vld [vmem:[%s1 + $0x1be0] sm:$0xf]
    %v1821 = vld [vmem:[%s1 + $0x1be4] sm:$0xf]
    %v1822 = vld [vmem:[%s1 + $0x1be8] sm:$0xf]
    %v1823 = vld [vmem:[%s1 + $0x1bec] sm:$0xf]
    %v1824 = vld [vmem:[%s1 + $0x1bf0] sm:$0xf]
    %v1825 = vld [vmem:[%s1 + $0x1bf4] sm:$0xf]
    %v1826 = vld [vmem:[%s1 + $0x1bf8] sm:$0xf]
    %v1827 = vld [vmem:[%s1 + $0x1bfc] sm:$0xf]
    %v1828 = vld [vmem:[%s1 + $0x1c00] sm:$0xf]
    %v1829 = vld [vmem:[%s1 + $0x1c04] sm:$0xf]
    %v1830 = vld [vmem:[%s1 + $0x1c08] sm:$0xf]
    %v1831 = vld [vmem:[%s1 + $0x1c0c] sm:$0xf]
    %v1832 = vld [vmem:[%s1 + $0x1c10] sm:$0xf]
    %v1833 = vld [vmem:[%s1 + $0x1c14] sm:$0xf]
    %v1834 = vld [vmem:[%s1 + $0x1c18] sm:$0xf]
    %v1835 = vld [vmem:[%s1 + $0x1c1c] sm:$0xf]
    %v1836 = vld [vmem:[%s1 + $0x1c20] sm:$0xf]
    %v1837 = vld [vmem:[%s1 + $0x1c24] sm:$0xf]
    %v1838 = vld [vmem:[%s1 + $0x1c28] sm:$0xf]
    %v1839 = vld [vmem:[%s1 + $0x1c2c] sm:$0xf]
    %v1840 = vld [vmem:[%s1 + $0x1c30] sm:$0xf]
    %v1841 = vld [vmem:[%s1 + $0x1c34] sm:$0xf]
    %v1842 = vld [vmem:[%s1 + $0x1c38] sm:$0xf]
    %v1843 = vld [vmem:[%s1 + $0x1c3c] sm:$0xf]
    %v1844 = vld [vmem:[%s1 + $0x1c40] sm:$0xf]
    %v1845 = vld [vmem:[%s1 + $0x1c44] sm:$0xf]
    %v1846 = vld [vmem:[%s1 + $0x1c48] sm:$0xf]
    %v1847 = vld [vmem:[%s1 + $0x1c4c] sm:$0xf]
    %v1848 = vld [vmem:[%s1 + $0x1c50] sm:$0xf]
    %v1849 = vld [vmem:[%s1 + $0x1c54] sm:$0xf]
    %v1850 = vld [vmem:[%s1 + $0x1c58] sm:$0xf]
    %v1851 = vld [vmem:[%s1 + $0x1c5c] sm:$0xf]
    %v1852 = vld [vmem:[%s1 + $0x1c60] sm:$0xf]
    %v1853 = vld [vmem:[%s1 + $0x1c64] sm:$0xf]
    %v1854 = vld [vmem:[%s1 + $0x1c68] sm:$0xf]
    %v1855 = vld [vmem:[%s1 + $0x1c6c] sm:$0xf]
    %v1856 = vld [vmem:[%s1 + $0x1c70] sm:$0xf]
    %v1857 = vld [vmem:[%s1 + $0x1c74] sm:$0xf]
    %v1858 = vld [vmem:[%s1 + $0x1c78] sm:$0xf]
    %v1859 = vld [vmem:[%s1 + $0x1c7c] sm:$0xf]
    %v1860 = vld [vmem:[%s1 + $0x1c80] sm:$0xf]
    %v1861 = vld [vmem:[%s1 + $0x1c84] sm:$0xf]
    %v1862 = vld [vmem:[%s1 + $0x1c88] sm:$0xf]
    %v1863 = vld [vmem:[%s1 + $0x1c8c] sm:$0xf]
    %v1864 = vld [vmem:[%s1 + $0x1c90] sm:$0xf]
    %v1865 = vld [vmem:[%s1 + $0x1c94] sm:$0xf]
    %v1866 = vld [vmem:[%s1 + $0x1c98] sm:$0xf]
    %v1867 = vld [vmem:[%s1 + $0x1c9c] sm:$0xf]
    %v1868 = vld [vmem:[%s1 + $0x1ca0] sm:$0xf]
    %v1869 = vld [vmem:[%s1 + $0x1ca4] sm:$0xf]
    %v1870 = vld [vmem:[%s1 + $0x1ca8] sm:$0xf]
    %v1871 = vld [vmem:[%s1 + $0x1cac] sm:$0xf]
    %v1872 = vld [vmem:[%s1 + $0x1cb0] sm:$0xf]
    %v1873 = vld [vmem:[%s1 + $0x1cb4] sm:$0xf]
    %v1874 = vld [vmem:[%s1 + $0x1cb8] sm:$0xf]
    %v1875 = vld [vmem:[%s1 + $0x1cbc] sm:$0xf]
    %v1876 = vld [vmem:[%s1 + $0x1cc0] sm:$0xf]
    %v1877 = vld [vmem:[%s1 + $0x1cc4] sm:$0xf]
    %v1878 = vld [vmem:[%s1 + $0x1cc8] sm:$0xf]
    %v1879 = vld [vmem:[%s1 + $0x1ccc] sm:$0xf]
    %v1880 = vld [vmem:[%s1 + $0x1cd0] sm:$0xf]
    %v1881 = vld [vmem:[%s1 + $0x1cd4] sm:$0xf]
    %v1882 = vld [vmem:[%s1 + $0x1cd8] sm:$0xf]
    %v1883 = vld [vmem:[%s1 + $0x1cdc] sm:$0xf]
    %v1884 = vld [vmem:[%s1 + $0x1ce0] sm:$0xf]
    %v1885 = vld [vmem:[%s1 + $0x1ce4] sm:$0xf]
    %v1886 = vld [vmem:[%s1 + $0x1ce8] sm:$0xf]
    %v1887 = vld [vmem:[%s1 + $0x1cec] sm:$0xf]
    %v1888 = vld [vmem:[%s1 + $0x1cf0] sm:$0xf]
    %v1889 = vld [vmem:[%s1 + $0x1cf4] sm:$0xf]
    %v1890 = vld [vmem:[%s1 + $0x1cf8] sm:$0xf]
    %v1891 = vld [vmem:[%s1 + $0x1cfc] sm:$0xf]
    %v1892 = vld [vmem:[%s2] sm:$0x1]
    %v1894 = vperm.slane %v1892, 0
    %1897 = vst [vmem:[#allocation1] ss:$9 sm:$0xff] %v21
    %v1898 = vld [vmem:[#allocation1] sm:$0xff]
    %v1899 = vld [vmem:[#allocation1 + $0x9] sm:$0xff]
    %v1900 = vld [vmem:[#allocation1 + $0x12] sm:$0xff]
    %v1901 = vld [vmem:[#allocation1 + $0x1b] sm:$0xff]
    %v1902 = vld [vmem:[#allocation1 + $0x24] sm:$0xff]
    %v1903 = vld [vmem:[#allocation1 + $0x2d] sm:$0xff]
    %v1904 = vld [vmem:[#allocation1 + $0x36] sm:$0xff]
    %v1905 = vld [vmem:[#allocation1 + $0x3f] sm:$0xff]
    %1907 = vst [vmem:[#allocation1] ss:$9 sm:$0xff] %v22
    %v1908 = vld [vmem:[#allocation1] sm:$0xff]
    %v1909 = vld [vmem:[#allocation1 + $0x9] sm:$0xff]
    %v1910 = vld [vmem:[#allocation1 + $0x12] sm:$0xff]
    %v1911 = vld [vmem:[#allocation1 + $0x1b] sm:$0xff]
    %v1912 = vld [vmem:[#allocation1 + $0x24] sm:$0xff]
    %v1913 = vld [vmem:[#allocation1 + $0x2d] sm:$0xff]
    %v1914 = vld [vmem:[#allocation1 + $0x36] sm:$0xff]
    %v1915 = vld [vmem:[#allocation1 + $0x3f] sm:$0xff]
    %1917 = vst [vmem:[#allocation1] ss:$9 sm:$0xff] %v23
    %v1918 = vld [vmem:[#allocation1] sm:$0xff]
    %v1919 = vld [vmem:[#allocation1 + $0x9] sm:$0xff]
    %v1920 = vld [vmem:[#allocation1 + $0x12] sm:$0xff]
    %v1921 = vld [vmem:[#allocation1 + $0x1b] sm:$0xff]
    %v1922 = vld [vmem:[#allocation1 + $0x24] sm:$0xff]
    %v1923 = vld [vmem:[#allocation1 + $0x2d] sm:$0xff]
    %v1924 = vld [vmem:[#allocation1 + $0x36] sm:$0xff]
    %v1925 = vld [vmem:[#allocation1 + $0x3f] sm:$0xff]
    %1927 = vst [vmem:[#allocation1] ss:$9 sm:$0xff] %v24
    %v1928 = vld [vmem:[#allocation1] sm:$0xff]
    %v1929 = vld [vmem:[#allocation1 + $0x9] sm:$0xff]
    %v1930 = vld [vmem:[#allocation1 + $0x12] sm:$0xff]
    %v1931 = vld [vmem:[#allocation1 + $0x1b] sm:$0xff]
    %v1932 = vld [vmem:[#allocation1 + $0x24] sm:$0xff]
    %v1933 = vld [vmem:[#allocation1 + $0x2d] sm:$0xff]
    %v1934 = vld [vmem:[#allocation1 + $0x36] sm:$0xff]
    %v1935 = vld [vmem:[#allocation1 + $0x3f] sm:$0xff]
    %1937 = vst [vmem:[#allocation1] ss:$9 sm:$0xff] %v25
    %v1938 = vld [vmem:[#allocation1] sm:$0xff]
    %v1939 = vld [vmem:[#allocation1 + $0x9] sm:$0xff]
    %v1940 = vld [vmem:[#allocation1 + $0x12] sm:$0xff]
    %v1941 = vld [vmem:[#allocation1 + $0x1b] sm:$0xff]
    %v1942 = vld [vmem:[#allocation1 + $0x24] sm:$0xff]
    %v1943 = vld [vmem:[#allocation1 + $0x2d] sm:$0xff]
    %v1944 = vld [vmem:[#allocation1 + $0x36] sm:$0xff]
    %v1945 = vld [vmem:[#allocation1 + $0x3f] sm:$0xff]
    %1947 = vst [vmem:[#allocation1] ss:$9 sm:$0xff] %v26
    %v1948 = vld [vmem:[#allocation1] sm:$0xff]
    %v1949 = vld [vmem:[#allocation1 + $0x9] sm:$0xff]
    %v1950 = vld [vmem:[#allocation1 + $0x12] sm:$0xff]
    %v1951 = vld [vmem:[#allocation1 + $0x1b] sm:$0xff]
    %v1952 = vld [vmem:[#allocation1 + $0x24] sm:$0xff]
    %v1953 = vld [vmem:[#allocation1 + $0x2d] sm:$0xff]
    %v1954 = vld [vmem:[#allocation1 + $0x36] sm:$0xff]
    %v1955 = vld [vmem:[#allocation1 + $0x3f] sm:$0xff]
    %1957 = vst [vmem:[#allocation1] ss:$9 sm:$0xff] %v27
    %v1958 = vld [vmem:[#allocation1] sm:$0xff]
    %v1959 = vld [vmem:[#allocation1 + $0x9] sm:$0xff]
    %v1960 = vld [vmem:[#allocation1 + $0x12] sm:$0xff]
    %v1961 = vld [vmem:[#allocation1 + $0x1b] sm:$0xff]
    %v1962 = vld [vmem:[#allocation1 + $0x24] sm:$0xff]
    %v1963 = vld [vmem:[#allocation1 + $0x2d] sm:$0xff]
    %v1964 = vld [vmem:[#allocation1 + $0x36] sm:$0xff]
    %v1965 = vld [vmem:[#allocation1 + $0x3f] sm:$0xff]
    %1967 = vst [vmem:[#allocation1] ss:$9 sm:$0xff] %v28
    %v1968 = vld [vmem:[#allocation1] sm:$0xff]
    %v1969 = vld [vmem:[#allocation1 + $0x9] sm:$0xff]
    %v1970 = vld [vmem:[#allocation1 + $0x12] sm:$0xff]
    %v1971 = vld [vmem:[#allocation1 + $0x1b] sm:$0xff]
    %v1972 = vld [vmem:[#allocation1 + $0x24] sm:$0xff]
    %v1973 = vld [vmem:[#allocation1 + $0x2d] sm:$0xff]
    %v1974 = vld [vmem:[#allocation1 + $0x36] sm:$0xff]
    %v1975 = vld [vmem:[#allocation1 + $0x3f] sm:$0xff]
    %1977 = vst [vmem:[#allocation1] ss:$9 sm:$0xff] %v29
    %v1978 = vld [vmem:[#allocation1] sm:$0xff]
    %v1979 = vld [vmem:[#allocation1 + $0x9] sm:$0xff]
    %v1980 = vld [vmem:[#allocation1 + $0x12] sm:$0xff]
    %v1981 = vld [vmem:[#allocation1 + $0x1b] sm:$0xff]
    %v1982 = vld [vmem:[#allocation1 + $0x24] sm:$0xff]
    %v1983 = vld [vmem:[#allocation1 + $0x2d] sm:$0xff]
    %v1984 = vld [vmem:[#allocation1 + $0x36] sm:$0xff]
    %v1985 = vld [vmem:[#allocation1 + $0x3f] sm:$0xff]
    %1987 = vst [vmem:[#allocation1] ss:$9 sm:$0xff] %v30
    %v1988 = vld [vmem:[#allocation1] sm:$0xff]
    %v1989 = vld [vmem:[#allocation1 + $0x9] sm:$0xff]
    %v1990 = vld [vmem:[#allocation1 + $0x12] sm:$0xff]
    %v1991 = vld [vmem:[#allocation1 + $0x1b] sm:$0xff]
    %v1992 = vld [vmem:[#allocation1 + $0x24] sm:$0xff]
    %v1993 = vld [vmem:[#allocation1 + $0x2d] sm:$0xff]
    %v1994 = vld [vmem:[#allocation1 + $0x36] sm:$0xff]
    %v1995 = vld [vmem:[#allocation1 + $0x3f] sm:$0xff]
    %1997 = vst [vmem:[#allocation1] ss:$9 sm:$0xff] %v31
    %v1998 = vld [vmem:[#allocation1] sm:$0xff]
    %v1999 = vld [vmem:[#allocation1 + $0x9] sm:$0xff]
    %v2000 = vld [vmem:[#allocation1 + $0x12] sm:$0xff]
    %v2001 = vld [vmem:[#allocation1 + $0x1b] sm:$0xff]
    %v2002 = vld [vmem:[#allocation1 + $0x24] sm:$0xff]
    %v2003 = vld [vmem:[#allocation1 + $0x2d] sm:$0xff]
    %v2004 = vld [vmem:[#allocation1 + $0x36] sm:$0xff]
    %v2005 = vld [vmem:[#allocation1 + $0x3f] sm:$0xff]
    %2007 = vst [vmem:[#allocation1] ss:$9 sm:$0xff] %v32
    %v2008 = vld [vmem:[#allocation1] sm:$0xff]
    %v2009 = vld [vmem:[#allocation1 + $0x9] sm:$0xff]
    %v2010 = vld [vmem:[#allocation1 + $0x12] sm:$0xff]
    %v2011 = vld [vmem:[#allocation1 + $0x1b] sm:$0xff]
    %v2012 = vld [vmem:[#allocation1 + $0x24] sm:$0xff]
    %v2013 = vld [vmem:[#allocation1 + $0x2d] sm:$0xff]
    %v2014 = vld [vmem:[#allocation1 + $0x36] sm:$0xff]
    %v2015 = vld [vmem:[#allocation1 + $0x3f] sm:$0xff]
    %2017 = vst [vmem:[#allocation1] ss:$9 sm:$0xff] %v33
    %v2018 = vld [vmem:[#allocation1] sm:$0xff]
    %v2019 = vld [vmem:[#allocation1 + $0x9] sm:$0xff]
    %v2020 = vld [vmem:[#allocation1 + $0x12] sm:$0xff]
    %v2021 = vld [vmem:[#allocation1 + $0x1b] sm:$0xff]
    %v2022 = vld [vmem:[#allocation1 + $0x24] sm:$0xff]
    %v2023 = vld [vmem:[#allocation1 + $0x2d] sm:$0xff]
    %v2024 = vld [vmem:[#allocation1 + $0x36] sm:$0xff]
    %v2025 = vld [vmem:[#allocation1 + $0x3f] sm:$0xff]
    %2027 = vst [vmem:[#allocation1] ss:$9 sm:$0xff] %v34
    %v2028 = vld [vmem:[#allocation1] sm:$0xff]
    %v2029 = vld [vmem:[#allocation1 + $0x9] sm:$0xff]
    %v2030 = vld [vmem:[#allocation1 + $0x12] sm:$0xff]
    %v2031 = vld [vmem:[#allocation1 + $0x1b] sm:$0xff]
    %v2032 = vld [vmem:[#allocation1 + $0x24] sm:$0xff]
    %v2033 = vld [vmem:[#allocation1 + $0x2d] sm:$0xff]
    %v2034 = vld [vmem:[#allocation1 + $0x36] sm:$0xff]
    %v2035 = vld [vmem:[#allocation1 + $0x3f] sm:$0xff]
    %2037 = vst [vmem:[#allocation1] ss:$9 sm:$0xff] %v35
    %v2038 = vld [vmem:[#allocation1] sm:$0xff]
    %v2039 = vld [vmem:[#allocation1 + $0x9] sm:$0xff]
    %v2040 = vld [vmem:[#allocation1 + $0x12] sm:$0xff]
    %v2041 = vld [vmem:[#allocation1 + $0x1b] sm:$0xff]
    %v4014 = vunpack.c.l.b16 %v36
    %v4015 = vunpack.c.l.b16 %v37
    %v4016 = vunpack.c.l.b16 %v38
    %v4017 = vunpack.c.l.b16 %v39
    %v4018 = vunpack.c.l.b16 %v40
    %v4019 = vunpack.c.l.b16 %v41
    %v4020 = vunpack.c.l.b16 %v42
    %v4021 = vunpack.c.l.b16 %v43
    %v4022 = vunpack.c.l.b16 %v44
    %v4023 = vunpack.c.l.b16 %v45
    %v4024 = vunpack.c.l.b16 %v46
    %v4025 = vunpack.c.l.b16 %v47
    %v4026 = vunpack.c.l.b16 %v48
    %v4027 = vunpack.c.l.b16 %v49
    %v4028 = vunpack.c.l.b16 %v50
    %v4029 = vunpack.c.l.b16 %v51
    %v4030 = vunpack.c.l.b16 %v52
    %v4031 = vunpack.c.l.b16 %v53
    %v4032 = vunpack.c.l.b16 %v54
    %v4033 = vunpack.c.l.b16 %v55
    %v4034 = vunpack.c.l.b16 %v56
    %v4035 = vunpack.c.l.b16 %v57
    %v4036 = vunpack.c.l.b16 %v58
    %v4037 = vunpack.c.l.b16 %v59
    %v4038 = vunpack.c.l.b16 %v60
    %v4039 = vunpack.c.l.b16 %v61
    %v4040 = vunpack.c.l.b16 %v62
    %v4041 = vunpack.c.l.b16 %v63
    %v4042 = vunpack.c.l.b16 %v64
    %v4043 = vunpack.c.l.b16 %v65
    %v4044 = vunpack.c.l.b16 %v66
    %v4045 = vunpack.c.l.b16 %v67
    %v4046 = vunpack.c.l.b16 %v68
    %v4047 = vunpack.c.l.b16 %v69
    %v4048 = vunpack.c.l.b16 %v70
    %v4049 = vunpack.c.l.b16 %v71
    %v4050 = vunpack.c.l.b16 %v72
    %v4051 = vunpack.c.l.b16 %v73
    %v4052 = vunpack.c.l.b16 %v74
    %v4053 = vunpack.c.l.b16 %v75
    %v4054 = vunpack.c.l.b16 %v76
    %v4055 = vunpack.c.l.b16 %v77
    %v4056 = vunpack.c.l.b16 %v78
    %v4057 = vunpack.c.l.b16 %v79
    %v4058 = vunpack.c.l.b16 %v80
    %v4059 = vunpack.c.l.b16 %v81
    %v4060 = vunpack.c.l.b16 %v82
    %v4061 = vunpack.c.l.b16 %v83
    %v4062 = vunpack.c.l.b16 %v84
    %v4063 = vunpack.c.l.b16 %v85
    %v4064 = vunpack.c.l.b16 %v86
    %v4065 = vunpack.c.l.b16 %v87
    %v4066 = vunpack.c.l.b16 %v88
    %v4067 = vunpack.c.l.b16 %v89
    %v4068 = vunpack.c.l.b16 %v90
    %v4069 = vunpack.c.l.b16 %v91
    %v4070 = vunpack.c.l.b16 %v92
    %v4071 = vunpack.c.l.b16 %v93
    %v4072 = vunpack.c.l.b16 %v94
    %v4073 = vunpack.c.l.b16 %v95
    %v4074 = vunpack.c.l.b16 %v96
    %v4075 = vunpack.c.l.b16 %v97
    %v4076 = vunpack.c.l.b16 %v98
    %v4077 = vunpack.c.l.b16 %v99
    %v4078 = vunpack.c.l.b16 %v100
    %v4079 = vunpack.c.l.b16 %v101
    %v4080 = vunpack.c.l.b16 %v102
    %v4081 = vunpack.c.l.b16 %v103
    %v4082 = vunpack.c.l.b16 %v104
    %v4083 = vunpack.c.l.b16 %v105
    %v4084 = vunpack.c.l.b16 %v106
    %v4085 = vunpack.c.l.b16 %v107
    %v4086 = vunpack.c.l.b16 %v108
    %v4087 = vunpack.c.l.b16 %v109
    %v4088 = vunpack.c.l.b16 %v110
    %v4089 = vunpack.c.l.b16 %v111
    %v4090 = vunpack.c.l.b16 %v112
    %v4091 = vunpack.c.l.b16 %v113
    %v4092 = vunpack.c.l.b16 %v114
    %v4093 = vunpack.c.l.b16 %v115
    %v4094 = vunpack.c.l.b16 %v116
    %v4095 = vunpack.c.l.b16 %v117
    %v4096 = vunpack.c.l.b16 %v118
    %v4097 = vunpack.c.l.b16 %v119
    %v4098 = vunpack.c.l.b16 %v120
    %v4099 = vunpack.c.l.b16 %v121
    %v4100 = vunpack.c.l.b16 %v122
    %v4101 = vunpack.c.l.b16 %v123
    %v4102 = vunpack.c.l.b16 %v124
    %v4103 = vunpack.c.l.b16 %v125
    %v4104 = vunpack.c.l.b16 %v126
    %v4105 = vunpack.c.l.b16 %v127
    %v4106 = vunpack.c.l.b16 %v128
    %v4107 = vunpack.c.l.b16 %v129
    %v4108 = vunpack.c.l.b16 %v130
    %v4109 = vunpack.c.l.b16 %v131
    %v4110 = vunpack.c.l.b16 %v132
    %v4111 = vunpack.c.l.b16 %v133
    %v4112 = vunpack.c.l.b16 %v134
    %v4113 = vunpack.c.l.b16 %v135
    %v4114 = vunpack.c.l.b16 %v136
    %v4115 = vunpack.c.l.b16 %v137
    %v4116 = vunpack.c.l.b16 %v138
    %v4117 = vunpack.c.l.b16 %v139
    %v4118 = vunpack.c.l.b16 %v140
    %v4119 = vunpack.c.l.b16 %v141
    %v4120 = vunpack.c.l.b16 %v142
    %v4121 = vunpack.c.l.b16 %v143
    %v4122 = vunpack.c.l.b16 %v144
    %v4123 = vunpack.c.l.b16 %v145
    %v4124 = vunpack.c.l.b16 %v146
    %v4125 = vunpack.c.l.b16 %v147
    %v4126 = vunpack.c.l.b16 %v148
    %v4127 = vunpack.c.l.b16 %v149
    %v4128 = vunpack.c.l.b16 %v150
    %v4129 = vunpack.c.l.b16 %v151
    %v4130 = vunpack.c.l.b16 %v152
    %v4131 = vunpack.c.l.b16 %v153
    %v4132 = vunpack.c.l.b16 %v154
    %v4133 = vunpack.c.l.b16 %v155
    %v4134 = vunpack.c.l.b16 %v156
    %v4135 = vunpack.c.l.b16 %v157
    %v4136 = vunpack.c.l.b16 %v158
    %v4137 = vunpack.c.l.b16 %v159
    %v4138 = vunpack.c.l.b16 %v160
    %v4139 = vunpack.c.l.b16 %v161
    %v4140 = vunpack.c.l.b16 %v162
    %v4141 = vunpack.c.l.b16 %v163
    %v4142 = vunpack.c.l.b16 %v164
    %v4143 = vunpack.c.l.b16 %v165
    %v4144 = vunpack.c.l.b16 %v166
    %v4145 = vunpack.c.l.b16 %v167
    %v4146 = vunpack.c.l.b16 %v168
    %v4147 = vunpack.c.l.b16 %v169
    %v4148 = vunpack.c.l.b16 %v170
    %v4149 = vunpack.c.l.b16 %v171
    %v4150 = vunpack.c.l.b16 %v172
    %v4151 = vunpack.c.l.b16 %v173
    %v4152 = vunpack.c.l.b16 %v174
    %v4153 = vunpack.c.l.b16 %v175
    %v4154 = vunpack.c.l.b16 %v176
    %v4155 = vunpack.c.l.b16 %v177
    %v4156 = vunpack.c.l.b16 %v178
    %v4157 = vunpack.c.l.b16 %v179
    %v4158 = vunpack.c.l.b16 %v180
    %v4159 = vunpack.c.l.b16 %v181
    %v4160 = vunpack.c.l.b16 %v182
    %v4161 = vunpack.c.l.b16 %v183
    %v4162 = vunpack.c.l.b16 %v184
    %v4163 = vunpack.c.l.b16 %v185
    %v4164 = vunpack.c.l.b16 %v186
    %v4165 = vunpack.c.l.b16 %v187
    %v4166 = vunpack.c.l.b16 %v188
    %v4167 = vunpack.c.l.b16 %v189
    %v4168 = vunpack.c.l.b16 %v190
    %v4169 = vunpack.c.l.b16 %v191
    %v4170 = vunpack.c.l.b16 %v192
    %v4171 = vunpack.c.l.b16 %v193
    %v4172 = vunpack.c.l.b16 %v194
    %v4173 = vunpack.c.l.b16 %v195
    %v4174 = vunpack.c.l.b16 %v196
    %v4175 = vunpack.c.l.b16 %v197
    %v4176 = vunpack.c.l.b16 %v198
    %v4177 = vunpack.c.l.b16 %v199
    %v4178 = vunpack.c.l.b16 %v200
    %v4179 = vunpack.c.l.b16 %v201
    %v4180 = vunpack.c.l.b16 %v202
    %v4181 = vunpack.c.l.b16 %v203
    %v4182 = vunpack.c.l.b16 %v204
    %v4183 = vunpack.c.l.b16 %v205
    %v4184 = vunpack.c.l.b16 %v206
    %v4185 = vunpack.c.l.b16 %v207
    %v4186 = vunpack.c.l.b16 %v208
    %v4187 = vunpack.c.l.b16 %v209
    %v4188 = vunpack.c.l.b16 %v210
    %v4189 = vunpack.c.l.b16 %v211
    %v4190 = vunpack.c.l.b16 %v212
    %v4191 = vunpack.c.l.b16 %v213
    %v4192 = vunpack.c.l.b16 %v214
    %v4193 = vunpack.c.l.b16 %v215
    %v4194 = vunpack.c.l.b16 %v216
    %v4195 = vunpack.c.l.b16 %v217
    %v4196 = vunpack.c.l.b16 %v218
    %v4197 = vunpack.c.l.b16 %v219
    %v4198 = vunpack.c.l.b16 %v220
    %v4199 = vunpack.c.l.b16 %v221
    %v4200 = vunpack.c.l.b16 %v222
    %v4201 = vunpack.c.l.b16 %v223
    %v4202 = vunpack.c.l.b16 %v224
    %v4203 = vunpack.c.l.b16 %v225
    %v4204 = vunpack.c.l.b16 %v226
    %v4205 = vunpack.c.l.b16 %v227
    %v4206 = vunpack.c.l.b16 %v228
    %v4207 = vunpack.c.l.b16 %v229
    %v4208 = vunpack.c.l.b16 %v230
    %v4209 = vunpack.c.l.b16 %v231
    %v4210 = vunpack.c.l.b16 %v232
    %v4211 = vunpack.c.l.b16 %v233
    %v4212 = vunpack.c.l.b16 %v234
    %v4213 = vunpack.c.l.b16 %v235
    %v4214 = vunpack.c.l.b16 %v236
    %v4215 = vunpack.c.l.b16 %v237
    %v4216 = vunpack.c.l.b16 %v238
    %v4217 = vunpack.c.l.b16 %v239
    %v4218 = vunpack.c.l.b16 %v240
    %v4219 = vunpack.c.l.b16 %v241
    %v4220 = vunpack.c.l.b16 %v242
    %v4221 = vunpack.c.l.b16 %v243
    %v4222 = vunpack.c.l.b16 %v244
    %v4223 = vunpack.c.l.b16 %v245
    %v4224 = vunpack.c.l.b16 %v246
    %v4225 = vunpack.c.l.b16 %v247
    %v4226 = vunpack.c.l.b16 %v248
    %v4227 = vunpack.c.l.b16 %v249
    %v4228 = vunpack.c.l.b16 %v250
    %v4229 = vunpack.c.l.b16 %v251
    %v4230 = vunpack.c.l.b16 %v252
    %v4231 = vunpack.c.l.b16 %v253
    %v4232 = vunpack.c.l.b16 %v254
    %v4233 = vunpack.c.l.b16 %v255
    %v4234 = vunpack.c.l.b16 %v256
    %v4235 = vunpack.c.l.b16 %v257
    %v4236 = vunpack.c.l.b16 %v258
    %v4237 = vunpack.c.l.b16 %v259
    %v4238 = vunpack.c.l.b16 %v260
    %v4239 = vunpack.c.l.b16 %v261
    %v4240 = vunpack.c.l.b16 %v262
    %v4241 = vunpack.c.l.b16 %v263
    %v4242 = vunpack.c.l.b16 %v264
    %v4243 = vunpack.c.l.b16 %v265
    %v4244 = vunpack.c.l.b16 %v266
    %v4245 = vunpack.c.l.b16 %v267
    %v4246 = vunpack.c.l.b16 %v268
    %v4247 = vunpack.c.l.b16 %v269
    %v4248 = vunpack.c.l.b16 %v270
    %v4249 = vunpack.c.l.b16 %v271
    %v4250 = vunpack.c.l.b16 %v272
    %v4251 = vunpack.c.l.b16 %v273
    %v4252 = vunpack.c.l.b16 %v274
    %v4253 = vunpack.c.l.b16 %v275
    %v4254 = vunpack.c.l.b16 %v276
    %v4255 = vunpack.c.l.b16 %v277
    %v4256 = vunpack.c.l.b16 %v278
    %v4257 = vunpack.c.l.b16 %v279
    %v4258 = vunpack.c.l.b16 %v280
    %v4259 = vunpack.c.l.b16 %v281
    %v4260 = vunpack.c.l.b16 %v282
    %v4261 = vunpack.c.l.b16 %v283
    %v4262 = vunpack.c.l.b16 %v284
    %v4263 = vunpack.c.l.b16 %v285
    %v4264 = vunpack.c.l.b16 %v286
    %v4265 = vunpack.c.l.b16 %v287
    %v4266 = vunpack.c.l.b16 %v288
    %v4267 = vunpack.c.l.b16 %v289
    %v4268 = vunpack.c.l.b16 %v290
    %v4269 = vunpack.c.l.b16 %v291
    %v4270 = vunpack.c.l.b16 %v292
    %v4271 = vunpack.c.l.b16 %v293
    %v4272 = vunpack.c.l.b16 %v294
    %v4273 = vunpack.c.l.b16 %v295
    %v4274 = vunpack.c.l.b16 %v296
    %v4275 = vunpack.c.l.b16 %v297
    %v4276 = vunpack.c.l.b16 %v298
    %v4277 = vunpack.c.l.b16 %v299
    %v4278 = vunpack.c.l.b16 %v300
    %v4279 = vunpack.c.l.b16 %v301
    %v4280 = vunpack.c.l.b16 %v302
    %v4281 = vunpack.c.l.b16 %v303
    %v4282 = vunpack.c.l.b16 %v304
    %v4283 = vunpack.c.l.b16 %v305
    %v4284 = vunpack.c.l.b16 %v306
    %v4285 = vunpack.c.l.b16 %v307
    %v4286 = vunpack.c.l.b16 %v308
    %v4287 = vunpack.c.l.b16 %v309
    %v4288 = vunpack.c.l.b16 %v310
    %v4289 = vunpack.c.l.b16 %v311
    %v4290 = vunpack.c.l.b16 %v312
    %v4291 = vunpack.c.l.b16 %v313
    %v4292 = vunpack.c.l.b16 %v314
    %v4293 = vunpack.c.l.b16 %v315
    %v4294 = vunpack.c.l.b16 %v316
    %v4295 = vunpack.c.l.b16 %v317
    %v4296 = vunpack.c.l.b16 %v318
    %v4297 = vunpack.c.l.b16 %v319
    %v4298 = vunpack.c.l.b16 %v320
    %v4299 = vunpack.c.l.b16 %v321
    %v4300 = vunpack.c.l.b16 %v322
    %v4301 = vunpack.c.l.b16 %v323
    %v4302 = vunpack.c.l.b16 %v324
    %v4303 = vunpack.c.l.b16 %v325
    %v4304 = vunpack.c.l.b16 %v326
    %v4305 = vunpack.c.l.b16 %v327
    %v4306 = vunpack.c.l.b16 %v328
    %v4307 = vunpack.c.l.b16 %v329
    %v4308 = vunpack.c.l.b16 %v330
    %v4309 = vunpack.c.l.b16 %v331
    %v4310 = vunpack.c.l.b16 %v332
    %v4311 = vunpack.c.l.b16 %v333
    %v4312 = vunpack.c.l.b16 %v334
    %v4313 = vunpack.c.l.b16 %v335
    %v4314 = vunpack.c.l.b16 %v336
    %v4315 = vunpack.c.l.b16 %v337
    %v4316 = vunpack.c.l.b16 %v338
    %v4317 = vunpack.c.l.b16 %v339
    %v4318 = vunpack.c.l.b16 %v340
    %v4319 = vunpack.c.l.b16 %v341
    %v4320 = vunpack.c.l.b16 %v342
    %v4321 = vunpack.c.l.b16 %v343
    %v4322 = vunpack.c.l.b16 %v344
    %v4323 = vunpack.c.l.b16 %v345
    %v4324 = vunpack.c.l.b16 %v346
    %v4325 = vunpack.c.l.b16 %v347
    %v4326 = vunpack.c.l.b16 %v348
    %v4327 = vunpack.c.l.b16 %v349
    %v4328 = vunpack.c.l.b16 %v350
    %v4329 = vunpack.c.l.b16 %v351
    %v4330 = vunpack.c.l.b16 %v352
    %v4331 = vunpack.c.l.b16 %v353
    %v4332 = vunpack.c.l.b16 %v354
    %v4333 = vunpack.c.l.b16 %v355
    %v4334 = vunpack.c.l.b16 %v356
    %v4335 = vunpack.c.l.b16 %v357
    %v4336 = vunpack.c.l.b16 %v358
    %v4337 = vunpack.c.l.b16 %v359
    %v4338 = vunpack.c.l.b16 %v360
    %v4339 = vunpack.c.l.b16 %v361
    %v4340 = vunpack.c.l.b16 %v362
    %v4341 = vunpack.c.l.b16 %v363
    %v4342 = vunpack.c.l.b16 %v364
    %v4343 = vunpack.c.l.b16 %v365
    %v4344 = vunpack.c.l.b16 %v366
    %v4345 = vunpack.c.l.b16 %v367
    %v4346 = vunpack.c.l.b16 %v368
    %v4347 = vunpack.c.l.b16 %v369
    %v4348 = vunpack.c.l.b16 %v370
    %v4349 = vunpack.c.l.b16 %v371
    %v4350 = vunpack.c.l.b16 %v372
    %v4351 = vunpack.c.l.b16 %v373
    %v4352 = vunpack.c.l.b16 %v374
    %v4353 = vunpack.c.l.b16 %v375
    %v4354 = vunpack.c.l.b16 %v376
    %v4355 = vunpack.c.l.b16 %v377
    %v4356 = vunpack.c.l.b16 %v378
    %v4357 = vunpack.c.l.b16 %v379
    %v4358 = vunpack.c.l.b16 %v380
    %v4359 = vunpack.c.l.b16 %v381
    %v4360 = vunpack.c.l.b16 %v382
    %v4361 = vunpack.c.l.b16 %v383
    %v4362 = vunpack.c.l.b16 %v384
    %v4363 = vunpack.c.l.b16 %v385
    %v4364 = vunpack.c.l.b16 %v386
    %v4365 = vunpack.c.l.b16 %v387
    %v4366 = vunpack.c.l.b16 %v388
    %v4367 = vunpack.c.l.b16 %v389
    %v4368 = vunpack.c.l.b16 %v390
    %v4369 = vunpack.c.l.b16 %v391
    %v4370 = vunpack.c.l.b16 %v392
    %v4371 = vunpack.c.l.b16 %v393
    %v4372 = vunpack.c.l.b16 %v394
    %v4373 = vunpack.c.l.b16 %v395
    %v4374 = vunpack.c.l.b16 %v396
    %v4375 = vunpack.c.l.b16 %v397
    %v4376 = vunpack.c.l.b16 %v398
    %v4377 = vunpack.c.l.b16 %v399
    %v4378 = vunpack.c.l.b16 %v400
    %v4379 = vunpack.c.l.b16 %v401
    %v4380 = vunpack.c.l.b16 %v402
    %v4381 = vunpack.c.l.b16 %v403
    %v4382 = vunpack.c.l.b16 %v404
    %v4383 = vunpack.c.l.b16 %v405
    %v4384 = vunpack.c.l.b16 %v406
    %v4385 = vunpack.c.l.b16 %v407
    %v4386 = vunpack.c.l.b16 %v408
    %v4387 = vunpack.c.l.b16 %v409
    %v4388 = vunpack.c.l.b16 %v410
    %v4389 = vunpack.c.l.b16 %v411
    %v4390 = vunpack.c.l.b16 %v412
    %v4391 = vunpack.c.l.b16 %v413
    %v4392 = vunpack.c.l.b16 %v414
    %v4393 = vunpack.c.l.b16 %v415
    %v4394 = vunpack.c.l.b16 %v416
    %v4395 = vunpack.c.l.b16 %v417
    %v4396 = vunpack.c.l.b16 %v418
    %v4397 = vunpack.c.l.b16 %v419
    %v4398 = vunpack.c.l.b16 %v420
    %v4399 = vunpack.c.l.b16 %v421
    %v4400 = vunpack.c.l.b16 %v422
    %v4401 = vunpack.c.l.b16 %v423
    %v4402 = vunpack.c.l.b16 %v424
    %v4403 = vunpack.c.l.b16 %v425
    %v4404 = vunpack.c.l.b16 %v426
    %v4405 = vunpack.c.l.b16 %v427
    %v4406 = vunpack.c.l.b16 %v428
    %v4407 = vunpack.c.l.b16 %v429
    %v4408 = vunpack.c.l.b16 %v430
    %v4409 = vunpack.c.l.b16 %v431
    %v4410 = vunpack.c.l.b16 %v432
    %v4411 = vunpack.c.l.b16 %v433
    %v4412 = vunpack.c.l.b16 %v434
    %v4413 = vunpack.c.l.b16 %v435
    %v4414 = vunpack.c.l.b16 %v436
    %v4415 = vunpack.c.l.b16 %v437
    %v4416 = vunpack.c.l.b16 %v438
    %v4417 = vunpack.c.l.b16 %v439
    %v4418 = vunpack.c.l.b16 %v440
    %v4419 = vunpack.c.l.b16 %v441
    %v4420 = vunpack.c.l.b16 %v442
    %v4421 = vunpack.c.l.b16 %v443
    %v4422 = vunpack.c.l.b16 %v444
    %v4423 = vunpack.c.l.b16 %v445
    %v4424 = vunpack.c.l.b16 %v446
    %v4425 = vunpack.c.l.b16 %v447
    %v4426 = vunpack.c.l.b16 %v448
    %v4427 = vunpack.c.l.b16 %v449
    %v4428 = vunpack.c.l.b16 %v450
    %v4429 = vunpack.c.l.b16 %v451
    %v4430 = vunpack.c.l.b16 %v452
    %v4431 = vunpack.c.l.b16 %v453
    %v4432 = vunpack.c.l.b16 %v454
    %v4433 = vunpack.c.l.b16 %v455
    %v4434 = vunpack.c.l.b16 %v456
    %v4435 = vunpack.c.l.b16 %v457
    %v4436 = vunpack.c.l.b16 %v458
    %v4437 = vunpack.c.l.b16 %v459
    %v4438 = vunpack.c.l.b16 %v460
    %v4439 = vunpack.c.l.b16 %v461
    %v4440 = vunpack.c.l.b16 %v462
    %v4441 = vunpack.c.l.b16 %v463
    %v4442 = vunpack.c.l.b16 %v464
    %v4443 = vunpack.c.l.b16 %v465
    %v4444 = vunpack.c.l.b16 %v466
    %v4445 = vunpack.c.l.b16 %v467
    %v4446 = vunpack.c.l.b16 %v468
    %v4447 = vunpack.c.l.b16 %v469
    %v4448 = vunpack.c.l.b16 %v470
    %v4449 = vunpack.c.l.b16 %v471
    %v4450 = vunpack.c.l.b16 %v472
    %v4451 = vunpack.c.l.b16 %v473
    %v4452 = vunpack.c.l.b16 %v474
    %v4453 = vunpack.c.l.b16 %v475
    %v4454 = vunpack.c.l.b16 %v476
    %v4455 = vunpack.c.l.b16 %v477
    %v4456 = vunpack.c.l.b16 %v478
    %v4457 = vunpack.c.l.b16 %v479
    %v4458 = vunpack.c.l.b16 %v480
    %v4459 = vunpack.c.l.b16 %v481
    %v4460 = vunpack.c.l.b16 %v482
    %v4461 = vunpack.c.l.b16 %v483
    %v4462 = vunpack.c.l.b16 %v484
    %v4463 = vunpack.c.l.b16 %v485
    %v4464 = vunpack.c.l.b16 %v486
    %v4465 = vunpack.c.l.b16 %v487
    %v4466 = vunpack.c.l.b16 %v488
    %v4467 = vunpack.c.l.b16 %v489
    %v4468 = vunpack.c.l.b16 %v490
    %v4469 = vunpack.c.l.b16 %v491
    %v4470 = vunpack.c.l.b16 %v492
    %v4471 = vunpack.c.l.b16 %v493
    %v4472 = vunpack.c.l.b16 %v494
    %v4473 = vunpack.c.l.b16 %v495
    %v4474 = vunpack.c.l.b16 %v496
    %v4475 = vunpack.c.l.b16 %v497
    %v4476 = vunpack.c.l.b16 %v498
    %v4477 = vunpack.c.l.b16 %v499
    %v4478 = vunpack.c.l.b16 %v500
    %v4479 = vunpack.c.l.b16 %v501
    %v4480 = vunpack.c.l.b16 %v502
    %v4481 = vunpack.c.l.b16 %v503
    %v4482 = vunpack.c.l.b16 %v504
    %v4483 = vunpack.c.l.b16 %v505
    %v4484 = vunpack.c.l.b16 %v506
    %v4485 = vunpack.c.l.b16 %v507
    %v4486 = vunpack.c.l.b16 %v508
    %v4487 = vunpack.c.l.b16 %v509
    %v4488 = vunpack.c.l.b16 %v510
    %v4489 = vunpack.c.l.b16 %v511
    %v4490 = vunpack.c.l.b16 %v512
    %v4491 = vunpack.c.l.b16 %v513
    %v4492 = vunpack.c.l.b16 %v514
    %v4493 = vunpack.c.l.b16 %v515
    %v4494 = vunpack.c.l.b16 %v516
    %v4495 = vunpack.c.l.b16 %v517
    %v4496 = vunpack.c.l.b16 %v518
    %v4497 = vunpack.c.l.b16 %v519
    %v4498 = vunpack.c.l.b16 %v520
    %v4499 = vunpack.c.l.b16 %v521
    %v4500 = vunpack.c.l.b16 %v522
    %v4501 = vunpack.c.l.b16 %v523
    %v4502 = vunpack.c.l.b16 %v524
    %v4503 = vunpack.c.l.b16 %v525
    %v4504 = vunpack.c.l.b16 %v526
    %v4505 = vunpack.c.l.b16 %v527
    %v4506 = vunpack.c.l.b16 %v528
    %v4507 = vunpack.c.l.b16 %v529
    %v4508 = vunpack.c.l.b16 %v530
    %v4509 = vunpack.c.l.b16 %v531
    %v4510 = vunpack.c.l.b16 %v532
    %v4511 = vunpack.c.l.b16 %v533
    %v4512 = vunpack.c.l.b16 %v534
    %v4513 = vunpack.c.l.b16 %v535
    %v4514 = vunpack.c.l.b16 %v536
    %v4515 = vunpack.c.l.b16 %v537
    %v4516 = vunpack.c.l.b16 %v538
    %v4517 = vunpack.c.l.b16 %v539
    %v4518 = vunpack.c.l.b16 %v540
    %v4519 = vunpack.c.l.b16 %v541
    %v4520 = vunpack.c.l.b16 %v542
    %v4521 = vunpack.c.l.b16 %v543
    %v4522 = vunpack.c.l.b16 %v544
    %v4523 = vunpack.c.l.b16 %v545
    %v4524 = vunpack.c.l.b16 %v546
    %v4525 = vunpack.c.l.b16 %v547
    %v4526 = vunpack.c.l.b16 %v548
    %v4527 = vunpack.c.l.b16 %v549
    %v4528 = vunpack.c.l.b16 %v550
    %v4529 = vunpack.c.l.b16 %v551
    %v4530 = vunpack.c.l.b16 %v552
    %v4531 = vunpack.c.l.b16 %v553
    %v4532 = vunpack.c.l.b16 %v554
    %v4533 = vunpack.c.l.b16 %v555
    %v4534 = vunpack.c.l.b16 %v556
    %v4535 = vunpack.c.l.b16 %v557
    %v4536 = vunpack.c.l.b16 %v558
    %v4537 = vunpack.c.l.b16 %v559
    %v4538 = vunpack.c.l.b16 %v560
    %v4539 = vunpack.c.l.b16 %v561
    %v4540 = vunpack.c.l.b16 %v562
    %v4541 = vunpack.c.l.b16 %v563
    %v4542 = vunpack.c.l.b16 %v564
    %v4543 = vunpack.c.l.b16 %v565
    %v4544 = vunpack.c.l.b16 %v566
    %v4545 = vunpack.c.l.b16 %v567
    %v4546 = vunpack.c.l.b16 %v568
    %v4547 = vunpack.c.l.b16 %v569
    %v4548 = vunpack.c.l.b16 %v570
    %v4549 = vunpack.c.l.b16 %v571
    %v4550 = vunpack.c.l.b16 %v572
    %v4551 = vunpack.c.l.b16 %v573
    %v4552 = vunpack.c.l.b16 %v574
    %v4553 = vunpack.c.l.b16 %v575
    %v4554 = vunpack.c.l.b16 %v576
    %v4555 = vunpack.c.l.b16 %v577
    %v4556 = vunpack.c.l.b16 %v578
    %v4557 = vunpack.c.l.b16 %v579
    %v4558 = vunpack.c.l.b16 %v580
    %v4559 = vunpack.c.l.b16 %v581
    %v4560 = vunpack.c.l.b16 %v582
    %v4561 = vunpack.c.l.b16 %v583
    %v4562 = vunpack.c.l.b16 %v584
    %v4563 = vunpack.c.l.b16 %v585
    %v4564 = vunpack.c.l.b16 %v586
    %v4565 = vunpack.c.l.b16 %v587
    %v4566 = vunpack.c.l.b16 %v588
    %v4567 = vunpack.c.l.b16 %v589
    %v4568 = vunpack.c.l.b16 %v590
    %v4569 = vunpack.c.l.b16 %v591
    %v4570 = vunpack.c.l.b16 %v592
    %v4571 = vunpack.c.l.b16 %v593
    %v4572 = vunpack.c.l.b16 %v594
    %v4573 = vunpack.c.l.b16 %v595
    %v4574 = vunpack.c.l.b16 %v596
    %v4575 = vunpack.c.l.b16 %v597
    %v4576 = vunpack.c.l.b16 %v598
    %v4577 = vunpack.c.l.b16 %v599
    %v4578 = vunpack.c.l.b16 %v600
    %v4579 = vunpack.c.l.b16 %v601
    %v4580 = vunpack.c.l.b16 %v602
    %v4581 = vunpack.c.l.b16 %v603
    %v4582 = vunpack.c.l.b16 %v604
    %v4583 = vunpack.c.l.b16 %v605
    %v4584 = vunpack.c.l.b16 %v606
    %v4585 = vunpack.c.l.b16 %v607
    %v4586 = vunpack.c.l.b16 %v608
    %v4587 = vunpack.c.l.b16 %v609
    %v4588 = vunpack.c.l.b16 %v610
    %v4589 = vunpack.c.l.b16 %v611
    %v4590 = vunpack.c.l.b16 %v612
    %v4591 = vunpack.c.l.b16 %v613
    %v4592 = vunpack.c.l.b16 %v614
    %v4593 = vunpack.c.l.b16 %v615
    %v4594 = vunpack.c.l.b16 %v616
    %v4595 = vunpack.c.l.b16 %v617
    %v4596 = vunpack.c.l.b16 %v618
    %v4597 = vunpack.c.l.b16 %v619
    %v4598 = vunpack.c.l.b16 %v620
    %v4599 = vunpack.c.l.b16 %v621
    %v4600 = vunpack.c.l.b16 %v622
    %v4601 = vunpack.c.l.b16 %v623
    %v4602 = vunpack.c.l.b16 %v624
    %v4603 = vunpack.c.l.b16 %v625
    %v4604 = vunpack.c.l.b16 %v626
    %v4605 = vunpack.c.l.b16 %v627
    %v4606 = vunpack.c.l.b16 %v628
    %v4607 = vunpack.c.l.b16 %v629
    %v4608 = vunpack.c.l.b16 %v630
    %v4609 = vunpack.c.l.b16 %v631
    %v4610 = vunpack.c.l.b16 %v632
    %v4611 = vunpack.c.l.b16 %v633
    %v4612 = vunpack.c.l.b16 %v634
    %v4613 = vunpack.c.l.b16 %v635
    %v4614 = vunpack.c.l.b16 %v636
    %v4615 = vunpack.c.l.b16 %v637
    %v4616 = vunpack.c.l.b16 %v638
    %v4617 = vunpack.c.l.b16 %v639
    %v4618 = vunpack.c.l.b16 %v640
    %v4619 = vunpack.c.l.b16 %v641
    %v4620 = vunpack.c.l.b16 %v642
    %v4621 = vunpack.c.l.b16 %v643
    %v4622 = vunpack.c.l.b16 %v644
    %v4623 = vunpack.c.l.b16 %v645
    %v4624 = vunpack.c.l.b16 %v646
    %v4625 = vunpack.c.l.b16 %v647
    %v4626 = vunpack.c.l.b16 %v648
    %v4627 = vunpack.c.l.b16 %v649
    %v4628 = vunpack.c.l.b16 %v650
    %v4629 = vunpack.c.l.b16 %v651
    %v4630 = vunpack.c.l.b16 %v652
    %v4631 = vunpack.c.l.b16 %v653
    %v4632 = vunpack.c.l.b16 %v654
    %v4633 = vunpack.c.l.b16 %v655
    %v4634 = vunpack.c.l.b16 %v656
    %v4635 = vunpack.c.l.b16 %v657
    %v4636 = vunpack.c.l.b16 %v658
    %v4637 = vunpack.c.l.b16 %v659
    %v4638 = vunpack.c.l.b16 %v660
    %v4639 = vunpack.c.l.b16 %v661
    %v4640 = vunpack.c.l.b16 %v662
    %v4641 = vunpack.c.l.b16 %v663
    %v4642 = vunpack.c.l.b16 %v664
    %v4643 = vunpack.c.l.b16 %v665
    %v4644 = vunpack.c.l.b16 %v666
    %v4645 = vunpack.c.l.b16 %v667
    %v4646 = vunpack.c.l.b16 %v668
    %v4647 = vunpack.c.l.b16 %v669
    %v4648 = vunpack.c.l.b16 %v670
    %v4649 = vunpack.c.l.b16 %v671
    %v4650 = vunpack.c.l.b16 %v672
    %v4651 = vunpack.c.l.b16 %v673
    %v4652 = vunpack.c.l.b16 %v674
    %v4653 = vunpack.c.l.b16 %v675
    %v4654 = vunpack.c.l.b16 %v676
    %v4655 = vunpack.c.l.b16 %v677
    %v4656 = vunpack.c.l.b16 %v678
    %v4657 = vunpack.c.l.b16 %v679
    %v4658 = vunpack.c.l.b16 %v680
    %v4659 = vunpack.c.l.b16 %v681
    %v4660 = vunpack.c.l.b16 %v682
    %v4661 = vunpack.c.l.b16 %v683
    %v4662 = vunpack.c.l.b16 %v684
    %v4663 = vunpack.c.l.b16 %v685
    %v4664 = vunpack.c.l.b16 %v686
    %v4665 = vunpack.c.l.b16 %v687
    %v4666 = vunpack.c.l.b16 %v688
    %v4667 = vunpack.c.l.b16 %v689
    %v4668 = vunpack.c.l.b16 %v690
    %v4669 = vunpack.c.l.b16 %v691
    %v4670 = vunpack.c.l.b16 %v692
    %v4671 = vunpack.c.l.b16 %v693
    %v4672 = vunpack.c.l.b16 %v694
    %v4673 = vunpack.c.l.b16 %v695
    %v4674 = vunpack.c.l.b16 %v696
    %v4675 = vunpack.c.l.b16 %v697
    %v4676 = vunpack.c.l.b16 %v698
    %v4677 = vunpack.c.l.b16 %v699
    %v4678 = vunpack.c.l.b16 %v700
    %v4679 = vunpack.c.l.b16 %v701
    %v4680 = vunpack.c.l.b16 %v702
    %v4681 = vunpack.c.l.b16 %v703
    %v4682 = vunpack.c.l.b16 %v704
    %v4683 = vunpack.c.l.b16 %v705
    %v4684 = vunpack.c.l.b16 %v706
    %v4685 = vunpack.c.l.b16 %v707
    %v4686 = vunpack.c.l.b16 %v708
    %v4687 = vunpack.c.l.b16 %v709
    %v4688 = vunpack.c.l.b16 %v710
    %v4689 = vunpack.c.l.b16 %v711
    %v4690 = vunpack.c.l.b16 %v712
    %v4691 = vunpack.c.l.b16 %v713
    %v4692 = vunpack.c.l.b16 %v714
    %v4693 = vunpack.c.l.b16 %v715
    %v4694 = vunpack.c.l.b16 %v716
    %v4695 = vunpack.c.l.b16 %v717
    %v4696 = vunpack.c.l.b16 %v718
    %v4697 = vunpack.c.l.b16 %v719
    %v4698 = vunpack.c.l.b16 %v720
    %v4699 = vunpack.c.l.b16 %v721
    %v4700 = vunpack.c.l.b16 %v722
    %v4701 = vunpack.c.l.b16 %v723
    %v4702 = vunpack.c.l.b16 %v724
    %v4703 = vunpack.c.l.b16 %v725
    %v4704 = vunpack.c.l.b16 %v726
    %v4705 = vunpack.c.l.b16 %v727
    %v4706 = vunpack.c.l.b16 %v728
    %v4707 = vunpack.c.l.b16 %v729
    %v4708 = vunpack.c.l.b16 %v730
    %v4709 = vunpack.c.l.b16 %v731
    %v4710 = vunpack.c.l.b16 %v732
    %v4711 = vunpack.c.l.b16 %v733
    %v4712 = vunpack.c.l.b16 %v734
    %v4713 = vunpack.c.l.b16 %v735
    %v4714 = vunpack.c.l.b16 %v736
    %v4715 = vunpack.c.l.b16 %v737
    %v4716 = vunpack.c.l.b16 %v738
    %v4717 = vunpack.c.l.b16 %v739
    %v4718 = vunpack.c.l.b16 %v740
    %v4719 = vunpack.c.l.b16 %v741
    %v4720 = vunpack.c.l.b16 %v742
    %v4721 = vunpack.c.l.b16 %v743
    %v4722 = vunpack.c.l.b16 %v744
    %v4723 = vunpack.c.l.b16 %v745
    %v4724 = vunpack.c.l.b16 %v746
    %v4725 = vunpack.c.l.b16 %v747
    %v4726 = vunpack.c.l.b16 %v748
    %v4727 = vunpack.c.l.b16 %v749
    %v4728 = vunpack.c.l.b16 %v750
    %v4729 = vunpack.c.l.b16 %v751
    %v4730 = vunpack.c.l.b16 %v752
    %v4731 = vunpack.c.l.b16 %v753
    %v4732 = vunpack.c.l.b16 %v754
    %v4733 = vunpack.c.l.b16 %v755
    %v4734 = vunpack.c.l.b16 %v756
    %v4735 = vunpack.c.l.b16 %v757
    %v4736 = vunpack.c.l.b16 %v758
    %v4737 = vunpack.c.l.b16 %v759
    %v4738 = vunpack.c.l.b16 %v760
    %v4739 = vunpack.c.l.b16 %v761
    %v4740 = vunpack.c.l.b16 %v762
    %v4741 = vunpack.c.l.b16 %v763
    %v4742 = vunpack.c.l.b16 %v764
    %v4743 = vunpack.c.l.b16 %v765
    %v4744 = vunpack.c.l.b16 %v766
    %v4745 = vunpack.c.l.b16 %v767
    %v4746 = vunpack.c.l.b16 %v768
    %v4747 = vunpack.c.l.b16 %v769
    %v4748 = vunpack.c.l.b16 %v770
    %v4749 = vunpack.c.l.b16 %v771
    %v4750 = vunpack.c.l.b16 %v772
    %v4751 = vunpack.c.l.b16 %v773
    %v4752 = vunpack.c.l.b16 %v774
    %v4753 = vunpack.c.l.b16 %v775
    %v4754 = vunpack.c.l.b16 %v776
    %v4755 = vunpack.c.l.b16 %v777
    %v4756 = vunpack.c.l.b16 %v778
    %v4757 = vunpack.c.l.b16 %v779
    %v4758 = vunpack.c.l.b16 %v780
    %v4759 = vunpack.c.l.b16 %v781
    %v4760 = vunpack.c.l.b16 %v782
    %v4761 = vunpack.c.l.b16 %v783
    %v4762 = vunpack.c.l.b16 %v784
    %v4763 = vunpack.c.l.b16 %v785
    %v4764 = vunpack.c.l.b16 %v786
    %v4765 = vunpack.c.l.b16 %v787
    %v4766 = vunpack.c.l.b16 %v788
    %v4767 = vunpack.c.l.b16 %v789
    %v4768 = vunpack.c.l.b16 %v790
    %v4769 = vunpack.c.l.b16 %v791
    %v4770 = vunpack.c.l.b16 %v792
    %v4771 = vunpack.c.l.b16 %v793
    %v4772 = vunpack.c.l.b16 %v794
    %v4773 = vunpack.c.l.b16 %v795
    %v4774 = vunpack.c.l.b16 %v796
    %v4775 = vunpack.c.l.b16 %v797
    %v4776 = vunpack.c.l.b16 %v798
    %v4777 = vunpack.c.l.b16 %v799
    %v4778 = vunpack.c.l.b16 %v800
    %v4779 = vunpack.c.l.b16 %v801
    %v4780 = vunpack.c.l.b16 %v802
    %v4781 = vunpack.c.l.b16 %v803
    %v4782 = vunpack.c.l.b16 %v804
    %v4783 = vunpack.c.l.b16 %v805
    %v4784 = vunpack.c.l.b16 %v806
    %v4785 = vunpack.c.l.b16 %v807
    %v4786 = vunpack.c.l.b16 %v808
    %v4787 = vunpack.c.l.b16 %v809
    %v4788 = vunpack.c.l.b16 %v810
    %v4789 = vunpack.c.l.b16 %v811
    %v4790 = vunpack.c.l.b16 %v812
    %v4791 = vunpack.c.l.b16 %v813
    %v4792 = vunpack.c.l.b16 %v814
    %v4793 = vunpack.c.l.b16 %v815
    %v4794 = vunpack.c.l.b16 %v816
    %v4795 = vunpack.c.l.b16 %v817
    %v4796 = vunpack.c.l.b16 %v818
    %v4797 = vunpack.c.l.b16 %v819
    %v4798 = vunpack.c.l.b16 %v820
    %v4799 = vunpack.c.l.b16 %v821
    %v4800 = vunpack.c.l.b16 %v822
    %v4801 = vunpack.c.l.b16 %v823
    %v4802 = vunpack.c.l.b16 %v824
    %v4803 = vunpack.c.l.b16 %v825
    %v4804 = vunpack.c.l.b16 %v826
    %v4805 = vunpack.c.l.b16 %v827
    %v4806 = vunpack.c.l.b16 %v828
    %v4807 = vunpack.c.l.b16 %v829
    %v4808 = vunpack.c.l.b16 %v830
    %v4809 = vunpack.c.l.b16 %v831
    %v4810 = vunpack.c.l.b16 %v832
    %v4811 = vunpack.c.l.b16 %v833
    %v4812 = vunpack.c.l.b16 %v834
    %v4813 = vunpack.c.l.b16 %v835
    %v4814 = vunpack.c.l.b16 %v836
    %v4815 = vunpack.c.l.b16 %v837
    %v4816 = vunpack.c.l.b16 %v838
    %v4817 = vunpack.c.l.b16 %v839
    %v4818 = vunpack.c.l.b16 %v840
    %v4819 = vunpack.c.l.b16 %v841
    %v4820 = vunpack.c.l.b16 %v842
    %v4821 = vunpack.c.l.b16 %v843
    %v4822 = vunpack.c.l.b16 %v844
    %v4823 = vunpack.c.l.b16 %v845
    %v4824 = vunpack.c.l.b16 %v846
    %v4825 = vunpack.c.l.b16 %v847
    %v4826 = vunpack.c.l.b16 %v848
    %v4827 = vunpack.c.l.b16 %v849
    %v4828 = vunpack.c.l.b16 %v850
    %v4829 = vunpack.c.l.b16 %v851
    %v4830 = vunpack.c.l.b16 %v852
    %v4831 = vunpack.c.l.b16 %v853
    %v4832 = vunpack.c.l.b16 %v854
    %v4833 = vunpack.c.l.b16 %v855
    %v4834 = vunpack.c.l.b16 %v856
    %v4835 = vunpack.c.l.b16 %v857
    %v4836 = vunpack.c.l.b16 %v858
    %v4837 = vunpack.c.l.b16 %v859
    %v4838 = vunpack.c.l.b16 %v860
    %v4839 = vunpack.c.l.b16 %v861
    %v4840 = vunpack.c.l.b16 %v862
    %v4841 = vunpack.c.l.b16 %v863
    %v4842 = vunpack.c.l.b16 %v864
    %v4843 = vunpack.c.l.b16 %v865
    %v4844 = vunpack.c.l.b16 %v866
    %v4845 = vunpack.c.l.b16 %v867
    %v4846 = vunpack.c.l.b16 %v868
    %v4847 = vunpack.c.l.b16 %v869
    %v4848 = vunpack.c.l.b16 %v870
    %v4849 = vunpack.c.l.b16 %v871
    %v4850 = vunpack.c.l.b16 %v872
    %v4851 = vunpack.c.l.b16 %v873
    %v4852 = vunpack.c.l.b16 %v874
    %v4853 = vunpack.c.l.b16 %v875
    %v4854 = vunpack.c.l.b16 %v876
    %v4855 = vunpack.c.l.b16 %v877
    %v4856 = vunpack.c.l.b16 %v878
    %v4857 = vunpack.c.l.b16 %v879
    %v4858 = vunpack.c.l.b16 %v880
    %v4859 = vunpack.c.l.b16 %v881
    %v4860 = vunpack.c.l.b16 %v882
    %v4861 = vunpack.c.l.b16 %v883
    %v4862 = vunpack.c.l.b16 %v884
    %v4863 = vunpack.c.l.b16 %v885
    %v4864 = vunpack.c.l.b16 %v886
    %v4865 = vunpack.c.l.b16 %v887
    %v4866 = vunpack.c.l.b16 %v888
    %v4867 = vunpack.c.l.b16 %v889
    %v4868 = vunpack.c.l.b16 %v890
    %v4869 = vunpack.c.l.b16 %v891
    %v4870 = vunpack.c.l.b16 %v892
    %v4871 = vunpack.c.l.b16 %v893
    %v4872 = vunpack.c.l.b16 %v894
    %v4873 = vunpack.c.l.b16 %v895
    %v4874 = vunpack.c.l.b16 %v896
    %v4875 = vunpack.c.l.b16 %v897
    %v4876 = vunpack.c.l.b16 %v898
    %v4877 = vunpack.c.l.b16 %v899
    %v4878 = vunpack.c.l.b16 %v900
    %v4879 = vunpack.c.l.b16 %v901
    %v4880 = vunpack.c.l.b16 %v902
    %v4881 = vunpack.c.l.b16 %v903
    %v4882 = vunpack.c.l.b16 %v904
    %v4883 = vunpack.c.l.b16 %v905
    %v4884 = vunpack.c.l.b16 %v906
    %v4885 = vunpack.c.l.b16 %v907
    %v4886 = vunpack.c.l.b16 %v908
    %v4887 = vunpack.c.l.b16 %v909
    %v4888 = vunpack.c.l.b16 %v910
    %v4889 = vunpack.c.l.b16 %v911
    %v4890 = vunpack.c.l.b16 %v912
    %v4891 = vunpack.c.l.b16 %v913
    %v4892 = vunpack.c.l.b16 %v914
    %v4893 = vunpack.c.l.b16 %v915
    %v4894 = vunpack.c.l.b16 %v916
    %v4895 = vunpack.c.l.b16 %v917
    %v4896 = vunpack.c.l.b16 %v918
    %v4897 = vunpack.c.l.b16 %v919
    %v4898 = vunpack.c.l.b16 %v920
    %v4899 = vunpack.c.l.b16 %v921
    %v4900 = vunpack.c.l.b16 %v922
    %v4901 = vunpack.c.l.b16 %v923
    %v4902 = vunpack.c.l.b16 %v924
    %v4903 = vunpack.c.l.b16 %v925
    %v4904 = vunpack.c.l.b16 %v926
    %v4905 = vunpack.c.l.b16 %v927
    %v4906 = vunpack.c.l.b16 %v928
    %v4907 = vunpack.c.l.b16 %v929
    %v4908 = vunpack.c.l.b16 %v930
    %v4909 = vunpack.c.l.b16 %v931
    %v4910 = vunpack.c.l.b16 %v932
    %v4911 = vunpack.c.l.b16 %v933
    %v4912 = vunpack.c.l.b16 %v934
    %v4913 = vunpack.c.l.b16 %v935
    %v4914 = vunpack.c.l.b16 %v936
    %v4915 = vunpack.c.l.b16 %v937
    %v4916 = vunpack.c.l.b16 %v938
    %v4917 = vunpack.c.l.b16 %v939
    %v4918 = vunpack.c.l.b16 %v940
    %v4919 = vunpack.c.l.b16 %v941
    %v4920 = vunpack.c.l.b16 %v942
    %v4921 = vunpack.c.l.b16 %v943
    %v4922 = vunpack.c.l.b16 %v944
    %v4923 = vunpack.c.l.b16 %v945
    %v4924 = vunpack.c.l.b16 %v946
    %v4925 = vunpack.c.l.b16 %v947
    %v4926 = vunpack.c.l.b16 %v948
    %v4927 = vunpack.c.l.b16 %v949
    %v4928 = vunpack.c.l.b16 %v950
    %v4929 = vunpack.c.l.b16 %v951
    %v4930 = vunpack.c.l.b16 %v952
    %v4931 = vunpack.c.l.b16 %v953
    %v4932 = vunpack.c.l.b16 %v954
    %v4933 = vunpack.c.l.b16 %v955
    %v4934 = vunpack.c.l.b16 %v956
    %v4935 = vunpack.c.l.b16 %v957
    %v4936 = vunpack.c.l.b16 %v958
    %v4937 = vunpack.c.l.b16 %v959
    %v4938 = vunpack.c.l.b16 %v960
    %v4939 = vunpack.c.l.b16 %v961
    %v4940 = vunpack.c.l.b16 %v962
    %v4941 = vunpack.c.l.b16 %v963
    %v4942 = vunpack.c.l.b16 %v964
    %v4943 = vunpack.c.l.b16 %v965
    %v4944 = vunpack.c.l.b16 %v966
    %v4945 = vunpack.c.l.b16 %v967
    %v4946 = vunpack.c.l.b16 %v968
    %v4947 = vunpack.c.l.b16 %v969
    %v4948 = vunpack.c.l.b16 %v970
    %v4949 = vunpack.c.l.b16 %v971
    %v4950 = vunpack.c.l.b16 %v972
    %v4951 = vunpack.c.l.b16 %v973
    %v4952 = vunpack.c.l.b16 %v974
    %v4953 = vunpack.c.l.b16 %v975
    %v4954 = vunpack.c.l.b16 %v976
    %v4955 = vunpack.c.l.b16 %v977
    %v4956 = vunpack.c.l.b16 %v978
    %v4957 = vunpack.c.l.b16 %v979
    %v4958 = vunpack.c.l.b16 %v980
    %v4959 = vunpack.c.l.b16 %v981
    %v4960 = vunpack.c.l.b16 %v982
    %v4961 = vunpack.c.l.b16 %v983
    %v4962 = vunpack.c.l.b16 %v984
    %v4963 = vunpack.c.l.b16 %v985
    %v4964 = vunpack.c.l.b16 %v986
    %v4965 = vunpack.c.l.b16 %v987
    %v4966 = vunpack.c.l.b16 %v988
    %v4967 = vunpack.c.l.b16 %v989
    %v4968 = vunpack.c.l.b16 %v990
    %v4969 = vunpack.c.l.b16 %v991
    %v4970 = vunpack.c.l.b16 %v992
    %v4971 = vunpack.c.l.b16 %v993
    %v4972 = vunpack.c.l.b16 %v994
    %v4973 = vunpack.c.l.b16 %v995
    %v4974 = vunpack.c.l.b16 %v996
    %v4975 = vunpack.c.l.b16 %v997
    %v4976 = vunpack.c.l.b16 %v998
    %v4977 = vunpack.c.l.b16 %v999
    %v4978 = vunpack.c.l.b16 %v1000
    %v4979 = vunpack.c.l.b16 %v1001
    %v4980 = vunpack.c.l.b16 %v1002
    %v4981 = vunpack.c.l.b16 %v1003
    %v4982 = vunpack.c.l.b16 %v1004
    %v4983 = vunpack.c.l.b16 %v1005
    %v4984 = vunpack.c.l.b16 %v1006
    %v4985 = vunpack.c.l.b16 %v1007
    %v4986 = vunpack.c.l.b16 %v1008
    %v4987 = vunpack.c.l.b16 %v1009
    %v4988 = vunpack.c.l.b16 %v1010
    %v4989 = vunpack.c.l.b16 %v1011
    %v4990 = vunpack.c.l.b16 %v1012
    %v4991 = vunpack.c.l.b16 %v1013
    %v4992 = vunpack.c.l.b16 %v1014
    %v4993 = vunpack.c.l.b16 %v1015
    %v4994 = vunpack.c.l.b16 %v1016
    %v4995 = vunpack.c.l.b16 %v1017
    %v4996 = vunpack.c.l.b16 %v1018
    %v4997 = vunpack.c.l.b16 %v1019
    %v4998 = vunpack.c.l.b16 %v1020
    %v4999 = vunpack.c.l.b16 %v1021
    %v5000 = vunpack.c.l.b16 %v1022
    %v5001 = vunpack.c.l.b16 %v1023
    %v5002 = vunpack.c.l.b16 %v1024
    %v5003 = vunpack.c.l.b16 %v1025
    %v5004 = vunpack.c.l.b16 %v1026
    %v5005 = vunpack.c.l.b16 %v1027
    %v5006 = vunpack.c.l.b16 %v1028
    %v5007 = vunpack.c.l.b16 %v1029
    %v5008 = vunpack.c.l.b16 %v1030
    %v5009 = vunpack.c.l.b16 %v1031
    %v5010 = vunpack.c.l.b16 %v1032
    %v5011 = vunpack.c.l.b16 %v1033
    %v5012 = vunpack.c.l.b16 %v1034
    %v5013 = vunpack.c.l.b16 %v1035
    %v5014 = vunpack.c.l.b16 %v1036
    %v5015 = vunpack.c.l.b16 %v1037
    %v5016 = vunpack.c.l.b16 %v1038
    %v5017 = vunpack.c.l.b16 %v1039
    %v5018 = vunpack.c.l.b16 %v1040
    %v5019 = vunpack.c.l.b16 %v1041
    %v5020 = vunpack.c.l.b16 %v1042
    %v5021 = vunpack.c.l.b16 %v1043
    %v5022 = vunpack.c.l.b16 %v1044
    %v5023 = vunpack.c.l.b16 %v1045
    %v5024 = vunpack.c.l.b16 %v1046
    %v5025 = vunpack.c.l.b16 %v1047
    %v5026 = vunpack.c.l.b16 %v1048
    %v5027 = vunpack.c.l.b16 %v1049
    %v5028 = vunpack.c.l.b16 %v1050
    %v5029 = vunpack.c.l.b16 %v1051
    %v5030 = vunpack.c.l.b16 %v1052
    %v5031 = vunpack.c.l.b16 %v1053
    %v5032 = vunpack.c.l.b16 %v1054
    %v5033 = vunpack.c.l.b16 %v1055
    %v5034 = vunpack.c.l.b16 %v1056
    %v5035 = vunpack.c.l.b16 %v1057
    %v5036 = vunpack.c.l.b16 %v1058
    %v5037 = vunpack.c.l.b16 %v1059
    %v5038 = vunpack.c.l.b16 %v1060
    %v5039 = vunpack.c.l.b16 %v1061
    %v5040 = vunpack.c.l.b16 %v1062
    %v5041 = vunpack.c.l.b16 %v1063
    %v5042 = vunpack.c.l.b16 %v1064
    %v5043 = vunpack.c.l.b16 %v1065
    %v5044 = vunpack.c.l.b16 %v1066
    %v5045 = vunpack.c.l.b16 %v1067
    %v5046 = vunpack.c.l.b16 %v1068
    %v5047 = vunpack.c.l.b16 %v1069
    %v5048 = vunpack.c.l.b16 %v1070
    %v5049 = vunpack.c.l.b16 %v1071
    %v5050 = vunpack.c.l.b16 %v1072
    %v5051 = vunpack.c.l.b16 %v1073
    %v5052 = vunpack.c.l.b16 %v1074
    %v5053 = vunpack.c.l.b16 %v1075
    %v5054 = vunpack.c.l.b16 %v1076
    %v5055 = vunpack.c.l.b16 %v1077
    %v5056 = vunpack.c.l.b16 %v1078
    %v5057 = vunpack.c.l.b16 %v1079
    %v5058 = vunpack.c.l.b16 %v1080
    %v5059 = vunpack.c.l.b16 %v1081
    %v5060 = vunpack.c.l.b16 %v1082
    %v5061 = vunpack.c.l.b16 %v1083
    %v5062 = vunpack.c.l.b16 %v1084
    %v5063 = vunpack.c.l.b16 %v1085
    %v5064 = vunpack.c.l.b16 %v1086
    %v5065 = vunpack.c.l.b16 %v1087
    %v5066 = vunpack.c.l.b16 %v1088
    %v5067 = vunpack.c.l.b16 %v1089
    %v5068 = vunpack.c.l.b16 %v1090
    %v5069 = vunpack.c.l.b16 %v1091
    %v5070 = vunpack.c.l.b16 %v1092
    %v5071 = vunpack.c.l.b16 %v1093
    %v5072 = vunpack.c.l.b16 %v1094
    %v5073 = vunpack.c.l.b16 %v1095
    %v5074 = vunpack.c.l.b16 %v1096
    %v5075 = vunpack.c.l.b16 %v1097
    %v5076 = vunpack.c.l.b16 %v1098
    %v5077 = vunpack.c.l.b16 %v1099
    %v5078 = vunpack.c.l.b16 %v1100
    %v5079 = vunpack.c.l.b16 %v1101
    %v5080 = vunpack.c.l.b16 %v1102
    %v5081 = vunpack.c.l.b16 %v1103
    %v5082 = vunpack.c.l.b16 %v1104
    %v5083 = vunpack.c.l.b16 %v1105
    %v5084 = vunpack.c.l.b16 %v1106
    %v5085 = vunpack.c.l.b16 %v1107
    %v5086 = vunpack.c.l.b16 %v1108
    %v5087 = vunpack.c.l.b16 %v1109
    %v5088 = vunpack.c.l.b16 %v1110
    %v5089 = vunpack.c.l.b16 %v1111
    %v5090 = vunpack.c.l.b16 %v1112
    %v5091 = vunpack.c.l.b16 %v1113
    %v5092 = vunpack.c.l.b16 %v1114
    %v5093 = vunpack.c.l.b16 %v1115
    %v5094 = vunpack.c.l.b16 %v1116
    %v5095 = vunpack.c.l.b16 %v1117
    %v5096 = vunpack.c.l.b16 %v1118
    %v5097 = vunpack.c.l.b16 %v1119
    %v5098 = vunpack.c.l.b16 %v1120
    %v5099 = vunpack.c.l.b16 %v1121
    %v5100 = vunpack.c.l.b16 %v1122
    %v5101 = vunpack.c.l.b16 %v1123
    %v5102 = vunpack.c.l.b16 %v1124
    %v5103 = vunpack.c.l.b16 %v1125
    %v5104 = vunpack.c.l.b16 %v1126
    %v5105 = vunpack.c.l.b16 %v1127
    %v5106 = vunpack.c.l.b16 %v1128
    %v5107 = vunpack.c.l.b16 %v1129
    %v5108 = vunpack.c.l.b16 %v1130
    %v5109 = vunpack.c.l.b16 %v1131
    %v5110 = vunpack.c.l.b16 %v1132
    %v5111 = vunpack.c.l.b16 %v1133
    %v5112 = vunpack.c.l.b16 %v1134
    %v5113 = vunpack.c.l.b16 %v1135
    %v5114 = vunpack.c.l.b16 %v1136
    %v5115 = vunpack.c.l.b16 %v1137
    %v5116 = vunpack.c.l.b16 %v1138
    %v5117 = vunpack.c.l.b16 %v1139
    %v5118 = vunpack.c.l.b16 %v1140
    %v5119 = vunpack.c.l.b16 %v1141
    %v5120 = vunpack.c.l.b16 %v1142
    %v5121 = vunpack.c.l.b16 %v1143
    %v5122 = vunpack.c.l.b16 %v1144
    %v5123 = vunpack.c.l.b16 %v1145
    %v5124 = vunpack.c.l.b16 %v1146
    %v5125 = vunpack.c.l.b16 %v1147
    %v5126 = vunpack.c.l.b16 %v1148
    %v5127 = vunpack.c.l.b16 %v1149
    %v5128 = vunpack.c.l.b16 %v1150
    %v5129 = vunpack.c.l.b16 %v1151
    %v5130 = vunpack.c.l.b16 %v1152
    %v5131 = vunpack.c.l.b16 %v1153
    %v5132 = vunpack.c.l.b16 %v1154
    %v5133 = vunpack.c.l.b16 %v1155
    %v5134 = vunpack.c.l.b16 %v1156
    %v5135 = vunpack.c.l.b16 %v1157
    %v5136 = vunpack.c.l.b16 %v1158
    %v5137 = vunpack.c.l.b16 %v1159
    %v5138 = vunpack.c.l.b16 %v1160
    %v5139 = vunpack.c.l.b16 %v1161
    %v5140 = vunpack.c.l.b16 %v1162
    %v5141 = vunpack.c.l.b16 %v1163
    %v5142 = vunpack.c.l.b16 %v1164
    %v5143 = vunpack.c.l.b16 %v1165
    %v5144 = vunpack.c.l.b16 %v1166
    %v5145 = vunpack.c.l.b16 %v1167
    %v5146 = vunpack.c.l.b16 %v1168
    %v5147 = vunpack.c.l.b16 %v1169
    %v5148 = vunpack.c.l.b16 %v1170
    %v5149 = vunpack.c.l.b16 %v1171
    %v5150 = vunpack.c.l.b16 %v1172
    %v5151 = vunpack.c.l.b16 %v1173
    %v5152 = vunpack.c.l.b16 %v1174
    %v5153 = vunpack.c.l.b16 %v1175
    %v5154 = vunpack.c.l.b16 %v1176
    %v5155 = vunpack.c.l.b16 %v1177
    %v5156 = vunpack.c.l.b16 %v1178
    %v5157 = vunpack.c.l.b16 %v1179
    %v5158 = vunpack.c.l.b16 %v1180
    %v5159 = vunpack.c.l.b16 %v1181
    %v5160 = vunpack.c.l.b16 %v1182
    %v5161 = vunpack.c.l.b16 %v1183
    %v5162 = vunpack.c.l.b16 %v1184
    %v5163 = vunpack.c.l.b16 %v1185
    %v5164 = vunpack.c.l.b16 %v1186
    %v5165 = vunpack.c.l.b16 %v1187
    %v5166 = vunpack.c.l.b16 %v1188
    %v5167 = vunpack.c.l.b16 %v1189
    %v5168 = vunpack.c.l.b16 %v1190
    %v5169 = vunpack.c.l.b16 %v1191
    %v5170 = vunpack.c.l.b16 %v1192
    %v5171 = vunpack.c.l.b16 %v1193
    %v5172 = vunpack.c.l.b16 %v1194
    %v5173 = vunpack.c.l.b16 %v1195
    %v5174 = vunpack.c.l.b16 %v1196
    %v5175 = vunpack.c.l.b16 %v1197
    %v5176 = vunpack.c.l.b16 %v1198
    %v5177 = vunpack.c.l.b16 %v1199
    %v5178 = vunpack.c.l.b16 %v1200
    %v5179 = vunpack.c.l.b16 %v1201
    %v5180 = vunpack.c.l.b16 %v1202
    %v5181 = vunpack.c.l.b16 %v1203
    %v5182 = vunpack.c.l.b16 %v1204
    %v5183 = vunpack.c.l.b16 %v1205
    %v5184 = vunpack.c.l.b16 %v1206
    %v5185 = vunpack.c.l.b16 %v1207
    %v5186 = vunpack.c.l.b16 %v1208
    %v5187 = vunpack.c.l.b16 %v1209
    %v5188 = vunpack.c.l.b16 %v1210
    %v5189 = vunpack.c.l.b16 %v1211
    %v5190 = vunpack.c.l.b16 %v1212
    %v5191 = vunpack.c.l.b16 %v1213
    %v5192 = vunpack.c.l.b16 %v1214
    %v5193 = vunpack.c.l.b16 %v1215
    %v5194 = vunpack.c.l.b16 %v1216
    %v5195 = vunpack.c.l.b16 %v1217
    %v5196 = vunpack.c.l.b16 %v1218
    %v5197 = vunpack.c.l.b16 %v1219
    %v5198 = vunpack.c.l.b16 %v1220
    %v5199 = vunpack.c.l.b16 %v1221
    %v5200 = vunpack.c.l.b16 %v1222
    %v5201 = vunpack.c.l.b16 %v1223
    %v5202 = vunpack.c.l.b16 %v1224
    %v5203 = vunpack.c.l.b16 %v1225
    %v5204 = vunpack.c.l.b16 %v1226
    %v5205 = vunpack.c.l.b16 %v1227
    %v5206 = vunpack.c.l.b16 %v1228
    %v5207 = vunpack.c.l.b16 %v1229
    %v5208 = vunpack.c.l.b16 %v1230
    %v5209 = vunpack.c.l.b16 %v1231
    %v5210 = vunpack.c.l.b16 %v1232
    %v5211 = vunpack.c.l.b16 %v1233
    %v5212 = vunpack.c.l.b16 %v1234
    %v5213 = vunpack.c.l.b16 %v1235
    %v5214 = vunpack.c.l.b16 %v1236
    %v5215 = vunpack.c.l.b16 %v1237
    %v5216 = vunpack.c.l.b16 %v1238
    %v5217 = vunpack.c.l.b16 %v1239
    %v5218 = vunpack.c.l.b16 %v1240
    %v5219 = vunpack.c.l.b16 %v1241
    %v5220 = vunpack.c.l.b16 %v1242
    %v5221 = vunpack.c.l.b16 %v1243
    %v5222 = vunpack.c.l.b16 %v1244
    %v5223 = vunpack.c.l.b16 %v1245
    %v5224 = vunpack.c.l.b16 %v1246
    %v5225 = vunpack.c.l.b16 %v1247
    %v5226 = vunpack.c.l.b16 %v1248
    %v5227 = vunpack.c.l.b16 %v1249
    %v5228 = vunpack.c.l.b16 %v1250
    %v5229 = vunpack.c.l.b16 %v1251
    %v5230 = vunpack.c.l.b16 %v1252
    %v5231 = vunpack.c.l.b16 %v1253
    %v5232 = vunpack.c.l.b16 %v1254
    %v5233 = vunpack.c.l.b16 %v1255
    %v5234 = vunpack.c.l.b16 %v1256
    %v5235 = vunpack.c.l.b16 %v1257
    %v5236 = vunpack.c.l.b16 %v1258
    %v5237 = vunpack.c.l.b16 %v1259
    %v5238 = vunpack.c.l.b16 %v1260
    %v5239 = vunpack.c.l.b16 %v1261
    %v5240 = vunpack.c.l.b16 %v1262
    %v5241 = vunpack.c.l.b16 %v1263
    %v5242 = vunpack.c.l.b16 %v1264
    %v5243 = vunpack.c.l.b16 %v1265
    %v5244 = vunpack.c.l.b16 %v1266
    %v5245 = vunpack.c.l.b16 %v1267
    %v5246 = vunpack.c.l.b16 %v1268
    %v5247 = vunpack.c.l.b16 %v1269
    %v5248 = vunpack.c.l.b16 %v1270
    %v5249 = vunpack.c.l.b16 %v1271
    %v5250 = vunpack.c.l.b16 %v1272
    %v5251 = vunpack.c.l.b16 %v1273
    %v5252 = vunpack.c.l.b16 %v1274
    %v5253 = vunpack.c.l.b16 %v1275
    %v5254 = vunpack.c.l.b16 %v1276
    %v5255 = vunpack.c.l.b16 %v1277
    %v5256 = vunpack.c.l.b16 %v1278
    %v5257 = vunpack.c.l.b16 %v1279
    %v5258 = vunpack.c.l.b16 %v1280
    %v5259 = vunpack.c.l.b16 %v1281
    %v5260 = vunpack.c.l.b16 %v1282
    %v5261 = vunpack.c.l.b16 %v1283
    %v5262 = vunpack.c.l.b16 %v1284
    %v5263 = vunpack.c.l.b16 %v1285
    %v5264 = vunpack.c.l.b16 %v1286
    %v5265 = vunpack.c.l.b16 %v1287
    %v5266 = vunpack.c.l.b16 %v1288
    %v5267 = vunpack.c.l.b16 %v1289
    %v5268 = vunpack.c.l.b16 %v1290
    %v5269 = vunpack.c.l.b16 %v1291
    %v5270 = vunpack.c.l.b16 %v1292
    %v5271 = vunpack.c.l.b16 %v1293
    %v5272 = vunpack.c.l.b16 %v1294
    %v5273 = vunpack.c.l.b16 %v1295
    %v5274 = vunpack.c.l.b16 %v1296
    %v5275 = vunpack.c.l.b16 %v1297
    %v5276 = vunpack.c.l.b16 %v1298
    %v5277 = vunpack.c.l.b16 %v1299
    %v5278 = vunpack.c.l.b16 %v1300
    %v5279 = vunpack.c.l.b16 %v1301
    %v5280 = vunpack.c.l.b16 %v1302
    %v5281 = vunpack.c.l.b16 %v1303
    %v5282 = vunpack.c.l.b16 %v1304
    %v5283 = vunpack.c.l.b16 %v1305
    %v5284 = vunpack.c.l.b16 %v1306
    %v5285 = vunpack.c.l.b16 %v1307
    %v5286 = vunpack.c.l.b16 %v1308
    %v5287 = vunpack.c.l.b16 %v1309
    %v5288 = vunpack.c.l.b16 %v1310
    %v5289 = vunpack.c.l.b16 %v1311
    %v5290 = vunpack.c.l.b16 %v1312
    %v5291 = vunpack.c.l.b16 %v1313
    %v5292 = vunpack.c.l.b16 %v1314
    %v5293 = vunpack.c.l.b16 %v1315
    %v5294 = vunpack.c.l.b16 %v1316
    %v5295 = vunpack.c.l.b16 %v1317
    %v5296 = vunpack.c.l.b16 %v1318
    %v5297 = vunpack.c.l.b16 %v1319
    %v5298 = vunpack.c.l.b16 %v1320
    %v5299 = vunpack.c.l.b16 %v1321
    %v5300 = vunpack.c.l.b16 %v1322
    %v5301 = vunpack.c.l.b16 %v1323
    %v5302 = vunpack.c.l.b16 %v1324
    %v5303 = vunpack.c.l.b16 %v1325
    %v5304 = vunpack.c.l.b16 %v1326
    %v5305 = vunpack.c.l.b16 %v1327
    %v5306 = vunpack.c.l.b16 %v1328
    %v5307 = vunpack.c.l.b16 %v1329
    %v5308 = vunpack.c.l.b16 %v1330
    %v5309 = vunpack.c.l.b16 %v1331
    %v5310 = vunpack.c.l.b16 %v1332
    %v5311 = vunpack.c.l.b16 %v1333
    %v5312 = vunpack.c.l.b16 %v1334
    %v5313 = vunpack.c.l.b16 %v1335
    %v5314 = vunpack.c.l.b16 %v1336
    %v5315 = vunpack.c.l.b16 %v1337
    %v5316 = vunpack.c.l.b16 %v1338
    %v5317 = vunpack.c.l.b16 %v1339
    %v5318 = vunpack.c.l.b16 %v1340
    %v5319 = vunpack.c.l.b16 %v1341
    %v5320 = vunpack.c.l.b16 %v1342
    %v5321 = vunpack.c.l.b16 %v1343
    %v5322 = vunpack.c.l.b16 %v1344
    %v5323 = vunpack.c.l.b16 %v1345
    %v5324 = vunpack.c.l.b16 %v1346
    %v5325 = vunpack.c.l.b16 %v1347
    %v5326 = vunpack.c.l.b16 %v1348
    %v5327 = vunpack.c.l.b16 %v1349
    %v5328 = vunpack.c.l.b16 %v1350
    %v5329 = vunpack.c.l.b16 %v1351
    %v5330 = vunpack.c.l.b16 %v1352
    %v5331 = vunpack.c.l.b16 %v1353
    %v5332 = vunpack.c.l.b16 %v1354
    %v5333 = vunpack.c.l.b16 %v1355
    %v5334 = vunpack.c.l.b16 %v1356
    %v5335 = vunpack.c.l.b16 %v1357
    %v5336 = vunpack.c.l.b16 %v1358
    %v5337 = vunpack.c.l.b16 %v1359
    %v5338 = vunpack.c.l.b16 %v1360
    %v5339 = vunpack.c.l.b16 %v1361
    %v5340 = vunpack.c.l.b16 %v1362
    %v5341 = vunpack.c.l.b16 %v1363
    %v5342 = vunpack.c.l.b16 %v1364
    %v5343 = vunpack.c.l.b16 %v1365
    %v5344 = vunpack.c.l.b16 %v1366
    %v5345 = vunpack.c.l.b16 %v1367
    %v5346 = vunpack.c.l.b16 %v1368
    %v5347 = vunpack.c.l.b16 %v1369
    %v5348 = vunpack.c.l.b16 %v1370
    %v5349 = vunpack.c.l.b16 %v1371
    %v5350 = vunpack.c.l.b16 %v1372
    %v5351 = vunpack.c.l.b16 %v1373
    %v5352 = vunpack.c.l.b16 %v1374
    %v5353 = vunpack.c.l.b16 %v1375
    %v5354 = vunpack.c.l.b16 %v1376
    %v5355 = vunpack.c.l.b16 %v1377
    %v5356 = vunpack.c.l.b16 %v1378
    %v5357 = vunpack.c.l.b16 %v1379
    %v5358 = vunpack.c.l.b16 %v1380
    %v5359 = vunpack.c.l.b16 %v1381
    %v5360 = vunpack.c.l.b16 %v1382
    %v5361 = vunpack.c.l.b16 %v1383
    %v5362 = vunpack.c.l.b16 %v1384
    %v5363 = vunpack.c.l.b16 %v1385
    %v5364 = vunpack.c.l.b16 %v1386
    %v5365 = vunpack.c.l.b16 %v1387
    %v5366 = vunpack.c.l.b16 %v1388
    %v5367 = vunpack.c.l.b16 %v1389
    %v5368 = vunpack.c.l.b16 %v1390
    %v5369 = vunpack.c.l.b16 %v1391
    %v5370 = vunpack.c.l.b16 %v1392
    %v5371 = vunpack.c.l.b16 %v1393
    %v5372 = vunpack.c.l.b16 %v1394
    %v5373 = vunpack.c.l.b16 %v1395
    %v5374 = vunpack.c.l.b16 %v1396
    %v5375 = vunpack.c.l.b16 %v1397
    %v5376 = vunpack.c.l.b16 %v1398
    %v5377 = vunpack.c.l.b16 %v1399
    %v5378 = vunpack.c.l.b16 %v1400
    %v5379 = vunpack.c.l.b16 %v1401
    %v5380 = vunpack.c.l.b16 %v1402
    %v5381 = vunpack.c.l.b16 %v1403
    %v5382 = vunpack.c.l.b16 %v1404
    %v5383 = vunpack.c.l.b16 %v1405
    %v5384 = vunpack.c.l.b16 %v1406
    %v5385 = vunpack.c.l.b16 %v1407
    %v5386 = vunpack.c.l.b16 %v1408
    %v5387 = vunpack.c.l.b16 %v1409
    %v5388 = vunpack.c.l.b16 %v1410
    %v5389 = vunpack.c.l.b16 %v1411
    %v5390 = vunpack.c.l.b16 %v1412
    %v5391 = vunpack.c.l.b16 %v1413
    %v5392 = vunpack.c.l.b16 %v1414
    %v5393 = vunpack.c.l.b16 %v1415
    %v5394 = vunpack.c.l.b16 %v1416
    %v5395 = vunpack.c.l.b16 %v1417
    %v5396 = vunpack.c.l.b16 %v1418
    %v5397 = vunpack.c.l.b16 %v1419
    %v5398 = vunpack.c.l.b16 %v1420
    %v5399 = vunpack.c.l.b16 %v1421
    %v5400 = vunpack.c.l.b16 %v1422
    %v5401 = vunpack.c.l.b16 %v1423
    %v5402 = vunpack.c.l.b16 %v1424
    %v5403 = vunpack.c.l.b16 %v1425
    %v5404 = vunpack.c.l.b16 %v1426
    %v5405 = vunpack.c.l.b16 %v1427
    %v5406 = vunpack.c.l.b16 %v1428
    %v5407 = vunpack.c.l.b16 %v1429
    %v5408 = vunpack.c.l.b16 %v1430
    %v5409 = vunpack.c.l.b16 %v1431
    %v5410 = vunpack.c.l.b16 %v1432
    %v5411 = vunpack.c.l.b16 %v1433
    %v5412 = vunpack.c.l.b16 %v1434
    %v5413 = vunpack.c.l.b16 %v1435
    %v5414 = vunpack.c.l.b16 %v1436
    %v5415 = vunpack.c.l.b16 %v1437
    %v5416 = vunpack.c.l.b16 %v1438
    %v5417 = vunpack.c.l.b16 %v1439
    %v5418 = vunpack.c.l.b16 %v1440
    %v5419 = vunpack.c.l.b16 %v1441
    %v5420 = vunpack.c.l.b16 %v1442
    %v5421 = vunpack.c.l.b16 %v1443
    %v5422 = vunpack.c.l.b16 %v1444
    %v5423 = vunpack.c.l.b16 %v1445
    %v5424 = vunpack.c.l.b16 %v1446
    %v5425 = vunpack.c.l.b16 %v1447
    %v5426 = vunpack.c.l.b16 %v1448
    %v5427 = vunpack.c.l.b16 %v1449
    %v5428 = vunpack.c.l.b16 %v1450
    %v5429 = vunpack.c.l.b16 %v1451
    %v5430 = vunpack.c.l.b16 %v1452
    %v5431 = vunpack.c.l.b16 %v1453
    %v5432 = vunpack.c.l.b16 %v1454
    %v5433 = vunpack.c.l.b16 %v1455
    %v5434 = vunpack.c.l.b16 %v1456
    %v5435 = vunpack.c.l.b16 %v1457
    %v5436 = vunpack.c.l.b16 %v1458
    %v5437 = vunpack.c.l.b16 %v1459
    %v5438 = vunpack.c.l.b16 %v1460
    %v5439 = vunpack.c.l.b16 %v1461
    %v5440 = vunpack.c.l.b16 %v1462
    %v5441 = vunpack.c.l.b16 %v1463
    %v5442 = vunpack.c.l.b16 %v1464
    %v5443 = vunpack.c.l.b16 %v1465
    %v5444 = vunpack.c.l.b16 %v1466
    %v5445 = vunpack.c.l.b16 %v1467
    %v5446 = vunpack.c.l.b16 %v1468
    %v5447 = vunpack.c.l.b16 %v1469
    %v5448 = vunpack.c.l.b16 %v1470
    %v5449 = vunpack.c.l.b16 %v1471
    %v5450 = vunpack.c.l.b16 %v1472
    %v5451 = vunpack.c.l.b16 %v1473
    %v5452 = vunpack.c.l.b16 %v1474
    %v5453 = vunpack.c.l.b16 %v1475
    %v5454 = vunpack.c.l.b16 %v1476
    %v5455 = vunpack.c.l.b16 %v1477
    %v5456 = vunpack.c.l.b16 %v1478
    %v5457 = vunpack.c.l.b16 %v1479
    %v5458 = vunpack.c.l.b16 %v1480
    %v5459 = vunpack.c.l.b16 %v1481
    %v5460 = vunpack.c.l.b16 %v1482
    %v5461 = vunpack.c.l.b16 %v1483
    %v5462 = vunpack.c.l.b16 %v1484
    %v5463 = vunpack.c.l.b16 %v1485
    %v5464 = vunpack.c.l.b16 %v1486
    %v5465 = vunpack.c.l.b16 %v1487
    %v5466 = vunpack.c.l.b16 %v1488
    %v5467 = vunpack.c.l.b16 %v1489
    %v5468 = vunpack.c.l.b16 %v1490
    %v5469 = vunpack.c.l.b16 %v1491
    %v5470 = vunpack.c.l.b16 %v1492
    %v5471 = vunpack.c.l.b16 %v1493
    %v5472 = vunpack.c.l.b16 %v1494
    %v5473 = vunpack.c.l.b16 %v1495
    %v5474 = vunpack.c.l.b16 %v1496
    %v5475 = vunpack.c.l.b16 %v1497
    %v5476 = vunpack.c.l.b16 %v1498
    %v5477 = vunpack.c.l.b16 %v1499
    %v5478 = vunpack.c.l.b16 %v1500
    %v5479 = vunpack.c.l.b16 %v1501
    %v5480 = vunpack.c.l.b16 %v1502
    %v5481 = vunpack.c.l.b16 %v1503
    %v5482 = vunpack.c.l.b16 %v1504
    %v5483 = vunpack.c.l.b16 %v1505
    %v5484 = vunpack.c.l.b16 %v1506
    %v5485 = vunpack.c.l.b16 %v1507
    %v5486 = vunpack.c.l.b16 %v1508
    %v5487 = vunpack.c.l.b16 %v1509
    %v5488 = vunpack.c.l.b16 %v1510
    %v5489 = vunpack.c.l.b16 %v1511
    %v5490 = vunpack.c.l.b16 %v1512
    %v5491 = vunpack.c.l.b16 %v1513
    %v5492 = vunpack.c.l.b16 %v1514
    %v5493 = vunpack.c.l.b16 %v1515
    %v5494 = vunpack.c.l.b16 %v1516
    %v5495 = vunpack.c.l.b16 %v1517
    %v5496 = vunpack.c.l.b16 %v1518
    %v5497 = vunpack.c.l.b16 %v1519
    %v5498 = vunpack.c.l.b16 %v1520
    %v5499 = vunpack.c.l.b16 %v1521
    %v5500 = vunpack.c.l.b16 %v1522
    %v5501 = vunpack.c.l.b16 %v1523
    %v5502 = vunpack.c.l.b16 %v1524
    %v5503 = vunpack.c.l.b16 %v1525
    %v5504 = vunpack.c.l.b16 %v1526
    %v5505 = vunpack.c.l.b16 %v1527
    %v5506 = vunpack.c.l.b16 %v1528
    %v5507 = vunpack.c.l.b16 %v1529
    %v5508 = vunpack.c.l.b16 %v1530
    %v5509 = vunpack.c.l.b16 %v1531
    %v5510 = vunpack.c.l.b16 %v1532
    %v5511 = vunpack.c.l.b16 %v1533
    %v5512 = vunpack.c.l.b16 %v1534
    %v5513 = vunpack.c.l.b16 %v1535
    %v5514 = vunpack.c.l.b16 %v1536
    %v5515 = vunpack.c.l.b16 %v1537
    %v5516 = vunpack.c.l.b16 %v1538
    %v5517 = vunpack.c.l.b16 %v1539
    %v5518 = vunpack.c.l.b16 %v1540
    %v5519 = vunpack.c.l.b16 %v1541
    %v5520 = vunpack.c.l.b16 %v1542
    %v5521 = vunpack.c.l.b16 %v1543
    %v5522 = vunpack.c.l.b16 %v1544
    %v5523 = vunpack.c.l.b16 %v1545
    %v5524 = vunpack.c.l.b16 %v1546
    %v5525 = vunpack.c.l.b16 %v1547
    %v5526 = vunpack.c.l.b16 %v1548
    %v5527 = vunpack.c.l.b16 %v1549
    %v5528 = vunpack.c.l.b16 %v1550
    %v5529 = vunpack.c.l.b16 %v1551
    %v5530 = vunpack.c.l.b16 %v1552
    %v5531 = vunpack.c.l.b16 %v1553
    %v5532 = vunpack.c.l.b16 %v1554
    %v5533 = vunpack.c.l.b16 %v1555
    %v5534 = vunpack.c.l.b16 %v1556
    %v5535 = vunpack.c.l.b16 %v1557
    %v5536 = vunpack.c.l.b16 %v1558
    %v5537 = vunpack.c.l.b16 %v1559
    %v5538 = vunpack.c.l.b16 %v1560
    %v5539 = vunpack.c.l.b16 %v1561
    %v5540 = vunpack.c.l.b16 %v1562
    %v5541 = vunpack.c.l.b16 %v1563
    %v5542 = vunpack.c.l.b16 %v1564
    %v5543 = vunpack.c.l.b16 %v1565
    %v5544 = vunpack.c.l.b16 %v1566
    %v5545 = vunpack.c.l.b16 %v1567
    %v5546 = vunpack.c.l.b16 %v1568
    %v5547 = vunpack.c.l.b16 %v1569
    %v5548 = vunpack.c.l.b16 %v1570
    %v5549 = vunpack.c.l.b16 %v1571
    %v5550 = vunpack.c.l.b16 %v1572
    %v5551 = vunpack.c.l.b16 %v1573
    %v5552 = vunpack.c.l.b16 %v1574
    %v5553 = vunpack.c.l.b16 %v1575
    %v5554 = vunpack.c.l.b16 %v1576
    %v5555 = vunpack.c.l.b16 %v1577
    %v5556 = vunpack.c.l.b16 %v1578
    %v5557 = vunpack.c.l.b16 %v1579
    %v5558 = vunpack.c.l.b16 %v1580
    %v5559 = vunpack.c.l.b16 %v1581
    %v5560 = vunpack.c.l.b16 %v1582
    %v5561 = vunpack.c.l.b16 %v1583
    %v5562 = vunpack.c.l.b16 %v1584
    %v5563 = vunpack.c.l.b16 %v1585
    %v5564 = vunpack.c.l.b16 %v1586
    %v5565 = vunpack.c.l.b16 %v1587
    %v5566 = vunpack.c.l.b16 %v1588
    %v5567 = vunpack.c.l.b16 %v1589
    %v5568 = vunpack.c.l.b16 %v1590
    %v5569 = vunpack.c.l.b16 %v1591
    %v5570 = vunpack.c.l.b16 %v1592
    %v5571 = vunpack.c.l.b16 %v1593
    %v5572 = vunpack.c.l.b16 %v1594
    %v5573 = vunpack.c.l.b16 %v1595
    %v5574 = vunpack.c.l.b16 %v1596
    %v5575 = vunpack.c.l.b16 %v1597
    %v5576 = vunpack.c.l.b16 %v1598
    %v5577 = vunpack.c.l.b16 %v1599
    %v5578 = vunpack.c.l.b16 %v1600
    %v5579 = vunpack.c.l.b16 %v1601
    %v5580 = vunpack.c.l.b16 %v1602
    %v5581 = vunpack.c.l.b16 %v1603
    %v5582 = vunpack.c.l.b16 %v1604
    %v5583 = vunpack.c.l.b16 %v1605
    %v5584 = vunpack.c.l.b16 %v1606
    %v5585 = vunpack.c.l.b16 %v1607
    %v5586 = vunpack.c.l.b16 %v1608
    %v5587 = vunpack.c.l.b16 %v1609
    %v5588 = vunpack.c.l.b16 %v1610
    %v5589 = vunpack.c.l.b16 %v1611
    %v5590 = vunpack.c.l.b16 %v1612
    %v5591 = vunpack.c.l.b16 %v1613
    %v5592 = vunpack.c.l.b16 %v1614
    %v5593 = vunpack.c.l.b16 %v1615
    %v5594 = vunpack.c.l.b16 %v1616
    %v5595 = vunpack.c.l.b16 %v1617
    %v5596 = vunpack.c.l.b16 %v1618
    %v5597 = vunpack.c.l.b16 %v1619
    %v5598 = vunpack.c.l.b16 %v1620
    %v5599 = vunpack.c.l.b16 %v1621
    %v5600 = vunpack.c.l.b16 %v1622
    %v5601 = vunpack.c.l.b16 %v1623
    %v5602 = vunpack.c.l.b16 %v1624
    %v5603 = vunpack.c.l.b16 %v1625
    %v5604 = vunpack.c.l.b16 %v1626
    %v5605 = vunpack.c.l.b16 %v1627
    %v5606 = vunpack.c.l.b16 %v1628
    %v5607 = vunpack.c.l.b16 %v1629
    %v5608 = vunpack.c.l.b16 %v1630
    %v5609 = vunpack.c.l.b16 %v1631
    %v5610 = vunpack.c.l.b16 %v1632
    %v5611 = vunpack.c.l.b16 %v1633
    %v5612 = vunpack.c.l.b16 %v1634
    %v5613 = vunpack.c.l.b16 %v1635
    %v5614 = vunpack.c.l.b16 %v1636
    %v5615 = vunpack.c.l.b16 %v1637
    %v5616 = vunpack.c.l.b16 %v1638
    %v5617 = vunpack.c.l.b16 %v1639
    %v5618 = vunpack.c.l.b16 %v1640
    %v5619 = vunpack.c.l.b16 %v1641
    %v5620 = vunpack.c.l.b16 %v1642
    %v5621 = vunpack.c.l.b16 %v1643
    %v5622 = vunpack.c.l.b16 %v1644
    %v5623 = vunpack.c.l.b16 %v1645
    %v5624 = vunpack.c.l.b16 %v1646
    %v5625 = vunpack.c.l.b16 %v1647
    %v5626 = vunpack.c.l.b16 %v1648
    %v5627 = vunpack.c.l.b16 %v1649
    %v5628 = vunpack.c.l.b16 %v1650
    %v5629 = vunpack.c.l.b16 %v1651
    %v5630 = vunpack.c.l.b16 %v1652
    %v5631 = vunpack.c.l.b16 %v1653
    %v5632 = vunpack.c.l.b16 %v1654
    %v5633 = vunpack.c.l.b16 %v1655
    %v5634 = vunpack.c.l.b16 %v1656
    %v5635 = vunpack.c.l.b16 %v1657
    %v5636 = vunpack.c.l.b16 %v1658
    %v5637 = vunpack.c.l.b16 %v1659
    %v5638 = vunpack.c.l.b16 %v1660
    %v5639 = vunpack.c.l.b16 %v1661
    %v5640 = vunpack.c.l.b16 %v1662
    %v5641 = vunpack.c.l.b16 %v1663
    %v5642 = vunpack.c.l.b16 %v1664
    %v5643 = vunpack.c.l.b16 %v1665
    %v5644 = vunpack.c.l.b16 %v1666
    %v5645 = vunpack.c.l.b16 %v1667
    %v5646 = vunpack.c.l.b16 %v1668
    %v5647 = vunpack.c.l.b16 %v1669
    %v5648 = vunpack.c.l.b16 %v1670
    %v5649 = vunpack.c.l.b16 %v1671
    %v5650 = vunpack.c.l.b16 %v1672
    %v5651 = vunpack.c.l.b16 %v1673
    %v5652 = vunpack.c.l.b16 %v1674
    %v5653 = vunpack.c.l.b16 %v1675
    %v5654 = vunpack.c.l.b16 %v1676
    %v5655 = vunpack.c.l.b16 %v1677
    %v5656 = vunpack.c.l.b16 %v1678
    %v5657 = vunpack.c.l.b16 %v1679
    %v5658 = vunpack.c.l.b16 %v1680
    %v5659 = vunpack.c.l.b16 %v1681
    %v5660 = vunpack.c.l.b16 %v1682
    %v5661 = vunpack.c.l.b16 %v1683
    %v5662 = vunpack.c.l.b16 %v1684
    %v5663 = vunpack.c.l.b16 %v1685
    %v5664 = vunpack.c.l.b16 %v1686
    %v5665 = vunpack.c.l.b16 %v1687
    %v5666 = vunpack.c.l.b16 %v1688
    %v5667 = vunpack.c.l.b16 %v1689
    %v5668 = vunpack.c.l.b16 %v1690
    %v5669 = vunpack.c.l.b16 %v1691
    %v5670 = vunpack.c.l.b16 %v1692
    %v5671 = vunpack.c.l.b16 %v1693
    %v5672 = vunpack.c.l.b16 %v1694
    %v5673 = vunpack.c.l.b16 %v1695
    %v5674 = vunpack.c.l.b16 %v1696
    %v5675 = vunpack.c.l.b16 %v1697
    %v5676 = vunpack.c.l.b16 %v1698
    %v5677 = vunpack.c.l.b16 %v1699
    %v5678 = vunpack.c.l.b16 %v1700
    %v5679 = vunpack.c.l.b16 %v1701
    %v5680 = vunpack.c.l.b16 %v1702
    %v5681 = vunpack.c.l.b16 %v1703
    %v5682 = vunpack.c.l.b16 %v1704
    %v5683 = vunpack.c.l.b16 %v1705
    %v5684 = vunpack.c.l.b16 %v1706
    %v5685 = vunpack.c.l.b16 %v1707
    %v5686 = vunpack.c.l.b16 %v1708
    %v5687 = vunpack.c.l.b16 %v1709
    %v5688 = vunpack.c.l.b16 %v1710
    %v5689 = vunpack.c.l.b16 %v1711
    %v5690 = vunpack.c.l.b16 %v1712
    %v5691 = vunpack.c.l.b16 %v1713
    %v5692 = vunpack.c.l.b16 %v1714
    %v5693 = vunpack.c.l.b16 %v1715
    %v5694 = vunpack.c.l.b16 %v1716
    %v5695 = vunpack.c.l.b16 %v1717
    %v5696 = vunpack.c.l.b16 %v1718
    %v5697 = vunpack.c.l.b16 %v1719
    %v5698 = vunpack.c.l.b16 %v1720
    %v5699 = vunpack.c.l.b16 %v1721
    %v5700 = vunpack.c.l.b16 %v1722
    %v5701 = vunpack.c.l.b16 %v1723
    %v5702 = vunpack.c.l.b16 %v1724
    %v5703 = vunpack.c.l.b16 %v1725
    %v5704 = vunpack.c.l.b16 %v1726
    %v5705 = vunpack.c.l.b16 %v1727
    %v5706 = vunpack.c.l.b16 %v1728
    %v5707 = vunpack.c.l.b16 %v1729
    %v5708 = vunpack.c.l.b16 %v1730
    %v5709 = vunpack.c.l.b16 %v1731
    %v5710 = vunpack.c.l.b16 %v1732
    %v5711 = vunpack.c.l.b16 %v1733
    %v5712 = vunpack.c.l.b16 %v1734
    %v5713 = vunpack.c.l.b16 %v1735
    %v5714 = vunpack.c.l.b16 %v1736
    %v5715 = vunpack.c.l.b16 %v1737
    %v5716 = vunpack.c.l.b16 %v1738
    %v5717 = vunpack.c.l.b16 %v1739
    %v5718 = vunpack.c.l.b16 %v1740
    %v5719 = vunpack.c.l.b16 %v1741
    %v5720 = vunpack.c.l.b16 %v1742
    %v5721 = vunpack.c.l.b16 %v1743
    %v5722 = vunpack.c.l.b16 %v1744
    %v5723 = vunpack.c.l.b16 %v1745
    %v5724 = vunpack.c.l.b16 %v1746
    %v5725 = vunpack.c.l.b16 %v1747
    %v5726 = vunpack.c.l.b16 %v1748
    %v5727 = vunpack.c.l.b16 %v1749
    %v5728 = vunpack.c.l.b16 %v1750
    %v5729 = vunpack.c.l.b16 %v1751
    %v5730 = vunpack.c.l.b16 %v1752
    %v5731 = vunpack.c.l.b16 %v1753
    %v5732 = vunpack.c.l.b16 %v1754
    %v5733 = vunpack.c.l.b16 %v1755
    %v5734 = vunpack.c.l.b16 %v1756
    %v5735 = vunpack.c.l.b16 %v1757
    %v5736 = vunpack.c.l.b16 %v1758
    %v5737 = vunpack.c.l.b16 %v1759
    %v5738 = vunpack.c.l.b16 %v1760
    %v5739 = vunpack.c.l.b16 %v1761
    %v5740 = vunpack.c.l.b16 %v1762
    %v5741 = vunpack.c.l.b16 %v1763
    %v5742 = vunpack.c.l.b16 %v1764
    %v5743 = vunpack.c.l.b16 %v1765
    %v5744 = vunpack.c.l.b16 %v1766
    %v5745 = vunpack.c.l.b16 %v1767
    %v5746 = vunpack.c.l.b16 %v1768
    %v5747 = vunpack.c.l.b16 %v1769
    %v5748 = vunpack.c.l.b16 %v1770
    %v5749 = vunpack.c.l.b16 %v1771
    %v5750 = vunpack.c.l.b16 %v1772
    %v5751 = vunpack.c.l.b16 %v1773
    %v5752 = vunpack.c.l.b16 %v1774
    %v5753 = vunpack.c.l.b16 %v1775
    %v5754 = vunpack.c.l.b16 %v1776
    %v5755 = vunpack.c.l.b16 %v1777
    %v5756 = vunpack.c.l.b16 %v1778
    %v5757 = vunpack.c.l.b16 %v1779
    %v5758 = vunpack.c.l.b16 %v1780
    %v5759 = vunpack.c.l.b16 %v1781
    %v5760 = vunpack.c.l.b16 %v1782
    %v5761 = vunpack.c.l.b16 %v1783
    %v5762 = vunpack.c.l.b16 %v1784
    %v5763 = vunpack.c.l.b16 %v1785
    %v5764 = vunpack.c.l.b16 %v1786
    %v5765 = vunpack.c.l.b16 %v1787
    %v5766 = vunpack.c.l.b16 %v1788
    %v5767 = vunpack.c.l.b16 %v1789
    %v5768 = vunpack.c.l.b16 %v1790
    %v5769 = vunpack.c.l.b16 %v1791
    %v5770 = vunpack.c.l.b16 %v1792
    %v5771 = vunpack.c.l.b16 %v1793
    %v5772 = vunpack.c.l.b16 %v1794
    %v5773 = vunpack.c.l.b16 %v1795
    %v5774 = vunpack.c.l.b16 %v1796
    %v5775 = vunpack.c.l.b16 %v1797
    %v5776 = vunpack.c.l.b16 %v1798
    %v5777 = vunpack.c.l.b16 %v1799
    %v5778 = vunpack.c.l.b16 %v1800
    %v5779 = vunpack.c.l.b16 %v1801
    %v5780 = vunpack.c.l.b16 %v1802
    %v5781 = vunpack.c.l.b16 %v1803
    %v5782 = vunpack.c.l.b16 %v1804
    %v5783 = vunpack.c.l.b16 %v1805
    %v5784 = vunpack.c.l.b16 %v1806
    %v5785 = vunpack.c.l.b16 %v1807
    %v5786 = vunpack.c.l.b16 %v1808
    %v5787 = vunpack.c.l.b16 %v1809
    %v5788 = vunpack.c.l.b16 %v1810
    %v5789 = vunpack.c.l.b16 %v1811
    %v5790 = vunpack.c.l.b16 %v1812
    %v5791 = vunpack.c.l.b16 %v1813
    %v5792 = vunpack.c.l.b16 %v1814
    %v5793 = vunpack.c.l.b16 %v1815
    %v5794 = vunpack.c.l.b16 %v1816
    %v5795 = vunpack.c.l.b16 %v1817
    %v5796 = vunpack.c.l.b16 %v1818
    %v5797 = vunpack.c.l.b16 %v1819
    %v5798 = vunpack.c.l.b16 %v1820
    %v5799 = vunpack.c.l.b16 %v1821
    %v5800 = vunpack.c.l.b16 %v1822
    %v5801 = vunpack.c.l.b16 %v1823
    %v5802 = vunpack.c.l.b16 %v1824
    %v5803 = vunpack.c.l.b16 %v1825
    %v5804 = vunpack.c.l.b16 %v1826
    %v5805 = vunpack.c.l.b16 %v1827
    %v5806 = vunpack.c.l.b16 %v1828
    %v5807 = vunpack.c.l.b16 %v1829
    %v5808 = vunpack.c.l.b16 %v1830
    %v5809 = vunpack.c.l.b16 %v1831
    %v5810 = vunpack.c.l.b16 %v1832
    %v5811 = vunpack.c.l.b16 %v1833
    %v5812 = vunpack.c.l.b16 %v1834
    %v5813 = vunpack.c.l.b16 %v1835
    %v5814 = vunpack.c.l.b16 %v1836
    %v5815 = vunpack.c.l.b16 %v1837
    %v5816 = vunpack.c.l.b16 %v1838
    %v5817 = vunpack.c.l.b16 %v1839
    %v5818 = vunpack.c.l.b16 %v1840
    %v5819 = vunpack.c.l.b16 %v1841
    %v5820 = vunpack.c.l.b16 %v1842
    %v5821 = vunpack.c.l.b16 %v1843
    %v5822 = vunpack.c.l.b16 %v1844
    %v5823 = vunpack.c.l.b16 %v1845
    %v5824 = vunpack.c.l.b16 %v1846
    %v5825 = vunpack.c.l.b16 %v1847
    %v5826 = vunpack.c.l.b16 %v1848
    %v5827 = vunpack.c.l.b16 %v1849
    %v5828 = vunpack.c.l.b16 %v1850
    %v5829 = vunpack.c.l.b16 %v1851
    %v5830 = vunpack.c.l.b16 %v1852
    %v5831 = vunpack.c.l.b16 %v1853
    %v5832 = vunpack.c.l.b16 %v1854
    %v5833 = vunpack.c.l.b16 %v1855
    %v5834 = vunpack.c.l.b16 %v1856
    %v5835 = vunpack.c.l.b16 %v1857
    %v5836 = vunpack.c.l.b16 %v1858
    %v5837 = vunpack.c.l.b16 %v1859
    %v5838 = vunpack.c.l.b16 %v1860
    %v5839 = vunpack.c.l.b16 %v1861
    %v5840 = vunpack.c.l.b16 %v1862
    %v5841 = vunpack.c.l.b16 %v1863
    %v5842 = vunpack.c.l.b16 %v1864
    %v5843 = vunpack.c.l.b16 %v1865
    %v5844 = vunpack.c.l.b16 %v1866
    %v5845 = vunpack.c.l.b16 %v1867
    %v5846 = vunpack.c.l.b16 %v1868
    %v5847 = vunpack.c.l.b16 %v1869
    %v5848 = vunpack.c.l.b16 %v1870
    %v5849 = vunpack.c.l.b16 %v1871
    %v5850 = vunpack.c.l.b16 %v1872
    %v5851 = vunpack.c.l.b16 %v1873
    %v5852 = vunpack.c.l.b16 %v1874
    %v5853 = vunpack.c.l.b16 %v1875
    %v5854 = vunpack.c.l.b16 %v1876
    %v5855 = vunpack.c.l.b16 %v1877
    %v5856 = vunpack.c.l.b16 %v1878
    %v5857 = vunpack.c.l.b16 %v1879
    %v5858 = vunpack.c.l.b16 %v1880
    %v5859 = vunpack.c.l.b16 %v1881
    %v5860 = vunpack.c.l.b16 %v1882
    %v5861 = vunpack.c.l.b16 %v1883
    %v5862 = vunpack.c.l.b16 %v1884
    %v5863 = vunpack.c.l.b16 %v1885
    %v5864 = vunpack.c.l.b16 %v1886
    %v5865 = vunpack.c.l.b16 %v1887
    %v5866 = vunpack.c.l.b16 %v1888
    %v5867 = vunpack.c.l.b16 %v1889
    %v5868 = vunpack.c.l.b16 %v1890
    %v5869 = vunpack.c.l.b16 %v1891
    %v5870 = vpack.c.b16 %v4015, %v4014
    %v5871 = vpack.c.b16 %v4017, %v4016
    %v5872 = vpack.c.b16 %v4019, %v4018
    %v5873 = vpack.c.b16 %v4021, %v4020
    %v5874 = vpack.c.b16 %v4023, %v4022
    %v5875 = vpack.c.b16 %v4025, %v4024
    %v5876 = vpack.c.b16 %v4027, %v4026
    %v5877 = vpack.c.b16 %v4029, %v4028
    %v5878 = vpack.c.b16 %v4031, %v4030
    %v5879 = vpack.c.b16 %v4033, %v4032
    %v5880 = vpack.c.b16 %v4035, %v4034
    %v5881 = vpack.c.b16 %v4037, %v4036
    %v5882 = vpack.c.b16 %v4039, %v4038
    %v5883 = vpack.c.b16 %v4041, %v4040
    %v5884 = vpack.c.b16 %v4043, %v4042
    %v5885 = vpack.c.b16 %v4045, %v4044
    %v5886 = vpack.c.b16 %v4047, %v4046
    %v5887 = vpack.c.b16 %v4049, %v4048
    %v5888 = vpack.c.b16 %v4051, %v4050
    %v5889 = vpack.c.b16 %v4053, %v4052
    %v5890 = vpack.c.b16 %v4055, %v4054
    %v5891 = vpack.c.b16 %v4057, %v4056
    %v5892 = vpack.c.b16 %v4059, %v4058
    %v5893 = vpack.c.b16 %v4061, %v4060
    %v5894 = vpack.c.b16 %v4063, %v4062
    %v5895 = vpack.c.b16 %v4065, %v4064
    %v5896 = vpack.c.b16 %v4067, %v4066
    %v5897 = vpack.c.b16 %v4069, %v4068
    %v5898 = vpack.c.b16 %v4071, %v4070
    %v5899 = vpack.c.b16 %v4073, %v4072
    %v5900 = vpack.c.b16 %v4075, %v4074
    %v5901 = vpack.c.b16 %v4077, %v4076
    %v5902 = vpack.c.b16 %v4079, %v4078
    %v5903 = vpack.c.b16 %v4081, %v4080
    %v5904 = vpack.c.b16 %v4083, %v4082
    %v5905 = vpack.c.b16 %v4085, %v4084
    %v5906 = vpack.c.b16 %v4087, %v4086
    %v5907 = vpack.c.b16 %v4089, %v4088
    %v5908 = vpack.c.b16 %v4091, %v4090
    %v5909 = vpack.c.b16 %v4093, %v4092
    %v5910 = vpack.c.b16 %v4095, %v4094
    %v5911 = vpack.c.b16 %v4097, %v4096
    %v5912 = vpack.c.b16 %v4099, %v4098
    %v5913 = vpack.c.b16 %v4101, %v4100
    %v5914 = vpack.c.b16 %v4103, %v4102
    %v5915 = vpack.c.b16 %v4105, %v4104
    %v5916 = vpack.c.b16 %v4107, %v4106
    %v5917 = vpack.c.b16 %v4109, %v4108
    %v5918 = vpack.c.b16 %v4111, %v4110
    %v5919 = vpack.c.b16 %v4113, %v4112
    %v5920 = vpack.c.b16 %v4115, %v4114
    %v5921 = vpack.c.b16 %v4117, %v4116
    %v5922 = vpack.c.b16 %v4119, %v4118
    %v5923 = vpack.c.b16 %v4121, %v4120
    %v5924 = vpack.c.b16 %v4123, %v4122
    %v5925 = vpack.c.b16 %v4125, %v4124
    %v5926 = vpack.c.b16 %v4127, %v4126
    %v5927 = vpack.c.b16 %v4129, %v4128
    %v5928 = vpack.c.b16 %v4131, %v4130
    %v5929 = vpack.c.b16 %v4133, %v4132
    %v5930 = vpack.c.b16 %v4135, %v4134
    %v5931 = vpack.c.b16 %v4137, %v4136
    %v5932 = vpack.c.b16 %v4139, %v4138
    %v5933 = vpack.c.b16 %v4141, %v4140
    %v5934 = vpack.c.b16 %v4143, %v4142
    %v5935 = vpack.c.b16 %v4145, %v4144
    %v5936 = vpack.c.b16 %v4147, %v4146
    %v5937 = vpack.c.b16 %v4149, %v4148
    %v5938 = vpack.c.b16 %v4151, %v4150
    %v5939 = vpack.c.b16 %v4153, %v4152
    %v5940 = vpack.c.b16 %v4155, %v4154
    %v5941 = vpack.c.b16 %v4157, %v4156
    %v5942 = vpack.c.b16 %v4159, %v4158
    %v5943 = vpack.c.b16 %v4161, %v4160
    %v5944 = vpack.c.b16 %v4163, %v4162
    %v5945 = vpack.c.b16 %v4165, %v4164
    %v5946 = vpack.c.b16 %v4167, %v4166
    %v5947 = vpack.c.b16 %v4169, %v4168
    %v5948 = vpack.c.b16 %v4171, %v4170
    %v5949 = vpack.c.b16 %v4173, %v4172
    %v5950 = vpack.c.b16 %v4175, %v4174
    %v5951 = vpack.c.b16 %v4177, %v4176
    %v5952 = vpack.c.b16 %v4179, %v4178
    %v5953 = vpack.c.b16 %v4181, %v4180
    %v5954 = vpack.c.b16 %v4183, %v4182
    %v5955 = vpack.c.b16 %v4185, %v4184
    %v5956 = vpack.c.b16 %v4187, %v4186
    %v5957 = vpack.c.b16 %v4189, %v4188
    %v5958 = vpack.c.b16 %v4191, %v4190
    %v5959 = vpack.c.b16 %v4193, %v4192
    %v5960 = vpack.c.b16 %v4195, %v4194
    %v5961 = vpack.c.b16 %v4197, %v4196
    %v5962 = vpack.c.b16 %v4199, %v4198
    %v5963 = vpack.c.b16 %v4201, %v4200
    %v5964 = vpack.c.b16 %v4203, %v4202
    %v5965 = vpack.c.b16 %v4205, %v4204
    %v5966 = vpack.c.b16 %v4207, %v4206
    %v5967 = vpack.c.b16 %v4209, %v4208
    %v5968 = vpack.c.b16 %v4211, %v4210
    %v5969 = vpack.c.b16 %v4213, %v4212
    %v5970 = vpack.c.b16 %v4215, %v4214
    %v5971 = vpack.c.b16 %v4217, %v4216
    %v5972 = vpack.c.b16 %v4219, %v4218
    %v5973 = vpack.c.b16 %v4221, %v4220
    %v5974 = vpack.c.b16 %v4223, %v4222
    %v5975 = vpack.c.b16 %v4225, %v4224
    %v5976 = vpack.c.b16 %v4227, %v4226
    %v5977 = vpack.c.b16 %v4229, %v4228
    %v5978 = vpack.c.b16 %v4231, %v4230
    %v5979 = vpack.c.b16 %v4233, %v4232
    %v5980 = vpack.c.b16 %v4235, %v4234
    %v5981 = vpack.c.b16 %v4237, %v4236
    %v5982 = vpack.c.b16 %v4239, %v4238
    %v5983 = vpack.c.b16 %v4241, %v4240
    %v5984 = vpack.c.b16 %v4243, %v4242
    %v5985 = vpack.c.b16 %v4245, %v4244
    %v5986 = vpack.c.b16 %v4247, %v4246
    %v5987 = vpack.c.b16 %v4249, %v4248
    %v5988 = vpack.c.b16 %v4251, %v4250
    %v5989 = vpack.c.b16 %v4253, %v4252
    %v5990 = vpack.c.b16 %v4255, %v4254
    %v5991 = vpack.c.b16 %v4257, %v4256
    %v5992 = vpack.c.b16 %v4259, %v4258
    %v5993 = vpack.c.b16 %v4261, %v4260
    %v5994 = vpack.c.b16 %v4263, %v4262
    %v5995 = vpack.c.b16 %v4265, %v4264
    %v5996 = vpack.c.b16 %v4267, %v4266
    %v5997 = vpack.c.b16 %v4269, %v4268
    %v5998 = vpack.c.b16 %v4271, %v4270
    %v5999 = vpack.c.b16 %v4273, %v4272
    %v6000 = vpack.c.b16 %v4275, %v4274
    %v6001 = vpack.c.b16 %v4277, %v4276
    %v6002 = vpack.c.b16 %v4279, %v4278
    %v6003 = vpack.c.b16 %v4281, %v4280
    %v6004 = vpack.c.b16 %v4283, %v4282
    %v6005 = vpack.c.b16 %v4285, %v4284
    %v6006 = vpack.c.b16 %v4287, %v4286
    %v6007 = vpack.c.b16 %v4289, %v4288
    %v6008 = vpack.c.b16 %v4291, %v4290
    %v6009 = vpack.c.b16 %v4293, %v4292
    %v6010 = vpack.c.b16 %v4295, %v4294
    %v6011 = vpack.c.b16 %v4297, %v4296
    %v6012 = vpack.c.b16 %v4299, %v4298
    %v6013 = vpack.c.b16 %v4301, %v4300
    %v6014 = vpack.c.b16 %v4303, %v4302
    %v6015 = vpack.c.b16 %v4305, %v4304
    %v6016 = vpack.c.b16 %v4307, %v4306
    %v6017 = vpack.c.b16 %v4309, %v4308
    %v6018 = vpack.c.b16 %v4311, %v4310
    %v6019 = vpack.c.b16 %v4313, %v4312
    %v6020 = vpack.c.b16 %v4315, %v4314
    %v6021 = vpack.c.b16 %v4317, %v4316
    %v6022 = vpack.c.b16 %v4319, %v4318
    %v6023 = vpack.c.b16 %v4321, %v4320
    %v6024 = vpack.c.b16 %v4323, %v4322
    %v6025 = vpack.c.b16 %v4325, %v4324
    %v6026 = vpack.c.b16 %v4327, %v4326
    %v6027 = vpack.c.b16 %v4329, %v4328
    %v6028 = vpack.c.b16 %v4331, %v4330
    %v6029 = vpack.c.b16 %v4333, %v4332
    %v6030 = vpack.c.b16 %v4335, %v4334
    %v6031 = vpack.c.b16 %v4337, %v4336
    %v6032 = vpack.c.b16 %v4339, %v4338
    %v6033 = vpack.c.b16 %v4341, %v4340
    %v6034 = vpack.c.b16 %v4343, %v4342
    %v6035 = vpack.c.b16 %v4345, %v4344
    %v6036 = vpack.c.b16 %v4347, %v4346
    %v6037 = vpack.c.b16 %v4349, %v4348
    %v6038 = vpack.c.b16 %v4351, %v4350
    %v6039 = vpack.c.b16 %v4353, %v4352
    %v6040 = vpack.c.b16 %v4355, %v4354
    %v6041 = vpack.c.b16 %v4357, %v4356
    %v6042 = vpack.c.b16 %v4359, %v4358
    %v6043 = vpack.c.b16 %v4361, %v4360
    %v6044 = vpack.c.b16 %v4363, %v4362
    %v6045 = vpack.c.b16 %v4365, %v4364
    %v6046 = vpack.c.b16 %v4367, %v4366
    %v6047 = vpack.c.b16 %v4369, %v4368
    %v6048 = vpack.c.b16 %v4371, %v4370
    %v6049 = vpack.c.b16 %v4373, %v4372
    %v6050 = vpack.c.b16 %v4375, %v4374
    %v6051 = vpack.c.b16 %v4377, %v4376
    %v6052 = vpack.c.b16 %v4379, %v4378
    %v6053 = vpack.c.b16 %v4381, %v4380
    %v6054 = vpack.c.b16 %v4383, %v4382
    %v6055 = vpack.c.b16 %v4385, %v4384
    %v6056 = vpack.c.b16 %v4387, %v4386
    %v6057 = vpack.c.b16 %v4389, %v4388
    %v6058 = vpack.c.b16 %v4391, %v4390
    %v6059 = vpack.c.b16 %v4393, %v4392
    %v6060 = vpack.c.b16 %v4395, %v4394
    %v6061 = vpack.c.b16 %v4397, %v4396
    %v6062 = vpack.c.b16 %v4399, %v4398
    %v6063 = vpack.c.b16 %v4401, %v4400
    %v6064 = vpack.c.b16 %v4403, %v4402
    %v6065 = vpack.c.b16 %v4405, %v4404
    %v6066 = vpack.c.b16 %v4407, %v4406
    %v6067 = vpack.c.b16 %v4409, %v4408
    %v6068 = vpack.c.b16 %v4411, %v4410
    %v6069 = vpack.c.b16 %v4413, %v4412
    %v6070 = vpack.c.b16 %v4415, %v4414
    %v6071 = vpack.c.b16 %v4417, %v4416
    %v6072 = vpack.c.b16 %v4419, %v4418
    %v6073 = vpack.c.b16 %v4421, %v4420
    %v6074 = vpack.c.b16 %v4423, %v4422
    %v6075 = vpack.c.b16 %v4425, %v4424
    %v6076 = vpack.c.b16 %v4427, %v4426
    %v6077 = vpack.c.b16 %v4429, %v4428
    %v6078 = vpack.c.b16 %v4431, %v4430
    %v6079 = vpack.c.b16 %v4433, %v4432
    %v6080 = vpack.c.b16 %v4435, %v4434
    %v6081 = vpack.c.b16 %v4437, %v4436
    %v6082 = vpack.c.b16 %v4439, %v4438
    %v6083 = vpack.c.b16 %v4441, %v4440
    %v6084 = vpack.c.b16 %v4443, %v4442
    %v6085 = vpack.c.b16 %v4445, %v4444
    %v6086 = vpack.c.b16 %v4447, %v4446
    %v6087 = vpack.c.b16 %v4449, %v4448
    %v6088 = vpack.c.b16 %v4451, %v4450
    %v6089 = vpack.c.b16 %v4453, %v4452
    %v6090 = vpack.c.b16 %v4455, %v4454
    %v6091 = vpack.c.b16 %v4457, %v4456
    %v6092 = vpack.c.b16 %v4459, %v4458
    %v6093 = vpack.c.b16 %v4461, %v4460
    %v6094 = vpack.c.b16 %v4463, %v4462
    %v6095 = vpack.c.b16 %v4465, %v4464
    %v6096 = vpack.c.b16 %v4467, %v4466
    %v6097 = vpack.c.b16 %v4469, %v4468
    %v6098 = vpack.c.b16 %v4471, %v4470
    %v6099 = vpack.c.b16 %v4473, %v4472
    %v6100 = vpack.c.b16 %v4475, %v4474
    %v6101 = vpack.c.b16 %v4477, %v4476
    %v6102 = vpack.c.b16 %v4479, %v4478
    %v6103 = vpack.c.b16 %v4481, %v4480
    %v6104 = vpack.c.b16 %v4483, %v4482
    %v6105 = vpack.c.b16 %v4485, %v4484
    %v6106 = vpack.c.b16 %v4487, %v4486
    %v6107 = vpack.c.b16 %v4489, %v4488
    %v6108 = vpack.c.b16 %v4491, %v4490
    %v6109 = vpack.c.b16 %v4493, %v4492
    %v6110 = vpack.c.b16 %v4495, %v4494
    %v6111 = vpack.c.b16 %v4497, %v4496
    %v6112 = vpack.c.b16 %v4499, %v4498
    %v6113 = vpack.c.b16 %v4501, %v4500
    %v6114 = vpack.c.b16 %v4503, %v4502
    %v6115 = vpack.c.b16 %v4505, %v4504
    %v6116 = vpack.c.b16 %v4507, %v4506
    %v6117 = vpack.c.b16 %v4509, %v4508
    %v6118 = vpack.c.b16 %v4511, %v4510
    %v6119 = vpack.c.b16 %v4513, %v4512
    %v6120 = vpack.c.b16 %v4515, %v4514
    %v6121 = vpack.c.b16 %v4517, %v4516
    %v6122 = vpack.c.b16 %v4519, %v4518
    %v6123 = vpack.c.b16 %v4521, %v4520
    %v6124 = vpack.c.b16 %v4523, %v4522
    %v6125 = vpack.c.b16 %v4525, %v4524
    %v6126 = vpack.c.b16 %v4527, %v4526
    %v6127 = vpack.c.b16 %v4529, %v4528
    %v6128 = vpack.c.b16 %v4531, %v4530
    %v6129 = vpack.c.b16 %v4533, %v4532
    %v6130 = vpack.c.b16 %v4535, %v4534
    %v6131 = vpack.c.b16 %v4537, %v4536
    %v6132 = vpack.c.b16 %v4539, %v4538
    %v6133 = vpack.c.b16 %v4541, %v4540
    %v6134 = vpack.c.b16 %v4543, %v4542
    %v6135 = vpack.c.b16 %v4545, %v4544
    %v6136 = vpack.c.b16 %v4547, %v4546
    %v6137 = vpack.c.b16 %v4549, %v4548
    %v6138 = vpack.c.b16 %v4551, %v4550
    %v6139 = vpack.c.b16 %v4553, %v4552
    %v6140 = vpack.c.b16 %v4555, %v4554
    %v6141 = vpack.c.b16 %v4557, %v4556
    %v6142 = vpack.c.b16 %v4559, %v4558
    %v6143 = vpack.c.b16 %v4561, %v4560
    %v6144 = vpack.c.b16 %v4563, %v4562
    %v6145 = vpack.c.b16 %v4565, %v4564
    %v6146 = vpack.c.b16 %v4567, %v4566
    %v6147 = vpack.c.b16 %v4569, %v4568
    %v6148 = vpack.c.b16 %v4571, %v4570
    %v6149 = vpack.c.b16 %v4573, %v4572
    %v6150 = vpack.c.b16 %v4575, %v4574
    %v6151 = vpack.c.b16 %v4577, %v4576
    %v6152 = vpack.c.b16 %v4579, %v4578
    %v6153 = vpack.c.b16 %v4581, %v4580
    %v6154 = vpack.c.b16 %v4583, %v4582
    %v6155 = vpack.c.b16 %v4585, %v4584
    %v6156 = vpack.c.b16 %v4587, %v4586
    %v6157 = vpack.c.b16 %v4589, %v4588
    %v6158 = vpack.c.b16 %v4591, %v4590
    %v6159 = vpack.c.b16 %v4593, %v4592
    %v6160 = vpack.c.b16 %v4595, %v4594
    %v6161 = vpack.c.b16 %v4597, %v4596
    %v6162 = vpack.c.b16 %v4599, %v4598
    %v6163 = vpack.c.b16 %v4601, %v4600
    %v6164 = vpack.c.b16 %v4603, %v4602
    %v6165 = vpack.c.b16 %v4605, %v4604
    %v6166 = vpack.c.b16 %v4607, %v4606
    %v6167 = vpack.c.b16 %v4609, %v4608
    %v6168 = vpack.c.b16 %v4611, %v4610
    %v6169 = vpack.c.b16 %v4613, %v4612
    %v6170 = vpack.c.b16 %v4615, %v4614
    %v6171 = vpack.c.b16 %v4617, %v4616
    %v6172 = vpack.c.b16 %v4619, %v4618
    %v6173 = vpack.c.b16 %v4621, %v4620
    %v6174 = vpack.c.b16 %v4623, %v4622
    %v6175 = vpack.c.b16 %v4625, %v4624
    %v6176 = vpack.c.b16 %v4627, %v4626
    %v6177 = vpack.c.b16 %v4629, %v4628
    %v6178 = vpack.c.b16 %v4631, %v4630
    %v6179 = vpack.c.b16 %v4633, %v4632
    %v6180 = vpack.c.b16 %v4635, %v4634
    %v6181 = vpack.c.b16 %v4637, %v4636
    %v6182 = vpack.c.b16 %v4639, %v4638
    %v6183 = vpack.c.b16 %v4641, %v4640
    %v6184 = vpack.c.b16 %v4643, %v4642
    %v6185 = vpack.c.b16 %v4645, %v4644
    %v6186 = vpack.c.b16 %v4647, %v4646
    %v6187 = vpack.c.b16 %v4649, %v4648
    %v6188 = vpack.c.b16 %v4651, %v4650
    %v6189 = vpack.c.b16 %v4653, %v4652
    %v6190 = vpack.c.b16 %v4655, %v4654
    %v6191 = vpack.c.b16 %v4657, %v4656
    %v6192 = vpack.c.b16 %v4659, %v4658
    %v6193 = vpack.c.b16 %v4661, %v4660
    %v6194 = vpack.c.b16 %v4663, %v4662
    %v6195 = vpack.c.b16 %v4665, %v4664
    %v6196 = vpack.c.b16 %v4667, %v4666
    %v6197 = vpack.c.b16 %v4669, %v4668
    %v6198 = vpack.c.b16 %v4671, %v4670
    %v6199 = vpack.c.b16 %v4673, %v4672
    %v6200 = vpack.c.b16 %v4675, %v4674
    %v6201 = vpack.c.b16 %v4677, %v4676
    %v6202 = vpack.c.b16 %v4679, %v4678
    %v6203 = vpack.c.b16 %v4681, %v4680
    %v6204 = vpack.c.b16 %v4683, %v4682
    %v6205 = vpack.c.b16 %v4685, %v4684
    %v6206 = vpack.c.b16 %v4687, %v4686
    %v6207 = vpack.c.b16 %v4689, %v4688
    %v6208 = vpack.c.b16 %v4691, %v4690
    %v6209 = vpack.c.b16 %v4693, %v4692
    %v6210 = vpack.c.b16 %v4695, %v4694
    %v6211 = vpack.c.b16 %v4697, %v4696
    %v6212 = vpack.c.b16 %v4699, %v4698
    %v6213 = vpack.c.b16 %v4701, %v4700
    %v6214 = vpack.c.b16 %v4703, %v4702
    %v6215 = vpack.c.b16 %v4705, %v4704
    %v6216 = vpack.c.b16 %v4707, %v4706
    %v6217 = vpack.c.b16 %v4709, %v4708
    %v6218 = vpack.c.b16 %v4711, %v4710
    %v6219 = vpack.c.b16 %v4713, %v4712
    %v6220 = vpack.c.b16 %v4715, %v4714
    %v6221 = vpack.c.b16 %v4717, %v4716
    %v6222 = vpack.c.b16 %v4719, %v4718
    %v6223 = vpack.c.b16 %v4721, %v4720
    %v6224 = vpack.c.b16 %v4723, %v4722
    %v6225 = vpack.c.b16 %v4725, %v4724
    %v6226 = vpack.c.b16 %v4727, %v4726
    %v6227 = vpack.c.b16 %v4729, %v4728
    %v6228 = vpack.c.b16 %v4731, %v4730
    %v6229 = vpack.c.b16 %v4733, %v4732
    %v6230 = vpack.c.b16 %v4735, %v4734
    %v6231 = vpack.c.b16 %v4737, %v4736
    %v6232 = vpack.c.b16 %v4739, %v4738
    %v6233 = vpack.c.b16 %v4741, %v4740
    %v6234 = vpack.c.b16 %v4743, %v4742
    %v6235 = vpack.c.b16 %v4745, %v4744
    %v6236 = vpack.c.b16 %v4747, %v4746
    %v6237 = vpack.c.b16 %v4749, %v4748
    %v6238 = vpack.c.b16 %v4751, %v4750
    %v6239 = vpack.c.b16 %v4753, %v4752
    %v6240 = vpack.c.b16 %v4755, %v4754
    %v6241 = vpack.c.b16 %v4757, %v4756
    %v6242 = vpack.c.b16 %v4759, %v4758
    %v6243 = vpack.c.b16 %v4761, %v4760
    %v6244 = vpack.c.b16 %v4763, %v4762
    %v6245 = vpack.c.b16 %v4765, %v4764
    %v6246 = vpack.c.b16 %v4767, %v4766
    %v6247 = vpack.c.b16 %v4769, %v4768
    %v6248 = vpack.c.b16 %v4771, %v4770
    %v6249 = vpack.c.b16 %v4773, %v4772
    %v6250 = vpack.c.b16 %v4775, %v4774
    %v6251 = vpack.c.b16 %v4777, %v4776
    %v6252 = vpack.c.b16 %v4779, %v4778
    %v6253 = vpack.c.b16 %v4781, %v4780
    %v6254 = vpack.c.b16 %v4783, %v4782
    %v6255 = vpack.c.b16 %v4785, %v4784
    %v6256 = vpack.c.b16 %v4787, %v4786
    %v6257 = vpack.c.b16 %v4789, %v4788
    %v6258 = vpack.c.b16 %v4791, %v4790
    %v6259 = vpack.c.b16 %v4793, %v4792
    %v6260 = vpack.c.b16 %v4795, %v4794
    %v6261 = vpack.c.b16 %v4797, %v4796
    %v6262 = vpack.c.b16 %v4799, %v4798
    %v6263 = vpack.c.b16 %v4801, %v4800
    %v6264 = vpack.c.b16 %v4803, %v4802
    %v6265 = vpack.c.b16 %v4805, %v4804
    %v6266 = vpack.c.b16 %v4807, %v4806
    %v6267 = vpack.c.b16 %v4809, %v4808
    %v6268 = vpack.c.b16 %v4811, %v4810
    %v6269 = vpack.c.b16 %v4813, %v4812
    %v6270 = vpack.c.b16 %v4815, %v4814
    %v6271 = vpack.c.b16 %v4817, %v4816
    %v6272 = vpack.c.b16 %v4819, %v4818
    %v6273 = vpack.c.b16 %v4821, %v4820
    %v6274 = vpack.c.b16 %v4823, %v4822
    %v6275 = vpack.c.b16 %v4825, %v4824
    %v6276 = vpack.c.b16 %v4827, %v4826
    %v6277 = vpack.c.b16 %v4829, %v4828
    %v6278 = vpack.c.b16 %v4831, %v4830
    %v6279 = vpack.c.b16 %v4833, %v4832
    %v6280 = vpack.c.b16 %v4835, %v4834
    %v6281 = vpack.c.b16 %v4837, %v4836
    %v6282 = vpack.c.b16 %v4839, %v4838
    %v6283 = vpack.c.b16 %v4841, %v4840
    %v6284 = vpack.c.b16 %v4843, %v4842
    %v6285 = vpack.c.b16 %v4845, %v4844
    %v6286 = vpack.c.b16 %v4847, %v4846
    %v6287 = vpack.c.b16 %v4849, %v4848
    %v6288 = vpack.c.b16 %v4851, %v4850
    %v6289 = vpack.c.b16 %v4853, %v4852
    %v6290 = vpack.c.b16 %v4855, %v4854
    %v6291 = vpack.c.b16 %v4857, %v4856
    %v6292 = vpack.c.b16 %v4859, %v4858
    %v6293 = vpack.c.b16 %v4861, %v4860
    %v6294 = vpack.c.b16 %v4863, %v4862
    %v6295 = vpack.c.b16 %v4865, %v4864
    %v6296 = vpack.c.b16 %v4867, %v4866
    %v6297 = vpack.c.b16 %v4869, %v4868
    %v6298 = vpack.c.b16 %v4871, %v4870
    %v6299 = vpack.c.b16 %v4873, %v4872
    %v6300 = vpack.c.b16 %v4875, %v4874
    %v6301 = vpack.c.b16 %v4877, %v4876
    %v6302 = vpack.c.b16 %v4879, %v4878
    %v6303 = vpack.c.b16 %v4881, %v4880
    %v6304 = vpack.c.b16 %v4883, %v4882
    %v6305 = vpack.c.b16 %v4885, %v4884
    %v6306 = vpack.c.b16 %v4887, %v4886
    %v6307 = vpack.c.b16 %v4889, %v4888
    %v6308 = vpack.c.b16 %v4891, %v4890
    %v6309 = vpack.c.b16 %v4893, %v4892
    %v6310 = vpack.c.b16 %v4895, %v4894
    %v6311 = vpack.c.b16 %v4897, %v4896
    %v6312 = vpack.c.b16 %v4899, %v4898
    %v6313 = vpack.c.b16 %v4901, %v4900
    %v6314 = vpack.c.b16 %v4903, %v4902
    %v6315 = vpack.c.b16 %v4905, %v4904
    %v6316 = vpack.c.b16 %v4907, %v4906
    %v6317 = vpack.c.b16 %v4909, %v4908
    %v6318 = vpack.c.b16 %v4911, %v4910
    %v6319 = vpack.c.b16 %v4913, %v4912
    %v6320 = vpack.c.b16 %v4915, %v4914
    %v6321 = vpack.c.b16 %v4917, %v4916
    %v6322 = vpack.c.b16 %v4919, %v4918
    %v6323 = vpack.c.b16 %v4921, %v4920
    %v6324 = vpack.c.b16 %v4923, %v4922
    %v6325 = vpack.c.b16 %v4925, %v4924
    %v6326 = vpack.c.b16 %v4927, %v4926
    %v6327 = vpack.c.b16 %v4929, %v4928
    %v6328 = vpack.c.b16 %v4931, %v4930
    %v6329 = vpack.c.b16 %v4933, %v4932
    %v6330 = vpack.c.b16 %v4935, %v4934
    %v6331 = vpack.c.b16 %v4937, %v4936
    %v6332 = vpack.c.b16 %v4939, %v4938
    %v6333 = vpack.c.b16 %v4941, %v4940
    %v6334 = vpack.c.b16 %v4943, %v4942
    %v6335 = vpack.c.b16 %v4945, %v4944
    %v6336 = vpack.c.b16 %v4947, %v4946
    %v6337 = vpack.c.b16 %v4949, %v4948
    %v6338 = vpack.c.b16 %v4951, %v4950
    %v6339 = vpack.c.b16 %v4953, %v4952
    %v6340 = vpack.c.b16 %v4955, %v4954
    %v6341 = vpack.c.b16 %v4957, %v4956
    %v6342 = vpack.c.b16 %v4959, %v4958
    %v6343 = vpack.c.b16 %v4961, %v4960
    %v6344 = vpack.c.b16 %v4963, %v4962
    %v6345 = vpack.c.b16 %v4965, %v4964
    %v6346 = vpack.c.b16 %v4967, %v4966
    %v6347 = vpack.c.b16 %v4969, %v4968
    %v6348 = vpack.c.b16 %v4971, %v4970
    %v6349 = vpack.c.b16 %v4973, %v4972
    %v6350 = vpack.c.b16 %v4975, %v4974
    %v6351 = vpack.c.b16 %v4977, %v4976
    %v6352 = vpack.c.b16 %v4979, %v4978
    %v6353 = vpack.c.b16 %v4981, %v4980
    %v6354 = vpack.c.b16 %v4983, %v4982
    %v6355 = vpack.c.b16 %v4985, %v4984
    %v6356 = vpack.c.b16 %v4987, %v4986
    %v6357 = vpack.c.b16 %v4989, %v4988
    %v6358 = vpack.c.b16 %v4991, %v4990
    %v6359 = vpack.c.b16 %v4993, %v4992
    %v6360 = vpack.c.b16 %v4995, %v4994
    %v6361 = vpack.c.b16 %v4997, %v4996
    %v6362 = vpack.c.b16 %v4999, %v4998
    %v6363 = vpack.c.b16 %v5001, %v5000
    %v6364 = vpack.c.b16 %v5003, %v5002
    %v6365 = vpack.c.b16 %v5005, %v5004
    %v6366 = vpack.c.b16 %v5007, %v5006
    %v6367 = vpack.c.b16 %v5009, %v5008
    %v6368 = vpack.c.b16 %v5011, %v5010
    %v6369 = vpack.c.b16 %v5013, %v5012
    %v6370 = vpack.c.b16 %v5015, %v5014
    %v6371 = vpack.c.b16 %v5017, %v5016
    %v6372 = vpack.c.b16 %v5019, %v5018
    %v6373 = vpack.c.b16 %v5021, %v5020
    %v6374 = vpack.c.b16 %v5023, %v5022
    %v6375 = vpack.c.b16 %v5025, %v5024
    %v6376 = vpack.c.b16 %v5027, %v5026
    %v6377 = vpack.c.b16 %v5029, %v5028
    %v6378 = vpack.c.b16 %v5031, %v5030
    %v6379 = vpack.c.b16 %v5033, %v5032
    %v6380 = vpack.c.b16 %v5035, %v5034
    %v6381 = vpack.c.b16 %v5037, %v5036
    %v6382 = vpack.c.b16 %v5039, %v5038
    %v6383 = vpack.c.b16 %v5041, %v5040
    %v6384 = vpack.c.b16 %v5043, %v5042
    %v6385 = vpack.c.b16 %v5045, %v5044
    %v6386 = vpack.c.b16 %v5047, %v5046
    %v6387 = vpack.c.b16 %v5049, %v5048
    %v6388 = vpack.c.b16 %v5051, %v5050
    %v6389 = vpack.c.b16 %v5053, %v5052
    %v6390 = vpack.c.b16 %v5055, %v5054
    %v6391 = vpack.c.b16 %v5057, %v5056
    %v6392 = vpack.c.b16 %v5059, %v5058
    %v6393 = vpack.c.b16 %v5061, %v5060
    %v6394 = vpack.c.b16 %v5063, %v5062
    %v6395 = vpack.c.b16 %v5065, %v5064
    %v6396 = vpack.c.b16 %v5067, %v5066
    %v6397 = vpack.c.b16 %v5069, %v5068
    %v6398 = vpack.c.b16 %v5071, %v5070
    %v6399 = vpack.c.b16 %v5073, %v5072
    %v6400 = vpack.c.b16 %v5075, %v5074
    %v6401 = vpack.c.b16 %v5077, %v5076
    %v6402 = vpack.c.b16 %v5079, %v5078
    %v6403 = vpack.c.b16 %v5081, %v5080
    %v6404 = vpack.c.b16 %v5083, %v5082
    %v6405 = vpack.c.b16 %v5085, %v5084
    %v6406 = vpack.c.b16 %v5087, %v5086
    %v6407 = vpack.c.b16 %v5089, %v5088
    %v6408 = vpack.c.b16 %v5091, %v5090
    %v6409 = vpack.c.b16 %v5093, %v5092
    %v6410 = vpack.c.b16 %v5095, %v5094
    %v6411 = vpack.c.b16 %v5097, %v5096
    %v6412 = vpack.c.b16 %v5099, %v5098
    %v6413 = vpack.c.b16 %v5101, %v5100
    %v6414 = vpack.c.b16 %v5103, %v5102
    %v6415 = vpack.c.b16 %v5105, %v5104
    %v6416 = vpack.c.b16 %v5107, %v5106
    %v6417 = vpack.c.b16 %v5109, %v5108
    %v6418 = vpack.c.b16 %v5111, %v5110
    %v6419 = vpack.c.b16 %v5113, %v5112
    %v6420 = vpack.c.b16 %v5115, %v5114
    %v6421 = vpack.c.b16 %v5117, %v5116
    %v6422 = vpack.c.b16 %v5119, %v5118
    %v6423 = vpack.c.b16 %v5121, %v5120
    %v6424 = vpack.c.b16 %v5123, %v5122
    %v6425 = vpack.c.b16 %v5125, %v5124
    %v6426 = vpack.c.b16 %v5127, %v5126
    %v6427 = vpack.c.b16 %v5129, %v5128
    %v6428 = vpack.c.b16 %v5131, %v5130
    %v6429 = vpack.c.b16 %v5133, %v5132
    %v6430 = vpack.c.b16 %v5135, %v5134
    %v6431 = vpack.c.b16 %v5137, %v5136
    %v6432 = vpack.c.b16 %v5139, %v5138
    %v6433 = vpack.c.b16 %v5141, %v5140
    %v6434 = vpack.c.b16 %v5143, %v5142
    %v6435 = vpack.c.b16 %v5145, %v5144
    %v6436 = vpack.c.b16 %v5147, %v5146
    %v6437 = vpack.c.b16 %v5149, %v5148
    %v6438 = vpack.c.b16 %v5151, %v5150
    %v6439 = vpack.c.b16 %v5153, %v5152
    %v6440 = vpack.c.b16 %v5155, %v5154
    %v6441 = vpack.c.b16 %v5157, %v5156
    %v6442 = vpack.c.b16 %v5159, %v5158
    %v6443 = vpack.c.b16 %v5161, %v5160
    %v6444 = vpack.c.b16 %v5163, %v5162
    %v6445 = vpack.c.b16 %v5165, %v5164
    %v6446 = vpack.c.b16 %v5167, %v5166
    %v6447 = vpack.c.b16 %v5169, %v5168
    %v6448 = vpack.c.b16 %v5171, %v5170
    %v6449 = vpack.c.b16 %v5173, %v5172
    %v6450 = vpack.c.b16 %v5175, %v5174
    %v6451 = vpack.c.b16 %v5177, %v5176
    %v6452 = vpack.c.b16 %v5179, %v5178
    %v6453 = vpack.c.b16 %v5181, %v5180
    %v6454 = vpack.c.b16 %v5183, %v5182
    %v6455 = vpack.c.b16 %v5185, %v5184
    %v6456 = vpack.c.b16 %v5187, %v5186
    %v6457 = vpack.c.b16 %v5189, %v5188
    %v6458 = vpack.c.b16 %v5191, %v5190
    %v6459 = vpack.c.b16 %v5193, %v5192
    %v6460 = vpack.c.b16 %v5195, %v5194
    %v6461 = vpack.c.b16 %v5197, %v5196
    %v6462 = vpack.c.b16 %v5199, %v5198
    %v6463 = vpack.c.b16 %v5201, %v5200
    %v6464 = vpack.c.b16 %v5203, %v5202
    %v6465 = vpack.c.b16 %v5205, %v5204
    %v6466 = vpack.c.b16 %v5207, %v5206
    %v6467 = vpack.c.b16 %v5209, %v5208
    %v6468 = vpack.c.b16 %v5211, %v5210
    %v6469 = vpack.c.b16 %v5213, %v5212
    %v6470 = vpack.c.b16 %v5215, %v5214
    %v6471 = vpack.c.b16 %v5217, %v5216
    %v6472 = vpack.c.b16 %v5219, %v5218
    %v6473 = vpack.c.b16 %v5221, %v5220
    %v6474 = vpack.c.b16 %v5223, %v5222
    %v6475 = vpack.c.b16 %v5225, %v5224
    %v6476 = vpack.c.b16 %v5227, %v5226
    %v6477 = vpack.c.b16 %v5229, %v5228
    %v6478 = vpack.c.b16 %v5231, %v5230
    %v6479 = vpack.c.b16 %v5233, %v5232
    %v6480 = vpack.c.b16 %v5235, %v5234
    %v6481 = vpack.c.b16 %v5237, %v5236
    %v6482 = vpack.c.b16 %v5239, %v5238
    %v6483 = vpack.c.b16 %v5241, %v5240
    %v6484 = vpack.c.b16 %v5243, %v5242
    %v6485 = vpack.c.b16 %v5245, %v5244
    %v6486 = vpack.c.b16 %v5247, %v5246
    %v6487 = vpack.c.b16 %v5249, %v5248
    %v6488 = vpack.c.b16 %v5251, %v5250
    %v6489 = vpack.c.b16 %v5253, %v5252
    %v6490 = vpack.c.b16 %v5255, %v5254
    %v6491 = vpack.c.b16 %v5257, %v5256
    %v6492 = vpack.c.b16 %v5259, %v5258
    %v6493 = vpack.c.b16 %v5261, %v5260
    %v6494 = vpack.c.b16 %v5263, %v5262
    %v6495 = vpack.c.b16 %v5265, %v5264
    %v6496 = vpack.c.b16 %v5267, %v5266
    %v6497 = vpack.c.b16 %v5269, %v5268
    %v6498 = vpack.c.b16 %v5271, %v5270
    %v6499 = vpack.c.b16 %v5273, %v5272
    %v6500 = vpack.c.b16 %v5275, %v5274
    %v6501 = vpack.c.b16 %v5277, %v5276
    %v6502 = vpack.c.b16 %v5279, %v5278
    %v6503 = vpack.c.b16 %v5281, %v5280
    %v6504 = vpack.c.b16 %v5283, %v5282
    %v6505 = vpack.c.b16 %v5285, %v5284
    %v6506 = vpack.c.b16 %v5287, %v5286
    %v6507 = vpack.c.b16 %v5289, %v5288
    %v6508 = vpack.c.b16 %v5291, %v5290
    %v6509 = vpack.c.b16 %v5293, %v5292
    %v6510 = vpack.c.b16 %v5295, %v5294
    %v6511 = vpack.c.b16 %v5297, %v5296
    %v6512 = vpack.c.b16 %v5299, %v5298
    %v6513 = vpack.c.b16 %v5301, %v5300
    %v6514 = vpack.c.b16 %v5303, %v5302
    %v6515 = vpack.c.b16 %v5305, %v5304
    %v6516 = vpack.c.b16 %v5307, %v5306
    %v6517 = vpack.c.b16 %v5309, %v5308
    %v6518 = vpack.c.b16 %v5311, %v5310
    %v6519 = vpack.c.b16 %v5313, %v5312
    %v6520 = vpack.c.b16 %v5315, %v5314
    %v6521 = vpack.c.b16 %v5317, %v5316
    %v6522 = vpack.c.b16 %v5319, %v5318
    %v6523 = vpack.c.b16 %v5321, %v5320
    %v6524 = vpack.c.b16 %v5323, %v5322
    %v6525 = vpack.c.b16 %v5325, %v5324
    %v6526 = vpack.c.b16 %v5327, %v5326
    %v6527 = vpack.c.b16 %v5329, %v5328
    %v6528 = vpack.c.b16 %v5331, %v5330
    %v6529 = vpack.c.b16 %v5333, %v5332
    %v6530 = vpack.c.b16 %v5335, %v5334
    %v6531 = vpack.c.b16 %v5337, %v5336
    %v6532 = vpack.c.b16 %v5339, %v5338
    %v6533 = vpack.c.b16 %v5341, %v5340
    %v6534 = vpack.c.b16 %v5343, %v5342
    %v6535 = vpack.c.b16 %v5345, %v5344
    %v6536 = vpack.c.b16 %v5347, %v5346
    %v6537 = vpack.c.b16 %v5349, %v5348
    %v6538 = vpack.c.b16 %v5351, %v5350
    %v6539 = vpack.c.b16 %v5353, %v5352
    %v6540 = vpack.c.b16 %v5355, %v5354
    %v6541 = vpack.c.b16 %v5357, %v5356
    %v6542 = vpack.c.b16 %v5359, %v5358
    %v6543 = vpack.c.b16 %v5361, %v5360
    %v6544 = vpack.c.b16 %v5363, %v5362
    %v6545 = vpack.c.b16 %v5365, %v5364
    %v6546 = vpack.c.b16 %v5367, %v5366
    %v6547 = vpack.c.b16 %v5369, %v5368
    %v6548 = vpack.c.b16 %v5371, %v5370
    %v6549 = vpack.c.b16 %v5373, %v5372
    %v6550 = vpack.c.b16 %v5375, %v5374
    %v6551 = vpack.c.b16 %v5377, %v5376
    %v6552 = vpack.c.b16 %v5379, %v5378
    %v6553 = vpack.c.b16 %v5381, %v5380
    %v6554 = vpack.c.b16 %v5383, %v5382
    %v6555 = vpack.c.b16 %v5385, %v5384
    %v6556 = vpack.c.b16 %v5387, %v5386
    %v6557 = vpack.c.b16 %v5389, %v5388
    %v6558 = vpack.c.b16 %v5391, %v5390
    %v6559 = vpack.c.b16 %v5393, %v5392
    %v6560 = vpack.c.b16 %v5395, %v5394
    %v6561 = vpack.c.b16 %v5397, %v5396
    %v6562 = vpack.c.b16 %v5399, %v5398
    %v6563 = vpack.c.b16 %v5401, %v5400
    %v6564 = vpack.c.b16 %v5403, %v5402
    %v6565 = vpack.c.b16 %v5405, %v5404
    %v6566 = vpack.c.b16 %v5407, %v5406
    %v6567 = vpack.c.b16 %v5409, %v5408
    %v6568 = vpack.c.b16 %v5411, %v5410
    %v6569 = vpack.c.b16 %v5413, %v5412
    %v6570 = vpack.c.b16 %v5415, %v5414
    %v6571 = vpack.c.b16 %v5417, %v5416
    %v6572 = vpack.c.b16 %v5419, %v5418
    %v6573 = vpack.c.b16 %v5421, %v5420
    %v6574 = vpack.c.b16 %v5423, %v5422
    %v6575 = vpack.c.b16 %v5425, %v5424
    %v6576 = vpack.c.b16 %v5427, %v5426
    %v6577 = vpack.c.b16 %v5429, %v5428
    %v6578 = vpack.c.b16 %v5431, %v5430
    %v6579 = vpack.c.b16 %v5433, %v5432
    %v6580 = vpack.c.b16 %v5435, %v5434
    %v6581 = vpack.c.b16 %v5437, %v5436
    %v6582 = vpack.c.b16 %v5439, %v5438
    %v6583 = vpack.c.b16 %v5441, %v5440
    %v6584 = vpack.c.b16 %v5443, %v5442
    %v6585 = vpack.c.b16 %v5445, %v5444
    %v6586 = vpack.c.b16 %v5447, %v5446
    %v6587 = vpack.c.b16 %v5449, %v5448
    %v6588 = vpack.c.b16 %v5451, %v5450
    %v6589 = vpack.c.b16 %v5453, %v5452
    %v6590 = vpack.c.b16 %v5455, %v5454
    %v6591 = vpack.c.b16 %v5457, %v5456
    %v6592 = vpack.c.b16 %v5459, %v5458
    %v6593 = vpack.c.b16 %v5461, %v5460
    %v6594 = vpack.c.b16 %v5463, %v5462
    %v6595 = vpack.c.b16 %v5465, %v5464
    %v6596 = vpack.c.b16 %v5467, %v5466
    %v6597 = vpack.c.b16 %v5469, %v5468
    %v6598 = vpack.c.b16 %v5471, %v5470
    %v6599 = vpack.c.b16 %v5473, %v5472
    %v6600 = vpack.c.b16 %v5475, %v5474
    %v6601 = vpack.c.b16 %v5477, %v5476
    %v6602 = vpack.c.b16 %v5479, %v5478
    %v6603 = vpack.c.b16 %v5481, %v5480
    %v6604 = vpack.c.b16 %v5483, %v5482
    %v6605 = vpack.c.b16 %v5485, %v5484
    %v6606 = vpack.c.b16 %v5487, %v5486
    %v6607 = vpack.c.b16 %v5489, %v5488
    %v6608 = vpack.c.b16 %v5491, %v5490
    %v6609 = vpack.c.b16 %v5493, %v5492
    %v6610 = vpack.c.b16 %v5495, %v5494
    %v6611 = vpack.c.b16 %v5497, %v5496
    %v6612 = vpack.c.b16 %v5499, %v5498
    %v6613 = vpack.c.b16 %v5501, %v5500
    %v6614 = vpack.c.b16 %v5503, %v5502
    %v6615 = vpack.c.b16 %v5505, %v5504
    %v6616 = vpack.c.b16 %v5507, %v5506
    %v6617 = vpack.c.b16 %v5509, %v5508
    %v6618 = vpack.c.b16 %v5511, %v5510
    %v6619 = vpack.c.b16 %v5513, %v5512
    %v6620 = vpack.c.b16 %v5515, %v5514
    %v6621 = vpack.c.b16 %v5517, %v5516
    %v6622 = vpack.c.b16 %v5519, %v5518
    %v6623 = vpack.c.b16 %v5521, %v5520
    %v6624 = vpack.c.b16 %v5523, %v5522
    %v6625 = vpack.c.b16 %v5525, %v5524
    %v6626 = vpack.c.b16 %v5527, %v5526
    %v6627 = vpack.c.b16 %v5529, %v5528
    %v6628 = vpack.c.b16 %v5531, %v5530
    %v6629 = vpack.c.b16 %v5533, %v5532
    %v6630 = vpack.c.b16 %v5535, %v5534
    %v6631 = vpack.c.b16 %v5537, %v5536
    %v6632 = vpack.c.b16 %v5539, %v5538
    %v6633 = vpack.c.b16 %v5541, %v5540
    %v6634 = vpack.c.b16 %v5543, %v5542
    %v6635 = vpack.c.b16 %v5545, %v5544
    %v6636 = vpack.c.b16 %v5547, %v5546
    %v6637 = vpack.c.b16 %v5549, %v5548
    %v6638 = vpack.c.b16 %v5551, %v5550
    %v6639 = vpack.c.b16 %v5553, %v5552
    %v6640 = vpack.c.b16 %v5555, %v5554
    %v6641 = vpack.c.b16 %v5557, %v5556
    %v6642 = vpack.c.b16 %v5559, %v5558
    %v6643 = vpack.c.b16 %v5561, %v5560
    %v6644 = vpack.c.b16 %v5563, %v5562
    %v6645 = vpack.c.b16 %v5565, %v5564
    %v6646 = vpack.c.b16 %v5567, %v5566
    %v6647 = vpack.c.b16 %v5569, %v5568
    %v6648 = vpack.c.b16 %v5571, %v5570
    %v6649 = vpack.c.b16 %v5573, %v5572
    %v6650 = vpack.c.b16 %v5575, %v5574
    %v6651 = vpack.c.b16 %v5577, %v5576
    %v6652 = vpack.c.b16 %v5579, %v5578
    %v6653 = vpack.c.b16 %v5581, %v5580
    %v6654 = vpack.c.b16 %v5583, %v5582
    %v6655 = vpack.c.b16 %v5585, %v5584
    %v6656 = vpack.c.b16 %v5587, %v5586
    %v6657 = vpack.c.b16 %v5589, %v5588
    %v6658 = vpack.c.b16 %v5591, %v5590
    %v6659 = vpack.c.b16 %v5593, %v5592
    %v6660 = vpack.c.b16 %v5595, %v5594
    %v6661 = vpack.c.b16 %v5597, %v5596
    %v6662 = vpack.c.b16 %v5599, %v5598
    %v6663 = vpack.c.b16 %v5601, %v5600
    %v6664 = vpack.c.b16 %v5603, %v5602
    %v6665 = vpack.c.b16 %v5605, %v5604
    %v6666 = vpack.c.b16 %v5607, %v5606
    %v6667 = vpack.c.b16 %v5609, %v5608
    %v6668 = vpack.c.b16 %v5611, %v5610
    %v6669 = vpack.c.b16 %v5613, %v5612
    %v6670 = vpack.c.b16 %v5615, %v5614
    %v6671 = vpack.c.b16 %v5617, %v5616
    %v6672 = vpack.c.b16 %v5619, %v5618
    %v6673 = vpack.c.b16 %v5621, %v5620
    %v6674 = vpack.c.b16 %v5623, %v5622
    %v6675 = vpack.c.b16 %v5625, %v5624
    %v6676 = vpack.c.b16 %v5627, %v5626
    %v6677 = vpack.c.b16 %v5629, %v5628
    %v6678 = vpack.c.b16 %v5631, %v5630
    %v6679 = vpack.c.b16 %v5633, %v5632
    %v6680 = vpack.c.b16 %v5635, %v5634
    %v6681 = vpack.c.b16 %v5637, %v5636
    %v6682 = vpack.c.b16 %v5639, %v5638
    %v6683 = vpack.c.b16 %v5641, %v5640
    %v6684 = vpack.c.b16 %v5643, %v5642
    %v6685 = vpack.c.b16 %v5645, %v5644
    %v6686 = vpack.c.b16 %v5647, %v5646
    %v6687 = vpack.c.b16 %v5649, %v5648
    %v6688 = vpack.c.b16 %v5651, %v5650
    %v6689 = vpack.c.b16 %v5653, %v5652
    %v6690 = vpack.c.b16 %v5655, %v5654
    %v6691 = vpack.c.b16 %v5657, %v5656
    %v6692 = vpack.c.b16 %v5659, %v5658
    %v6693 = vpack.c.b16 %v5661, %v5660
    %v6694 = vpack.c.b16 %v5663, %v5662
    %v6695 = vpack.c.b16 %v5665, %v5664
    %v6696 = vpack.c.b16 %v5667, %v5666
    %v6697 = vpack.c.b16 %v5669, %v5668
    %v6698 = vpack.c.b16 %v5671, %v5670
    %v6699 = vpack.c.b16 %v5673, %v5672
    %v6700 = vpack.c.b16 %v5675, %v5674
    %v6701 = vpack.c.b16 %v5677, %v5676
    %v6702 = vpack.c.b16 %v5679, %v5678
    %v6703 = vpack.c.b16 %v5681, %v5680
    %v6704 = vpack.c.b16 %v5683, %v5682
    %v6705 = vpack.c.b16 %v5685, %v5684
    %v6706 = vpack.c.b16 %v5687, %v5686
    %v6707 = vpack.c.b16 %v5689, %v5688
    %v6708 = vpack.c.b16 %v5691, %v5690
    %v6709 = vpack.c.b16 %v5693, %v5692
    %v6710 = vpack.c.b16 %v5695, %v5694
    %v6711 = vpack.c.b16 %v5697, %v5696
    %v6712 = vpack.c.b16 %v5699, %v5698
    %v6713 = vpack.c.b16 %v5701, %v5700
    %v6714 = vpack.c.b16 %v5703, %v5702
    %v6715 = vpack.c.b16 %v5705, %v5704
    %v6716 = vpack.c.b16 %v5707, %v5706
    %v6717 = vpack.c.b16 %v5709, %v5708
    %v6718 = vpack.c.b16 %v5711, %v5710
    %v6719 = vpack.c.b16 %v5713, %v5712
    %v6720 = vpack.c.b16 %v5715, %v5714
    %v6721 = vpack.c.b16 %v5717, %v5716
    %v6722 = vpack.c.b16 %v5719, %v5718
    %v6723 = vpack.c.b16 %v5721, %v5720
    %v6724 = vpack.c.b16 %v5723, %v5722
    %v6725 = vpack.c.b16 %v5725, %v5724
    %v6726 = vpack.c.b16 %v5727, %v5726
    %v6727 = vpack.c.b16 %v5729, %v5728
    %v6728 = vpack.c.b16 %v5731, %v5730
    %v6729 = vpack.c.b16 %v5733, %v5732
    %v6730 = vpack.c.b16 %v5735, %v5734
    %v6731 = vpack.c.b16 %v5737, %v5736
    %v6732 = vpack.c.b16 %v5739, %v5738
    %v6733 = vpack.c.b16 %v5741, %v5740
    %v6734 = vpack.c.b16 %v5743, %v5742
    %v6735 = vpack.c.b16 %v5745, %v5744
    %v6736 = vpack.c.b16 %v5747, %v5746
    %v6737 = vpack.c.b16 %v5749, %v5748
    %v6738 = vpack.c.b16 %v5751, %v5750
    %v6739 = vpack.c.b16 %v5753, %v5752
    %v6740 = vpack.c.b16 %v5755, %v5754
    %v6741 = vpack.c.b16 %v5757, %v5756
    %v6742 = vpack.c.b16 %v5759, %v5758
    %v6743 = vpack.c.b16 %v5761, %v5760
    %v6744 = vpack.c.b16 %v5763, %v5762
    %v6745 = vpack.c.b16 %v5765, %v5764
    %v6746 = vpack.c.b16 %v5767, %v5766
    %v6747 = vpack.c.b16 %v5769, %v5768
    %v6748 = vpack.c.b16 %v5771, %v5770
    %v6749 = vpack.c.b16 %v5773, %v5772
    %v6750 = vpack.c.b16 %v5775, %v5774
    %v6751 = vpack.c.b16 %v5777, %v5776
    %v6752 = vpack.c.b16 %v5779, %v5778
    %v6753 = vpack.c.b16 %v5781, %v5780
    %v6754 = vpack.c.b16 %v5783, %v5782
    %v6755 = vpack.c.b16 %v5785, %v5784
    %v6756 = vpack.c.b16 %v5787, %v5786
    %v6757 = vpack.c.b16 %v5789, %v5788
    %v6758 = vpack.c.b16 %v5791, %v5790
    %v6759 = vpack.c.b16 %v5793, %v5792
    %v6760 = vpack.c.b16 %v5795, %v5794
    %v6761 = vpack.c.b16 %v5797, %v5796
    %v6762 = vpack.c.b16 %v5799, %v5798
    %v6763 = vpack.c.b16 %v5801, %v5800
    %v6764 = vpack.c.b16 %v5803, %v5802
    %v6765 = vpack.c.b16 %v5805, %v5804
    %v6766 = vpack.c.b16 %v5807, %v5806
    %v6767 = vpack.c.b16 %v5809, %v5808
    %v6768 = vpack.c.b16 %v5811, %v5810
    %v6769 = vpack.c.b16 %v5813, %v5812
    %v6770 = vpack.c.b16 %v5815, %v5814
    %v6771 = vpack.c.b16 %v5817, %v5816
    %v6772 = vpack.c.b16 %v5819, %v5818
    %v6773 = vpack.c.b16 %v5821, %v5820
    %v6774 = vpack.c.b16 %v5823, %v5822
    %v6775 = vpack.c.b16 %v5825, %v5824
    %v6776 = vpack.c.b16 %v5827, %v5826
    %v6777 = vpack.c.b16 %v5829, %v5828
    %v6778 = vpack.c.b16 %v5831, %v5830
    %v6779 = vpack.c.b16 %v5833, %v5832
    %v6780 = vpack.c.b16 %v5835, %v5834
    %v6781 = vpack.c.b16 %v5837, %v5836
    %v6782 = vpack.c.b16 %v5839, %v5838
    %v6783 = vpack.c.b16 %v5841, %v5840
    %v6784 = vpack.c.b16 %v5843, %v5842
    %v6785 = vpack.c.b16 %v5845, %v5844
    %v6786 = vpack.c.b16 %v5847, %v5846
    %v6787 = vpack.c.b16 %v5849, %v5848
    %v6788 = vpack.c.b16 %v5851, %v5850
    %v6789 = vpack.c.b16 %v5853, %v5852
    %v6790 = vpack.c.b16 %v5855, %v5854
    %v6791 = vpack.c.b16 %v5857, %v5856
    %v6792 = vpack.c.b16 %v5859, %v5858
    %v6793 = vpack.c.b16 %v5861, %v5860
    %v6794 = vpack.c.b16 %v5863, %v5862
    %v6795 = vpack.c.b16 %v5865, %v5864
    %v6796 = vpack.c.b16 %v5867, %v5866
    %v6797 = vpack.c.b16 %v5869, %v5868
    %7726 = vmatpush.bf16.msra.mxu0 %v5877
    %7727 = vmatpush.bf16.msra.mxu0 %v5876
    %7728 = vmatpush.bf16.msra.mxu0 %v5875
    %7729 = vmatpush.bf16.msra.mxu0 %v5874
    %7730 = vmatpush.bf16.msra.mxu0 %v5873
    %7731 = vmatpush.bf16.msra.mxu0 %v5872
    %7732 = vmatpush.bf16.msra.mxu0 %v5871
    %7733 = vmatpush.bf16.msra.mxu0 %v5870
    %7734 = vmatmul.bf16.gmra.mxu0 %v1898
    %v7735 = vpop.f32.mrf.mxu0
    %v7736 = vadd.f32 %v1894, %v7735
    %v7737 = vpop.f32.mrf.mxu0
    %7738 = vdwg.mxu0
    %7739 = vmatpush.bf16.msra.mxu0 %v5885
    %7740 = vmatpush.bf16.msra.mxu0 %v5884
    %7741 = vmatpush.bf16.msra.mxu0 %v5883
    %7742 = vmatpush.bf16.msra.mxu0 %v5882
    %7743 = vmatpush.bf16.msra.mxu0 %v5881
    %7744 = vmatpush.bf16.msra.mxu0 %v5880
    %7745 = vmatpush.bf16.msra.mxu0 %v5879
    %7746 = vmatpush.bf16.msra.mxu0 %v5878
    %7747 = vmatmul.bf16.gmra.mxu0 %v1899
    %v7748 = vpop.f32.mrf.mxu0
    %v7749 = vadd.f32 %v7736, %v7748
    %v7750 = vpop.f32.mrf.mxu0
    %7751 = vdwg.mxu0
    %7752 = vmatpush.bf16.msra.mxu0 %v5893
    %7753 = vmatpush.bf16.msra.mxu0 %v5892
    %7754 = vmatpush.bf16.msra.mxu0 %v5891
    %7755 = vmatpush.bf16.msra.mxu0 %v5890
    %7756 = vmatpush.bf16.msra.mxu0 %v5889
    %7757 = vmatpush.bf16.msra.mxu0 %v5888
    %7758 = vmatpush.bf16.msra.mxu0 %v5887
    %7759 = vmatpush.bf16.msra.mxu0 %v5886
    %7760 = vmatmul.bf16.gmra.mxu0 %v1900
    %v7761 = vpop.f32.mrf.mxu0
    %v7762 = vadd.f32 %v7749, %v7761
    %v7763 = vpop.f32.mrf.mxu0
    %7764 = vdwg.mxu0
    %7765 = vmatpush.bf16.msra.mxu0 %v5901
    %7766 = vmatpush.bf16.msra.mxu0 %v5900
    %7767 = vmatpush.bf16.msra.mxu0 %v5899
    %7768 = vmatpush.bf16.msra.mxu0 %v5898
    %7769 = vmatpush.bf16.msra.mxu0 %v5897
    %7770 = vmatpush.bf16.msra.mxu0 %v5896
    %7771 = vmatpush.bf16.msra.mxu0 %v5895
    %7772 = vmatpush.bf16.msra.mxu0 %v5894
    %7773 = vmatmul.bf16.gmra.mxu0 %v1901
    %v7774 = vpop.f32.mrf.mxu0
    %v7775 = vadd.f32 %v7762, %v7774
    %v7776 = vpop.f32.mrf.mxu0
    %7777 = vdwg.mxu0
    %7778 = vmatpush.bf16.msra.mxu0 %v5909
    %7779 = vmatpush.bf16.msra.mxu0 %v5908
    %7780 = vmatpush.bf16.msra.mxu0 %v5907
    %7781 = vmatpush.bf16.msra.mxu0 %v5906
    %7782 = vmatpush.bf16.msra.mxu0 %v5905
    %7783 = vmatpush.bf16.msra.mxu0 %v5904
    %7784 = vmatpush.bf16.msra.mxu0 %v5903
    %7785 = vmatpush.bf16.msra.mxu0 %v5902
    %7786 = vmatmul.bf16.gmra.mxu0 %v1902
    %v7787 = vpop.f32.mrf.mxu0
    %v7788 = vadd.f32 %v7775, %v7787
    %v7789 = vpop.f32.mrf.mxu0
    %7790 = vdwg.mxu0
    %7791 = vmatpush.bf16.msra.mxu0 %v5917
    %7792 = vmatpush.bf16.msra.mxu0 %v5916
    %7793 = vmatpush.bf16.msra.mxu0 %v5915
    %7794 = vmatpush.bf16.msra.mxu0 %v5914
    %7795 = vmatpush.bf16.msra.mxu0 %v5913
    %7796 = vmatpush.bf16.msra.mxu0 %v5912
    %7797 = vmatpush.bf16.msra.mxu0 %v5911
    %7798 = vmatpush.bf16.msra.mxu0 %v5910
    %7799 = vmatmul.bf16.gmra.mxu0 %v1903
    %v7800 = vpop.f32.mrf.mxu0
    %v7801 = vadd.f32 %v7788, %v7800
    %v7802 = vpop.f32.mrf.mxu0
    %7803 = vdwg.mxu0
    %7804 = vmatpush.bf16.msra.mxu0 %v5925
    %7805 = vmatpush.bf16.msra.mxu0 %v5924
    %7806 = vmatpush.bf16.msra.mxu0 %v5923
    %7807 = vmatpush.bf16.msra.mxu0 %v5922
    %7808 = vmatpush.bf16.msra.mxu0 %v5921
    %7809 = vmatpush.bf16.msra.mxu0 %v5920
    %7810 = vmatpush.bf16.msra.mxu0 %v5919
    %7811 = vmatpush.bf16.msra.mxu0 %v5918
    %7812 = vmatmul.bf16.gmra.mxu0 %v1904
    %v7813 = vpop.f32.mrf.mxu0
    %v7814 = vadd.f32 %v7801, %v7813
    %v7815 = vpop.f32.mrf.mxu0
    %7816 = vdwg.mxu0
    %7817 = vmatpush.bf16.msra.mxu0 %v5933
    %7818 = vmatpush.bf16.msra.mxu0 %v5932
    %7819 = vmatpush.bf16.msra.mxu0 %v5931
    %7820 = vmatpush.bf16.msra.mxu0 %v5930
    %7821 = vmatpush.bf16.msra.mxu0 %v5929
    %7822 = vmatpush.bf16.msra.mxu0 %v5928
    %7823 = vmatpush.bf16.msra.mxu0 %v5927
    %7824 = vmatpush.bf16.msra.mxu0 %v5926
    %7825 = vmatmul.bf16.gmra.mxu0 %v1905
    %v7826 = vpop.f32.mrf.mxu0
    %v7827 = vadd.f32 %v7814, %v7826
    %v7828 = vpop.f32.mrf.mxu0
    %7829 = vdwg.mxu0
    %7830 = vmatpush.bf16.msra.mxu0 %v5941
    %7831 = vmatpush.bf16.msra.mxu0 %v5940
    %7832 = vmatpush.bf16.msra.mxu0 %v5939
    %7833 = vmatpush.bf16.msra.mxu0 %v5938
    %7834 = vmatpush.bf16.msra.mxu0 %v5937
    %7835 = vmatpush.bf16.msra.mxu0 %v5936
    %7836 = vmatpush.bf16.msra.mxu0 %v5935
    %7837 = vmatpush.bf16.msra.mxu0 %v5934
    %7838 = vmatmul.bf16.gmra.mxu0 %v1908
    %v7839 = vpop.f32.mrf.mxu0
    %v7840 = vadd.f32 %v7827, %v7839
    %v7841 = vpop.f32.mrf.mxu0
    %7842 = vdwg.mxu0
    %7843 = vmatpush.bf16.msra.mxu0 %v5949
    %7844 = vmatpush.bf16.msra.mxu0 %v5948
    %7845 = vmatpush.bf16.msra.mxu0 %v5947
    %7846 = vmatpush.bf16.msra.mxu0 %v5946
    %7847 = vmatpush.bf16.msra.mxu0 %v5945
    %7848 = vmatpush.bf16.msra.mxu0 %v5944
    %7849 = vmatpush.bf16.msra.mxu0 %v5943
    %7850 = vmatpush.bf16.msra.mxu0 %v5942
    %7851 = vmatmul.bf16.gmra.mxu0 %v1909
    %v7852 = vpop.f32.mrf.mxu0
    %v7853 = vadd.f32 %v7840, %v7852
    %v7854 = vpop.f32.mrf.mxu0
    %7855 = vdwg.mxu0
    %7856 = vmatpush.bf16.msra.mxu0 %v5957
    %7857 = vmatpush.bf16.msra.mxu0 %v5956
    %7858 = vmatpush.bf16.msra.mxu0 %v5955
    %7859 = vmatpush.bf16.msra.mxu0 %v5954
    %7860 = vmatpush.bf16.msra.mxu0 %v5953
    %7861 = vmatpush.bf16.msra.mxu0 %v5952
    %7862 = vmatpush.bf16.msra.mxu0 %v5951
    %7863 = vmatpush.bf16.msra.mxu0 %v5950
    %7864 = vmatmul.bf16.gmra.mxu0 %v1910
    %v7865 = vpop.f32.mrf.mxu0
    %v7866 = vadd.f32 %v7853, %v7865
    %v7867 = vpop.f32.mrf.mxu0
    %7868 = vdwg.mxu0
    %7869 = vmatpush.bf16.msra.mxu0 %v5965
    %7870 = vmatpush.bf16.msra.mxu0 %v5964
    %7871 = vmatpush.bf16.msra.mxu0 %v5963
    %7872 = vmatpush.bf16.msra.mxu0 %v5962
    %7873 = vmatpush.bf16.msra.mxu0 %v5961
    %7874 = vmatpush.bf16.msra.mxu0 %v5960
    %7875 = vmatpush.bf16.msra.mxu0 %v5959
    %7876 = vmatpush.bf16.msra.mxu0 %v5958
    %7877 = vmatmul.bf16.gmra.mxu0 %v1911
    %v7878 = vpop.f32.mrf.mxu0
    %v7879 = vadd.f32 %v7866, %v7878
    %v7880 = vpop.f32.mrf.mxu0
    %7881 = vdwg.mxu0
    %7882 = vmatpush.bf16.msra.mxu0 %v5973
    %7883 = vmatpush.bf16.msra.mxu0 %v5972
    %7884 = vmatpush.bf16.msra.mxu0 %v5971
    %7885 = vmatpush.bf16.msra.mxu0 %v5970
    %7886 = vmatpush.bf16.msra.mxu0 %v5969
    %7887 = vmatpush.bf16.msra.mxu0 %v5968
    %7888 = vmatpush.bf16.msra.mxu0 %v5967
    %7889 = vmatpush.bf16.msra.mxu0 %v5966
    %7890 = vmatmul.bf16.gmra.mxu0 %v1912
    %v7891 = vpop.f32.mrf.mxu0
    %v7892 = vadd.f32 %v7879, %v7891
    %v7893 = vpop.f32.mrf.mxu0
    %7894 = vdwg.mxu0
    %7895 = vmatpush.bf16.msra.mxu0 %v5981
    %7896 = vmatpush.bf16.msra.mxu0 %v5980
    %7897 = vmatpush.bf16.msra.mxu0 %v5979
    %7898 = vmatpush.bf16.msra.mxu0 %v5978
    %7899 = vmatpush.bf16.msra.mxu0 %v5977
    %7900 = vmatpush.bf16.msra.mxu0 %v5976
    %7901 = vmatpush.bf16.msra.mxu0 %v5975
    %7902 = vmatpush.bf16.msra.mxu0 %v5974
    %7903 = vmatmul.bf16.gmra.mxu0 %v1913
    %v7904 = vpop.f32.mrf.mxu0
    %v7905 = vadd.f32 %v7892, %v7904
    %v7906 = vpop.f32.mrf.mxu0
    %7907 = vdwg.mxu0
    %7908 = vmatpush.bf16.msra.mxu0 %v5989
    %7909 = vmatpush.bf16.msra.mxu0 %v5988
    %7910 = vmatpush.bf16.msra.mxu0 %v5987
    %7911 = vmatpush.bf16.msra.mxu0 %v5986
    %7912 = vmatpush.bf16.msra.mxu0 %v5985
    %7913 = vmatpush.bf16.msra.mxu0 %v5984
    %7914 = vmatpush.bf16.msra.mxu0 %v5983
    %7915 = vmatpush.bf16.msra.mxu0 %v5982
    %7916 = vmatmul.bf16.gmra.mxu0 %v1914
    %v7917 = vpop.f32.mrf.mxu0
    %v7918 = vadd.f32 %v7905, %v7917
    %v7919 = vpop.f32.mrf.mxu0
    %7920 = vdwg.mxu0
    %7921 = vmatpush.bf16.msra.mxu0 %v5997
    %7922 = vmatpush.bf16.msra.mxu0 %v5996
    %7923 = vmatpush.bf16.msra.mxu0 %v5995
    %7924 = vmatpush.bf16.msra.mxu0 %v5994
    %7925 = vmatpush.bf16.msra.mxu0 %v5993
    %7926 = vmatpush.bf16.msra.mxu0 %v5992
    %7927 = vmatpush.bf16.msra.mxu0 %v5991
    %7928 = vmatpush.bf16.msra.mxu0 %v5990
    %7929 = vmatmul.bf16.gmra.mxu0 %v1915
    %v7930 = vpop.f32.mrf.mxu0
    %v7931 = vadd.f32 %v7918, %v7930
    %v7932 = vpop.f32.mrf.mxu0
    %7933 = vdwg.mxu0
    %7934 = vmatpush.bf16.msra.mxu0 %v6005
    %7935 = vmatpush.bf16.msra.mxu0 %v6004
    %7936 = vmatpush.bf16.msra.mxu0 %v6003
    %7937 = vmatpush.bf16.msra.mxu0 %v6002
    %7938 = vmatpush.bf16.msra.mxu0 %v6001
    %7939 = vmatpush.bf16.msra.mxu0 %v6000
    %7940 = vmatpush.bf16.msra.mxu0 %v5999
    %7941 = vmatpush.bf16.msra.mxu0 %v5998
    %7942 = vmatmul.bf16.gmra.mxu0 %v1918
    %v7943 = vpop.f32.mrf.mxu0
    %v7944 = vadd.f32 %v7931, %v7943
    %v7945 = vpop.f32.mrf.mxu0
    %7946 = vdwg.mxu0
    %7947 = vmatpush.bf16.msra.mxu0 %v6013
    %7948 = vmatpush.bf16.msra.mxu0 %v6012
    %7949 = vmatpush.bf16.msra.mxu0 %v6011
    %7950 = vmatpush.bf16.msra.mxu0 %v6010
    %7951 = vmatpush.bf16.msra.mxu0 %v6009
    %7952 = vmatpush.bf16.msra.mxu0 %v6008
    %7953 = vmatpush.bf16.msra.mxu0 %v6007
    %7954 = vmatpush.bf16.msra.mxu0 %v6006
    %7955 = vmatmul.bf16.gmra.mxu0 %v1919
    %v7956 = vpop.f32.mrf.mxu0
    %v7957 = vadd.f32 %v7944, %v7956
    %v7958 = vpop.f32.mrf.mxu0
    %7959 = vdwg.mxu0
    %7960 = vmatpush.bf16.msra.mxu0 %v6021
    %7961 = vmatpush.bf16.msra.mxu0 %v6020
    %7962 = vmatpush.bf16.msra.mxu0 %v6019
    %7963 = vmatpush.bf16.msra.mxu0 %v6018
    %7964 = vmatpush.bf16.msra.mxu0 %v6017
    %7965 = vmatpush.bf16.msra.mxu0 %v6016
    %7966 = vmatpush.bf16.msra.mxu0 %v6015
    %7967 = vmatpush.bf16.msra.mxu0 %v6014
    %7968 = vmatmul.bf16.gmra.mxu0 %v1920
    %v7969 = vpop.f32.mrf.mxu0
    %v7970 = vadd.f32 %v7957, %v7969
    %v7971 = vpop.f32.mrf.mxu0
    %7972 = vdwg.mxu0
    %7973 = vmatpush.bf16.msra.mxu0 %v6029
    %7974 = vmatpush.bf16.msra.mxu0 %v6028
    %7975 = vmatpush.bf16.msra.mxu0 %v6027
    %7976 = vmatpush.bf16.msra.mxu0 %v6026
    %7977 = vmatpush.bf16.msra.mxu0 %v6025
    %7978 = vmatpush.bf16.msra.mxu0 %v6024
    %7979 = vmatpush.bf16.msra.mxu0 %v6023
    %7980 = vmatpush.bf16.msra.mxu0 %v6022
    %7981 = vmatmul.bf16.gmra.mxu0 %v1921
    %v7982 = vpop.f32.mrf.mxu0
    %v7983 = vadd.f32 %v7970, %v7982
    %v7984 = vpop.f32.mrf.mxu0
    %7985 = vdwg.mxu0
    %7986 = vmatpush.bf16.msra.mxu0 %v6037
    %7987 = vmatpush.bf16.msra.mxu0 %v6036
    %7988 = vmatpush.bf16.msra.mxu0 %v6035
    %7989 = vmatpush.bf16.msra.mxu0 %v6034
    %7990 = vmatpush.bf16.msra.mxu0 %v6033
    %7991 = vmatpush.bf16.msra.mxu0 %v6032
    %7992 = vmatpush.bf16.msra.mxu0 %v6031
    %7993 = vmatpush.bf16.msra.mxu0 %v6030
    %7994 = vmatmul.bf16.gmra.mxu0 %v1922
    %v7995 = vpop.f32.mrf.mxu0
    %v7996 = vadd.f32 %v7983, %v7995
    %v7997 = vpop.f32.mrf.mxu0
    %7998 = vdwg.mxu0
    %7999 = vmatpush.bf16.msra.mxu0 %v6045
    %8000 = vmatpush.bf16.msra.mxu0 %v6044
    %8001 = vmatpush.bf16.msra.mxu0 %v6043
    %8002 = vmatpush.bf16.msra.mxu0 %v6042
    %8003 = vmatpush.bf16.msra.mxu0 %v6041
    %8004 = vmatpush.bf16.msra.mxu0 %v6040
    %8005 = vmatpush.bf16.msra.mxu0 %v6039
    %8006 = vmatpush.bf16.msra.mxu0 %v6038
    %8007 = vmatmul.bf16.gmra.mxu0 %v1923
    %v8008 = vpop.f32.mrf.mxu0
    %v8009 = vadd.f32 %v7996, %v8008
    %v8010 = vpop.f32.mrf.mxu0
    %8011 = vdwg.mxu0
    %8012 = vmatpush.bf16.msra.mxu0 %v6053
    %8013 = vmatpush.bf16.msra.mxu0 %v6052
    %8014 = vmatpush.bf16.msra.mxu0 %v6051
    %8015 = vmatpush.bf16.msra.mxu0 %v6050
    %8016 = vmatpush.bf16.msra.mxu0 %v6049
    %8017 = vmatpush.bf16.msra.mxu0 %v6048
    %8018 = vmatpush.bf16.msra.mxu0 %v6047
    %8019 = vmatpush.bf16.msra.mxu0 %v6046
    %8020 = vmatmul.bf16.gmra.mxu0 %v1924
    %v8021 = vpop.f32.mrf.mxu0
    %v8022 = vadd.f32 %v8009, %v8021
    %v8023 = vpop.f32.mrf.mxu0
    %8024 = vdwg.mxu0
    %8025 = vmatpush.bf16.msra.mxu0 %v6061
    %8026 = vmatpush.bf16.msra.mxu0 %v6060
    %8027 = vmatpush.bf16.msra.mxu0 %v6059
    %8028 = vmatpush.bf16.msra.mxu0 %v6058
    %8029 = vmatpush.bf16.msra.mxu0 %v6057
    %8030 = vmatpush.bf16.msra.mxu0 %v6056
    %8031 = vmatpush.bf16.msra.mxu0 %v6055
    %8032 = vmatpush.bf16.msra.mxu0 %v6054
    %8033 = vmatmul.bf16.gmra.mxu0 %v1925
    %v8034 = vpop.f32.mrf.mxu0
    %v8035 = vadd.f32 %v8022, %v8034
    %v8036 = vpop.f32.mrf.mxu0
    %8037 = vdwg.mxu0
    %8038 = vmatpush.bf16.msra.mxu0 %v6069
    %8039 = vmatpush.bf16.msra.mxu0 %v6068
    %8040 = vmatpush.bf16.msra.mxu0 %v6067
    %8041 = vmatpush.bf16.msra.mxu0 %v6066
    %8042 = vmatpush.bf16.msra.mxu0 %v6065
    %8043 = vmatpush.bf16.msra.mxu0 %v6064
    %8044 = vmatpush.bf16.msra.mxu0 %v6063
    %8045 = vmatpush.bf16.msra.mxu0 %v6062
    %8046 = vmatmul.bf16.gmra.mxu0 %v1928
    %v8047 = vpop.f32.mrf.mxu0
    %v8048 = vadd.f32 %v8035, %v8047
    %v8049 = vpop.f32.mrf.mxu0
    %8050 = vdwg.mxu0
    %8051 = vmatpush.bf16.msra.mxu0 %v6077
    %8052 = vmatpush.bf16.msra.mxu0 %v6076
    %8053 = vmatpush.bf16.msra.mxu0 %v6075
    %8054 = vmatpush.bf16.msra.mxu0 %v6074
    %8055 = vmatpush.bf16.msra.mxu0 %v6073
    %8056 = vmatpush.bf16.msra.mxu0 %v6072
    %8057 = vmatpush.bf16.msra.mxu0 %v6071
    %8058 = vmatpush.bf16.msra.mxu0 %v6070
    %8059 = vmatmul.bf16.gmra.mxu0 %v1929
    %v8060 = vpop.f32.mrf.mxu0
    %v8061 = vadd.f32 %v8048, %v8060
    %v8062 = vpop.f32.mrf.mxu0
    %8063 = vdwg.mxu0
    %8064 = vmatpush.bf16.msra.mxu0 %v6085
    %8065 = vmatpush.bf16.msra.mxu0 %v6084
    %8066 = vmatpush.bf16.msra.mxu0 %v6083
    %8067 = vmatpush.bf16.msra.mxu0 %v6082
    %8068 = vmatpush.bf16.msra.mxu0 %v6081
    %8069 = vmatpush.bf16.msra.mxu0 %v6080
    %8070 = vmatpush.bf16.msra.mxu0 %v6079
    %8071 = vmatpush.bf16.msra.mxu0 %v6078
    %8072 = vmatmul.bf16.gmra.mxu0 %v1930
    %v8073 = vpop.f32.mrf.mxu0
    %v8074 = vadd.f32 %v8061, %v8073
    %v8075 = vpop.f32.mrf.mxu0
    %8076 = vdwg.mxu0
    %8077 = vmatpush.bf16.msra.mxu0 %v6093
    %8078 = vmatpush.bf16.msra.mxu0 %v6092
    %8079 = vmatpush.bf16.msra.mxu0 %v6091
    %8080 = vmatpush.bf16.msra.mxu0 %v6090
    %8081 = vmatpush.bf16.msra.mxu0 %v6089
    %8082 = vmatpush.bf16.msra.mxu0 %v6088
    %8083 = vmatpush.bf16.msra.mxu0 %v6087
    %8084 = vmatpush.bf16.msra.mxu0 %v6086
    %8085 = vmatmul.bf16.gmra.mxu0 %v1931
    %v8086 = vpop.f32.mrf.mxu0
    %v8087 = vadd.f32 %v8074, %v8086
    %v8088 = vpop.f32.mrf.mxu0
    %8089 = vdwg.mxu0
    %8090 = vmatpush.bf16.msra.mxu0 %v6101
    %8091 = vmatpush.bf16.msra.mxu0 %v6100
    %8092 = vmatpush.bf16.msra.mxu0 %v6099
    %8093 = vmatpush.bf16.msra.mxu0 %v6098
    %8094 = vmatpush.bf16.msra.mxu0 %v6097
    %8095 = vmatpush.bf16.msra.mxu0 %v6096
    %8096 = vmatpush.bf16.msra.mxu0 %v6095
    %8097 = vmatpush.bf16.msra.mxu0 %v6094
    %8098 = vmatmul.bf16.gmra.mxu0 %v1932
    %v8099 = vpop.f32.mrf.mxu0
    %v8100 = vadd.f32 %v8087, %v8099
    %v8101 = vpop.f32.mrf.mxu0
    %8102 = vdwg.mxu0
    %8103 = vmatpush.bf16.msra.mxu0 %v6109
    %8104 = vmatpush.bf16.msra.mxu0 %v6108
    %8105 = vmatpush.bf16.msra.mxu0 %v6107
    %8106 = vmatpush.bf16.msra.mxu0 %v6106
    %8107 = vmatpush.bf16.msra.mxu0 %v6105
    %8108 = vmatpush.bf16.msra.mxu0 %v6104
    %8109 = vmatpush.bf16.msra.mxu0 %v6103
    %8110 = vmatpush.bf16.msra.mxu0 %v6102
    %8111 = vmatmul.bf16.gmra.mxu0 %v1933
    %v8112 = vpop.f32.mrf.mxu0
    %v8113 = vadd.f32 %v8100, %v8112
    %v8114 = vpop.f32.mrf.mxu0
    %8115 = vdwg.mxu0
    %8116 = vmatpush.bf16.msra.mxu0 %v6117
    %8117 = vmatpush.bf16.msra.mxu0 %v6116
    %8118 = vmatpush.bf16.msra.mxu0 %v6115
    %8119 = vmatpush.bf16.msra.mxu0 %v6114
    %8120 = vmatpush.bf16.msra.mxu0 %v6113
    %8121 = vmatpush.bf16.msra.mxu0 %v6112
    %8122 = vmatpush.bf16.msra.mxu0 %v6111
    %8123 = vmatpush.bf16.msra.mxu0 %v6110
    %8124 = vmatmul.bf16.gmra.mxu0 %v1934
    %v8125 = vpop.f32.mrf.mxu0
    %v8126 = vadd.f32 %v8113, %v8125
    %v8127 = vpop.f32.mrf.mxu0
    %8128 = vdwg.mxu0
    %8129 = vmatpush.bf16.msra.mxu0 %v6125
    %8130 = vmatpush.bf16.msra.mxu0 %v6124
    %8131 = vmatpush.bf16.msra.mxu0 %v6123
    %8132 = vmatpush.bf16.msra.mxu0 %v6122
    %8133 = vmatpush.bf16.msra.mxu0 %v6121
    %8134 = vmatpush.bf16.msra.mxu0 %v6120
    %8135 = vmatpush.bf16.msra.mxu0 %v6119
    %8136 = vmatpush.bf16.msra.mxu0 %v6118
    %8137 = vmatmul.bf16.gmra.mxu0 %v1935
    %v8138 = vpop.f32.mrf.mxu0
    %v8139 = vadd.f32 %v8126, %v8138
    %v8140 = vpop.f32.mrf.mxu0
    %8141 = vdwg.mxu0
    %8142 = vmatpush.bf16.msra.mxu0 %v6133
    %8143 = vmatpush.bf16.msra.mxu0 %v6132
    %8144 = vmatpush.bf16.msra.mxu0 %v6131
    %8145 = vmatpush.bf16.msra.mxu0 %v6130
    %8146 = vmatpush.bf16.msra.mxu0 %v6129
    %8147 = vmatpush.bf16.msra.mxu0 %v6128
    %8148 = vmatpush.bf16.msra.mxu0 %v6127
    %8149 = vmatpush.bf16.msra.mxu0 %v6126
    %8150 = vmatmul.bf16.gmra.mxu0 %v1938
    %v8151 = vpop.f32.mrf.mxu0
    %v8152 = vadd.f32 %v8139, %v8151
    %v8153 = vpop.f32.mrf.mxu0
    %8154 = vdwg.mxu0
    %8155 = vmatpush.bf16.msra.mxu0 %v6141
    %8156 = vmatpush.bf16.msra.mxu0 %v6140
    %8157 = vmatpush.bf16.msra.mxu0 %v6139
    %8158 = vmatpush.bf16.msra.mxu0 %v6138
    %8159 = vmatpush.bf16.msra.mxu0 %v6137
    %8160 = vmatpush.bf16.msra.mxu0 %v6136
    %8161 = vmatpush.bf16.msra.mxu0 %v6135
    %8162 = vmatpush.bf16.msra.mxu0 %v6134
    %8163 = vmatmul.bf16.gmra.mxu0 %v1939
    %v8164 = vpop.f32.mrf.mxu0
    %v8165 = vadd.f32 %v8152, %v8164
    %v8166 = vpop.f32.mrf.mxu0
    %8167 = vdwg.mxu0
    %8168 = vmatpush.bf16.msra.mxu0 %v6149
    %8169 = vmatpush.bf16.msra.mxu0 %v6148
    %8170 = vmatpush.bf16.msra.mxu0 %v6147
    %8171 = vmatpush.bf16.msra.mxu0 %v6146
    %8172 = vmatpush.bf16.msra.mxu0 %v6145
    %8173 = vmatpush.bf16.msra.mxu0 %v6144
    %8174 = vmatpush.bf16.msra.mxu0 %v6143
    %8175 = vmatpush.bf16.msra.mxu0 %v6142
    %8176 = vmatmul.bf16.gmra.mxu0 %v1940
    %v8177 = vpop.f32.mrf.mxu0
    %v8178 = vadd.f32 %v8165, %v8177
    %v8179 = vpop.f32.mrf.mxu0
    %8180 = vdwg.mxu0
    %8181 = vmatpush.bf16.msra.mxu0 %v6157
    %8182 = vmatpush.bf16.msra.mxu0 %v6156
    %8183 = vmatpush.bf16.msra.mxu0 %v6155
    %8184 = vmatpush.bf16.msra.mxu0 %v6154
    %8185 = vmatpush.bf16.msra.mxu0 %v6153
    %8186 = vmatpush.bf16.msra.mxu0 %v6152
    %8187 = vmatpush.bf16.msra.mxu0 %v6151
    %8188 = vmatpush.bf16.msra.mxu0 %v6150
    %8189 = vmatmul.bf16.gmra.mxu0 %v1941
    %v8190 = vpop.f32.mrf.mxu0
    %v8191 = vadd.f32 %v8178, %v8190
    %v8192 = vpop.f32.mrf.mxu0
    %8193 = vdwg.mxu0
    %8194 = vmatpush.bf16.msra.mxu0 %v6165
    %8195 = vmatpush.bf16.msra.mxu0 %v6164
    %8196 = vmatpush.bf16.msra.mxu0 %v6163
    %8197 = vmatpush.bf16.msra.mxu0 %v6162
    %8198 = vmatpush.bf16.msra.mxu0 %v6161
    %8199 = vmatpush.bf16.msra.mxu0 %v6160
    %8200 = vmatpush.bf16.msra.mxu0 %v6159
    %8201 = vmatpush.bf16.msra.mxu0 %v6158
    %8202 = vmatmul.bf16.gmra.mxu0 %v1942
    %v8203 = vpop.f32.mrf.mxu0
    %v8204 = vadd.f32 %v8191, %v8203
    %v8205 = vpop.f32.mrf.mxu0
    %8206 = vdwg.mxu0
    %8207 = vmatpush.bf16.msra.mxu0 %v6173
    %8208 = vmatpush.bf16.msra.mxu0 %v6172
    %8209 = vmatpush.bf16.msra.mxu0 %v6171
    %8210 = vmatpush.bf16.msra.mxu0 %v6170
    %8211 = vmatpush.bf16.msra.mxu0 %v6169
    %8212 = vmatpush.bf16.msra.mxu0 %v6168
    %8213 = vmatpush.bf16.msra.mxu0 %v6167
    %8214 = vmatpush.bf16.msra.mxu0 %v6166
    %8215 = vmatmul.bf16.gmra.mxu0 %v1943
    %v8216 = vpop.f32.mrf.mxu0
    %v8217 = vadd.f32 %v8204, %v8216
    %v8218 = vpop.f32.mrf.mxu0
    %8219 = vdwg.mxu0
    %8220 = vmatpush.bf16.msra.mxu0 %v6181
    %8221 = vmatpush.bf16.msra.mxu0 %v6180
    %8222 = vmatpush.bf16.msra.mxu0 %v6179
    %8223 = vmatpush.bf16.msra.mxu0 %v6178
    %8224 = vmatpush.bf16.msra.mxu0 %v6177
    %8225 = vmatpush.bf16.msra.mxu0 %v6176
    %8226 = vmatpush.bf16.msra.mxu0 %v6175
    %8227 = vmatpush.bf16.msra.mxu0 %v6174
    %8228 = vmatmul.bf16.gmra.mxu0 %v1944
    %v8229 = vpop.f32.mrf.mxu0
    %v8230 = vadd.f32 %v8217, %v8229
    %v8231 = vpop.f32.mrf.mxu0
    %8232 = vdwg.mxu0
    %8233 = vmatpush.bf16.msra.mxu0 %v6189
    %8234 = vmatpush.bf16.msra.mxu0 %v6188
    %8235 = vmatpush.bf16.msra.mxu0 %v6187
    %8236 = vmatpush.bf16.msra.mxu0 %v6186
    %8237 = vmatpush.bf16.msra.mxu0 %v6185
    %8238 = vmatpush.bf16.msra.mxu0 %v6184
    %8239 = vmatpush.bf16.msra.mxu0 %v6183
    %8240 = vmatpush.bf16.msra.mxu0 %v6182
    %8241 = vmatmul.bf16.gmra.mxu0 %v1945
    %v8242 = vpop.f32.mrf.mxu0
    %v8243 = vadd.f32 %v8230, %v8242
    %v8244 = vpop.f32.mrf.mxu0
    %8245 = vdwg.mxu0
    %8246 = vmatpush.bf16.msra.mxu0 %v6197
    %8247 = vmatpush.bf16.msra.mxu0 %v6196
    %8248 = vmatpush.bf16.msra.mxu0 %v6195
    %8249 = vmatpush.bf16.msra.mxu0 %v6194
    %8250 = vmatpush.bf16.msra.mxu0 %v6193
    %8251 = vmatpush.bf16.msra.mxu0 %v6192
    %8252 = vmatpush.bf16.msra.mxu0 %v6191
    %8253 = vmatpush.bf16.msra.mxu0 %v6190
    %8254 = vmatmul.bf16.gmra.mxu0 %v1948
    %v8255 = vpop.f32.mrf.mxu0
    %v8256 = vadd.f32 %v8243, %v8255
    %v8257 = vpop.f32.mrf.mxu0
    %8258 = vdwg.mxu0
    %8259 = vmatpush.bf16.msra.mxu0 %v6205
    %8260 = vmatpush.bf16.msra.mxu0 %v6204
    %8261 = vmatpush.bf16.msra.mxu0 %v6203
    %8262 = vmatpush.bf16.msra.mxu0 %v6202
    %8263 = vmatpush.bf16.msra.mxu0 %v6201
    %8264 = vmatpush.bf16.msra.mxu0 %v6200
    %8265 = vmatpush.bf16.msra.mxu0 %v6199
    %8266 = vmatpush.bf16.msra.mxu0 %v6198
    %8267 = vmatmul.bf16.gmra.mxu0 %v1949
    %v8268 = vpop.f32.mrf.mxu0
    %v8269 = vadd.f32 %v8256, %v8268
    %v8270 = vpop.f32.mrf.mxu0
    %8271 = vdwg.mxu0
    %8272 = vmatpush.bf16.msra.mxu0 %v6213
    %8273 = vmatpush.bf16.msra.mxu0 %v6212
    %8274 = vmatpush.bf16.msra.mxu0 %v6211
    %8275 = vmatpush.bf16.msra.mxu0 %v6210
    %8276 = vmatpush.bf16.msra.mxu0 %v6209
    %8277 = vmatpush.bf16.msra.mxu0 %v6208
    %8278 = vmatpush.bf16.msra.mxu0 %v6207
    %8279 = vmatpush.bf16.msra.mxu0 %v6206
    %8280 = vmatmul.bf16.gmra.mxu0 %v1950
    %v8281 = vpop.f32.mrf.mxu0
    %v8282 = vadd.f32 %v8269, %v8281
    %v8283 = vpop.f32.mrf.mxu0
    %8284 = vdwg.mxu0
    %8285 = vmatpush.bf16.msra.mxu0 %v6221
    %8286 = vmatpush.bf16.msra.mxu0 %v6220
    %8287 = vmatpush.bf16.msra.mxu0 %v6219
    %8288 = vmatpush.bf16.msra.mxu0 %v6218
    %8289 = vmatpush.bf16.msra.mxu0 %v6217
    %8290 = vmatpush.bf16.msra.mxu0 %v6216
    %8291 = vmatpush.bf16.msra.mxu0 %v6215
    %8292 = vmatpush.bf16.msra.mxu0 %v6214
    %8293 = vmatmul.bf16.gmra.mxu0 %v1951
    %v8294 = vpop.f32.mrf.mxu0
    %v8295 = vadd.f32 %v8282, %v8294
    %v8296 = vpop.f32.mrf.mxu0
    %8297 = vdwg.mxu0
    %8298 = vmatpush.bf16.msra.mxu0 %v6229
    %8299 = vmatpush.bf16.msra.mxu0 %v6228
    %8300 = vmatpush.bf16.msra.mxu0 %v6227
    %8301 = vmatpush.bf16.msra.mxu0 %v6226
    %8302 = vmatpush.bf16.msra.mxu0 %v6225
    %8303 = vmatpush.bf16.msra.mxu0 %v6224
    %8304 = vmatpush.bf16.msra.mxu0 %v6223
    %8305 = vmatpush.bf16.msra.mxu0 %v6222
    %8306 = vmatmul.bf16.gmra.mxu0 %v1952
    %v8307 = vpop.f32.mrf.mxu0
    %v8308 = vadd.f32 %v8295, %v8307
    %v8309 = vpop.f32.mrf.mxu0
    %8310 = vdwg.mxu0
    %8311 = vmatpush.bf16.msra.mxu0 %v6237
    %8312 = vmatpush.bf16.msra.mxu0 %v6236
    %8313 = vmatpush.bf16.msra.mxu0 %v6235
    %8314 = vmatpush.bf16.msra.mxu0 %v6234
    %8315 = vmatpush.bf16.msra.mxu0 %v6233
    %8316 = vmatpush.bf16.msra.mxu0 %v6232
    %8317 = vmatpush.bf16.msra.mxu0 %v6231
    %8318 = vmatpush.bf16.msra.mxu0 %v6230
    %8319 = vmatmul.bf16.gmra.mxu0 %v1953
    %v8320 = vpop.f32.mrf.mxu0
    %v8321 = vadd.f32 %v8308, %v8320
    %v8322 = vpop.f32.mrf.mxu0
    %8323 = vdwg.mxu0
    %8324 = vmatpush.bf16.msra.mxu0 %v6245
    %8325 = vmatpush.bf16.msra.mxu0 %v6244
    %8326 = vmatpush.bf16.msra.mxu0 %v6243
    %8327 = vmatpush.bf16.msra.mxu0 %v6242
    %8328 = vmatpush.bf16.msra.mxu0 %v6241
    %8329 = vmatpush.bf16.msra.mxu0 %v6240
    %8330 = vmatpush.bf16.msra.mxu0 %v6239
    %8331 = vmatpush.bf16.msra.mxu0 %v6238
    %8332 = vmatmul.bf16.gmra.mxu0 %v1954
    %v8333 = vpop.f32.mrf.mxu0
    %v8334 = vadd.f32 %v8321, %v8333
    %v8335 = vpop.f32.mrf.mxu0
    %8336 = vdwg.mxu0
    %8337 = vmatpush.bf16.msra.mxu0 %v6253
    %8338 = vmatpush.bf16.msra.mxu0 %v6252
    %8339 = vmatpush.bf16.msra.mxu0 %v6251
    %8340 = vmatpush.bf16.msra.mxu0 %v6250
    %8341 = vmatpush.bf16.msra.mxu0 %v6249
    %8342 = vmatpush.bf16.msra.mxu0 %v6248
    %8343 = vmatpush.bf16.msra.mxu0 %v6247
    %8344 = vmatpush.bf16.msra.mxu0 %v6246
    %8345 = vmatmul.bf16.gmra.mxu0 %v1955
    %v8346 = vpop.f32.mrf.mxu0
    %v8347 = vadd.f32 %v8334, %v8346
    %v8348 = vpop.f32.mrf.mxu0
    %8349 = vdwg.mxu0
    %8350 = vmatpush.bf16.msra.mxu0 %v6261
    %8351 = vmatpush.bf16.msra.mxu0 %v6260
    %8352 = vmatpush.bf16.msra.mxu0 %v6259
    %8353 = vmatpush.bf16.msra.mxu0 %v6258
    %8354 = vmatpush.bf16.msra.mxu0 %v6257
    %8355 = vmatpush.bf16.msra.mxu0 %v6256
    %8356 = vmatpush.bf16.msra.mxu0 %v6255
    %8357 = vmatpush.bf16.msra.mxu0 %v6254
    %8358 = vmatmul.bf16.gmra.mxu0 %v1958
    %v8359 = vpop.f32.mrf.mxu0
    %v8360 = vadd.f32 %v8347, %v8359
    %v8361 = vpop.f32.mrf.mxu0
    %8362 = vdwg.mxu0
    %8363 = vmatpush.bf16.msra.mxu0 %v6269
    %8364 = vmatpush.bf16.msra.mxu0 %v6268
    %8365 = vmatpush.bf16.msra.mxu0 %v6267
    %8366 = vmatpush.bf16.msra.mxu0 %v6266
    %8367 = vmatpush.bf16.msra.mxu0 %v6265
    %8368 = vmatpush.bf16.msra.mxu0 %v6264
    %8369 = vmatpush.bf16.msra.mxu0 %v6263
    %8370 = vmatpush.bf16.msra.mxu0 %v6262
    %8371 = vmatmul.bf16.gmra.mxu0 %v1959
    %v8372 = vpop.f32.mrf.mxu0
    %v8373 = vadd.f32 %v8360, %v8372
    %v8374 = vpop.f32.mrf.mxu0
    %8375 = vdwg.mxu0
    %8376 = vmatpush.bf16.msra.mxu0 %v6277
    %8377 = vmatpush.bf16.msra.mxu0 %v6276
    %8378 = vmatpush.bf16.msra.mxu0 %v6275
    %8379 = vmatpush.bf16.msra.mxu0 %v6274
    %8380 = vmatpush.bf16.msra.mxu0 %v6273
    %8381 = vmatpush.bf16.msra.mxu0 %v6272
    %8382 = vmatpush.bf16.msra.mxu0 %v6271
    %8383 = vmatpush.bf16.msra.mxu0 %v6270
    %8384 = vmatmul.bf16.gmra.mxu0 %v1960
    %v8385 = vpop.f32.mrf.mxu0
    %v8386 = vadd.f32 %v8373, %v8385
    %v8387 = vpop.f32.mrf.mxu0
    %8388 = vdwg.mxu0
    %8389 = vmatpush.bf16.msra.mxu0 %v6285
    %8390 = vmatpush.bf16.msra.mxu0 %v6284
    %8391 = vmatpush.bf16.msra.mxu0 %v6283
    %8392 = vmatpush.bf16.msra.mxu0 %v6282
    %8393 = vmatpush.bf16.msra.mxu0 %v6281
    %8394 = vmatpush.bf16.msra.mxu0 %v6280
    %8395 = vmatpush.bf16.msra.mxu0 %v6279
    %8396 = vmatpush.bf16.msra.mxu0 %v6278
    %8397 = vmatmul.bf16.gmra.mxu0 %v1961
    %v8398 = vpop.f32.mrf.mxu0
    %v8399 = vadd.f32 %v8386, %v8398
    %v8400 = vpop.f32.mrf.mxu0
    %8401 = vdwg.mxu0
    %8402 = vmatpush.bf16.msra.mxu0 %v6293
    %8403 = vmatpush.bf16.msra.mxu0 %v6292
    %8404 = vmatpush.bf16.msra.mxu0 %v6291
    %8405 = vmatpush.bf16.msra.mxu0 %v6290
    %8406 = vmatpush.bf16.msra.mxu0 %v6289
    %8407 = vmatpush.bf16.msra.mxu0 %v6288
    %8408 = vmatpush.bf16.msra.mxu0 %v6287
    %8409 = vmatpush.bf16.msra.mxu0 %v6286
    %8410 = vmatmul.bf16.gmra.mxu0 %v1962
    %v8411 = vpop.f32.mrf.mxu0
    %v8412 = vadd.f32 %v8399, %v8411
    %v8413 = vpop.f32.mrf.mxu0
    %8414 = vdwg.mxu0
    %8415 = vmatpush.bf16.msra.mxu0 %v6301
    %8416 = vmatpush.bf16.msra.mxu0 %v6300
    %8417 = vmatpush.bf16.msra.mxu0 %v6299
    %8418 = vmatpush.bf16.msra.mxu0 %v6298
    %8419 = vmatpush.bf16.msra.mxu0 %v6297
    %8420 = vmatpush.bf16.msra.mxu0 %v6296
    %8421 = vmatpush.bf16.msra.mxu0 %v6295
    %8422 = vmatpush.bf16.msra.mxu0 %v6294
    %8423 = vmatmul.bf16.gmra.mxu0 %v1963
    %v8424 = vpop.f32.mrf.mxu0
    %v8425 = vadd.f32 %v8412, %v8424
    %v8426 = vpop.f32.mrf.mxu0
    %8427 = vdwg.mxu0
    %8428 = vmatpush.bf16.msra.mxu0 %v6309
    %8429 = vmatpush.bf16.msra.mxu0 %v6308
    %8430 = vmatpush.bf16.msra.mxu0 %v6307
    %8431 = vmatpush.bf16.msra.mxu0 %v6306
    %8432 = vmatpush.bf16.msra.mxu0 %v6305
    %8433 = vmatpush.bf16.msra.mxu0 %v6304
    %8434 = vmatpush.bf16.msra.mxu0 %v6303
    %8435 = vmatpush.bf16.msra.mxu0 %v6302
    %8436 = vmatmul.bf16.gmra.mxu0 %v1964
    %v8437 = vpop.f32.mrf.mxu0
    %v8438 = vadd.f32 %v8425, %v8437
    %v8439 = vpop.f32.mrf.mxu0
    %8440 = vdwg.mxu0
    %8441 = vmatpush.bf16.msra.mxu0 %v6317
    %8442 = vmatpush.bf16.msra.mxu0 %v6316
    %8443 = vmatpush.bf16.msra.mxu0 %v6315
    %8444 = vmatpush.bf16.msra.mxu0 %v6314
    %8445 = vmatpush.bf16.msra.mxu0 %v6313
    %8446 = vmatpush.bf16.msra.mxu0 %v6312
    %8447 = vmatpush.bf16.msra.mxu0 %v6311
    %8448 = vmatpush.bf16.msra.mxu0 %v6310
    %8449 = vmatmul.bf16.gmra.mxu0 %v1965
    %v8450 = vpop.f32.mrf.mxu0
    %v8451 = vadd.f32 %v8438, %v8450
    %v8452 = vpop.f32.mrf.mxu0
    %8453 = vdwg.mxu0
    %8454 = vmatpush.bf16.msra.mxu0 %v6325
    %8455 = vmatpush.bf16.msra.mxu0 %v6324
    %8456 = vmatpush.bf16.msra.mxu0 %v6323
    %8457 = vmatpush.bf16.msra.mxu0 %v6322
    %8458 = vmatpush.bf16.msra.mxu0 %v6321
    %8459 = vmatpush.bf16.msra.mxu0 %v6320
    %8460 = vmatpush.bf16.msra.mxu0 %v6319
    %8461 = vmatpush.bf16.msra.mxu0 %v6318
    %8462 = vmatmul.bf16.gmra.mxu0 %v1968
    %v8463 = vpop.f32.mrf.mxu0
    %v8464 = vadd.f32 %v8451, %v8463
    %v8465 = vpop.f32.mrf.mxu0
    %8466 = vdwg.mxu0
    %8467 = vmatpush.bf16.msra.mxu0 %v6333
    %8468 = vmatpush.bf16.msra.mxu0 %v6332
    %8469 = vmatpush.bf16.msra.mxu0 %v6331
    %8470 = vmatpush.bf16.msra.mxu0 %v6330
    %8471 = vmatpush.bf16.msra.mxu0 %v6329
    %8472 = vmatpush.bf16.msra.mxu0 %v6328
    %8473 = vmatpush.bf16.msra.mxu0 %v6327
    %8474 = vmatpush.bf16.msra.mxu0 %v6326
    %8475 = vmatmul.bf16.gmra.mxu0 %v1969
    %v8476 = vpop.f32.mrf.mxu0
    %v8477 = vadd.f32 %v8464, %v8476
    %v8478 = vpop.f32.mrf.mxu0
    %8479 = vdwg.mxu0
    %8480 = vmatpush.bf16.msra.mxu0 %v6341
    %8481 = vmatpush.bf16.msra.mxu0 %v6340
    %8482 = vmatpush.bf16.msra.mxu0 %v6339
    %8483 = vmatpush.bf16.msra.mxu0 %v6338
    %8484 = vmatpush.bf16.msra.mxu0 %v6337
    %8485 = vmatpush.bf16.msra.mxu0 %v6336
    %8486 = vmatpush.bf16.msra.mxu0 %v6335
    %8487 = vmatpush.bf16.msra.mxu0 %v6334
    %8488 = vmatmul.bf16.gmra.mxu0 %v1970
    %v8489 = vpop.f32.mrf.mxu0
    %v8490 = vadd.f32 %v8477, %v8489
    %v8491 = vpop.f32.mrf.mxu0
    %8492 = vdwg.mxu0
    %8493 = vmatpush.bf16.msra.mxu0 %v6349
    %8494 = vmatpush.bf16.msra.mxu0 %v6348
    %8495 = vmatpush.bf16.msra.mxu0 %v6347
    %8496 = vmatpush.bf16.msra.mxu0 %v6346
    %8497 = vmatpush.bf16.msra.mxu0 %v6345
    %8498 = vmatpush.bf16.msra.mxu0 %v6344
    %8499 = vmatpush.bf16.msra.mxu0 %v6343
    %8500 = vmatpush.bf16.msra.mxu0 %v6342
    %8501 = vmatmul.bf16.gmra.mxu0 %v1971
    %v8502 = vpop.f32.mrf.mxu0
    %v8503 = vadd.f32 %v8490, %v8502
    %v8504 = vpop.f32.mrf.mxu0
    %8505 = vdwg.mxu0
    %8506 = vmatpush.bf16.msra.mxu0 %v6357
    %8507 = vmatpush.bf16.msra.mxu0 %v6356
    %8508 = vmatpush.bf16.msra.mxu0 %v6355
    %8509 = vmatpush.bf16.msra.mxu0 %v6354
    %8510 = vmatpush.bf16.msra.mxu0 %v6353
    %8511 = vmatpush.bf16.msra.mxu0 %v6352
    %8512 = vmatpush.bf16.msra.mxu0 %v6351
    %8513 = vmatpush.bf16.msra.mxu0 %v6350
    %8514 = vmatmul.bf16.gmra.mxu0 %v1972
    %v8515 = vpop.f32.mrf.mxu0
    %v8516 = vadd.f32 %v8503, %v8515
    %v8517 = vpop.f32.mrf.mxu0
    %8518 = vdwg.mxu0
    %8519 = vmatpush.bf16.msra.mxu0 %v6365
    %8520 = vmatpush.bf16.msra.mxu0 %v6364
    %8521 = vmatpush.bf16.msra.mxu0 %v6363
    %8522 = vmatpush.bf16.msra.mxu0 %v6362
    %8523 = vmatpush.bf16.msra.mxu0 %v6361
    %8524 = vmatpush.bf16.msra.mxu0 %v6360
    %8525 = vmatpush.bf16.msra.mxu0 %v6359
    %8526 = vmatpush.bf16.msra.mxu0 %v6358
    %8527 = vmatmul.bf16.gmra.mxu0 %v1973
    %v8528 = vpop.f32.mrf.mxu0
    %v8529 = vadd.f32 %v8516, %v8528
    %v8530 = vpop.f32.mrf.mxu0
    %8531 = vdwg.mxu0
    %8532 = vmatpush.bf16.msra.mxu0 %v6373
    %8533 = vmatpush.bf16.msra.mxu0 %v6372
    %8534 = vmatpush.bf16.msra.mxu0 %v6371
    %8535 = vmatpush.bf16.msra.mxu0 %v6370
    %8536 = vmatpush.bf16.msra.mxu0 %v6369
    %8537 = vmatpush.bf16.msra.mxu0 %v6368
    %8538 = vmatpush.bf16.msra.mxu0 %v6367
    %8539 = vmatpush.bf16.msra.mxu0 %v6366
    %8540 = vmatmul.bf16.gmra.mxu0 %v1974
    %v8541 = vpop.f32.mrf.mxu0
    %v8542 = vadd.f32 %v8529, %v8541
    %v8543 = vpop.f32.mrf.mxu0
    %8544 = vdwg.mxu0
    %8545 = vmatpush.bf16.msra.mxu0 %v6381
    %8546 = vmatpush.bf16.msra.mxu0 %v6380
    %8547 = vmatpush.bf16.msra.mxu0 %v6379
    %8548 = vmatpush.bf16.msra.mxu0 %v6378
    %8549 = vmatpush.bf16.msra.mxu0 %v6377
    %8550 = vmatpush.bf16.msra.mxu0 %v6376
    %8551 = vmatpush.bf16.msra.mxu0 %v6375
    %8552 = vmatpush.bf16.msra.mxu0 %v6374
    %8553 = vmatmul.bf16.gmra.mxu0 %v1975
    %v8554 = vpop.f32.mrf.mxu0
    %v8555 = vadd.f32 %v8542, %v8554
    %v8556 = vpop.f32.mrf.mxu0
    %8557 = vdwg.mxu0
    %8558 = vmatpush.bf16.msra.mxu0 %v6389
    %8559 = vmatpush.bf16.msra.mxu0 %v6388
    %8560 = vmatpush.bf16.msra.mxu0 %v6387
    %8561 = vmatpush.bf16.msra.mxu0 %v6386
    %8562 = vmatpush.bf16.msra.mxu0 %v6385
    %8563 = vmatpush.bf16.msra.mxu0 %v6384
    %8564 = vmatpush.bf16.msra.mxu0 %v6383
    %8565 = vmatpush.bf16.msra.mxu0 %v6382
    %8566 = vmatmul.bf16.gmra.mxu0 %v1978
    %v8567 = vpop.f32.mrf.mxu0
    %v8568 = vadd.f32 %v8555, %v8567
    %v8569 = vpop.f32.mrf.mxu0
    %8570 = vdwg.mxu0
    %8571 = vmatpush.bf16.msra.mxu0 %v6397
    %8572 = vmatpush.bf16.msra.mxu0 %v6396
    %8573 = vmatpush.bf16.msra.mxu0 %v6395
    %8574 = vmatpush.bf16.msra.mxu0 %v6394
    %8575 = vmatpush.bf16.msra.mxu0 %v6393
    %8576 = vmatpush.bf16.msra.mxu0 %v6392
    %8577 = vmatpush.bf16.msra.mxu0 %v6391
    %8578 = vmatpush.bf16.msra.mxu0 %v6390
    %8579 = vmatmul.bf16.gmra.mxu0 %v1979
    %v8580 = vpop.f32.mrf.mxu0
    %v8581 = vadd.f32 %v8568, %v8580
    %v8582 = vpop.f32.mrf.mxu0
    %8583 = vdwg.mxu0
    %8584 = vmatpush.bf16.msra.mxu0 %v6405
    %8585 = vmatpush.bf16.msra.mxu0 %v6404
    %8586 = vmatpush.bf16.msra.mxu0 %v6403
    %8587 = vmatpush.bf16.msra.mxu0 %v6402
    %8588 = vmatpush.bf16.msra.mxu0 %v6401
    %8589 = vmatpush.bf16.msra.mxu0 %v6400
    %8590 = vmatpush.bf16.msra.mxu0 %v6399
    %8591 = vmatpush.bf16.msra.mxu0 %v6398
    %8592 = vmatmul.bf16.gmra.mxu0 %v1980
    %v8593 = vpop.f32.mrf.mxu0
    %v8594 = vadd.f32 %v8581, %v8593
    %v8595 = vpop.f32.mrf.mxu0
    %8596 = vdwg.mxu0
    %8597 = vmatpush.bf16.msra.mxu0 %v6413
    %8598 = vmatpush.bf16.msra.mxu0 %v6412
    %8599 = vmatpush.bf16.msra.mxu0 %v6411
    %8600 = vmatpush.bf16.msra.mxu0 %v6410
    %8601 = vmatpush.bf16.msra.mxu0 %v6409
    %8602 = vmatpush.bf16.msra.mxu0 %v6408
    %8603 = vmatpush.bf16.msra.mxu0 %v6407
    %8604 = vmatpush.bf16.msra.mxu0 %v6406
    %8605 = vmatmul.bf16.gmra.mxu0 %v1981
    %v8606 = vpop.f32.mrf.mxu0
    %v8607 = vadd.f32 %v8594, %v8606
    %v8608 = vpop.f32.mrf.mxu0
    %8609 = vdwg.mxu0
    %8610 = vmatpush.bf16.msra.mxu0 %v6421
    %8611 = vmatpush.bf16.msra.mxu0 %v6420
    %8612 = vmatpush.bf16.msra.mxu0 %v6419
    %8613 = vmatpush.bf16.msra.mxu0 %v6418
    %8614 = vmatpush.bf16.msra.mxu0 %v6417
    %8615 = vmatpush.bf16.msra.mxu0 %v6416
    %8616 = vmatpush.bf16.msra.mxu0 %v6415
    %8617 = vmatpush.bf16.msra.mxu0 %v6414
    %8618 = vmatmul.bf16.gmra.mxu0 %v1982
    %v8619 = vpop.f32.mrf.mxu0
    %v8620 = vadd.f32 %v8607, %v8619
    %v8621 = vpop.f32.mrf.mxu0
    %8622 = vdwg.mxu0
    %8623 = vmatpush.bf16.msra.mxu0 %v6429
    %8624 = vmatpush.bf16.msra.mxu0 %v6428
    %8625 = vmatpush.bf16.msra.mxu0 %v6427
    %8626 = vmatpush.bf16.msra.mxu0 %v6426
    %8627 = vmatpush.bf16.msra.mxu0 %v6425
    %8628 = vmatpush.bf16.msra.mxu0 %v6424
    %8629 = vmatpush.bf16.msra.mxu0 %v6423
    %8630 = vmatpush.bf16.msra.mxu0 %v6422
    %8631 = vmatmul.bf16.gmra.mxu0 %v1983
    %v8632 = vpop.f32.mrf.mxu0
    %v8633 = vadd.f32 %v8620, %v8632
    %v8634 = vpop.f32.mrf.mxu0
    %8635 = vdwg.mxu0
    %8636 = vmatpush.bf16.msra.mxu0 %v6437
    %8637 = vmatpush.bf16.msra.mxu0 %v6436
    %8638 = vmatpush.bf16.msra.mxu0 %v6435
    %8639 = vmatpush.bf16.msra.mxu0 %v6434
    %8640 = vmatpush.bf16.msra.mxu0 %v6433
    %8641 = vmatpush.bf16.msra.mxu0 %v6432
    %8642 = vmatpush.bf16.msra.mxu0 %v6431
    %8643 = vmatpush.bf16.msra.mxu0 %v6430
    %8644 = vmatmul.bf16.gmra.mxu0 %v1984
    %v8645 = vpop.f32.mrf.mxu0
    %v8646 = vadd.f32 %v8633, %v8645
    %v8647 = vpop.f32.mrf.mxu0
    %8648 = vdwg.mxu0
    %8649 = vmatpush.bf16.msra.mxu0 %v6445
    %8650 = vmatpush.bf16.msra.mxu0 %v6444
    %8651 = vmatpush.bf16.msra.mxu0 %v6443
    %8652 = vmatpush.bf16.msra.mxu0 %v6442
    %8653 = vmatpush.bf16.msra.mxu0 %v6441
    %8654 = vmatpush.bf16.msra.mxu0 %v6440
    %8655 = vmatpush.bf16.msra.mxu0 %v6439
    %8656 = vmatpush.bf16.msra.mxu0 %v6438
    %8657 = vmatmul.bf16.gmra.mxu0 %v1985
    %v8658 = vpop.f32.mrf.mxu0
    %v8659 = vadd.f32 %v8646, %v8658
    %v8660 = vpop.f32.mrf.mxu0
    %8661 = vdwg.mxu0
    %8662 = vmatpush.bf16.msra.mxu0 %v6453
    %8663 = vmatpush.bf16.msra.mxu0 %v6452
    %8664 = vmatpush.bf16.msra.mxu0 %v6451
    %8665 = vmatpush.bf16.msra.mxu0 %v6450
    %8666 = vmatpush.bf16.msra.mxu0 %v6449
    %8667 = vmatpush.bf16.msra.mxu0 %v6448
    %8668 = vmatpush.bf16.msra.mxu0 %v6447
    %8669 = vmatpush.bf16.msra.mxu0 %v6446
    %8670 = vmatmul.bf16.gmra.mxu0 %v1988
    %v8671 = vpop.f32.mrf.mxu0
    %v8672 = vadd.f32 %v8659, %v8671
    %v8673 = vpop.f32.mrf.mxu0
    %8674 = vdwg.mxu0
    %8675 = vmatpush.bf16.msra.mxu0 %v6461
    %8676 = vmatpush.bf16.msra.mxu0 %v6460
    %8677 = vmatpush.bf16.msra.mxu0 %v6459
    %8678 = vmatpush.bf16.msra.mxu0 %v6458
    %8679 = vmatpush.bf16.msra.mxu0 %v6457
    %8680 = vmatpush.bf16.msra.mxu0 %v6456
    %8681 = vmatpush.bf16.msra.mxu0 %v6455
    %8682 = vmatpush.bf16.msra.mxu0 %v6454
    %8683 = vmatmul.bf16.gmra.mxu0 %v1989
    %v8684 = vpop.f32.mrf.mxu0
    %v8685 = vadd.f32 %v8672, %v8684
    %v8686 = vpop.f32.mrf.mxu0
    %8687 = vdwg.mxu0
    %8688 = vmatpush.bf16.msra.mxu0 %v6469
    %8689 = vmatpush.bf16.msra.mxu0 %v6468
    %8690 = vmatpush.bf16.msra.mxu0 %v6467
    %8691 = vmatpush.bf16.msra.mxu0 %v6466
    %8692 = vmatpush.bf16.msra.mxu0 %v6465
    %8693 = vmatpush.bf16.msra.mxu0 %v6464
    %8694 = vmatpush.bf16.msra.mxu0 %v6463
    %8695 = vmatpush.bf16.msra.mxu0 %v6462
    %8696 = vmatmul.bf16.gmra.mxu0 %v1990
    %v8697 = vpop.f32.mrf.mxu0
    %v8698 = vadd.f32 %v8685, %v8697
    %v8699 = vpop.f32.mrf.mxu0
    %8700 = vdwg.mxu0
    %8701 = vmatpush.bf16.msra.mxu0 %v6477
    %8702 = vmatpush.bf16.msra.mxu0 %v6476
    %8703 = vmatpush.bf16.msra.mxu0 %v6475
    %8704 = vmatpush.bf16.msra.mxu0 %v6474
    %8705 = vmatpush.bf16.msra.mxu0 %v6473
    %8706 = vmatpush.bf16.msra.mxu0 %v6472
    %8707 = vmatpush.bf16.msra.mxu0 %v6471
    %8708 = vmatpush.bf16.msra.mxu0 %v6470
    %8709 = vmatmul.bf16.gmra.mxu0 %v1991
    %v8710 = vpop.f32.mrf.mxu0
    %v8711 = vadd.f32 %v8698, %v8710
    %v8712 = vpop.f32.mrf.mxu0
    %8713 = vdwg.mxu0
    %8714 = vmatpush.bf16.msra.mxu0 %v6485
    %8715 = vmatpush.bf16.msra.mxu0 %v6484
    %8716 = vmatpush.bf16.msra.mxu0 %v6483
    %8717 = vmatpush.bf16.msra.mxu0 %v6482
    %8718 = vmatpush.bf16.msra.mxu0 %v6481
    %8719 = vmatpush.bf16.msra.mxu0 %v6480
    %8720 = vmatpush.bf16.msra.mxu0 %v6479
    %8721 = vmatpush.bf16.msra.mxu0 %v6478
    %8722 = vmatmul.bf16.gmra.mxu0 %v1992
    %v8723 = vpop.f32.mrf.mxu0
    %v8724 = vadd.f32 %v8711, %v8723
    %v8725 = vpop.f32.mrf.mxu0
    %8726 = vdwg.mxu0
    %8727 = vmatpush.bf16.msra.mxu0 %v6493
    %8728 = vmatpush.bf16.msra.mxu0 %v6492
    %8729 = vmatpush.bf16.msra.mxu0 %v6491
    %8730 = vmatpush.bf16.msra.mxu0 %v6490
    %8731 = vmatpush.bf16.msra.mxu0 %v6489
    %8732 = vmatpush.bf16.msra.mxu0 %v6488
    %8733 = vmatpush.bf16.msra.mxu0 %v6487
    %8734 = vmatpush.bf16.msra.mxu0 %v6486
    %8735 = vmatmul.bf16.gmra.mxu0 %v1993
    %v8736 = vpop.f32.mrf.mxu0
    %v8737 = vadd.f32 %v8724, %v8736
    %v8738 = vpop.f32.mrf.mxu0
    %8739 = vdwg.mxu0
    %8740 = vmatpush.bf16.msra.mxu0 %v6501
    %8741 = vmatpush.bf16.msra.mxu0 %v6500
    %8742 = vmatpush.bf16.msra.mxu0 %v6499
    %8743 = vmatpush.bf16.msra.mxu0 %v6498
    %8744 = vmatpush.bf16.msra.mxu0 %v6497
    %8745 = vmatpush.bf16.msra.mxu0 %v6496
    %8746 = vmatpush.bf16.msra.mxu0 %v6495
    %8747 = vmatpush.bf16.msra.mxu0 %v6494
    %8748 = vmatmul.bf16.gmra.mxu0 %v1994
    %v8749 = vpop.f32.mrf.mxu0
    %v8750 = vadd.f32 %v8737, %v8749
    %v8751 = vpop.f32.mrf.mxu0
    %8752 = vdwg.mxu0
    %8753 = vmatpush.bf16.msra.mxu0 %v6509
    %8754 = vmatpush.bf16.msra.mxu0 %v6508
    %8755 = vmatpush.bf16.msra.mxu0 %v6507
    %8756 = vmatpush.bf16.msra.mxu0 %v6506
    %8757 = vmatpush.bf16.msra.mxu0 %v6505
    %8758 = vmatpush.bf16.msra.mxu0 %v6504
    %8759 = vmatpush.bf16.msra.mxu0 %v6503
    %8760 = vmatpush.bf16.msra.mxu0 %v6502
    %8761 = vmatmul.bf16.gmra.mxu0 %v1995
    %v8762 = vpop.f32.mrf.mxu0
    %v8763 = vadd.f32 %v8750, %v8762
    %v8764 = vpop.f32.mrf.mxu0
    %8765 = vdwg.mxu0
    %8766 = vmatpush.bf16.msra.mxu0 %v6517
    %8767 = vmatpush.bf16.msra.mxu0 %v6516
    %8768 = vmatpush.bf16.msra.mxu0 %v6515
    %8769 = vmatpush.bf16.msra.mxu0 %v6514
    %8770 = vmatpush.bf16.msra.mxu0 %v6513
    %8771 = vmatpush.bf16.msra.mxu0 %v6512
    %8772 = vmatpush.bf16.msra.mxu0 %v6511
    %8773 = vmatpush.bf16.msra.mxu0 %v6510
    %8774 = vmatmul.bf16.gmra.mxu0 %v1998
    %v8775 = vpop.f32.mrf.mxu0
    %v8776 = vadd.f32 %v8763, %v8775
    %v8777 = vpop.f32.mrf.mxu0
    %8778 = vdwg.mxu0
    %8779 = vmatpush.bf16.msra.mxu0 %v6525
    %8780 = vmatpush.bf16.msra.mxu0 %v6524
    %8781 = vmatpush.bf16.msra.mxu0 %v6523
    %8782 = vmatpush.bf16.msra.mxu0 %v6522
    %8783 = vmatpush.bf16.msra.mxu0 %v6521
    %8784 = vmatpush.bf16.msra.mxu0 %v6520
    %8785 = vmatpush.bf16.msra.mxu0 %v6519
    %8786 = vmatpush.bf16.msra.mxu0 %v6518
    %8787 = vmatmul.bf16.gmra.mxu0 %v1999
    %v8788 = vpop.f32.mrf.mxu0
    %v8789 = vadd.f32 %v8776, %v8788
    %v8790 = vpop.f32.mrf.mxu0
    %8791 = vdwg.mxu0
    %8792 = vmatpush.bf16.msra.mxu0 %v6533
    %8793 = vmatpush.bf16.msra.mxu0 %v6532
    %8794 = vmatpush.bf16.msra.mxu0 %v6531
    %8795 = vmatpush.bf16.msra.mxu0 %v6530
    %8796 = vmatpush.bf16.msra.mxu0 %v6529
    %8797 = vmatpush.bf16.msra.mxu0 %v6528
    %8798 = vmatpush.bf16.msra.mxu0 %v6527
    %8799 = vmatpush.bf16.msra.mxu0 %v6526
    %8800 = vmatmul.bf16.gmra.mxu0 %v2000
    %v8801 = vpop.f32.mrf.mxu0
    %v8802 = vadd.f32 %v8789, %v8801
    %v8803 = vpop.f32.mrf.mxu0
    %8804 = vdwg.mxu0
    %8805 = vmatpush.bf16.msra.mxu0 %v6541
    %8806 = vmatpush.bf16.msra.mxu0 %v6540
    %8807 = vmatpush.bf16.msra.mxu0 %v6539
    %8808 = vmatpush.bf16.msra.mxu0 %v6538
    %8809 = vmatpush.bf16.msra.mxu0 %v6537
    %8810 = vmatpush.bf16.msra.mxu0 %v6536
    %8811 = vmatpush.bf16.msra.mxu0 %v6535
    %8812 = vmatpush.bf16.msra.mxu0 %v6534
    %8813 = vmatmul.bf16.gmra.mxu0 %v2001
    %v8814 = vpop.f32.mrf.mxu0
    %v8815 = vadd.f32 %v8802, %v8814
    %v8816 = vpop.f32.mrf.mxu0
    %8817 = vdwg.mxu0
    %8818 = vmatpush.bf16.msra.mxu0 %v6549
    %8819 = vmatpush.bf16.msra.mxu0 %v6548
    %8820 = vmatpush.bf16.msra.mxu0 %v6547
    %8821 = vmatpush.bf16.msra.mxu0 %v6546
    %8822 = vmatpush.bf16.msra.mxu0 %v6545
    %8823 = vmatpush.bf16.msra.mxu0 %v6544
    %8824 = vmatpush.bf16.msra.mxu0 %v6543
    %8825 = vmatpush.bf16.msra.mxu0 %v6542
    %8826 = vmatmul.bf16.gmra.mxu0 %v2002
    %v8827 = vpop.f32.mrf.mxu0
    %v8828 = vadd.f32 %v8815, %v8827
    %v8829 = vpop.f32.mrf.mxu0
    %8830 = vdwg.mxu0
    %8831 = vmatpush.bf16.msra.mxu0 %v6557
    %8832 = vmatpush.bf16.msra.mxu0 %v6556
    %8833 = vmatpush.bf16.msra.mxu0 %v6555
    %8834 = vmatpush.bf16.msra.mxu0 %v6554
    %8835 = vmatpush.bf16.msra.mxu0 %v6553
    %8836 = vmatpush.bf16.msra.mxu0 %v6552
    %8837 = vmatpush.bf16.msra.mxu0 %v6551
    %8838 = vmatpush.bf16.msra.mxu0 %v6550
    %8839 = vmatmul.bf16.gmra.mxu0 %v2003
    %v8840 = vpop.f32.mrf.mxu0
    %v8841 = vadd.f32 %v8828, %v8840
    %v8842 = vpop.f32.mrf.mxu0
    %8843 = vdwg.mxu0
    %8844 = vmatpush.bf16.msra.mxu0 %v6565
    %8845 = vmatpush.bf16.msra.mxu0 %v6564
    %8846 = vmatpush.bf16.msra.mxu0 %v6563
    %8847 = vmatpush.bf16.msra.mxu0 %v6562
    %8848 = vmatpush.bf16.msra.mxu0 %v6561
    %8849 = vmatpush.bf16.msra.mxu0 %v6560
    %8850 = vmatpush.bf16.msra.mxu0 %v6559
    %8851 = vmatpush.bf16.msra.mxu0 %v6558
    %8852 = vmatmul.bf16.gmra.mxu0 %v2004
    %v8853 = vpop.f32.mrf.mxu0
    %v8854 = vadd.f32 %v8841, %v8853
    %v8855 = vpop.f32.mrf.mxu0
    %8856 = vdwg.mxu0
    %8857 = vmatpush.bf16.msra.mxu0 %v6573
    %8858 = vmatpush.bf16.msra.mxu0 %v6572
    %8859 = vmatpush.bf16.msra.mxu0 %v6571
    %8860 = vmatpush.bf16.msra.mxu0 %v6570
    %8861 = vmatpush.bf16.msra.mxu0 %v6569
    %8862 = vmatpush.bf16.msra.mxu0 %v6568
    %8863 = vmatpush.bf16.msra.mxu0 %v6567
    %8864 = vmatpush.bf16.msra.mxu0 %v6566
    %8865 = vmatmul.bf16.gmra.mxu0 %v2005
    %v8866 = vpop.f32.mrf.mxu0
    %v8867 = vadd.f32 %v8854, %v8866
    %v8868 = vpop.f32.mrf.mxu0
    %8869 = vdwg.mxu0
    %8870 = vmatpush.bf16.msra.mxu0 %v6581
    %8871 = vmatpush.bf16.msra.mxu0 %v6580
    %8872 = vmatpush.bf16.msra.mxu0 %v6579
    %8873 = vmatpush.bf16.msra.mxu0 %v6578
    %8874 = vmatpush.bf16.msra.mxu0 %v6577
    %8875 = vmatpush.bf16.msra.mxu0 %v6576
    %8876 = vmatpush.bf16.msra.mxu0 %v6575
    %8877 = vmatpush.bf16.msra.mxu0 %v6574
    %8878 = vmatmul.bf16.gmra.mxu0 %v2008
    %v8879 = vpop.f32.mrf.mxu0
    %v8880 = vadd.f32 %v8867, %v8879
    %v8881 = vpop.f32.mrf.mxu0
    %8882 = vdwg.mxu0
    %8883 = vmatpush.bf16.msra.mxu0 %v6589
    %8884 = vmatpush.bf16.msra.mxu0 %v6588
    %8885 = vmatpush.bf16.msra.mxu0 %v6587
    %8886 = vmatpush.bf16.msra.mxu0 %v6586
    %8887 = vmatpush.bf16.msra.mxu0 %v6585
    %8888 = vmatpush.bf16.msra.mxu0 %v6584
    %8889 = vmatpush.bf16.msra.mxu0 %v6583
    %8890 = vmatpush.bf16.msra.mxu0 %v6582
    %8891 = vmatmul.bf16.gmra.mxu0 %v2009
    %v8892 = vpop.f32.mrf.mxu0
    %v8893 = vadd.f32 %v8880, %v8892
    %v8894 = vpop.f32.mrf.mxu0
    %8895 = vdwg.mxu0
    %8896 = vmatpush.bf16.msra.mxu0 %v6597
    %8897 = vmatpush.bf16.msra.mxu0 %v6596
    %8898 = vmatpush.bf16.msra.mxu0 %v6595
    %8899 = vmatpush.bf16.msra.mxu0 %v6594
    %8900 = vmatpush.bf16.msra.mxu0 %v6593
    %8901 = vmatpush.bf16.msra.mxu0 %v6592
    %8902 = vmatpush.bf16.msra.mxu0 %v6591
    %8903 = vmatpush.bf16.msra.mxu0 %v6590
    %8904 = vmatmul.bf16.gmra.mxu0 %v2010
    %v8905 = vpop.f32.mrf.mxu0
    %v8906 = vadd.f32 %v8893, %v8905
    %v8907 = vpop.f32.mrf.mxu0
    %8908 = vdwg.mxu0
    %8909 = vmatpush.bf16.msra.mxu0 %v6605
    %8910 = vmatpush.bf16.msra.mxu0 %v6604
    %8911 = vmatpush.bf16.msra.mxu0 %v6603
    %8912 = vmatpush.bf16.msra.mxu0 %v6602
    %8913 = vmatpush.bf16.msra.mxu0 %v6601
    %8914 = vmatpush.bf16.msra.mxu0 %v6600
    %8915 = vmatpush.bf16.msra.mxu0 %v6599
    %8916 = vmatpush.bf16.msra.mxu0 %v6598
    %8917 = vmatmul.bf16.gmra.mxu0 %v2011
    %v8918 = vpop.f32.mrf.mxu0
    %v8919 = vadd.f32 %v8906, %v8918
    %v8920 = vpop.f32.mrf.mxu0
    %8921 = vdwg.mxu0
    %8922 = vmatpush.bf16.msra.mxu0 %v6613
    %8923 = vmatpush.bf16.msra.mxu0 %v6612
    %8924 = vmatpush.bf16.msra.mxu0 %v6611
    %8925 = vmatpush.bf16.msra.mxu0 %v6610
    %8926 = vmatpush.bf16.msra.mxu0 %v6609
    %8927 = vmatpush.bf16.msra.mxu0 %v6608
    %8928 = vmatpush.bf16.msra.mxu0 %v6607
    %8929 = vmatpush.bf16.msra.mxu0 %v6606
    %8930 = vmatmul.bf16.gmra.mxu0 %v2012
    %v8931 = vpop.f32.mrf.mxu0
    %v8932 = vadd.f32 %v8919, %v8931
    %v8933 = vpop.f32.mrf.mxu0
    %8934 = vdwg.mxu0
    %8935 = vmatpush.bf16.msra.mxu0 %v6621
    %8936 = vmatpush.bf16.msra.mxu0 %v6620
    %8937 = vmatpush.bf16.msra.mxu0 %v6619
    %8938 = vmatpush.bf16.msra.mxu0 %v6618
    %8939 = vmatpush.bf16.msra.mxu0 %v6617
    %8940 = vmatpush.bf16.msra.mxu0 %v6616
    %8941 = vmatpush.bf16.msra.mxu0 %v6615
    %8942 = vmatpush.bf16.msra.mxu0 %v6614
    %8943 = vmatmul.bf16.gmra.mxu0 %v2013
    %v8944 = vpop.f32.mrf.mxu0
    %v8945 = vadd.f32 %v8932, %v8944
    %v8946 = vpop.f32.mrf.mxu0
    %8947 = vdwg.mxu0
    %8948 = vmatpush.bf16.msra.mxu0 %v6629
    %8949 = vmatpush.bf16.msra.mxu0 %v6628
    %8950 = vmatpush.bf16.msra.mxu0 %v6627
    %8951 = vmatpush.bf16.msra.mxu0 %v6626
    %8952 = vmatpush.bf16.msra.mxu0 %v6625
    %8953 = vmatpush.bf16.msra.mxu0 %v6624
    %8954 = vmatpush.bf16.msra.mxu0 %v6623
    %8955 = vmatpush.bf16.msra.mxu0 %v6622
    %8956 = vmatmul.bf16.gmra.mxu0 %v2014
    %v8957 = vpop.f32.mrf.mxu0
    %v8958 = vadd.f32 %v8945, %v8957
    %v8959 = vpop.f32.mrf.mxu0
    %8960 = vdwg.mxu0
    %8961 = vmatpush.bf16.msra.mxu0 %v6637
    %8962 = vmatpush.bf16.msra.mxu0 %v6636
    %8963 = vmatpush.bf16.msra.mxu0 %v6635
    %8964 = vmatpush.bf16.msra.mxu0 %v6634
    %8965 = vmatpush.bf16.msra.mxu0 %v6633
    %8966 = vmatpush.bf16.msra.mxu0 %v6632
    %8967 = vmatpush.bf16.msra.mxu0 %v6631
    %8968 = vmatpush.bf16.msra.mxu0 %v6630
    %8969 = vmatmul.bf16.gmra.mxu0 %v2015
    %v8970 = vpop.f32.mrf.mxu0
    %v8971 = vadd.f32 %v8958, %v8970
    %v8972 = vpop.f32.mrf.mxu0
    %8973 = vdwg.mxu0
    %8974 = vmatpush.bf16.msra.mxu0 %v6645
    %8975 = vmatpush.bf16.msra.mxu0 %v6644
    %8976 = vmatpush.bf16.msra.mxu0 %v6643
    %8977 = vmatpush.bf16.msra.mxu0 %v6642
    %8978 = vmatpush.bf16.msra.mxu0 %v6641
    %8979 = vmatpush.bf16.msra.mxu0 %v6640
    %8980 = vmatpush.bf16.msra.mxu0 %v6639
    %8981 = vmatpush.bf16.msra.mxu0 %v6638
    %8982 = vmatmul.bf16.gmra.mxu0 %v2018
    %v8983 = vpop.f32.mrf.mxu0
    %v8984 = vadd.f32 %v8971, %v8983
    %v8985 = vpop.f32.mrf.mxu0
    %8986 = vdwg.mxu0
    %8987 = vmatpush.bf16.msra.mxu0 %v6653
    %8988 = vmatpush.bf16.msra.mxu0 %v6652
    %8989 = vmatpush.bf16.msra.mxu0 %v6651
    %8990 = vmatpush.bf16.msra.mxu0 %v6650
    %8991 = vmatpush.bf16.msra.mxu0 %v6649
    %8992 = vmatpush.bf16.msra.mxu0 %v6648
    %8993 = vmatpush.bf16.msra.mxu0 %v6647
    %8994 = vmatpush.bf16.msra.mxu0 %v6646
    %8995 = vmatmul.bf16.gmra.mxu0 %v2019
    %v8996 = vpop.f32.mrf.mxu0
    %v8997 = vadd.f32 %v8984, %v8996
    %v8998 = vpop.f32.mrf.mxu0
    %8999 = vdwg.mxu0
    %9000 = vmatpush.bf16.msra.mxu0 %v6661
    %9001 = vmatpush.bf16.msra.mxu0 %v6660
    %9002 = vmatpush.bf16.msra.mxu0 %v6659
    %9003 = vmatpush.bf16.msra.mxu0 %v6658
    %9004 = vmatpush.bf16.msra.mxu0 %v6657
    %9005 = vmatpush.bf16.msra.mxu0 %v6656
    %9006 = vmatpush.bf16.msra.mxu0 %v6655
    %9007 = vmatpush.bf16.msra.mxu0 %v6654
    %9008 = vmatmul.bf16.gmra.mxu0 %v2020
    %v9009 = vpop.f32.mrf.mxu0
    %v9010 = vadd.f32 %v8997, %v9009
    %v9011 = vpop.f32.mrf.mxu0
    %9012 = vdwg.mxu0
    %9013 = vmatpush.bf16.msra.mxu0 %v6669
    %9014 = vmatpush.bf16.msra.mxu0 %v6668
    %9015 = vmatpush.bf16.msra.mxu0 %v6667
    %9016 = vmatpush.bf16.msra.mxu0 %v6666
    %9017 = vmatpush.bf16.msra.mxu0 %v6665
    %9018 = vmatpush.bf16.msra.mxu0 %v6664
    %9019 = vmatpush.bf16.msra.mxu0 %v6663
    %9020 = vmatpush.bf16.msra.mxu0 %v6662
    %9021 = vmatmul.bf16.gmra.mxu0 %v2021
    %v9022 = vpop.f32.mrf.mxu0
    %v9023 = vadd.f32 %v9010, %v9022
    %v9024 = vpop.f32.mrf.mxu0
    %9025 = vdwg.mxu0
    %9026 = vmatpush.bf16.msra.mxu0 %v6677
    %9027 = vmatpush.bf16.msra.mxu0 %v6676
    %9028 = vmatpush.bf16.msra.mxu0 %v6675
    %9029 = vmatpush.bf16.msra.mxu0 %v6674
    %9030 = vmatpush.bf16.msra.mxu0 %v6673
    %9031 = vmatpush.bf16.msra.mxu0 %v6672
    %9032 = vmatpush.bf16.msra.mxu0 %v6671
    %9033 = vmatpush.bf16.msra.mxu0 %v6670
    %9034 = vmatmul.bf16.gmra.mxu0 %v2022
    %v9035 = vpop.f32.mrf.mxu0
    %v9036 = vadd.f32 %v9023, %v9035
    %v9037 = vpop.f32.mrf.mxu0
    %9038 = vdwg.mxu0
    %9039 = vmatpush.bf16.msra.mxu0 %v6685
    %9040 = vmatpush.bf16.msra.mxu0 %v6684
    %9041 = vmatpush.bf16.msra.mxu0 %v6683
    %9042 = vmatpush.bf16.msra.mxu0 %v6682
    %9043 = vmatpush.bf16.msra.mxu0 %v6681
    %9044 = vmatpush.bf16.msra.mxu0 %v6680
    %9045 = vmatpush.bf16.msra.mxu0 %v6679
    %9046 = vmatpush.bf16.msra.mxu0 %v6678
    %9047 = vmatmul.bf16.gmra.mxu0 %v2023
    %v9048 = vpop.f32.mrf.mxu0
    %v9049 = vadd.f32 %v9036, %v9048
    %v9050 = vpop.f32.mrf.mxu0
    %9051 = vdwg.mxu0
    %9052 = vmatpush.bf16.msra.mxu0 %v6693
    %9053 = vmatpush.bf16.msra.mxu0 %v6692
    %9054 = vmatpush.bf16.msra.mxu0 %v6691
    %9055 = vmatpush.bf16.msra.mxu0 %v6690
    %9056 = vmatpush.bf16.msra.mxu0 %v6689
    %9057 = vmatpush.bf16.msra.mxu0 %v6688
    %9058 = vmatpush.bf16.msra.mxu0 %v6687
    %9059 = vmatpush.bf16.msra.mxu0 %v6686
    %9060 = vmatmul.bf16.gmra.mxu0 %v2024
    %v9061 = vpop.f32.mrf.mxu0
    %v9062 = vadd.f32 %v9049, %v9061
    %v9063 = vpop.f32.mrf.mxu0
    %9064 = vdwg.mxu0
    %9065 = vmatpush.bf16.msra.mxu0 %v6701
    %9066 = vmatpush.bf16.msra.mxu0 %v6700
    %9067 = vmatpush.bf16.msra.mxu0 %v6699
    %9068 = vmatpush.bf16.msra.mxu0 %v6698
    %9069 = vmatpush.bf16.msra.mxu0 %v6697
    %9070 = vmatpush.bf16.msra.mxu0 %v6696
    %9071 = vmatpush.bf16.msra.mxu0 %v6695
    %9072 = vmatpush.bf16.msra.mxu0 %v6694
    %9073 = vmatmul.bf16.gmra.mxu0 %v2025
    %v9074 = vpop.f32.mrf.mxu0
    %v9075 = vadd.f32 %v9062, %v9074
    %v9076 = vpop.f32.mrf.mxu0
    %9077 = vdwg.mxu0
    %9078 = vmatpush.bf16.msra.mxu0 %v6709
    %9079 = vmatpush.bf16.msra.mxu0 %v6708
    %9080 = vmatpush.bf16.msra.mxu0 %v6707
    %9081 = vmatpush.bf16.msra.mxu0 %v6706
    %9082 = vmatpush.bf16.msra.mxu0 %v6705
    %9083 = vmatpush.bf16.msra.mxu0 %v6704
    %9084 = vmatpush.bf16.msra.mxu0 %v6703
    %9085 = vmatpush.bf16.msra.mxu0 %v6702
    %9086 = vmatmul.bf16.gmra.mxu0 %v2028
    %v9087 = vpop.f32.mrf.mxu0
    %v9088 = vadd.f32 %v9075, %v9087
    %v9089 = vpop.f32.mrf.mxu0
    %9090 = vdwg.mxu0
    %9091 = vmatpush.bf16.msra.mxu0 %v6717
    %9092 = vmatpush.bf16.msra.mxu0 %v6716
    %9093 = vmatpush.bf16.msra.mxu0 %v6715
    %9094 = vmatpush.bf16.msra.mxu0 %v6714
    %9095 = vmatpush.bf16.msra.mxu0 %v6713
    %9096 = vmatpush.bf16.msra.mxu0 %v6712
    %9097 = vmatpush.bf16.msra.mxu0 %v6711
    %9098 = vmatpush.bf16.msra.mxu0 %v6710
    %9099 = vmatmul.bf16.gmra.mxu0 %v2029
    %v9100 = vpop.f32.mrf.mxu0
    %v9101 = vadd.f32 %v9088, %v9100
    %v9102 = vpop.f32.mrf.mxu0
    %9103 = vdwg.mxu0
    %9104 = vmatpush.bf16.msra.mxu0 %v6725
    %9105 = vmatpush.bf16.msra.mxu0 %v6724
    %9106 = vmatpush.bf16.msra.mxu0 %v6723
    %9107 = vmatpush.bf16.msra.mxu0 %v6722
    %9108 = vmatpush.bf16.msra.mxu0 %v6721
    %9109 = vmatpush.bf16.msra.mxu0 %v6720
    %9110 = vmatpush.bf16.msra.mxu0 %v6719
    %9111 = vmatpush.bf16.msra.mxu0 %v6718
    %9112 = vmatmul.bf16.gmra.mxu0 %v2030
    %v9113 = vpop.f32.mrf.mxu0
    %v9114 = vadd.f32 %v9101, %v9113
    %v9115 = vpop.f32.mrf.mxu0
    %9116 = vdwg.mxu0
    %9117 = vmatpush.bf16.msra.mxu0 %v6733
    %9118 = vmatpush.bf16.msra.mxu0 %v6732
    %9119 = vmatpush.bf16.msra.mxu0 %v6731
    %9120 = vmatpush.bf16.msra.mxu0 %v6730
    %9121 = vmatpush.bf16.msra.mxu0 %v6729
    %9122 = vmatpush.bf16.msra.mxu0 %v6728
    %9123 = vmatpush.bf16.msra.mxu0 %v6727
    %9124 = vmatpush.bf16.msra.mxu0 %v6726
    %9125 = vmatmul.bf16.gmra.mxu0 %v2031
    %v9126 = vpop.f32.mrf.mxu0
    %v9127 = vadd.f32 %v9114, %v9126
    %v9128 = vpop.f32.mrf.mxu0
    %9129 = vdwg.mxu0
    %9130 = vmatpush.bf16.msra.mxu0 %v6741
    %9131 = vmatpush.bf16.msra.mxu0 %v6740
    %9132 = vmatpush.bf16.msra.mxu0 %v6739
    %9133 = vmatpush.bf16.msra.mxu0 %v6738
    %9134 = vmatpush.bf16.msra.mxu0 %v6737
    %9135 = vmatpush.bf16.msra.mxu0 %v6736
    %9136 = vmatpush.bf16.msra.mxu0 %v6735
    %9137 = vmatpush.bf16.msra.mxu0 %v6734
    %9138 = vmatmul.bf16.gmra.mxu0 %v2032
    %v9139 = vpop.f32.mrf.mxu0
    %v9140 = vadd.f32 %v9127, %v9139
    %v9141 = vpop.f32.mrf.mxu0
    %9142 = vdwg.mxu0
    %9143 = vmatpush.bf16.msra.mxu0 %v6749
    %9144 = vmatpush.bf16.msra.mxu0 %v6748
    %9145 = vmatpush.bf16.msra.mxu0 %v6747
    %9146 = vmatpush.bf16.msra.mxu0 %v6746
    %9147 = vmatpush.bf16.msra.mxu0 %v6745
    %9148 = vmatpush.bf16.msra.mxu0 %v6744
    %9149 = vmatpush.bf16.msra.mxu0 %v6743
    %9150 = vmatpush.bf16.msra.mxu0 %v6742
    %9151 = vmatmul.bf16.gmra.mxu0 %v2033
    %v9152 = vpop.f32.mrf.mxu0
    %v9153 = vadd.f32 %v9140, %v9152
    %v9154 = vpop.f32.mrf.mxu0
    %9155 = vdwg.mxu0
    %9156 = vmatpush.bf16.msra.mxu0 %v6757
    %9157 = vmatpush.bf16.msra.mxu0 %v6756
    %9158 = vmatpush.bf16.msra.mxu0 %v6755
    %9159 = vmatpush.bf16.msra.mxu0 %v6754
    %9160 = vmatpush.bf16.msra.mxu0 %v6753
    %9161 = vmatpush.bf16.msra.mxu0 %v6752
    %9162 = vmatpush.bf16.msra.mxu0 %v6751
    %9163 = vmatpush.bf16.msra.mxu0 %v6750
    %9164 = vmatmul.bf16.gmra.mxu0 %v2034
    %v9165 = vpop.f32.mrf.mxu0
    %v9166 = vadd.f32 %v9153, %v9165
    %v9167 = vpop.f32.mrf.mxu0
    %9168 = vdwg.mxu0
    %9169 = vmatpush.bf16.msra.mxu0 %v6765
    %9170 = vmatpush.bf16.msra.mxu0 %v6764
    %9171 = vmatpush.bf16.msra.mxu0 %v6763
    %9172 = vmatpush.bf16.msra.mxu0 %v6762
    %9173 = vmatpush.bf16.msra.mxu0 %v6761
    %9174 = vmatpush.bf16.msra.mxu0 %v6760
    %9175 = vmatpush.bf16.msra.mxu0 %v6759
    %9176 = vmatpush.bf16.msra.mxu0 %v6758
    %9177 = vmatmul.bf16.gmra.mxu0 %v2035
    %v9178 = vpop.f32.mrf.mxu0
    %v9179 = vadd.f32 %v9166, %v9178
    %v9180 = vpop.f32.mrf.mxu0
    %9181 = vdwg.mxu0
    %9182 = vmatpush.bf16.msra.mxu0 %v6773
    %9183 = vmatpush.bf16.msra.mxu0 %v6772
    %9184 = vmatpush.bf16.msra.mxu0 %v6771
    %9185 = vmatpush.bf16.msra.mxu0 %v6770
    %9186 = vmatpush.bf16.msra.mxu0 %v6769
    %9187 = vmatpush.bf16.msra.mxu0 %v6768
    %9188 = vmatpush.bf16.msra.mxu0 %v6767
    %9189 = vmatpush.bf16.msra.mxu0 %v6766
    %9190 = vmatmul.bf16.gmra.mxu0 %v2038
    %v9191 = vpop.f32.mrf.mxu0
    %v9192 = vadd.f32 %v9179, %v9191
    %v9193 = vpop.f32.mrf.mxu0
    %9194 = vdwg.mxu0
    %9195 = vmatpush.bf16.msra.mxu0 %v6781
    %9196 = vmatpush.bf16.msra.mxu0 %v6780
    %9197 = vmatpush.bf16.msra.mxu0 %v6779
    %9198 = vmatpush.bf16.msra.mxu0 %v6778
    %9199 = vmatpush.bf16.msra.mxu0 %v6777
    %9200 = vmatpush.bf16.msra.mxu0 %v6776
    %9201 = vmatpush.bf16.msra.mxu0 %v6775
    %9202 = vmatpush.bf16.msra.mxu0 %v6774
    %9203 = vmatmul.bf16.gmra.mxu0 %v2039
    %v9204 = vpop.f32.mrf.mxu0
    %v9205 = vadd.f32 %v9192, %v9204
    %v9206 = vpop.f32.mrf.mxu0
    %9207 = vdwg.mxu0
    %9208 = vmatpush.bf16.msra.mxu0 %v6789
    %9209 = vmatpush.bf16.msra.mxu0 %v6788
    %9210 = vmatpush.bf16.msra.mxu0 %v6787
    %9211 = vmatpush.bf16.msra.mxu0 %v6786
    %9212 = vmatpush.bf16.msra.mxu0 %v6785
    %9213 = vmatpush.bf16.msra.mxu0 %v6784
    %9214 = vmatpush.bf16.msra.mxu0 %v6783
    %9215 = vmatpush.bf16.msra.mxu0 %v6782
    %9216 = vmatmul.bf16.gmra.mxu0 %v2040
    %v9217 = vpop.f32.mrf.mxu0
    %v9218 = vadd.f32 %v9205, %v9217
    %v9219 = vpop.f32.mrf.mxu0
    %9220 = vdwg.mxu0
    %9221 = vmatpush.bf16.msra.mxu0 %v6797
    %9222 = vmatpush.bf16.msra.mxu0 %v6796
    %9223 = vmatpush.bf16.msra.mxu0 %v6795
    %9224 = vmatpush.bf16.msra.mxu0 %v6794
    %9225 = vmatpush.bf16.msra.mxu0 %v6793
    %9226 = vmatpush.bf16.msra.mxu0 %v6792
    %9227 = vmatpush.bf16.msra.mxu0 %v6791
    %9228 = vmatpush.bf16.msra.mxu0 %v6790
    %9229 = vmatmul.bf16.gmra.mxu0 %v2041
    %v9230 = vpop.f32.mrf.mxu0
    %v9231 = vadd.f32 %v9218, %v9230
    %v9232 = vpop.f32.mrf.mxu0
    %9233 = vdwg.mxu0
    %v9234 = vmax.f32 %v9231, 0.0
    %v9235 = vpack.c.bf16 %v9234, %v9234
    %v9236 = vld [vmem:[%s3] sm:$0xf]
    %v9237 = vld [vmem:[%s3 + $0x4] sm:$0xf]
    %v9238 = vld [vmem:[%s3 + $0x8] sm:$0xf]
    %v9239 = vld [vmem:[%s3 + $0xc] sm:$0xf]
    %v9240 = vld [vmem:[%s3 + $0x10] sm:$0xf]
    %v9241 = vld [vmem:[%s3 + $0x14] sm:$0xf]
    %v9242 = vld [vmem:[%s3 + $0x18] sm:$0xf]
    %v9243 = vld [vmem:[%s3 + $0x1c] sm:$0xf]
    %v9244 = vld [vmem:[%s3 + $0x20] sm:$0xf]
    %v9245 = vld [vmem:[%s3 + $0x24] sm:$0xf]
    %v9246 = vld [vmem:[%s3 + $0x28] sm:$0xf]
    %v9247 = vld [vmem:[%s3 + $0x2c] sm:$0xf]
    %v9248 = vld [vmem:[%s3 + $0x30] sm:$0xf]
    %v9249 = vld [vmem:[%s3 + $0x34] sm:$0xf]
    %v9250 = vld [vmem:[%s3 + $0x38] sm:$0xf]
    %v9251 = vld [vmem:[%s3 + $0x3c] sm:$0xf]
    %v9252 = vld [vmem:[%s4] sm:$0x1]
    %v9254 = vperm.slane %v9252, 0
    %v9272 = vunpack.c.l.b16 %v9236
    %v9273 = vunpack.c.l.b16 %v9237
    %v9274 = vunpack.c.l.b16 %v9238
    %v9275 = vunpack.c.l.b16 %v9239
    %v9276 = vunpack.c.l.b16 %v9240
    %v9277 = vunpack.c.l.b16 %v9241
    %v9278 = vunpack.c.l.b16 %v9242
    %v9279 = vunpack.c.l.b16 %v9243
    %v9280 = vunpack.c.l.b16 %v9244
    %v9281 = vunpack.c.l.b16 %v9245
    %v9282 = vunpack.c.l.b16 %v9246
    %v9283 = vunpack.c.l.b16 %v9247
    %v9284 = vunpack.c.l.b16 %v9248
    %v9285 = vunpack.c.l.b16 %v9249
    %v9286 = vunpack.c.l.b16 %v9250
    %v9287 = vunpack.c.l.b16 %v9251
    %v9288 = vpack.c.b16 %v9273, %v9272
    %v9289 = vpack.c.b16 %v9275, %v9274
    %v9290 = vpack.c.b16 %v9277, %v9276
    %v9291 = vpack.c.b16 %v9279, %v9278
    %v9292 = vpack.c.b16 %v9281, %v9280
    %v9293 = vpack.c.b16 %v9283, %v9282
    %v9294 = vpack.c.b16 %v9285, %v9284
    %v9295 = vpack.c.b16 %v9287, %v9286
    %9304 = vmatpush.bf16.msra.mxu0 %v9295
    %9305 = vmatpush.bf16.msra.mxu0 %v9294
    %9306 = vmatpush.bf16.msra.mxu0 %v9293
    %9307 = vmatpush.bf16.msra.mxu0 %v9292
    %9308 = vmatpush.bf16.msra.mxu0 %v9291
    %9309 = vmatpush.bf16.msra.mxu0 %v9290
    %9310 = vmatpush.bf16.msra.mxu0 %v9289
    %9311 = vmatpush.bf16.msra.mxu0 %v9288
    %9312 = vmatmul.bf16.gmra.mxu0 %v9235
    %v9313 = vpop.f32.mrf.mxu0
    %v9314 = vadd.f32 %v9254, %v9313
    %v9315 = vpop.f32.mrf.mxu0
    %9316 = vdwg.mxu0
    %vm9317 = vcmask 74752
    %v9318 = vsel %vm9317, %v9314, -inf
    %9319 = vmax.xlane.f32.xlu0 %v9318
    %v9320 = vpop.xlane.xlu0 %9319
    %v9321 = vsub.f32 %v9314, %v9320
    %v9322 = vmul.f32 %v9321, 1.442695
    %v9323 = vpow.pop %v9322
    %v9324 = vsel %vm9317, %v9323, 0.0
    %9325 = vadd.xlane.f32.xlu0 %v9324
    %v9326 = vpop.xlane.xlu0 %9325
    %v9327 = vlog2.pop %v9326
    %v9328 = vmul.f32 %v9327, 0.6931472
    %v9329 = vsub.f32 %v9321, %v9328
    %9330 = vst.msk [vmem:[#allocation2] sm:$0x3] %vm9317, %v9329
    // Predicated region
    $region22: #{net_forward.3} parent=1 // pred_check
      _
    $region23: #{net_forward.3} parent=1 // pred_check_branch
      %9332 = sbr.rel (0) target = $region25
    $region24: #{net_forward.3} parent=1 // pred_region
      %9334 = vsyncadd [#allocation3], 0
      %s9336 = sshll.u32 [#allocation2], 4
      %s9337 = int_to_ptr.vmem [resolvable:$true] %s9336
      %s9338 = sshll.u32 %s5, 4
      %s9339 = int_to_ptr.hbm [resolvable:$true] %s9338
      %9341 = dma.vmem_to_hbm [thread:$0]  %s9337, 32, %s9339, [#allocation3]
    $region25: #{net_forward.3} parent=1 // pred_fallthru
      _
    // Predicated region
    $region26: #{net_forward.3} parent=1 // pred_check
      _
    $region27: #{net_forward.3} parent=1 // pred_check_branch
      %9343 = sbr.rel (0) target = $region29
    $region28: #{net_forward.3} parent=1 // pred_region
      %9345 = dma.done [#allocation3], 32
    $region29: #{net_forward.3} parent=1 // pred_fallthru
      _
    %9346 = vsyncpa [#allocation3], 1

</llo_original>
